<compile_context>
chip_gen: v5e
topology: v5e:2x2
jax: 0.10.0
libtpu: 0.0.40
codegen_flags: <defaults>
</compile_context>

<pallas_src>
import jax
import jax.numpy as jnp
from jax.experimental import pallas as pl
from jax.experimental.pallas import tpu as pltpu

BN_EPS = 1e-5
C = 128          # padded channel width (real: 80)
H1 = 256         # padded fc1 width   (real: 250)
NCLS = 25        # real number of classes
K1 = 32          # padded im2col depth for conv1 (real: 25)
NEG = -1e30      # pad-logit bias so padded lanes vanish in log_softmax
VMEM = pltpu.MemorySpace.VMEM


# ----------------------------- kernel helpers --------------------------------

def _bn_relu(acc, gamma, beta):
    """Train-mode BatchNorm (per-channel batch stats) + ReLU on (M, C) slab.

    One-pass statistics (sum / sum-of-squares) and a single fused per-channel
    scale+shift pass over the accumulator.
    """
    m = acc.shape[0]
    s = jnp.sum(acc, axis=0, keepdims=True)
    ss = jnp.sum(acc * acc, axis=0, keepdims=True)
    mean = s * (1.0 / m)
    var = jnp.maximum(ss * (1.0 / m) - mean * mean, 0.0)   # biased variance
    scale = gamma * jax.lax.rsqrt(var + BN_EPS)
    shift = beta - mean * scale
    return jnp.maximum(acc * scale + shift, 0.0)


def _maxpool2(ref, ho, wo):
    """2x2/stride-2 max pool via strided reads from a VMEM scratch ref."""
    a = jnp.maximum(ref[:, pl.ds(0, ho, stride=2), pl.ds(0, wo, stride=2), :],
                    ref[:, pl.ds(0, ho, stride=2), pl.ds(1, wo, stride=2), :])
    b = jnp.maximum(ref[:, pl.ds(1, ho, stride=2), pl.ds(0, wo, stride=2), :],
                    ref[:, pl.ds(1, ho, stride=2), pl.ds(1, wo, stride=2), :])
    return jnp.maximum(a, b)


# ----------------------------- fused kernel ----------------------------------

def net_kernel(x1_ref, w1_ref, g1_ref, be1_ref,
               w2_ref, g2_ref, be2_ref,
               fc1w_ref, fc1b_ref, fc2w_ref, fc2b_ref,
               o_ref, s1_ref, s2_ref):
    n = s1_ref.shape[0]

    # ---- conv1: one im2col matmul on the MXU, (n*576, 32) x (32, 128) ------
    acc1 = jnp.dot(x1_ref[...], w1_ref[...],
                   preferred_element_type=jnp.float32)            # (n*576, C)
    y1 = _bn_relu(acc1, g1_ref[...], be1_ref[...])
    s1_ref[...] = y1.reshape(n, 24, 24, C)
    p1 = _maxpool2(s1_ref, 12, 12)                                # (n,12,12,C)

    # ---- conv2: 25 shifted-window K=128 matmuls, accumulated ---------------
    acc2 = jnp.zeros((n * 8 * 8, C), jnp.float32)
    for kh in range(5):
        for kw in range(5):
            patch = p1[:, kh:kh + 8, kw:kw + 8, :].reshape(n * 8 * 8, C)
            acc2 = acc2 + jnp.dot(patch, w2_ref[kh * 5 + kw],
                                  preferred_element_type=jnp.float32)
    y2 = _bn_relu(acc2, g2_ref[...], be2_ref[...])
    s2_ref[...] = y2.reshape(n, 8, 8, C)
    p2 = _maxpool2(s2_ref, 4, 4)                                  # (n,4,4,C)

    # ---- fc1 + ReLU: 16 per-spatial-position matmuls (weights pre-permuted
    #      at init so no NHWC->NCHW transpose is needed) ---------------------
    h = jnp.zeros((n, H1), jnp.float32)
    for hh in range(4):
        for ww in range(4):
            v = p2[:, hh:hh + 1, ww:ww + 1, :].reshape(n, C)
            h = h + jnp.dot(v, fc1w_ref[hh * 4 + ww],
                            preferred_element_type=jnp.float32)
    h = jnp.maximum(h + fc1b_ref[...], 0.0)                       # (n, 256)

    # ---- fc2 + log_softmax: lane-dense 128-wide logits, padded lanes get a
    #      -1e30 bias so they contribute 0 to the softmax sum ----------------
    logits = jnp.dot(h, fc2w_ref[...],
                     preferred_element_type=jnp.float32) + fc2b_ref[...]
    m = jnp.max(logits, axis=1, keepdims=True)
    lse = jnp.log(jnp.sum(jnp.exp(logits - m), axis=1, keepdims=True)) + m
    o_ref[...] = (logits - lse)[:, :NCLS]


# ----------------------------- wrapper ----------------------------------------

def _im2col28(x_nchw):
    """im2col of the (N,1,28,28) input for the 5x5 conv1: (N*576, 32)."""
    n = x_nchw.shape[0]
    x = x_nchw[:, 0]                                   # (n, 28, 28)
    cols = [x[:, kh:kh + 24, kw:kw + 24]
            for kh in range(5) for kw in range(5)]
    p = jnp.stack(cols, axis=-1).reshape(n * 24 * 24, 25)
    return jnp.pad(p, ((0, 0), (0, K1 - 25)))          # pad K 25 -> 32


@jax.jit
def net_forward(x_nchw, kp):
    n = x_nchw.shape[0]
    x1 = _im2col28(x_nchw)
    return pl.pallas_call(
        net_kernel,
        out_shape=jax.ShapeDtypeStruct((n, NCLS), jnp.float32),
        in_specs=[pl.BlockSpec(memory_space=VMEM)] * 11,
        out_specs=pl.BlockSpec(memory_space=VMEM),
        scratch_shapes=[pltpu.VMEM((n, 24, 24, C), jnp.float32),
                        pltpu.VMEM((n, 8, 8, C), jnp.float32)],
    )(x1, kp["w1"], kp["g1"], kp["be1"],
      kp["w2"], kp["g2"], kp["be2"],
      kp["fc1_w"], kp["fc1_b"], kp["fc2_w"], kp["fc2_b"])


# ----------------------------- parameters -------------------------------------

def init_params(key):
    """PyTorch-layout parameters (uniform(-1/sqrt(fan_in)) like nn defaults)."""
    ks = jax.random.split(key, 8)

    def unif(k, shape, fan_in):
        b = 1.0 / (fan_in ** 0.5)
        return jax.random.uniform(k, shape, jnp.float32, -b, b)

    return {
        "conv1_w": unif(ks[0], (80, 1, 5, 5), 25),
        "conv1_b": unif(ks[1], (80,), 25),
        "conv2_w": unif(ks[2], (80, 80, 5, 5), 80 * 25),
        "conv2_b": unif(ks[3], (80,), 80 * 25),
        "bn1_g": jnp.ones((80,), jnp.float32),
        "bn1_b": jnp.zeros((80,), jnp.float32),
        "bn2_g": jnp.ones((80,), jnp.float32),
        "bn2_b": jnp.zeros((80,), jnp.float32),
        "fc1_w": unif(ks[4], (250, 1280), 1280),
        "fc1_b": unif(ks[5], (250,), 1280),
        "fc2_w": unif(ks[6], (25, 250), 250),
        "fc2_b": unif(ks[7], (25,), 250),
    }


def prepare_params(p):
    """Pad / permute PyTorch-layout params into the kernel's lane-dense layout."""
    kp = {}
    # conv1 (80,1,5,5) -> (25,80) [row = kh*5+kw, col = cout] -> pad (32,128).
    w1 = jnp.transpose(p["conv1_w"], (2, 3, 1, 0)).reshape(25, 80)
    kp["w1"] = jnp.pad(w1, ((0, K1 - 25), (0, C - 80)))
    # conv2 (80,80,5,5) -> (25,80,80) [t, cin, cout] -> pad (25,128,128).
    w2 = jnp.transpose(p["conv2_w"], (2, 3, 1, 0)).reshape(25, 80, 80)
    kp["w2"] = jnp.pad(w2, ((0, 0), (0, C - 80), (0, C - 80)))
    # BN affine params (padded lanes stay exactly 0).  Conv biases are not
    # passed: a per-channel constant before train-mode BN cancels exactly.
    for name, src in (("g1", "bn1_g"), ("be1", "bn1_b"),
                      ("g2", "bn2_g"), ("be2", "bn2_b")):
        kp[name] = jnp.pad(p[src], (0, C - 80)).reshape(1, C)
    # fc1: rows reordered from PyTorch (c,h,w) flatten order into per-spatial-
    # position blocks over NHWC channels -> (16, 128, 256).
    f1 = p["fc1_w"].reshape(250, 80, 4, 4)             # (o, c, h, w)
    f1 = jnp.transpose(f1, (2, 3, 1, 0))               # (h, w, c, o)
    f1 = jnp.pad(f1, ((0, 0), (0, 0), (0, C - 80), (0, H1 - 250)))
    kp["fc1_w"] = f1.reshape(16, C, H1)
    kp["fc1_b"] = jnp.pad(p["fc1_b"], (0, H1 - 250)).reshape(1, H1)
    # fc2: (25,250) -> (250,25) -> pad (256,128); padded logits biased to -1e30.
    kp["fc2_w"] = jnp.pad(p["fc2_w"].T, ((0, H1 - 250), (0, C - NCLS)))
    kp["fc2_b"] = jnp.concatenate(
        [p["fc2_b"], jnp.full((C - NCLS,), NEG, jnp.float32)]).reshape(1, C)
    return kp


# ----------------------------- main --------------------------------------------

if __name__ == "__main__":
    key = jax.random.PRNGKey(0)
    k_x, k_p = jax.random.split(key)
    # batch=2, NCHW input like the PyTorch module (28x28 implied by fc1=1280)
    x = jax.random.normal(k_x, (2, 1, 28, 28), jnp.float32)
    params = init_params(k_p)
    kparams = prepare_params(params)

    out = net_forward(x, kparams)
    out = jax.block_until_ready(out)

    assert out.shape == (2, 25) and out.dtype == jnp.float32
    assert bool(jnp.all(jnp.isfinite(out)))
    # log_softmax rows must exponentiate-sum to 1
    assert bool(jnp.allclose(jnp.sum(jnp.exp(out), axis=1), 1.0, atol=1e-3))
    print("KERNEL_OK")
</pallas_src>

<mosaic_0001>
module attributes {stable_mosaic.version = 11 : i64} {
  func.func @net_kernel(%arg0: memref<1152x32xf32, #tpu.memory_space<vmem>>, %arg1: memref<32x128xf32, #tpu.memory_space<vmem>>, %arg2: memref<1x128xf32, #tpu.memory_space<vmem>>, %arg3: memref<1x128xf32, #tpu.memory_space<vmem>>, %arg4: memref<25x128x128xf32, #tpu.memory_space<vmem>>, %arg5: memref<1x128xf32, #tpu.memory_space<vmem>>, %arg6: memref<1x128xf32, #tpu.memory_space<vmem>>, %arg7: memref<16x128x256xf32, #tpu.memory_space<vmem>>, %arg8: memref<1x256xf32, #tpu.memory_space<vmem>>, %arg9: memref<256x128xf32, #tpu.memory_space<vmem>>, %arg10: memref<1x128xf32, #tpu.memory_space<vmem>>, %arg11: memref<2x25xf32, #tpu.memory_space<vmem>>, %arg12: memref<2x24x24x128xf32, #tpu.memory_space<vmem>>, %arg13: memref<2x8x8x128xf32, #tpu.memory_space<vmem>>) attributes {dimension_semantics = [], scalar_prefetch = 0 : i64, scratch_operands = 2 : i64, tpu.core_type = #tpu.core_type<tc>} {
    %c0 = arith.constant 0 : index
    %c0_0 = arith.constant 0 : index
    %0 = vector.load %arg0[%c0, %c0_0] : memref<1152x32xf32, #tpu.memory_space<vmem>>, vector<1152x32xf32>
    %c0_1 = arith.constant 0 : index
    %c0_2 = arith.constant 0 : index
    %1 = vector.load %arg1[%c0_1, %c0_2] : memref<32x128xf32, #tpu.memory_space<vmem>>, vector<32x128xf32>
    %cst = arith.constant dense<0.000000e+00> : vector<1152x128xf32>
    %2 = tpu.matmul %0, %1, %cst {dimension_numbers = #tpu.dot_dimension_numbers<[1], [0], [0], [1], [0, 0, 1, 1], [], []>} : vector<1152x32xf32>, vector<32x128xf32>, vector<1152x128xf32> -> vector<1152x128xf32>
    %c0_3 = arith.constant 0 : index
    %c0_4 = arith.constant 0 : index
    %3 = vector.load %arg2[%c0_3, %c0_4] : memref<1x128xf32, #tpu.memory_space<vmem>>, vector<1x128xf32>
    %c0_5 = arith.constant 0 : index
    %c0_6 = arith.constant 0 : index
    %4 = vector.load %arg3[%c0_5, %c0_6] : memref<1x128xf32, #tpu.memory_space<vmem>>, vector<1x128xf32>
    %cst_7 = arith.constant dense<0.000000e+00> : vector<128xf32>
    %5 = vector.multi_reduction <add>, %2, %cst_7 [0] : vector<1152x128xf32> to vector<128xf32>
    %6 = vector.shape_cast %5 : vector<128xf32> to vector<1x128xf32>
    %7 = arith.mulf %2, %2 : vector<1152x128xf32>
    %cst_8 = arith.constant dense<0.000000e+00> : vector<128xf32>
    %8 = vector.multi_reduction <add>, %7, %cst_8 [0] : vector<1152x128xf32> to vector<128xf32>
    %9 = vector.shape_cast %8 : vector<128xf32> to vector<1x128xf32>
    %cst_9 = arith.constant 8.68055562E-4 : f32
    %10 = vector.broadcast %cst_9 : f32 to vector<1x128xf32>
    %11 = arith.mulf %6, %10 : vector<1x128xf32>
    %cst_10 = arith.constant 8.68055562E-4 : f32
    %12 = vector.broadcast %cst_10 : f32 to vector<1x128xf32>
    %13 = arith.mulf %9, %12 : vector<1x128xf32>
    %14 = arith.mulf %11, %11 : vector<1x128xf32>
    %15 = arith.subf %13, %14 : vector<1x128xf32>
    %cst_11 = arith.constant 0.000000e+00 : f32
    %16 = vector.broadcast %cst_11 : f32 to vector<1x128xf32>
    %17 = arith.maximumf %15, %16 : vector<1x128xf32>
    %cst_12 = arith.constant 9.99999974E-6 : f32
    %18 = vector.broadcast %cst_12 : f32 to vector<1x128xf32>
    %19 = arith.addf %17, %18 : vector<1x128xf32>
    %20 = math.rsqrt %19 : vector<1x128xf32>
    %21 = arith.mulf %3, %20 : vector<1x128xf32>
    %22 = arith.mulf %11, %21 : vector<1x128xf32>
    %23 = arith.subf %4, %22 : vector<1x128xf32>
    %24 = vector.broadcast %21 : vector<1x128xf32> to vector<1152x128xf32>
    %25 = arith.mulf %2, %24 : vector<1152x128xf32>
    %26 = vector.broadcast %23 : vector<1x128xf32> to vector<1152x128xf32>
    %27 = arith.addf %25, %26 : vector<1152x128xf32>
    %cst_13 = arith.constant 0.000000e+00 : f32
    %28 = vector.broadcast %cst_13 : f32 to vector<1152x128xf32>
    %29 = arith.maximumf %27, %28 : vector<1152x128xf32>
    %30 = vector.shape_cast %29 : vector<1152x128xf32> to vector<2x24x24x128xf32>
    %c0_14 = arith.constant 0 : index
    %c0_15 = arith.constant 0 : index
    %c0_16 = arith.constant 0 : index
    %c0_17 = arith.constant 0 : index
    %31 = vector.load %arg12[%c0_14, %c0_15, %c0_16, %c0_17] : memref<2x24x24x128xf32, #tpu.memory_space<vmem>>, vector<2x24x24x128xf32>
    tpu.vector_store %arg12[%c0_14, %c0_15, %c0_16, %c0_17], %30 {strides = array<i32>} : memref<2x24x24x128xf32, #tpu.memory_space<vmem>>, vector<2x24x24x128xf32>,
    %c0_18 = arith.constant 0 : index
    %c0_19 = arith.constant 0 : index
    %c0_20 = arith.constant 0 : index
    %c0_21 = arith.constant 0 : index
    %32 = tpu.strided_load %arg12[%c0_18, %c0_19, %c0_20, %c0_21] {strides = array<i32: 1, 2, 2, 1>} : memref<2x24x24x128xf32, #tpu.memory_space<vmem>>, vector<2x12x12x128xf32>
    %c0_22 = arith.constant 0 : index
    %c0_23 = arith.constant 0 : index
    %c1 = arith.constant 1 : index
    %c0_24 = arith.constant 0 : index
    %33 = tpu.strided_load %arg12[%c0_22, %c0_23, %c1, %c0_24] {strides = array<i32: 1, 2, 2, 1>} : memref<2x24x24x128xf32, #tpu.memory_space<vmem>>, vector<2x12x12x128xf32>
    %34 = arith.maximumf %32, %33 : vector<2x12x12x128xf32>
    %c0_25 = arith.constant 0 : index
    %c1_26 = arith.constant 1 : index
    %c0_27 = arith.constant 0 : index
    %c0_28 = arith.constant 0 : index
    %35 = tpu.strided_load %arg12[%c0_25, %c1_26, %c0_27, %c0_28] {strides = array<i32: 1, 2, 2, 1>} : memref<2x24x24x128xf32, #tpu.memory_space<vmem>>, vector<2x12x12x128xf32>
    %c0_29 = arith.constant 0 : index
    %c1_30 = arith.constant 1 : index
    %c1_31 = arith.constant 1 : index
    %c0_32 = arith.constant 0 : index
    %36 = tpu.strided_load %arg12[%c0_29, %c1_30, %c1_31, %c0_32] {strides = array<i32: 1, 2, 2, 1>} : memref<2x24x24x128xf32, #tpu.memory_space<vmem>>, vector<2x12x12x128xf32>
    %37 = arith.maximumf %35, %36 : vector<2x12x12x128xf32>
    %38 = arith.maximumf %34, %37 : vector<2x12x12x128xf32>
    %cst_33 = arith.constant 0.000000e+00 : f32
    %39 = vector.broadcast %cst_33 : f32 to vector<128x128xf32>
    %40 = vector.extract_strided_slice %38 {offsets = [0, 0, 0, 0], sizes = [2, 8, 8, 128], strides = [1, 1, 1, 1]} : vector<2x12x12x128xf32> to vector<2x8x8x128xf32>
    %41 = vector.shape_cast %40 : vector<2x8x8x128xf32> to vector<128x128xf32>
    %c0_34 = arith.constant 0 : index
    %c0_35 = arith.constant 0 : index
    %c0_36 = arith.constant 0 : index
    %42 = vector.load %arg4[%c0_34, %c0_35, %c0_36] : memref<25x128x128xf32, #tpu.memory_space<vmem>>, vector<1x128x128xf32>
    %43 = vector.shape_cast %42 : vector<1x128x128xf32> to vector<128x128xf32>
    %cst_37 = arith.constant dense<0.000000e+00> : vector<128x128xf32>
    %44 = tpu.matmul %41, %43, %cst_37 {dimension_numbers = #tpu.dot_dimension_numbers<[1], [0], [0], [1], [0, 0, 1, 1], [], []>} : vector<128x128xf32>, vector<128x128xf32>, vector<128x128xf32> -> vector<128x128xf32>
    %45 = arith.addf %39, %44 : vector<128x128xf32>
    %46 = vector.extract_strided_slice %38 {offsets = [0, 0, 1, 0], sizes = [2, 8, 8, 128], strides = [1, 1, 1, 1]} : vector<2x12x12x128xf32> to vector<2x8x8x128xf32>
    %47 = vector.shape_cast %46 : vector<2x8x8x128xf32> to vector<128x128xf32>
    %c1_38 = arith.constant 1 : index
    %c0_39 = arith.constant 0 : index
    %c0_40 = arith.constant 0 : index
    %48 = vector.load %arg4[%c1_38, %c0_39, %c0_40] : memref<25x128x128xf32, #tpu.memory_space<vmem>>, vector<1x128x128xf32>
    %49 = vector.shape_cast %48 : vector<1x128x128xf32> to vector<128x128xf32>
    %cst_41 = arith.constant dense<0.000000e+00> : vector<128x128xf32>
    %50 = tpu.matmul %47, %49, %cst_41 {dimension_numbers = #tpu.dot_dimension_numbers<[1], [0], [0], [1], [0, 0, 1, 1], [], []>} : vector<128x128xf32>, vector<128x128xf32>, vector<128x128xf32> -> vector<128x128xf32>
    %51 = arith.addf %45, %50 : vector<128x128xf32>
    %52 = vector.extract_strided_slice %38 {offsets = [0, 0, 2, 0], sizes = [2, 8, 8, 128], strides = [1, 1, 1, 1]} : vector<2x12x12x128xf32> to vector<2x8x8x128xf32>
    %53 = vector.shape_cast %52 : vector<2x8x8x128xf32> to vector<128x128xf32>
    %c2 = arith.constant 2 : index
    %c0_42 = arith.constant 0 : index
    %c0_43 = arith.constant 0 : index
    %54 = vector.load %arg4[%c2, %c0_42, %c0_43] : memref<25x128x128xf32, #tpu.memory_space<vmem>>, vector<1x128x128xf32>
    %55 = vector.shape_cast %54 : vector<1x128x128xf32> to vector<128x128xf32>
    %cst_44 = arith.constant dense<0.000000e+00> : vector<128x128xf32>
    %56 = tpu.matmul %53, %55, %cst_44 {dimension_numbers = #tpu.dot_dimension_numbers<[1], [0], [0], [1], [0, 0, 1, 1], [], []>} : vector<128x128xf32>, vector<128x128xf32>, vector<128x128xf32> -> vector<128x128xf32>
    %57 = arith.addf %51, %56 : vector<128x128xf32>
    %58 = vector.extract_strided_slice %38 {offsets = [0, 0, 3, 0], sizes = [2, 8, 8, 128], strides = [1, 1, 1, 1]} : vector<2x12x12x128xf32> to vector<2x8x8x128xf32>
    %59 = vector.shape_cast %58 : vector<2x8x8x128xf32> to vector<128x128xf32>
    %c3 = arith.constant 3 : index
    %c0_45 = arith.constant 0 : index
    %c0_46 = arith.constant 0 : index
    %60 = vector.load %arg4[%c3, %c0_45, %c0_46] : memref<25x128x128xf32, #tpu.memory_space<vmem>>, vector<1x128x128xf32>
    %61 = vector.shape_cast %60 : vector<1x128x128xf32> to vector<128x128xf32>
    %cst_47 = arith.constant dense<0.000000e+00> : vector<128x128xf32>
    %62 = tpu.matmul %59, %61, %cst_47 {dimension_numbers = #tpu.dot_dimension_numbers<[1], [0], [0], [1], [0, 0, 1, 1], [], []>} : vector<128x128xf32>, vector<128x128xf32>, vector<128x128xf32> -> vector<128x128xf32>
    %63 = arith.addf %57, %62 : vector<128x128xf32>
    %64 = vector.extract_strided_slice %38 {offsets = [0, 0, 4, 0], sizes = [2, 8, 8, 128], strides = [1, 1, 1, 1]} : vector<2x12x12x128xf32> to vector<2x8x8x128xf32>
    %65 = vector.shape_cast %64 : vector<2x8x8x128xf32> to vector<128x128xf32>
    %c4 = arith.constant 4 : index
    %c0_48 = arith.constant 0 : index
    %c0_49 = arith.constant 0 : index
    %66 = vector.load %arg4[%c4, %c0_48, %c0_49] : memref<25x128x128xf32, #tpu.memory_space<vmem>>, vector<1x128x128xf32>
    %67 = vector.shape_cast %66 : vector<1x128x128xf32> to vector<128x128xf32>
    %cst_50 = arith.constant dense<0.000000e+00> : vector<128x128xf32>
    %68 = tpu.matmul %65, %67, %cst_50 {dimension_numbers = #tpu.dot_dimension_numbers<[1], [0], [0], [1], [0, 0, 1, 1], [], []>} : vector<128x128xf32>, vector<128x128xf32>, vector<128x128xf32> -> vector<128x128xf32>
    %69 = arith.addf %63, %68 : vector<128x128xf32>
    %70 = vector.extract_strided_slice %38 {offsets = [0, 1, 0, 0], sizes = [2, 8, 8, 128], strides = [1, 1, 1, 1]} : vector<2x12x12x128xf32> to vector<2x8x8x128xf32>
    %71 = vector.shape_cast %70 : vector<2x8x8x128xf32> to vector<128x128xf32>
    %c5 = arith.constant 5 : index
    %c0_51 = arith.constant 0 : index
    %c0_52 = arith.constant 0 : index
    %72 = vector.load %arg4[%c5, %c0_51, %c0_52] : memref<25x128x128xf32, #tpu.memory_space<vmem>>, vector<1x128x128xf32>
    %73 = vector.shape_cast %72 : vector<1x128x128xf32> to vector<128x128xf32>
    %cst_53 = arith.constant dense<0.000000e+00> : vector<128x128xf32>
    %74 = tpu.matmul %71, %73, %cst_53 {dimension_numbers = #tpu.dot_dimension_numbers<[1], [0], [0], [1], [0, 0, 1, 1], [], []>} : vector<128x128xf32>, vector<128x128xf32>, vector<128x128xf32> -> vector<128x128xf32>
    %75 = arith.addf %69, %74 : vector<128x128xf32>
    %76 = vector.extract_strided_slice %38 {offsets = [0, 1, 1, 0], sizes = [2, 8, 8, 128], strides = [1, 1, 1, 1]} : vector<2x12x12x128xf32> to vector<2x8x8x128xf32>
    %77 = vector.shape_cast %76 : vector<2x8x8x128xf32> to vector<128x128xf32>
    %c6 = arith.constant 6 : index
    %c0_54 = arith.constant 0 : index
    %c0_55 = arith.constant 0 : index
    %78 = vector.load %arg4[%c6, %c0_54, %c0_55] : memref<25x128x128xf32, #tpu.memory_space<vmem>>, vector<1x128x128xf32>
    %79 = vector.shape_cast %78 : vector<1x128x128xf32> to vector<128x128xf32>
    %cst_56 = arith.constant dense<0.000000e+00> : vector<128x128xf32>
    %80 = tpu.matmul %77, %79, %cst_56 {dimension_numbers = #tpu.dot_dimension_numbers<[1], [0], [0], [1], [0, 0, 1, 1], [], []>} : vector<128x128xf32>, vector<128x128xf32>, vector<128x128xf32> -> vector<128x128xf32>
    %81 = arith.addf %75, %80 : vector<128x128xf32>
    %82 = vector.extract_strided_slice %38 {offsets = [0, 1, 2, 0], sizes = [2, 8, 8, 128], strides = [1, 1, 1, 1]} : vector<2x12x12x128xf32> to vector<2x8x8x128xf32>
    %83 = vector.shape_cast %82 : vector<2x8x8x128xf32> to vector<128x128xf32>
    %c7 = arith.constant 7 : index
    %c0_57 = arith.constant 0 : index
    %c0_58 = arith.constant 0 : index
    %84 = vector.load %arg4[%c7, %c0_57, %c0_58] : memref<25x128x128xf32, #tpu.memory_space<vmem>>, vector<1x128x128xf32>
    %85 = vector.shape_cast %84 : vector<1x128x128xf32> to vector<128x128xf32>
    %cst_59 = arith.constant dense<0.000000e+00> : vector<128x128xf32>
    %86 = tpu.matmul %83, %85, %cst_59 {dimension_numbers = #tpu.dot_dimension_numbers<[1], [0], [0], [1], [0, 0, 1, 1], [], []>} : vector<128x128xf32>, vector<128x128xf32>, vector<128x128xf32> -> vector<128x128xf32>
    %87 = arith.addf %81, %86 : vector<128x128xf32>
    %88 = vector.extract_strided_slice %38 {offsets = [0, 1, 3, 0], sizes = [2, 8, 8, 128], strides = [1, 1, 1, 1]} : vector<2x12x12x128xf32> to vector<2x8x8x128xf32>
    %89 = vector.shape_cast %88 : vector<2x8x8x128xf32> to vector<128x128xf32>
    %c8 = arith.constant 8 : index
    %c0_60 = arith.constant 0 : index
    %c0_61 = arith.constant 0 : index
    %90 = vector.load %arg4[%c8, %c0_60, %c0_61] : memref<25x128x128xf32, #tpu.memory_space<vmem>>, vector<1x128x128xf32>
    %91 = vector.shape_cast %90 : vector<1x128x128xf32> to vector<128x128xf32>
    %cst_62 = arith.constant dense<0.000000e+00> : vector<128x128xf32>
    %92 = tpu.matmul %89, %91, %cst_62 {dimension_numbers = #tpu.dot_dimension_numbers<[1], [0], [0], [1], [0, 0, 1, 1], [], []>} : vector<128x128xf32>, vector<128x128xf32>, vector<128x128xf32> -> vector<128x128xf32>
    %93 = arith.addf %87, %92 : vector<128x128xf32>
    %94 = vector.extract_strided_slice %38 {offsets = [0, 1, 4, 0], sizes = [2, 8, 8, 128], strides = [1, 1, 1, 1]} : vector<2x12x12x128xf32> to vector<2x8x8x128xf32>
    %95 = vector.shape_cast %94 : vector<2x8x8x128xf32> to vector<128x128xf32>
    %c9 = arith.constant 9 : index
    %c0_63 = arith.constant 0 : index
    %c0_64 = arith.constant 0 : index
    %96 = vector.load %arg4[%c9, %c0_63, %c0_64] : memref<25x128x128xf32, #tpu.memory_space<vmem>>, vector<1x128x128xf32>
    %97 = vector.shape_cast %96 : vector<1x128x128xf32> to vector<128x128xf32>
    %cst_65 = arith.constant dense<0.000000e+00> : vector<128x128xf32>
    %98 = tpu.matmul %95, %97, %cst_65 {dimension_numbers = #tpu.dot_dimension_numbers<[1], [0], [0], [1], [0, 0, 1, 1], [], []>} : vector<128x128xf32>, vector<128x128xf32>, vector<128x128xf32> -> vector<128x128xf32>
    %99 = arith.addf %93, %98 : vector<128x128xf32>
    %100 = vector.extract_strided_slice %38 {offsets = [0, 2, 0, 0], sizes = [2, 8, 8, 128], strides = [1, 1, 1, 1]} : vector<2x12x12x128xf32> to vector<2x8x8x128xf32>
    %101 = vector.shape_cast %100 : vector<2x8x8x128xf32> to vector<128x128xf32>
    %c10 = arith.constant 10 : index
    %c0_66 = arith.constant 0 : index
    %c0_67 = arith.constant 0 : index
    %102 = vector.load %arg4[%c10, %c0_66, %c0_67] : memref<25x128x128xf32, #tpu.memory_space<vmem>>, vector<1x128x128xf32>
    %103 = vector.shape_cast %102 : vector<1x128x128xf32> to vector<128x128xf32>
    %cst_68 = arith.constant dense<0.000000e+00> : vector<128x128xf32>
    %104 = tpu.matmul %101, %103, %cst_68 {dimension_numbers = #tpu.dot_dimension_numbers<[1], [0], [0], [1], [0, 0, 1, 1], [], []>} : vector<128x128xf32>, vector<128x128xf32>, vector<128x128xf32> -> vector<128x128xf32>
    %105 = arith.addf %99, %104 : vector<128x128xf32>
    %106 = vector.extract_strided_slice %38 {offsets = [0, 2, 1, 0], sizes = [2, 8, 8, 128], strides = [1, 1, 1, 1]} : vector<2x12x12x128xf32> to vector<2x8x8x128xf32>
    %107 = vector.shape_cast %106 : vector<2x8x8x128xf32> to vector<128x128xf32>
    %c11 = arith.constant 11 : index
    %c0_69 = arith.constant 0 : index
    %c0_70 = arith.constant 0 : index
    %108 = vector.load %arg4[%c11, %c0_69, %c0_70] : memref<25x128x128xf32, #tpu.memory_space<vmem>>, vector<1x128x128xf32>
    %109 = vector.shape_cast %108 : vector<1x128x128xf32> to vector<128x128xf32>
    %cst_71 = arith.constant dense<0.000000e+00> : vector<128x128xf32>
    %110 = tpu.matmul %107, %109, %cst_71 {dimension_numbers = #tpu.dot_dimension_numbers<[1], [0], [0], [1], [0, 0, 1, 1], [], []>} : vector<128x128xf32>, vector<128x128xf32>, vector<128x128xf32> -> vector<128x128xf32>
    %111 = arith.addf %105, %110 : vector<128x128xf32>
    %112 = vector.extract_strided_slice %38 {offsets = [0, 2, 2, 0], sizes = [2, 8, 8, 128], strides = [1, 1, 1, 1]} : vector<2x12x12x128xf32> to vector<2x8x8x128xf32>
    %113 = vector.shape_cast %112 : vector<2x8x8x128xf32> to vector<128x128xf32>
    %c12 = arith.constant 12 : index
    %c0_72 = arith.constant 0 : index
    %c0_73 = arith.constant 0 : index
    %114 = vector.load %arg4[%c12, %c0_72, %c0_73] : memref<25x128x128xf32, #tpu.memory_space<vmem>>, vector<1x128x128xf32>
    %115 = vector.shape_cast %114 : vector<1x128x128xf32> to vector<128x128xf32>
    %cst_74 = arith.constant dense<0.000000e+00> : vector<128x128xf32>
    %116 = tpu.matmul %113, %115, %cst_74 {dimension_numbers = #tpu.dot_dimension_numbers<[1], [0], [0], [1], [0, 0, 1, 1], [], []>} : vector<128x128xf32>, vector<128x128xf32>, vector<128x128xf32> -> vector<128x128xf32>
    %117 = arith.addf %111, %116 : vector<128x128xf32>
    %118 = vector.extract_strided_slice %38 {offsets = [0, 2, 3, 0], sizes = [2, 8, 8, 128], strides = [1, 1, 1, 1]} : vector<2x12x12x128xf32> to vector<2x8x8x128xf32>
    %119 = vector.shape_cast %118 : vector<2x8x8x128xf32> to vector<128x128xf32>
    %c13 = arith.constant 13 : index
    %c0_75 = arith.constant 0 : index
    %c0_76 = arith.constant 0 : index
    %120 = vector.load %arg4[%c13, %c0_75, %c0_76] : memref<25x128x128xf32, #tpu.memory_space<vmem>>, vector<1x128x128xf32>
    %121 = vector.shape_cast %120 : vector<1x128x128xf32> to vector<128x128xf32>
    %cst_77 = arith.constant dense<0.000000e+00> : vector<128x128xf32>
    %122 = tpu.matmul %119, %121, %cst_77 {dimension_numbers = #tpu.dot_dimension_numbers<[1], [0], [0], [1], [0, 0, 1, 1], [], []>} : vector<128x128xf32>, vector<128x128xf32>, vector<128x128xf32> -> vector<128x128xf32>
    %123 = arith.addf %117, %122 : vector<128x128xf32>
    %124 = vector.extract_strided_slice %38 {offsets = [0, 2, 4, 0], sizes = [2, 8, 8, 128], strides = [1, 1, 1, 1]} : vector<2x12x12x128xf32> to vector<2x8x8x128xf32>
    %125 = vector.shape_cast %124 : vector<2x8x8x128xf32> to vector<128x128xf32>
    %c14 = arith.constant 14 : index
    %c0_78 = arith.constant 0 : index
    %c0_79 = arith.constant 0 : index
    %126 = vector.load %arg4[%c14, %c0_78, %c0_79] : memref<25x128x128xf32, #tpu.memory_space<vmem>>, vector<1x128x128xf32>
    %127 = vector.shape_cast %126 : vector<1x128x128xf32> to vector<128x128xf32>
    %cst_80 = arith.constant dense<0.000000e+00> : vector<128x128xf32>
    %128 = tpu.matmul %125, %127, %cst_80 {dimension_numbers = #tpu.dot_dimension_numbers<[1], [0], [0], [1], [0, 0, 1, 1], [], []>} : vector<128x128xf32>, vector<128x128xf32>, vector<128x128xf32> -> vector<128x128xf32>
    %129 = arith.addf %123, %128 : vector<128x128xf32>
    %130 = vector.extract_strided_slice %38 {offsets = [0, 3, 0, 0], sizes = [2, 8, 8, 128], strides = [1, 1, 1, 1]} : vector<2x12x12x128xf32> to vector<2x8x8x128xf32>
    %131 = vector.shape_cast %130 : vector<2x8x8x128xf32> to vector<128x128xf32>
    %c15 = arith.constant 15 : index
    %c0_81 = arith.constant 0 : index
    %c0_82 = arith.constant 0 : index
    %132 = vector.load %arg4[%c15, %c0_81, %c0_82] : memref<25x128x128xf32, #tpu.memory_space<vmem>>, vector<1x128x128xf32>
    %133 = vector.shape_cast %132 : vector<1x128x128xf32> to vector<128x128xf32>
    %cst_83 = arith.constant dense<0.000000e+00> : vector<128x128xf32>
    %134 = tpu.matmul %131, %133, %cst_83 {dimension_numbers = #tpu.dot_dimension_numbers<[1], [0], [0], [1], [0, 0, 1, 1], [], []>} : vector<128x128xf32>, vector<128x128xf32>, vector<128x128xf32> -> vector<128x128xf32>
    %135 = arith.addf %129, %134 : vector<128x128xf32>
    %136 = vector.extract_strided_slice %38 {offsets = [0, 3, 1, 0], sizes = [2, 8, 8, 128], strides = [1, 1, 1, 1]} : vector<2x12x12x128xf32> to vector<2x8x8x128xf32>
    %137 = vector.shape_cast %136 : vector<2x8x8x128xf32> to vector<128x128xf32>
    %c16 = arith.constant 16 : index
    %c0_84 = arith.constant 0 : index
    %c0_85 = arith.constant 0 : index
    %138 = vector.load %arg4[%c16, %c0_84, %c0_85] : memref<25x128x128xf32, #tpu.memory_space<vmem>>, vector<1x128x128xf32>
    %139 = vector.shape_cast %138 : vector<1x128x128xf32> to vector<128x128xf32>
    %cst_86 = arith.constant dense<0.000000e+00> : vector<128x128xf32>
    %140 = tpu.matmul %137, %139, %cst_86 {dimension_numbers = #tpu.dot_dimension_numbers<[1], [0], [0], [1], [0, 0, 1, 1], [], []>} : vector<128x128xf32>, vector<128x128xf32>, vector<128x128xf32> -> vector<128x128xf32>
    %141 = arith.addf %135, %140 : vector<128x128xf32>
    %142 = vector.extract_strided_slice %38 {offsets = [0, 3, 2, 0], sizes = [2, 8, 8, 128], strides = [1, 1, 1, 1]} : vector<2x12x12x128xf32> to vector<2x8x8x128xf32>
    %143 = vector.shape_cast %142 : vector<2x8x8x128xf32> to vector<128x128xf32>
    %c17 = arith.constant 17 : index
    %c0_87 = arith.constant 0 : index
    %c0_88 = arith.constant 0 : index
    %144 = vector.load %arg4[%c17, %c0_87, %c0_88] : memref<25x128x128xf32, #tpu.memory_space<vmem>>, vector<1x128x128xf32>
    %145 = vector.shape_cast %144 : vector<1x128x128xf32> to vector<128x128xf32>
    %cst_89 = arith.constant dense<0.000000e+00> : vector<128x128xf32>
    %146 = tpu.matmul %143, %145, %cst_89 {dimension_numbers = #tpu.dot_dimension_numbers<[1], [0], [0], [1], [0, 0, 1, 1], [], []>} : vector<128x128xf32>, vector<128x128xf32>, vector<128x128xf32> -> vector<128x128xf32>
    %147 = arith.addf %141, %146 : vector<128x128xf32>
    %148 = vector.extract_strided_slice %38 {offsets = [0, 3, 3, 0], sizes = [2, 8, 8, 128], strides = [1, 1, 1, 1]} : vector<2x12x12x128xf32> to vector<2x8x8x128xf32>
    %149 = vector.shape_cast %148 : vector<2x8x8x128xf32> to vector<128x128xf32>
    %c18 = arith.constant 18 : index
    %c0_90 = arith.constant 0 : index
    %c0_91 = arith.constant 0 : index
    %150 = vector.load %arg4[%c18, %c0_90, %c0_91] : memref<25x128x128xf32, #tpu.memory_space<vmem>>, vector<1x128x128xf32>
    %151 = vector.shape_cast %150 : vector<1x128x128xf32> to vector<128x128xf32>
    %cst_92 = arith.constant dense<0.000000e+00> : vector<128x128xf32>
    %152 = tpu.matmul %149, %151, %cst_92 {dimension_numbers = #tpu.dot_dimension_numbers<[1], [0], [0], [1], [0, 0, 1, 1], [], []>} : vector<128x128xf32>, vector<128x128xf32>, vector<128x128xf32> -> vector<128x128xf32>
    %153 = arith.addf %147, %152 : vector<128x128xf32>
    %154 = vector.extract_strided_slice %38 {offsets = [0, 3, 4, 0], sizes = [2, 8, 8, 128], strides = [1, 1, 1, 1]} : vector<2x12x12x128xf32> to vector<2x8x8x128xf32>
    %155 = vector.shape_cast %154 : vector<2x8x8x128xf32> to vector<128x128xf32>
    %c19 = arith.constant 19 : index
    %c0_93 = arith.constant 0 : index
    %c0_94 = arith.constant 0 : index
    %156 = vector.load %arg4[%c19, %c0_93, %c0_94] : memref<25x128x128xf32, #tpu.memory_space<vmem>>, vector<1x128x128xf32>
    %157 = vector.shape_cast %156 : vector<1x128x128xf32> to vector<128x128xf32>
    %cst_95 = arith.constant dense<0.000000e+00> : vector<128x128xf32>
    %158 = tpu.matmul %155, %157, %cst_95 {dimension_numbers = #tpu.dot_dimension_numbers<[1], [0], [0], [1], [0, 0, 1, 1], [], []>} : vector<128x128xf32>, vector<128x128xf32>, vector<128x128xf32> -> vector<128x128xf32>
    %159 = arith.addf %153, %158 : vector<128x128xf32>
    %160 = vector.extract_strided_slice %38 {offsets = [0, 4, 0, 0], sizes = [2, 8, 8, 128], strides = [1, 1, 1, 1]} : vector<2x12x12x128xf32> to vector<2x8x8x128xf32>
    %161 = vector.shape_cast %160 : vector<2x8x8x128xf32> to vector<128x128xf32>
    %c20 = arith.constant 20 : index
    %c0_96 = arith.constant 0 : index
    %c0_97 = arith.constant 0 : index
    %162 = vector.load %arg4[%c20, %c0_96, %c0_97] : memref<25x128x128xf32, #tpu.memory_space<vmem>>, vector<1x128x128xf32>
    %163 = vector.shape_cast %162 : vector<1x128x128xf32> to vector<128x128xf32>
    %cst_98 = arith.constant dense<0.000000e+00> : vector<128x128xf32>
    %164 = tpu.matmul %161, %163, %cst_98 {dimension_numbers = #tpu.dot_dimension_numbers<[1], [0], [0], [1], [0, 0, 1, 1], [], []>} : vector<128x128xf32>, vector<128x128xf32>, vector<128x128xf32> -> vector<128x128xf32>
    %165 = arith.addf %159, %164 : vector<128x128xf32>
    %166 = vector.extract_strided_slice %38 {offsets = [0, 4, 1, 0], sizes = [2, 8, 8, 128], strides = [1, 1, 1, 1]} : vector<2x12x12x128xf32> to vector<2x8x8x128xf32>
    %167 = vector.shape_cast %166 : vector<2x8x8x128xf32> to vector<128x128xf32>
    %c21 = arith.constant 21 : index
    %c0_99 = arith.constant 0 : index
    %c0_100 = arith.constant 0 : index
    %168 = vector.load %arg4[%c21, %c0_99, %c0_100] : memref<25x128x128xf32, #tpu.memory_space<vmem>>, vector<1x128x128xf32>
    %169 = vector.shape_cast %168 : vector<1x128x128xf32> to vector<128x128xf32>
    %cst_101 = arith.constant dense<0.000000e+00> : vector<128x128xf32>
    %170 = tpu.matmul %167, %169, %cst_101 {dimension_numbers = #tpu.dot_dimension_numbers<[1], [0], [0], [1], [0, 0, 1, 1], [], []>} : vector<128x128xf32>, vector<128x128xf32>, vector<128x128xf32> -> vector<128x128xf32>
    %171 = arith.addf %165, %170 : vector<128x128xf32>
    %172 = vector.extract_strided_slice %38 {offsets = [0, 4, 2, 0], sizes = [2, 8, 8, 128], strides = [1, 1, 1, 1]} : vector<2x12x12x128xf32> to vector<2x8x8x128xf32>
    %173 = vector.shape_cast %172 : vector<2x8x8x128xf32> to vector<128x128xf32>
    %c22 = arith.constant 22 : index
    %c0_102 = arith.constant 0 : index
    %c0_103 = arith.constant 0 : index
    %174 = vector.load %arg4[%c22, %c0_102, %c0_103] : memref<25x128x128xf32, #tpu.memory_space<vmem>>, vector<1x128x128xf32>
    %175 = vector.shape_cast %174 : vector<1x128x128xf32> to vector<128x128xf32>
    %cst_104 = arith.constant dense<0.000000e+00> : vector<128x128xf32>
    %176 = tpu.matmul %173, %175, %cst_104 {dimension_numbers = #tpu.dot_dimension_numbers<[1], [0], [0], [1], [0, 0, 1, 1], [], []>} : vector<128x128xf32>, vector<128x128xf32>, vector<128x128xf32> -> vector<128x128xf32>
    %177 = arith.addf %171, %176 : vector<128x128xf32>
    %178 = vector.extract_strided_slice %38 {offsets = [0, 4, 3, 0], sizes = [2, 8, 8, 128], strides = [1, 1, 1, 1]} : vector<2x12x12x128xf32> to vector<2x8x8x128xf32>
    %179 = vector.shape_cast %178 : vector<2x8x8x128xf32> to vector<128x128xf32>
    %c23 = arith.constant 23 : index
    %c0_105 = arith.constant 0 : index
    %c0_106 = arith.constant 0 : index
    %180 = vector.load %arg4[%c23, %c0_105, %c0_106] : memref<25x128x128xf32, #tpu.memory_space<vmem>>, vector<1x128x128xf32>
    %181 = vector.shape_cast %180 : vector<1x128x128xf32> to vector<128x128xf32>
    %cst_107 = arith.constant dense<0.000000e+00> : vector<128x128xf32>
    %182 = tpu.matmul %179, %181, %cst_107 {dimension_numbers = #tpu.dot_dimension_numbers<[1], [0], [0], [1], [0, 0, 1, 1], [], []>} : vector<128x128xf32>, vector<128x128xf32>, vector<128x128xf32> -> vector<128x128xf32>
    %183 = arith.addf %177, %182 : vector<128x128xf32>
    %184 = vector.extract_strided_slice %38 {offsets = [0, 4, 4, 0], sizes = [2, 8, 8, 128], strides = [1, 1, 1, 1]} : vector<2x12x12x128xf32> to vector<2x8x8x128xf32>
    %185 = vector.shape_cast %184 : vector<2x8x8x128xf32> to vector<128x128xf32>
    %c24 = arith.constant 24 : index
    %c0_108 = arith.constant 0 : index
    %c0_109 = arith.constant 0 : index
    %186 = vector.load %arg4[%c24, %c0_108, %c0_109] : memref<25x128x128xf32, #tpu.memory_space<vmem>>, vector<1x128x128xf32>
    %187 = vector.shape_cast %186 : vector<1x128x128xf32> to vector<128x128xf32>
    %cst_110 = arith.constant dense<0.000000e+00> : vector<128x128xf32>
    %188 = tpu.matmul %185, %187, %cst_110 {dimension_numbers = #tpu.dot_dimension_numbers<[1], [0], [0], [1], [0, 0, 1, 1], [], []>} : vector<128x128xf32>, vector<128x128xf32>, vector<128x128xf32> -> vector<128x128xf32>
    %189 = arith.addf %183, %188 : vector<128x128xf32>
    %c0_111 = arith.constant 0 : index
    %c0_112 = arith.constant 0 : index
    %190 = vector.load %arg5[%c0_111, %c0_112] : memref<1x128xf32, #tpu.memory_space<vmem>>, vector<1x128xf32>
    %c0_113 = arith.constant 0 : index
    %c0_114 = arith.constant 0 : index
    %191 = vector.load %arg6[%c0_113, %c0_114] : memref<1x128xf32, #tpu.memory_space<vmem>>, vector<1x128xf32>
    %cst_115 = arith.constant dense<0.000000e+00> : vector<128xf32>
    %192 = vector.multi_reduction <add>, %189, %cst_115 [0] : vector<128x128xf32> to vector<128xf32>
    %193 = vector.shape_cast %192 : vector<128xf32> to vector<1x128xf32>
    %194 = arith.mulf %189, %189 : vector<128x128xf32>
    %cst_116 = arith.constant dense<0.000000e+00> : vector<128xf32>
    %195 = vector.multi_reduction <add>, %194, %cst_116 [0] : vector<128x128xf32> to vector<128xf32>
    %196 = vector.shape_cast %195 : vector<128xf32> to vector<1x128xf32>
    %cst_117 = arith.constant 7.812500e-03 : f32
    %197 = vector.broadcast %cst_117 : f32 to vector<1x128xf32>
    %198 = arith.mulf %193, %197 : vector<1x128xf32>
    %cst_118 = arith.constant 7.812500e-03 : f32
    %199 = vector.broadcast %cst_118 : f32 to vector<1x128xf32>
    %200 = arith.mulf %196, %199 : vector<1x128xf32>
    %201 = arith.mulf %198, %198 : vector<1x128xf32>
    %202 = arith.subf %200, %201 : vector<1x128xf32>
    %cst_119 = arith.constant 0.000000e+00 : f32
    %203 = vector.broadcast %cst_119 : f32 to vector<1x128xf32>
    %204 = arith.maximumf %202, %203 : vector<1x128xf32>
    %cst_120 = arith.constant 9.99999974E-6 : f32
    %205 = vector.broadcast %cst_120 : f32 to vector<1x128xf32>
    %206 = arith.addf %204, %205 : vector<1x128xf32>
    %207 = math.rsqrt %206 : vector<1x128xf32>
    %208 = arith.mulf %190, %207 : vector<1x128xf32>
    %209 = arith.mulf %198, %208 : vector<1x128xf32>
    %210 = arith.subf %191, %209 : vector<1x128xf32>
    %211 = vector.broadcast %208 : vector<1x128xf32> to vector<128x128xf32>
    %212 = arith.mulf %189, %211 : vector<128x128xf32>
    %213 = vector.broadcast %210 : vector<1x128xf32> to vector<128x128xf32>
    %214 = arith.addf %212, %213 : vector<128x128xf32>
    %cst_121 = arith.constant 0.000000e+00 : f32
    %215 = vector.broadcast %cst_121 : f32 to vector<128x128xf32>
    %216 = arith.maximumf %214, %215 : vector<128x128xf32>
    %217 = vector.shape_cast %216 : vector<128x128xf32> to vector<2x8x8x128xf32>
    %c0_122 = arith.constant 0 : index
    %c0_123 = arith.constant 0 : index
    %c0_124 = arith.constant 0 : index
    %c0_125 = arith.constant 0 : index
    %218 = vector.load %arg13[%c0_122, %c0_123, %c0_124, %c0_125] : memref<2x8x8x128xf32, #tpu.memory_space<vmem>>, vector<2x8x8x128xf32>
    tpu.vector_store %arg13[%c0_122, %c0_123, %c0_124, %c0_125], %217 {strides = array<i32>} : memref<2x8x8x128xf32, #tpu.memory_space<vmem>>, vector<2x8x8x128xf32>,
    %c0_126 = arith.constant 0 : index
    %c0_127 = arith.constant 0 : index
    %c0_128 = arith.constant 0 : index
    %c0_129 = arith.constant 0 : index
    %219 = tpu.strided_load %arg13[%c0_126, %c0_127, %c0_128, %c0_129] {strides = array<i32: 1, 2, 2, 1>} : memref<2x8x8x128xf32, #tpu.memory_space<vmem>>, vector<2x4x4x128xf32>
    %c0_130 = arith.constant 0 : index
    %c0_131 = arith.constant 0 : index
    %c1_132 = arith.constant 1 : index
    %c0_133 = arith.constant 0 : index
    %220 = tpu.strided_load %arg13[%c0_130, %c0_131, %c1_132, %c0_133] {strides = array<i32: 1, 2, 2, 1>} : memref<2x8x8x128xf32, #tpu.memory_space<vmem>>, vector<2x4x4x128xf32>
    %221 = arith.maximumf %219, %220 : vector<2x4x4x128xf32>
    %c0_134 = arith.constant 0 : index
    %c1_135 = arith.constant 1 : index
    %c0_136 = arith.constant 0 : index
    %c0_137 = arith.constant 0 : index
    %222 = tpu.strided_load %arg13[%c0_134, %c1_135, %c0_136, %c0_137] {strides = array<i32: 1, 2, 2, 1>} : memref<2x8x8x128xf32, #tpu.memory_space<vmem>>, vector<2x4x4x128xf32>
    %c0_138 = arith.constant 0 : index
    %c1_139 = arith.constant 1 : index
    %c1_140 = arith.constant 1 : index
    %c0_141 = arith.constant 0 : index
    %223 = tpu.strided_load %arg13[%c0_138, %c1_139, %c1_140, %c0_141] {strides = array<i32: 1, 2, 2, 1>} : memref<2x8x8x128xf32, #tpu.memory_space<vmem>>, vector<2x4x4x128xf32>
    %224 = arith.maximumf %222, %223 : vector<2x4x4x128xf32>
    %225 = arith.maximumf %221, %224 : vector<2x4x4x128xf32>
    %cst_142 = arith.constant 0.000000e+00 : f32
    %226 = vector.broadcast %cst_142 : f32 to vector<2x256xf32>
    %227 = vector.extract_strided_slice %225 {offsets = [0, 0, 0, 0], sizes = [2, 1, 1, 128], strides = [1, 1, 1, 1]} : vector<2x4x4x128xf32> to vector<2x1x1x128xf32>
    %228 = vector.shape_cast %227 : vector<2x1x1x128xf32> to vector<2x128xf32>
    %c0_143 = arith.constant 0 : index
    %c0_144 = arith.constant 0 : index
    %c0_145 = arith.constant 0 : index
    %229 = vector.load %arg7[%c0_143, %c0_144, %c0_145] : memref<16x128x256xf32, #tpu.memory_space<vmem>>, vector<1x128x256xf32>
    %230 = vector.shape_cast %229 : vector<1x128x256xf32> to vector<128x256xf32>
    %cst_146 = arith.constant dense<0.000000e+00> : vector<2x256xf32>
    %231 = tpu.matmul %228, %230, %cst_146 {dimension_numbers = #tpu.dot_dimension_numbers<[1], [0], [0], [1], [0, 0, 1, 1], [], []>} : vector<2x128xf32>, vector<128x256xf32>, vector<2x256xf32> -> vector<2x256xf32>
    %232 = arith.addf %226, %231 : vector<2x256xf32>
    %233 = vector.extract_strided_slice %225 {offsets = [0, 0, 1, 0], sizes = [2, 1, 1, 128], strides = [1, 1, 1, 1]} : vector<2x4x4x128xf32> to vector<2x1x1x128xf32>
    %234 = vector.shape_cast %233 : vector<2x1x1x128xf32> to vector<2x128xf32>
    %c1_147 = arith.constant 1 : index
    %c0_148 = arith.constant 0 : index
    %c0_149 = arith.constant 0 : index
    %235 = vector.load %arg7[%c1_147, %c0_148, %c0_149] : memref<16x128x256xf32, #tpu.memory_space<vmem>>, vector<1x128x256xf32>
    %236 = vector.shape_cast %235 : vector<1x128x256xf32> to vector<128x256xf32>
    %cst_150 = arith.constant dense<0.000000e+00> : vector<2x256xf32>
    %237 = tpu.matmul %234, %236, %cst_150 {dimension_numbers = #tpu.dot_dimension_numbers<[1], [0], [0], [1], [0, 0, 1, 1], [], []>} : vector<2x128xf32>, vector<128x256xf32>, vector<2x256xf32> -> vector<2x256xf32>
    %238 = arith.addf %232, %237 : vector<2x256xf32>
    %239 = vector.extract_strided_slice %225 {offsets = [0, 0, 2, 0], sizes = [2, 1, 1, 128], strides = [1, 1, 1, 1]} : vector<2x4x4x128xf32> to vector<2x1x1x128xf32>
    %240 = vector.shape_cast %239 : vector<2x1x1x128xf32> to vector<2x128xf32>
    %c2_151 = arith.constant 2 : index
    %c0_152 = arith.constant 0 : index
    %c0_153 = arith.constant 0 : index
    %241 = vector.load %arg7[%c2_151, %c0_152, %c0_153] : memref<16x128x256xf32, #tpu.memory_space<vmem>>, vector<1x128x256xf32>
    %242 = vector.shape_cast %241 : vector<1x128x256xf32> to vector<128x256xf32>
    %cst_154 = arith.constant dense<0.000000e+00> : vector<2x256xf32>
    %243 = tpu.matmul %240, %242, %cst_154 {dimension_numbers = #tpu.dot_dimension_numbers<[1], [0], [0], [1], [0, 0, 1, 1], [], []>} : vector<2x128xf32>, vector<128x256xf32>, vector<2x256xf32> -> vector<2x256xf32>
    %244 = arith.addf %238, %243 : vector<2x256xf32>
    %245 = vector.extract_strided_slice %225 {offsets = [0, 0, 3, 0], sizes = [2, 1, 1, 128], strides = [1, 1, 1, 1]} : vector<2x4x4x128xf32> to vector<2x1x1x128xf32>
    %246 = vector.shape_cast %245 : vector<2x1x1x128xf32> to vector<2x128xf32>
    %c3_155 = arith.constant 3 : index
    %c0_156 = arith.constant 0 : index
    %c0_157 = arith.constant 0 : index
    %247 = vector.load %arg7[%c3_155, %c0_156, %c0_157] : memref<16x128x256xf32, #tpu.memory_space<vmem>>, vector<1x128x256xf32>
    %248 = vector.shape_cast %247 : vector<1x128x256xf32> to vector<128x256xf32>
    %cst_158 = arith.constant dense<0.000000e+00> : vector<2x256xf32>
    %249 = tpu.matmul %246, %248, %cst_158 {dimension_numbers = #tpu.dot_dimension_numbers<[1], [0], [0], [1], [0, 0, 1, 1], [], []>} : vector<2x128xf32>, vector<128x256xf32>, vector<2x256xf32> -> vector<2x256xf32>
    %250 = arith.addf %244, %249 : vector<2x256xf32>
    %251 = vector.extract_strided_slice %225 {offsets = [0, 1, 0, 0], sizes = [2, 1, 1, 128], strides = [1, 1, 1, 1]} : vector<2x4x4x128xf32> to vector<2x1x1x128xf32>
    %252 = vector.shape_cast %251 : vector<2x1x1x128xf32> to vector<2x128xf32>
    %c4_159 = arith.constant 4 : index
    %c0_160 = arith.constant 0 : index
    %c0_161 = arith.constant 0 : index
    %253 = vector.load %arg7[%c4_159, %c0_160, %c0_161] : memref<16x128x256xf32, #tpu.memory_space<vmem>>, vector<1x128x256xf32>
    %254 = vector.shape_cast %253 : vector<1x128x256xf32> to vector<128x256xf32>
    %cst_162 = arith.constant dense<0.000000e+00> : vector<2x256xf32>
    %255 = tpu.matmul %252, %254, %cst_162 {dimension_numbers = #tpu.dot_dimension_numbers<[1], [0], [0], [1], [0, 0, 1, 1], [], []>} : vector<2x128xf32>, vector<128x256xf32>, vector<2x256xf32> -> vector<2x256xf32>
    %256 = arith.addf %250, %255 : vector<2x256xf32>
    %257 = vector.extract_strided_slice %225 {offsets = [0, 1, 1, 0], sizes = [2, 1, 1, 128], strides = [1, 1, 1, 1]} : vector<2x4x4x128xf32> to vector<2x1x1x128xf32>
    %258 = vector.shape_cast %257 : vector<2x1x1x128xf32> to vector<2x128xf32>
    %c5_163 = arith.constant 5 : index
    %c0_164 = arith.constant 0 : index
    %c0_165 = arith.constant 0 : index
    %259 = vector.load %arg7[%c5_163, %c0_164, %c0_165] : memref<16x128x256xf32, #tpu.memory_space<vmem>>, vector<1x128x256xf32>
    %260 = vector.shape_cast %259 : vector<1x128x256xf32> to vector<128x256xf32>
    %cst_166 = arith.constant dense<0.000000e+00> : vector<2x256xf32>
    %261 = tpu.matmul %258, %260, %cst_166 {dimension_numbers = #tpu.dot_dimension_numbers<[1], [0], [0], [1], [0, 0, 1, 1], [], []>} : vector<2x128xf32>, vector<128x256xf32>, vector<2x256xf32> -> vector<2x256xf32>
    %262 = arith.addf %256, %261 : vector<2x256xf32>
    %263 = vector.extract_strided_slice %225 {offsets = [0, 1, 2, 0], sizes = [2, 1, 1, 128], strides = [1, 1, 1, 1]} : vector<2x4x4x128xf32> to vector<2x1x1x128xf32>
    %264 = vector.shape_cast %263 : vector<2x1x1x128xf32> to vector<2x128xf32>
    %c6_167 = arith.constant 6 : index
    %c0_168 = arith.constant 0 : index
    %c0_169 = arith.constant 0 : index
    %265 = vector.load %arg7[%c6_167, %c0_168, %c0_169] : memref<16x128x256xf32, #tpu.memory_space<vmem>>, vector<1x128x256xf32>
    %266 = vector.shape_cast %265 : vector<1x128x256xf32> to vector<128x256xf32>
    %cst_170 = arith.constant dense<0.000000e+00> : vector<2x256xf32>
    %267 = tpu.matmul %264, %266, %cst_170 {dimension_numbers = #tpu.dot_dimension_numbers<[1], [0], [0], [1], [0, 0, 1, 1], [], []>} : vector<2x128xf32>, vector<128x256xf32>, vector<2x256xf32> -> vector<2x256xf32>
    %268 = arith.addf %262, %267 : vector<2x256xf32>
    %269 = vector.extract_strided_slice %225 {offsets = [0, 1, 3, 0], sizes = [2, 1, 1, 128], strides = [1, 1, 1, 1]} : vector<2x4x4x128xf32> to vector<2x1x1x128xf32>
    %270 = vector.shape_cast %269 : vector<2x1x1x128xf32> to vector<2x128xf32>
    %c7_171 = arith.constant 7 : index
    %c0_172 = arith.constant 0 : index
    %c0_173 = arith.constant 0 : index
    %271 = vector.load %arg7[%c7_171, %c0_172, %c0_173] : memref<16x128x256xf32, #tpu.memory_space<vmem>>, vector<1x128x256xf32>
    %272 = vector.shape_cast %271 : vector<1x128x256xf32> to vector<128x256xf32>
    %cst_174 = arith.constant dense<0.000000e+00> : vector<2x256xf32>
    %273 = tpu.matmul %270, %272, %cst_174 {dimension_numbers = #tpu.dot_dimension_numbers<[1], [0], [0], [1], [0, 0, 1, 1], [], []>} : vector<2x128xf32>, vector<128x256xf32>, vector<2x256xf32> -> vector<2x256xf32>
    %274 = arith.addf %268, %273 : vector<2x256xf32>
    %275 = vector.extract_strided_slice %225 {offsets = [0, 2, 0, 0], sizes = [2, 1, 1, 128], strides = [1, 1, 1, 1]} : vector<2x4x4x128xf32> to vector<2x1x1x128xf32>
    %276 = vector.shape_cast %275 : vector<2x1x1x128xf32> to vector<2x128xf32>
    %c8_175 = arith.constant 8 : index
    %c0_176 = arith.constant 0 : index
    %c0_177 = arith.constant 0 : index
    %277 = vector.load %arg7[%c8_175, %c0_176, %c0_177] : memref<16x128x256xf32, #tpu.memory_space<vmem>>, vector<1x128x256xf32>
    %278 = vector.shape_cast %277 : vector<1x128x256xf32> to vector<128x256xf32>
    %cst_178 = arith.constant dense<0.000000e+00> : vector<2x256xf32>
    %279 = tpu.matmul %276, %278, %cst_178 {dimension_numbers = #tpu.dot_dimension_numbers<[1], [0], [0], [1], [0, 0, 1, 1], [], []>} : vector<2x128xf32>, vector<128x256xf32>, vector<2x256xf32> -> vector<2x256xf32>
    %280 = arith.addf %274, %279 : vector<2x256xf32>
    %281 = vector.extract_strided_slice %225 {offsets = [0, 2, 1, 0], sizes = [2, 1, 1, 128], strides = [1, 1, 1, 1]} : vector<2x4x4x128xf32> to vector<2x1x1x128xf32>
    %282 = vector.shape_cast %281 : vector<2x1x1x128xf32> to vector<2x128xf32>
    %c9_179 = arith.constant 9 : index
    %c0_180 = arith.constant 0 : index
    %c0_181 = arith.constant 0 : index
    %283 = vector.load %arg7[%c9_179, %c0_180, %c0_181] : memref<16x128x256xf32, #tpu.memory_space<vmem>>, vector<1x128x256xf32>
    %284 = vector.shape_cast %283 : vector<1x128x256xf32> to vector<128x256xf32>
    %cst_182 = arith.constant dense<0.000000e+00> : vector<2x256xf32>
    %285 = tpu.matmul %282, %284, %cst_182 {dimension_numbers = #tpu.dot_dimension_numbers<[1], [0], [0], [1], [0, 0, 1, 1], [], []>} : vector<2x128xf32>, vector<128x256xf32>, vector<2x256xf32> -> vector<2x256xf32>
    %286 = arith.addf %280, %285 : vector<2x256xf32>
    %287 = vector.extract_strided_slice %225 {offsets = [0, 2, 2, 0], sizes = [2, 1, 1, 128], strides = [1, 1, 1, 1]} : vector<2x4x4x128xf32> to vector<2x1x1x128xf32>
    %288 = vector.shape_cast %287 : vector<2x1x1x128xf32> to vector<2x128xf32>
    %c10_183 = arith.constant 10 : index
    %c0_184 = arith.constant 0 : index
    %c0_185 = arith.constant 0 : index
    %289 = vector.load %arg7[%c10_183, %c0_184, %c0_185] : memref<16x128x256xf32, #tpu.memory_space<vmem>>, vector<1x128x256xf32>
    %290 = vector.shape_cast %289 : vector<1x128x256xf32> to vector<128x256xf32>
    %cst_186 = arith.constant dense<0.000000e+00> : vector<2x256xf32>
    %291 = tpu.matmul %288, %290, %cst_186 {dimension_numbers = #tpu.dot_dimension_numbers<[1], [0], [0], [1], [0, 0, 1, 1], [], []>} : vector<2x128xf32>, vector<128x256xf32>, vector<2x256xf32> -> vector<2x256xf32>
    %292 = arith.addf %286, %291 : vector<2x256xf32>
    %293 = vector.extract_strided_slice %225 {offsets = [0, 2, 3, 0], sizes = [2, 1, 1, 128], strides = [1, 1, 1, 1]} : vector<2x4x4x128xf32> to vector<2x1x1x128xf32>
    %294 = vector.shape_cast %293 : vector<2x1x1x128xf32> to vector<2x128xf32>
    %c11_187 = arith.constant 11 : index
    %c0_188 = arith.constant 0 : index
    %c0_189 = arith.constant 0 : index
    %295 = vector.load %arg7[%c11_187, %c0_188, %c0_189] : memref<16x128x256xf32, #tpu.memory_space<vmem>>, vector<1x128x256xf32>
    %296 = vector.shape_cast %295 : vector<1x128x256xf32> to vector<128x256xf32>
    %cst_190 = arith.constant dense<0.000000e+00> : vector<2x256xf32>
    %297 = tpu.matmul %294, %296, %cst_190 {dimension_numbers = #tpu.dot_dimension_numbers<[1], [0], [0], [1], [0, 0, 1, 1], [], []>} : vector<2x128xf32>, vector<128x256xf32>, vector<2x256xf32> -> vector<2x256xf32>
    %298 = arith.addf %292, %297 : vector<2x256xf32>
    %299 = vector.extract_strided_slice %225 {offsets = [0, 3, 0, 0], sizes = [2, 1, 1, 128], strides = [1, 1, 1, 1]} : vector<2x4x4x128xf32> to vector<2x1x1x128xf32>
    %300 = vector.shape_cast %299 : vector<2x1x1x128xf32> to vector<2x128xf32>
    %c12_191 = arith.constant 12 : index
    %c0_192 = arith.constant 0 : index
    %c0_193 = arith.constant 0 : index
    %301 = vector.load %arg7[%c12_191, %c0_192, %c0_193] : memref<16x128x256xf32, #tpu.memory_space<vmem>>, vector<1x128x256xf32>
    %302 = vector.shape_cast %301 : vector<1x128x256xf32> to vector<128x256xf32>
    %cst_194 = arith.constant dense<0.000000e+00> : vector<2x256xf32>
    %303 = tpu.matmul %300, %302, %cst_194 {dimension_numbers = #tpu.dot_dimension_numbers<[1], [0], [0], [1], [0, 0, 1, 1], [], []>} : vector<2x128xf32>, vector<128x256xf32>, vector<2x256xf32> -> vector<2x256xf32>
    %304 = arith.addf %298, %303 : vector<2x256xf32>
    %305 = vector.extract_strided_slice %225 {offsets = [0, 3, 1, 0], sizes = [2, 1, 1, 128], strides = [1, 1, 1, 1]} : vector<2x4x4x128xf32> to vector<2x1x1x128xf32>
    %306 = vector.shape_cast %305 : vector<2x1x1x128xf32> to vector<2x128xf32>
    %c13_195 = arith.constant 13 : index
    %c0_196 = arith.constant 0 : index
    %c0_197 = arith.constant 0 : index
    %307 = vector.load %arg7[%c13_195, %c0_196, %c0_197] : memref<16x128x256xf32, #tpu.memory_space<vmem>>, vector<1x128x256xf32>
    %308 = vector.shape_cast %307 : vector<1x128x256xf32> to vector<128x256xf32>
    %cst_198 = arith.constant dense<0.000000e+00> : vector<2x256xf32>
    %309 = tpu.matmul %306, %308, %cst_198 {dimension_numbers = #tpu.dot_dimension_numbers<[1], [0], [0], [1], [0, 0, 1, 1], [], []>} : vector<2x128xf32>, vector<128x256xf32>, vector<2x256xf32> -> vector<2x256xf32>
    %310 = arith.addf %304, %309 : vector<2x256xf32>
    %311 = vector.extract_strided_slice %225 {offsets = [0, 3, 2, 0], sizes = [2, 1, 1, 128], strides = [1, 1, 1, 1]} : vector<2x4x4x128xf32> to vector<2x1x1x128xf32>
    %312 = vector.shape_cast %311 : vector<2x1x1x128xf32> to vector<2x128xf32>
    %c14_199 = arith.constant 14 : index
    %c0_200 = arith.constant 0 : index
    %c0_201 = arith.constant 0 : index
    %313 = vector.load %arg7[%c14_199, %c0_200, %c0_201] : memref<16x128x256xf32, #tpu.memory_space<vmem>>, vector<1x128x256xf32>
    %314 = vector.shape_cast %313 : vector<1x128x256xf32> to vector<128x256xf32>
    %cst_202 = arith.constant dense<0.000000e+00> : vector<2x256xf32>
    %315 = tpu.matmul %312, %314, %cst_202 {dimension_numbers = #tpu.dot_dimension_numbers<[1], [0], [0], [1], [0, 0, 1, 1], [], []>} : vector<2x128xf32>, vector<128x256xf32>, vector<2x256xf32> -> vector<2x256xf32>
    %316 = arith.addf %310, %315 : vector<2x256xf32>
    %317 = vector.extract_strided_slice %225 {offsets = [0, 3, 3, 0], sizes = [2, 1, 1, 128], strides = [1, 1, 1, 1]} : vector<2x4x4x128xf32> to vector<2x1x1x128xf32>
    %318 = vector.shape_cast %317 : vector<2x1x1x128xf32> to vector<2x128xf32>
    %c15_203 = arith.constant 15 : index
    %c0_204 = arith.constant 0 : index
    %c0_205 = arith.constant 0 : index
    %319 = vector.load %arg7[%c15_203, %c0_204, %c0_205] : memref<16x128x256xf32, #tpu.memory_space<vmem>>, vector<1x128x256xf32>
    %320 = vector.shape_cast %319 : vector<1x128x256xf32> to vector<128x256xf32>
    %cst_206 = arith.constant dense<0.000000e+00> : vector<2x256xf32>
    %321 = tpu.matmul %318, %320, %cst_206 {dimension_numbers = #tpu.dot_dimension_numbers<[1], [0], [0], [1], [0, 0, 1, 1], [], []>} : vector<2x128xf32>, vector<128x256xf32>, vector<2x256xf32> -> vector<2x256xf32>
    %322 = arith.addf %316, %321 : vector<2x256xf32>
    %c0_207 = arith.constant 0 : index
    %c0_208 = arith.constant 0 : index
    %323 = vector.load %arg8[%c0_207, %c0_208] : memref<1x256xf32, #tpu.memory_space<vmem>>, vector<1x256xf32>
    %324 = vector.broadcast %323 : vector<1x256xf32> to vector<2x256xf32>
    %325 = arith.addf %322, %324 : vector<2x256xf32>
    %cst_209 = arith.constant 0.000000e+00 : f32
    %326 = vector.broadcast %cst_209 : f32 to vector<2x256xf32>
    %327 = arith.maximumf %325, %326 : vector<2x256xf32>
    %c0_210 = arith.constant 0 : index
    %c0_211 = arith.constant 0 : index
    %328 = vector.load %arg9[%c0_210, %c0_211] : memref<256x128xf32, #tpu.memory_space<vmem>>, vector<256x128xf32>
    %cst_212 = arith.constant dense<0.000000e+00> : vector<2x128xf32>
    %329 = tpu.matmul %327, %328, %cst_212 {dimension_numbers = #tpu.dot_dimension_numbers<[1], [0], [0], [1], [0, 0, 1, 1], [], []>} : vector<2x256xf32>, vector<256x128xf32>, vector<2x128xf32> -> vector<2x128xf32>
    %c0_213 = arith.constant 0 : index
    %c0_214 = arith.constant 0 : index
    %330 = vector.load %arg10[%c0_213, %c0_214] : memref<1x128xf32, #tpu.memory_space<vmem>>, vector<1x128xf32>
    %331 = vector.broadcast %330 : vector<1x128xf32> to vector<2x128xf32>
    %332 = arith.addf %329, %331 : vector<2x128xf32>
    %cst_215 = arith.constant dense<0xFF800000> : vector<2xf32>
    %333 = vector.multi_reduction <maximumf>, %332, %cst_215 [1] : vector<2x128xf32> to vector<2xf32>
    %334 = vector.shape_cast %333 : vector<2xf32> to vector<2x1xf32>
    %335 = vector.broadcast %334 : vector<2x1xf32> to vector<2x128xf32>
    %336 = arith.subf %332, %335 : vector<2x128xf32>
    %337 = math.exp %336 : vector<2x128xf32>
    %cst_216 = arith.constant dense<0.000000e+00> : vector<2xf32>
    %338 = vector.multi_reduction <add>, %337, %cst_216 [1] : vector<2x128xf32> to vector<2xf32>
    %339 = vector.shape_cast %338 : vector<2xf32> to vector<2x1xf32>
    %340 = math.log %339 : vector<2x1xf32>
    %341 = arith.addf %340, %334 : vector<2x1xf32>
    %342 = vector.broadcast %341 : vector<2x1xf32> to vector<2x128xf32>
    %343 = arith.subf %332, %342 : vector<2x128xf32>
    %344 = vector.extract_strided_slice %343 {offsets = [0, 0], sizes = [2, 25], strides = [1, 1]} : vector<2x128xf32> to vector<2x25xf32>
    %c0_217 = arith.constant 0 : index
    %c0_218 = arith.constant 0 : index
    %345 = vector.load %arg11[%c0_217, %c0_218] : memref<2x25xf32, #tpu.memory_space<vmem>>, vector<2x25xf32>
    tpu.vector_store %arg11[%c0_217, %c0_218], %344 {strides = array<i32>} : memref<2x25xf32, #tpu.memory_space<vmem>>, vector<2x25xf32>,
    return
  }
}

</mosaic_0001>

<llo_original>
// kernel: net_forward.1
$region0: #{net_forward.1}
  #allocation0 [shape = 'u32[]', space=smem, size = 0x4, offset = 0x4, fixed_abs, tag = 'smem constant byte address 0x4 - core index']
  #allocation1 [shape = 'u32[72,128]{1,0:T(1,128)}', space=vmem, size = 0x9000, scoped, tag = 'internal scratch']
  #allocation2 [shape = 'f32[2,24,24,128]{3,2,1,0:T(8,128)}', space=vmem, size = 0x90000, scoped, tag = 'scratch operand']
  #allocation3 [shape = 'f32[2,8,8,128]{3,2,1,0:T(8,128)}', space=vmem, size = 0x10000, scoped, tag = 'scratch operand']
  %s0 = inlined_call_operand.vmem [shape: f32[1152,32], index: 0, kind: input, shape index: {}]
  %s1 = inlined_call_operand.vmem [shape: f32[32,128], index: 1, kind: input, shape index: {}]
  %s2 = inlined_call_operand.vmem [shape: f32[1,128], index: 2, kind: input, shape index: {}]
  %s3 = inlined_call_operand.vmem [shape: f32[1,128], index: 3, kind: input, shape index: {}]
  %s4 = inlined_call_operand.vmem [shape: f32[25,128,128], index: 4, kind: input, shape index: {}]
  %s5 = inlined_call_operand.vmem [shape: f32[1,128], index: 5, kind: input, shape index: {}]
  %s6 = inlined_call_operand.vmem [shape: f32[1,128], index: 6, kind: input, shape index: {}]
  %s7 = inlined_call_operand.vmem [shape: f32[16,128,256], index: 7, kind: input, shape index: {}]
  %s8 = inlined_call_operand.vmem [shape: f32[1,256], index: 8, kind: input, shape index: {}]
  %s9 = inlined_call_operand.vmem [shape: f32[256,128], index: 9, kind: input, shape index: {}]
  %s10 = inlined_call_operand.vmem [shape: f32[1,128], index: 10, kind: input, shape index: {}]
  %s11 = inlined_call_operand.hbm [shape: f32[2,25], index: 11, kind: output, shape index: {}]
  %s12 = sld [smem:[#allocation0]]
  $region54: #{net_forward.1} parent=0
    _
  %s14 = ssub.s32 1, %s12
  %s15 = scalar_select 0, %s14, %s12
  $region1: #{net_forward.1} parent=0
    #allocation4 [shape = 'u8[1024]{0}', space=vmem, size = 0x400, scoped, tag = 'output window, operand 0, single buffered']
    #allocation5 [shape = 's32[1]{0}', space=sflag, size = 0x4, scoped, tag = 'scoped memory for net_forward.1']
    %16 = vsyncpa [#allocation5], 0
    // Predicated region
    $region2: #{net_forward.1} parent=1 // pred_check
      _
    $region3: #{net_forward.1} parent=1 // pred_check_branch
      %18 = sbr.rel (0) target = $region5
    $region4: #{net_forward.1} parent=1 // pred_region
      _
    $region5: #{net_forward.1} parent=1 // pred_fallthru
      _
    // Predicated region
    $region6: #{net_forward.1} parent=1 // pred_check
      _
    $region7: #{net_forward.1} parent=1 // pred_check_branch
      %20 = sbr.rel (0) target = $region9
    $region8: #{net_forward.1} parent=1 // pred_region
      _
    $region9: #{net_forward.1} parent=1 // pred_fallthru
      _
    // Predicated region
    $region10: #{net_forward.1} parent=1 // pred_check
      _
    $region11: #{net_forward.1} parent=1 // pred_check_branch
      %22 = sbr.rel (0) target = $region13
    $region12: #{net_forward.1} parent=1 // pred_region
      _
    $region13: #{net_forward.1} parent=1 // pred_fallthru
      _
    // Predicated region
    $region14: #{net_forward.1} parent=1 // pred_check
      _
    $region15: #{net_forward.1} parent=1 // pred_check_branch
      %24 = sbr.rel (0) target = $region17
    $region16: #{net_forward.1} parent=1 // pred_region
      _
    $region17: #{net_forward.1} parent=1 // pred_fallthru
      _
    // Predicated region
    $region18: #{net_forward.1} parent=1 // pred_check
      _
    $region19: #{net_forward.1} parent=1 // pred_check_branch
      %26 = sbr.rel (0) target = $region21
    $region20: #{net_forward.1} parent=1 // pred_region
      _
    $region21: #{net_forward.1} parent=1 // pred_fallthru
      _
    // Predicated region
    $region22: #{net_forward.1} parent=1 // pred_check
      _
    $region23: #{net_forward.1} parent=1 // pred_check_branch
      %28 = sbr.rel (0) target = $region25
    $region24: #{net_forward.1} parent=1 // pred_region
      _
    $region25: #{net_forward.1} parent=1 // pred_fallthru
      _
    // Predicated region
    $region26: #{net_forward.1} parent=1 // pred_check
      _
    $region27: #{net_forward.1} parent=1 // pred_check_branch
      %30 = sbr.rel (0) target = $region29
    $region28: #{net_forward.1} parent=1 // pred_region
      _
    $region29: #{net_forward.1} parent=1 // pred_fallthru
      _
    // Predicated region
    $region30: #{net_forward.1} parent=1 // pred_check
      _
    $region31: #{net_forward.1} parent=1 // pred_check_branch
      %32 = sbr.rel (0) target = $region33
    $region32: #{net_forward.1} parent=1 // pred_region
      _
    $region33: #{net_forward.1} parent=1 // pred_fallthru
      _
    // Predicated region
    $region34: #{net_forward.1} parent=1 // pred_check
      _
    $region35: #{net_forward.1} parent=1 // pred_check_branch
      %34 = sbr.rel (0) target = $region37
    $region36: #{net_forward.1} parent=1 // pred_region
      _
    $region37: #{net_forward.1} parent=1 // pred_fallthru
      _
    // Predicated region
    $region38: #{net_forward.1} parent=1 // pred_check
      _
    $region39: #{net_forward.1} parent=1 // pred_check_branch
      %36 = sbr.rel (0) target = $region41
    $region40: #{net_forward.1} parent=1 // pred_region
      _
    $region41: #{net_forward.1} parent=1 // pred_fallthru
      _
    // Predicated region
    $region42: #{net_forward.1} parent=1 // pred_check
      _
    $region43: #{net_forward.1} parent=1 // pred_check_branch
      %38 = sbr.rel (0) target = $region45
    $region44: #{net_forward.1} parent=1 // pred_region
      _
    $region45: #{net_forward.1} parent=1 // pred_fallthru
      _
    %v39 = vld [vmem:[%s0] sm:$0xff]
    %v40 = vld [vmem:[%s0 + $0x8] sm:$0xff]
    %v41 = vld [vmem:[%s0 + $0x10] sm:$0xff]
    %v42 = vld [vmem:[%s0 + $0x18] sm:$0xff]
    %v43 = vld [vmem:[%s0 + $0x20] sm:$0xff]
    %v44 = vld [vmem:[%s0 + $0x28] sm:$0xff]
    %v45 = vld [vmem:[%s0 + $0x30] sm:$0xff]
    %v46 = vld [vmem:[%s0 + $0x38] sm:$0xff]
    %v47 = vld [vmem:[%s0 + $0x40] sm:$0xff]
    %v48 = vld [vmem:[%s0 + $0x48] sm:$0xff]
    %v49 = vld [vmem:[%s0 + $0x50] sm:$0xff]
    %v50 = vld [vmem:[%s0 + $0x58] sm:$0xff]
    %v51 = vld [vmem:[%s0 + $0x60] sm:$0xff]
    %v52 = vld [vmem:[%s0 + $0x68] sm:$0xff]
    %v53 = vld [vmem:[%s0 + $0x70] sm:$0xff]
    %v54 = vld [vmem:[%s0 + $0x78] sm:$0xff]
    %v55 = vld [vmem:[%s0 + $0x80] sm:$0xff]
    %v56 = vld [vmem:[%s0 + $0x88] sm:$0xff]
    %v57 = vld [vmem:[%s0 + $0x90] sm:$0xff]
    %v58 = vld [vmem:[%s0 + $0x98] sm:$0xff]
    %v59 = vld [vmem:[%s0 + $0xa0] sm:$0xff]
    %v60 = vld [vmem:[%s0 + $0xa8] sm:$0xff]
    %v61 = vld [vmem:[%s0 + $0xb0] sm:$0xff]
    %v62 = vld [vmem:[%s0 + $0xb8] sm:$0xff]
    %v63 = vld [vmem:[%s0 + $0xc0] sm:$0xff]
    %v64 = vld [vmem:[%s0 + $0xc8] sm:$0xff]
    %v65 = vld [vmem:[%s0 + $0xd0] sm:$0xff]
    %v66 = vld [vmem:[%s0 + $0xd8] sm:$0xff]
    %v67 = vld [vmem:[%s0 + $0xe0] sm:$0xff]
    %v68 = vld [vmem:[%s0 + $0xe8] sm:$0xff]
    %v69 = vld [vmem:[%s0 + $0xf0] sm:$0xff]
    %v70 = vld [vmem:[%s0 + $0xf8] sm:$0xff]
    %v71 = vld [vmem:[%s0 + $0x100] sm:$0xff]
    %v72 = vld [vmem:[%s0 + $0x108] sm:$0xff]
    %v73 = vld [vmem:[%s0 + $0x110] sm:$0xff]
    %v74 = vld [vmem:[%s0 + $0x118] sm:$0xff]
    %v75 = vld [vmem:[%s0 + $0x120] sm:$0xff]
    %v76 = vld [vmem:[%s0 + $0x128] sm:$0xff]
    %v77 = vld [vmem:[%s0 + $0x130] sm:$0xff]
    %v78 = vld [vmem:[%s0 + $0x138] sm:$0xff]
    %v79 = vld [vmem:[%s0 + $0x140] sm:$0xff]
    %v80 = vld [vmem:[%s0 + $0x148] sm:$0xff]
    %v81 = vld [vmem:[%s0 + $0x150] sm:$0xff]
    %v82 = vld [vmem:[%s0 + $0x158] sm:$0xff]
    %v83 = vld [vmem:[%s0 + $0x160] sm:$0xff]
    %v84 = vld [vmem:[%s0 + $0x168] sm:$0xff]
    %v85 = vld [vmem:[%s0 + $0x170] sm:$0xff]
    %v86 = vld [vmem:[%s0 + $0x178] sm:$0xff]
    %v87 = vld [vmem:[%s0 + $0x180] sm:$0xff]
    %v88 = vld [vmem:[%s0 + $0x188] sm:$0xff]
    %v89 = vld [vmem:[%s0 + $0x190] sm:$0xff]
    %v90 = vld [vmem:[%s0 + $0x198] sm:$0xff]
    %v91 = vld [vmem:[%s0 + $0x1a0] sm:$0xff]
    %v92 = vld [vmem:[%s0 + $0x1a8] sm:$0xff]
    %v93 = vld [vmem:[%s0 + $0x1b0] sm:$0xff]
    %v94 = vld [vmem:[%s0 + $0x1b8] sm:$0xff]
    %v95 = vld [vmem:[%s0 + $0x1c0] sm:$0xff]
    %v96 = vld [vmem:[%s0 + $0x1c8] sm:$0xff]
    %v97 = vld [vmem:[%s0 + $0x1d0] sm:$0xff]
    %v98 = vld [vmem:[%s0 + $0x1d8] sm:$0xff]
    %v99 = vld [vmem:[%s0 + $0x1e0] sm:$0xff]
    %v100 = vld [vmem:[%s0 + $0x1e8] sm:$0xff]
    %v101 = vld [vmem:[%s0 + $0x1f0] sm:$0xff]
    %v102 = vld [vmem:[%s0 + $0x1f8] sm:$0xff]
    %v103 = vld [vmem:[%s0 + $0x200] sm:$0xff]
    %v104 = vld [vmem:[%s0 + $0x208] sm:$0xff]
    %v105 = vld [vmem:[%s0 + $0x210] sm:$0xff]
    %v106 = vld [vmem:[%s0 + $0x218] sm:$0xff]
    %v107 = vld [vmem:[%s0 + $0x220] sm:$0xff]
    %v108 = vld [vmem:[%s0 + $0x228] sm:$0xff]
    %v109 = vld [vmem:[%s0 + $0x230] sm:$0xff]
    %v110 = vld [vmem:[%s0 + $0x238] sm:$0xff]
    %v111 = vld [vmem:[%s0 + $0x240] sm:$0xff]
    %v112 = vld [vmem:[%s0 + $0x248] sm:$0xff]
    %v113 = vld [vmem:[%s0 + $0x250] sm:$0xff]
    %v114 = vld [vmem:[%s0 + $0x258] sm:$0xff]
    %v115 = vld [vmem:[%s0 + $0x260] sm:$0xff]
    %v116 = vld [vmem:[%s0 + $0x268] sm:$0xff]
    %v117 = vld [vmem:[%s0 + $0x270] sm:$0xff]
    %v118 = vld [vmem:[%s0 + $0x278] sm:$0xff]
    %v119 = vld [vmem:[%s0 + $0x280] sm:$0xff]
    %v120 = vld [vmem:[%s0 + $0x288] sm:$0xff]
    %v121 = vld [vmem:[%s0 + $0x290] sm:$0xff]
    %v122 = vld [vmem:[%s0 + $0x298] sm:$0xff]
    %v123 = vld [vmem:[%s0 + $0x2a0] sm:$0xff]
    %v124 = vld [vmem:[%s0 + $0x2a8] sm:$0xff]
    %v125 = vld [vmem:[%s0 + $0x2b0] sm:$0xff]
    %v126 = vld [vmem:[%s0 + $0x2b8] sm:$0xff]
    %v127 = vld [vmem:[%s0 + $0x2c0] sm:$0xff]
    %v128 = vld [vmem:[%s0 + $0x2c8] sm:$0xff]
    %v129 = vld [vmem:[%s0 + $0x2d0] sm:$0xff]
    %v130 = vld [vmem:[%s0 + $0x2d8] sm:$0xff]
    %v131 = vld [vmem:[%s0 + $0x2e0] sm:$0xff]
    %v132 = vld [vmem:[%s0 + $0x2e8] sm:$0xff]
    %v133 = vld [vmem:[%s0 + $0x2f0] sm:$0xff]
    %v134 = vld [vmem:[%s0 + $0x2f8] sm:$0xff]
    %v135 = vld [vmem:[%s0 + $0x300] sm:$0xff]
    %v136 = vld [vmem:[%s0 + $0x308] sm:$0xff]
    %v137 = vld [vmem:[%s0 + $0x310] sm:$0xff]
    %v138 = vld [vmem:[%s0 + $0x318] sm:$0xff]
    %v139 = vld [vmem:[%s0 + $0x320] sm:$0xff]
    %v140 = vld [vmem:[%s0 + $0x328] sm:$0xff]
    %v141 = vld [vmem:[%s0 + $0x330] sm:$0xff]
    %v142 = vld [vmem:[%s0 + $0x338] sm:$0xff]
    %v143 = vld [vmem:[%s0 + $0x340] sm:$0xff]
    %v144 = vld [vmem:[%s0 + $0x348] sm:$0xff]
    %v145 = vld [vmem:[%s0 + $0x350] sm:$0xff]
    %v146 = vld [vmem:[%s0 + $0x358] sm:$0xff]
    %v147 = vld [vmem:[%s0 + $0x360] sm:$0xff]
    %v148 = vld [vmem:[%s0 + $0x368] sm:$0xff]
    %v149 = vld [vmem:[%s0 + $0x370] sm:$0xff]
    %v150 = vld [vmem:[%s0 + $0x378] sm:$0xff]
    %v151 = vld [vmem:[%s0 + $0x380] sm:$0xff]
    %v152 = vld [vmem:[%s0 + $0x388] sm:$0xff]
    %v153 = vld [vmem:[%s0 + $0x390] sm:$0xff]
    %v154 = vld [vmem:[%s0 + $0x398] sm:$0xff]
    %v155 = vld [vmem:[%s0 + $0x3a0] sm:$0xff]
    %v156 = vld [vmem:[%s0 + $0x3a8] sm:$0xff]
    %v157 = vld [vmem:[%s0 + $0x3b0] sm:$0xff]
    %v158 = vld [vmem:[%s0 + $0x3b8] sm:$0xff]
    %v159 = vld [vmem:[%s0 + $0x3c0] sm:$0xff]
    %v160 = vld [vmem:[%s0 + $0x3c8] sm:$0xff]
    %v161 = vld [vmem:[%s0 + $0x3d0] sm:$0xff]
    %v162 = vld [vmem:[%s0 + $0x3d8] sm:$0xff]
    %v163 = vld [vmem:[%s0 + $0x3e0] sm:$0xff]
    %v164 = vld [vmem:[%s0 + $0x3e8] sm:$0xff]
    %v165 = vld [vmem:[%s0 + $0x3f0] sm:$0xff]
    %v166 = vld [vmem:[%s0 + $0x3f8] sm:$0xff]
    %v167 = vld [vmem:[%s0 + $0x400] sm:$0xff]
    %v168 = vld [vmem:[%s0 + $0x408] sm:$0xff]
    %v169 = vld [vmem:[%s0 + $0x410] sm:$0xff]
    %v170 = vld [vmem:[%s0 + $0x418] sm:$0xff]
    %v171 = vld [vmem:[%s0 + $0x420] sm:$0xff]
    %v172 = vld [vmem:[%s0 + $0x428] sm:$0xff]
    %v173 = vld [vmem:[%s0 + $0x430] sm:$0xff]
    %v174 = vld [vmem:[%s0 + $0x438] sm:$0xff]
    %v175 = vld [vmem:[%s0 + $0x440] sm:$0xff]
    %v176 = vld [vmem:[%s0 + $0x448] sm:$0xff]
    %v177 = vld [vmem:[%s0 + $0x450] sm:$0xff]
    %v178 = vld [vmem:[%s0 + $0x458] sm:$0xff]
    %v179 = vld [vmem:[%s0 + $0x460] sm:$0xff]
    %v180 = vld [vmem:[%s0 + $0x468] sm:$0xff]
    %v181 = vld [vmem:[%s0 + $0x470] sm:$0xff]
    %v182 = vld [vmem:[%s0 + $0x478] sm:$0xff]
    %v183 = vld [vmem:[%s1] sm:$0xff]
    %v184 = vld [vmem:[%s1 + $0x8] sm:$0xff]
    %v185 = vld [vmem:[%s1 + $0x10] sm:$0xff]
    %v186 = vld [vmem:[%s1 + $0x18] sm:$0xff]
    %vm187 = vcmask 261120
    %v189 = vsel %vm187, %v39, 0
    %v192 = vsel %vm187, %v40, 0
    %v195 = vsel %vm187, %v41, 0
    %v198 = vsel %vm187, %v42, 0
    %v201 = vsel %vm187, %v43, 0
    %v204 = vsel %vm187, %v44, 0
    %v207 = vsel %vm187, %v45, 0
    %v210 = vsel %vm187, %v46, 0
    %v213 = vsel %vm187, %v47, 0
    %v216 = vsel %vm187, %v48, 0
    %v219 = vsel %vm187, %v49, 0
    %v222 = vsel %vm187, %v50, 0
    %v225 = vsel %vm187, %v51, 0
    %v228 = vsel %vm187, %v52, 0
    %v231 = vsel %vm187, %v53, 0
    %v234 = vsel %vm187, %v54, 0
    %v237 = vsel %vm187, %v55, 0
    %v240 = vsel %vm187, %v56, 0
    %v243 = vsel %vm187, %v57, 0
    %v246 = vsel %vm187, %v58, 0
    %v249 = vsel %vm187, %v59, 0
    %v252 = vsel %vm187, %v60, 0
    %v255 = vsel %vm187, %v61, 0
    %v258 = vsel %vm187, %v62, 0
    %v261 = vsel %vm187, %v63, 0
    %v264 = vsel %vm187, %v64, 0
    %v267 = vsel %vm187, %v65, 0
    %v270 = vsel %vm187, %v66, 0
    %v273 = vsel %vm187, %v67, 0
    %v276 = vsel %vm187, %v68, 0
    %v279 = vsel %vm187, %v69, 0
    %v282 = vsel %vm187, %v70, 0
    %v285 = vsel %vm187, %v71, 0
    %v288 = vsel %vm187, %v72, 0
    %v291 = vsel %vm187, %v73, 0
    %v294 = vsel %vm187, %v74, 0
    %v297 = vsel %vm187, %v75, 0
    %v300 = vsel %vm187, %v76, 0
    %v303 = vsel %vm187, %v77, 0
    %v306 = vsel %vm187, %v78, 0
    %v309 = vsel %vm187, %v79, 0
    %v312 = vsel %vm187, %v80, 0
    %v315 = vsel %vm187, %v81, 0
    %v318 = vsel %vm187, %v82, 0
    %v321 = vsel %vm187, %v83, 0
    %v324 = vsel %vm187, %v84, 0
    %v327 = vsel %vm187, %v85, 0
    %v330 = vsel %vm187, %v86, 0
    %v333 = vsel %vm187, %v87, 0
    %v336 = vsel %vm187, %v88, 0
    %v339 = vsel %vm187, %v89, 0
    %v342 = vsel %vm187, %v90, 0
    %v345 = vsel %vm187, %v91, 0
    %v348 = vsel %vm187, %v92, 0
    %v351 = vsel %vm187, %v93, 0
    %v354 = vsel %vm187, %v94, 0
    %v357 = vsel %vm187, %v95, 0
    %v360 = vsel %vm187, %v96, 0
    %v363 = vsel %vm187, %v97, 0
    %v366 = vsel %vm187, %v98, 0
    %v369 = vsel %vm187, %v99, 0
    %v372 = vsel %vm187, %v100, 0
    %v375 = vsel %vm187, %v101, 0
    %v378 = vsel %vm187, %v102, 0
    %v381 = vsel %vm187, %v103, 0
    %v384 = vsel %vm187, %v104, 0
    %v387 = vsel %vm187, %v105, 0
    %v390 = vsel %vm187, %v106, 0
    %v393 = vsel %vm187, %v107, 0
    %v396 = vsel %vm187, %v108, 0
    %v399 = vsel %vm187, %v109, 0
    %v402 = vsel %vm187, %v110, 0
    %v405 = vsel %vm187, %v111, 0
    %v408 = vsel %vm187, %v112, 0
    %v411 = vsel %vm187, %v113, 0
    %v414 = vsel %vm187, %v114, 0
    %v417 = vsel %vm187, %v115, 0
    %v420 = vsel %vm187, %v116, 0
    %v423 = vsel %vm187, %v117, 0
    %v426 = vsel %vm187, %v118, 0
    %v429 = vsel %vm187, %v119, 0
    %v432 = vsel %vm187, %v120, 0
    %v435 = vsel %vm187, %v121, 0
    %v438 = vsel %vm187, %v122, 0
    %v441 = vsel %vm187, %v123, 0
    %v444 = vsel %vm187, %v124, 0
    %v447 = vsel %vm187, %v125, 0
    %v450 = vsel %vm187, %v126, 0
    %v453 = vsel %vm187, %v127, 0
    %v456 = vsel %vm187, %v128, 0
    %v459 = vsel %vm187, %v129, 0
    %v462 = vsel %vm187, %v130, 0
    %v465 = vsel %vm187, %v131, 0
    %v468 = vsel %vm187, %v132, 0
    %v471 = vsel %vm187, %v133, 0
    %v474 = vsel %vm187, %v134, 0
    %v477 = vsel %vm187, %v135, 0
    %v480 = vsel %vm187, %v136, 0
    %v483 = vsel %vm187, %v137, 0
    %v486 = vsel %vm187, %v138, 0
    %v489 = vsel %vm187, %v139, 0
    %v492 = vsel %vm187, %v140, 0
    %v495 = vsel %vm187, %v141, 0
    %v498 = vsel %vm187, %v142, 0
    %v501 = vsel %vm187, %v143, 0
    %v504 = vsel %vm187, %v144, 0
    %v507 = vsel %vm187, %v145, 0
    %v510 = vsel %vm187, %v146, 0
    %v513 = vsel %vm187, %v147, 0
    %v516 = vsel %vm187, %v148, 0
    %v519 = vsel %vm187, %v149, 0
    %v522 = vsel %vm187, %v150, 0
    %v525 = vsel %vm187, %v151, 0
    %v528 = vsel %vm187, %v152, 0
    %v531 = vsel %vm187, %v153, 0
    %v534 = vsel %vm187, %v154, 0
    %v537 = vsel %vm187, %v155, 0
    %v540 = vsel %vm187, %v156, 0
    %v543 = vsel %vm187, %v157, 0
    %v546 = vsel %vm187, %v158, 0
    %v549 = vsel %vm187, %v159, 0
    %v552 = vsel %vm187, %v160, 0
    %v555 = vsel %vm187, %v161, 0
    %v558 = vsel %vm187, %v162, 0
    %v561 = vsel %vm187, %v163, 0
    %v564 = vsel %vm187, %v164, 0
    %v567 = vsel %vm187, %v165, 0
    %v570 = vsel %vm187, %v166, 0
    %v573 = vsel %vm187, %v167, 0
    %v576 = vsel %vm187, %v168, 0
    %v579 = vsel %vm187, %v169, 0
    %v582 = vsel %vm187, %v170, 0
    %v585 = vsel %vm187, %v171, 0
    %v588 = vsel %vm187, %v172, 0
    %v591 = vsel %vm187, %v173, 0
    %v594 = vsel %vm187, %v174, 0
    %v597 = vsel %vm187, %v175, 0
    %v600 = vsel %vm187, %v176, 0
    %v603 = vsel %vm187, %v177, 0
    %v606 = vsel %vm187, %v178, 0
    %v609 = vsel %vm187, %v179, 0
    %v612 = vsel %vm187, %v180, 0
    %v615 = vsel %vm187, %v181, 0
    %v618 = vsel %vm187, %v182, 0
    %620 = vmatpush.msra.mxu0 0.0
    %621 = vmatpush.msra.mxu0 0.0
    %622 = vmatpush.msra.mxu0 0.0
    %623 = vmatpush.msra.mxu0 0.0
    %624 = vmatpush.msra.mxu0 0.0
    %625 = vmatpush.msra.mxu0 0.0
    %626 = vmatpush.msra.mxu0 0.0
    %627 = vmatpush.msra.mxu0 0.0
    %628 = vmatpush.msra.mxu0 0.0
    %629 = vmatpush.msra.mxu0 0.0
    %630 = vmatpush.msra.mxu0 0.0
    %631 = vmatpush.msra.mxu0 0.0
    %632 = vmatpush.msra.mxu0 %v186
    %633 = vmatpush.msra.mxu0 %v185
    %634 = vmatpush.msra.mxu0 %v184
    %635 = vmatpush.msra.mxu0 %v183
    %636 = vmatmul.f32.gmra.mxu0 %v189
    %v637 = vpop.f32.mrf.mxu0
    %v638 = vadd.f32 0.0, %v637
    %639 = vmatmul.f32.gmra.mxu0 %v192
    %v640 = vpop.f32.mrf.mxu0
    %v641 = vadd.f32 0.0, %v640
    %642 = vmatmul.f32.gmra.mxu0 %v195
    %v643 = vpop.f32.mrf.mxu0
    %v644 = vadd.f32 0.0, %v643
    %645 = vmatmul.f32.gmra.mxu0 %v198
    %v646 = vpop.f32.mrf.mxu0
    %v647 = vadd.f32 0.0, %v646
    %648 = vmatmul.f32.gmra.mxu0 %v201
    %v649 = vpop.f32.mrf.mxu0
    %v650 = vadd.f32 0.0, %v649
    %651 = vmatmul.f32.gmra.mxu0 %v204
    %v652 = vpop.f32.mrf.mxu0
    %v653 = vadd.f32 0.0, %v652
    %654 = vmatmul.f32.gmra.mxu0 %v207
    %v655 = vpop.f32.mrf.mxu0
    %v656 = vadd.f32 0.0, %v655
    %657 = vmatmul.f32.gmra.mxu0 %v210
    %v658 = vpop.f32.mrf.mxu0
    %v659 = vadd.f32 0.0, %v658
    %660 = vmatmul.f32.gmra.mxu0 %v213
    %v661 = vpop.f32.mrf.mxu0
    %v662 = vadd.f32 0.0, %v661
    %663 = vmatmul.f32.gmra.mxu0 %v216
    %v664 = vpop.f32.mrf.mxu0
    %v665 = vadd.f32 0.0, %v664
    %666 = vmatmul.f32.gmra.mxu0 %v219
    %v667 = vpop.f32.mrf.mxu0
    %v668 = vadd.f32 0.0, %v667
    %669 = vmatmul.f32.gmra.mxu0 %v222
    %v670 = vpop.f32.mrf.mxu0
    %v671 = vadd.f32 0.0, %v670
    %672 = vmatmul.f32.gmra.mxu0 %v225
    %v673 = vpop.f32.mrf.mxu0
    %v674 = vadd.f32 0.0, %v673
    %675 = vmatmul.f32.gmra.mxu0 %v228
    %v676 = vpop.f32.mrf.mxu0
    %v677 = vadd.f32 0.0, %v676
    %678 = vmatmul.f32.gmra.mxu0 %v231
    %v679 = vpop.f32.mrf.mxu0
    %v680 = vadd.f32 0.0, %v679
    %681 = vmatmul.f32.gmra.mxu0 %v234
    %v682 = vpop.f32.mrf.mxu0
    %v683 = vadd.f32 0.0, %v682
    %684 = vmatmul.f32.gmra.mxu0 %v237
    %v685 = vpop.f32.mrf.mxu0
    %v686 = vadd.f32 0.0, %v685
    %687 = vmatmul.f32.gmra.mxu0 %v240
    %v688 = vpop.f32.mrf.mxu0
    %v689 = vadd.f32 0.0, %v688
    %690 = vmatmul.f32.gmra.mxu0 %v243
    %v691 = vpop.f32.mrf.mxu0
    %v692 = vadd.f32 0.0, %v691
    %693 = vmatmul.f32.gmra.mxu0 %v246
    %v694 = vpop.f32.mrf.mxu0
    %v695 = vadd.f32 0.0, %v694
    %696 = vmatmul.f32.gmra.mxu0 %v249
    %v697 = vpop.f32.mrf.mxu0
    %v698 = vadd.f32 0.0, %v697
    %699 = vmatmul.f32.gmra.mxu0 %v252
    %v700 = vpop.f32.mrf.mxu0
    %v701 = vadd.f32 0.0, %v700
    %702 = vmatmul.f32.gmra.mxu0 %v255
    %v703 = vpop.f32.mrf.mxu0
    %v704 = vadd.f32 0.0, %v703
    %705 = vmatmul.f32.gmra.mxu0 %v258
    %v706 = vpop.f32.mrf.mxu0
    %v707 = vadd.f32 0.0, %v706
    %708 = vmatmul.f32.gmra.mxu0 %v261
    %v709 = vpop.f32.mrf.mxu0
    %v710 = vadd.f32 0.0, %v709
    %711 = vmatmul.f32.gmra.mxu0 %v264
    %v712 = vpop.f32.mrf.mxu0
    %v713 = vadd.f32 0.0, %v712
    %714 = vmatmul.f32.gmra.mxu0 %v267
    %v715 = vpop.f32.mrf.mxu0
    %v716 = vadd.f32 0.0, %v715
    %717 = vmatmul.f32.gmra.mxu0 %v270
    %v718 = vpop.f32.mrf.mxu0
    %v719 = vadd.f32 0.0, %v718
    %720 = vmatmul.f32.gmra.mxu0 %v273
    %v721 = vpop.f32.mrf.mxu0
    %v722 = vadd.f32 0.0, %v721
    %723 = vmatmul.f32.gmra.mxu0 %v276
    %v724 = vpop.f32.mrf.mxu0
    %v725 = vadd.f32 0.0, %v724
    %726 = vmatmul.f32.gmra.mxu0 %v279
    %v727 = vpop.f32.mrf.mxu0
    %v728 = vadd.f32 0.0, %v727
    %729 = vmatmul.f32.gmra.mxu0 %v282
    %v730 = vpop.f32.mrf.mxu0
    %v731 = vadd.f32 0.0, %v730
    %732 = vmatmul.f32.gmra.mxu0 %v285
    %v733 = vpop.f32.mrf.mxu0
    %v734 = vadd.f32 0.0, %v733
    %735 = vmatmul.f32.gmra.mxu0 %v288
    %v736 = vpop.f32.mrf.mxu0
    %v737 = vadd.f32 0.0, %v736
    %738 = vmatmul.f32.gmra.mxu0 %v291
    %v739 = vpop.f32.mrf.mxu0
    %v740 = vadd.f32 0.0, %v739
    %741 = vmatmul.f32.gmra.mxu0 %v294
    %v742 = vpop.f32.mrf.mxu0
    %v743 = vadd.f32 0.0, %v742
    %744 = vmatmul.f32.gmra.mxu0 %v297
    %v745 = vpop.f32.mrf.mxu0
    %v746 = vadd.f32 0.0, %v745
    %747 = vmatmul.f32.gmra.mxu0 %v300
    %v748 = vpop.f32.mrf.mxu0
    %v749 = vadd.f32 0.0, %v748
    %750 = vmatmul.f32.gmra.mxu0 %v303
    %v751 = vpop.f32.mrf.mxu0
    %v752 = vadd.f32 0.0, %v751
    %753 = vmatmul.f32.gmra.mxu0 %v306
    %v754 = vpop.f32.mrf.mxu0
    %v755 = vadd.f32 0.0, %v754
    %756 = vmatmul.f32.gmra.mxu0 %v309
    %v757 = vpop.f32.mrf.mxu0
    %v758 = vadd.f32 0.0, %v757
    %759 = vmatmul.f32.gmra.mxu0 %v312
    %v760 = vpop.f32.mrf.mxu0
    %v761 = vadd.f32 0.0, %v760
    %762 = vmatmul.f32.gmra.mxu0 %v315
    %v763 = vpop.f32.mrf.mxu0
    %v764 = vadd.f32 0.0, %v763
    %765 = vmatmul.f32.gmra.mxu0 %v318
    %v766 = vpop.f32.mrf.mxu0
    %v767 = vadd.f32 0.0, %v766
    %768 = vmatmul.f32.gmra.mxu0 %v321
    %v769 = vpop.f32.mrf.mxu0
    %v770 = vadd.f32 0.0, %v769
    %771 = vmatmul.f32.gmra.mxu0 %v324
    %v772 = vpop.f32.mrf.mxu0
    %v773 = vadd.f32 0.0, %v772
    %774 = vmatmul.f32.gmra.mxu0 %v327
    %v775 = vpop.f32.mrf.mxu0
    %v776 = vadd.f32 0.0, %v775
    %777 = vmatmul.f32.gmra.mxu0 %v330
    %v778 = vpop.f32.mrf.mxu0
    %v779 = vadd.f32 0.0, %v778
    %780 = vmatmul.f32.gmra.mxu0 %v333
    %v781 = vpop.f32.mrf.mxu0
    %v782 = vadd.f32 0.0, %v781
    %783 = vmatmul.f32.gmra.mxu0 %v336
    %v784 = vpop.f32.mrf.mxu0
    %v785 = vadd.f32 0.0, %v784
    %786 = vmatmul.f32.gmra.mxu0 %v339
    %v787 = vpop.f32.mrf.mxu0
    %v788 = vadd.f32 0.0, %v787
    %789 = vmatmul.f32.gmra.mxu0 %v342
    %v790 = vpop.f32.mrf.mxu0
    %v791 = vadd.f32 0.0, %v790
    %792 = vmatmul.f32.gmra.mxu0 %v345
    %v793 = vpop.f32.mrf.mxu0
    %v794 = vadd.f32 0.0, %v793
    %795 = vmatmul.f32.gmra.mxu0 %v348
    %v796 = vpop.f32.mrf.mxu0
    %v797 = vadd.f32 0.0, %v796
    %798 = vmatmul.f32.gmra.mxu0 %v351
    %v799 = vpop.f32.mrf.mxu0
    %v800 = vadd.f32 0.0, %v799
    %801 = vmatmul.f32.gmra.mxu0 %v354
    %v802 = vpop.f32.mrf.mxu0
    %v803 = vadd.f32 0.0, %v802
    %804 = vmatmul.f32.gmra.mxu0 %v357
    %v805 = vpop.f32.mrf.mxu0
    %v806 = vadd.f32 0.0, %v805
    %807 = vmatmul.f32.gmra.mxu0 %v360
    %v808 = vpop.f32.mrf.mxu0
    %v809 = vadd.f32 0.0, %v808
    %810 = vmatmul.f32.gmra.mxu0 %v363
    %v811 = vpop.f32.mrf.mxu0
    %v812 = vadd.f32 0.0, %v811
    %813 = vmatmul.f32.gmra.mxu0 %v366
    %v814 = vpop.f32.mrf.mxu0
    %v815 = vadd.f32 0.0, %v814
    %816 = vmatmul.f32.gmra.mxu0 %v369
    %v817 = vpop.f32.mrf.mxu0
    %v818 = vadd.f32 0.0, %v817
    %819 = vmatmul.f32.gmra.mxu0 %v372
    %v820 = vpop.f32.mrf.mxu0
    %v821 = vadd.f32 0.0, %v820
    %822 = vmatmul.f32.gmra.mxu0 %v375
    %v823 = vpop.f32.mrf.mxu0
    %v824 = vadd.f32 0.0, %v823
    %825 = vmatmul.f32.gmra.mxu0 %v378
    %v826 = vpop.f32.mrf.mxu0
    %v827 = vadd.f32 0.0, %v826
    %828 = vmatmul.f32.gmra.mxu0 %v381
    %v829 = vpop.f32.mrf.mxu0
    %v830 = vadd.f32 0.0, %v829
    %831 = vmatmul.f32.gmra.mxu0 %v384
    %v832 = vpop.f32.mrf.mxu0
    %v833 = vadd.f32 0.0, %v832
    %834 = vmatmul.f32.gmra.mxu0 %v387
    %v835 = vpop.f32.mrf.mxu0
    %v836 = vadd.f32 0.0, %v835
    %837 = vmatmul.f32.gmra.mxu0 %v390
    %v838 = vpop.f32.mrf.mxu0
    %v839 = vadd.f32 0.0, %v838
    %840 = vmatmul.f32.gmra.mxu0 %v393
    %v841 = vpop.f32.mrf.mxu0
    %v842 = vadd.f32 0.0, %v841
    %843 = vmatmul.f32.gmra.mxu0 %v396
    %v844 = vpop.f32.mrf.mxu0
    %v845 = vadd.f32 0.0, %v844
    %846 = vmatmul.f32.gmra.mxu0 %v399
    %v847 = vpop.f32.mrf.mxu0
    %v848 = vadd.f32 0.0, %v847
    %849 = vmatmul.f32.gmra.mxu0 %v402
    %v850 = vpop.f32.mrf.mxu0
    %v851 = vadd.f32 0.0, %v850
    %852 = vmatmul.f32.gmra.mxu0 %v405
    %v853 = vpop.f32.mrf.mxu0
    %v854 = vadd.f32 0.0, %v853
    %855 = vmatmul.f32.gmra.mxu0 %v408
    %v856 = vpop.f32.mrf.mxu0
    %v857 = vadd.f32 0.0, %v856
    %858 = vmatmul.f32.gmra.mxu0 %v411
    %v859 = vpop.f32.mrf.mxu0
    %v860 = vadd.f32 0.0, %v859
    %861 = vmatmul.f32.gmra.mxu0 %v414
    %v862 = vpop.f32.mrf.mxu0
    %v863 = vadd.f32 0.0, %v862
    %864 = vmatmul.f32.gmra.mxu0 %v417
    %v865 = vpop.f32.mrf.mxu0
    %v866 = vadd.f32 0.0, %v865
    %867 = vmatmul.f32.gmra.mxu0 %v420
    %v868 = vpop.f32.mrf.mxu0
    %v869 = vadd.f32 0.0, %v868
    %870 = vmatmul.f32.gmra.mxu0 %v423
    %v871 = vpop.f32.mrf.mxu0
    %v872 = vadd.f32 0.0, %v871
    %873 = vmatmul.f32.gmra.mxu0 %v426
    %v874 = vpop.f32.mrf.mxu0
    %v875 = vadd.f32 0.0, %v874
    %876 = vmatmul.f32.gmra.mxu0 %v429
    %v877 = vpop.f32.mrf.mxu0
    %v878 = vadd.f32 0.0, %v877
    %879 = vmatmul.f32.gmra.mxu0 %v432
    %v880 = vpop.f32.mrf.mxu0
    %v881 = vadd.f32 0.0, %v880
    %882 = vmatmul.f32.gmra.mxu0 %v435
    %v883 = vpop.f32.mrf.mxu0
    %v884 = vadd.f32 0.0, %v883
    %885 = vmatmul.f32.gmra.mxu0 %v438
    %v886 = vpop.f32.mrf.mxu0
    %v887 = vadd.f32 0.0, %v886
    %888 = vmatmul.f32.gmra.mxu0 %v441
    %v889 = vpop.f32.mrf.mxu0
    %v890 = vadd.f32 0.0, %v889
    %891 = vmatmul.f32.gmra.mxu0 %v444
    %v892 = vpop.f32.mrf.mxu0
    %v893 = vadd.f32 0.0, %v892
    %894 = vmatmul.f32.gmra.mxu0 %v447
    %v895 = vpop.f32.mrf.mxu0
    %v896 = vadd.f32 0.0, %v895
    %897 = vmatmul.f32.gmra.mxu0 %v450
    %v898 = vpop.f32.mrf.mxu0
    %v899 = vadd.f32 0.0, %v898
    %900 = vmatmul.f32.gmra.mxu0 %v453
    %v901 = vpop.f32.mrf.mxu0
    %v902 = vadd.f32 0.0, %v901
    %903 = vmatmul.f32.gmra.mxu0 %v456
    %v904 = vpop.f32.mrf.mxu0
    %v905 = vadd.f32 0.0, %v904
    %906 = vmatmul.f32.gmra.mxu0 %v459
    %v907 = vpop.f32.mrf.mxu0
    %v908 = vadd.f32 0.0, %v907
    %909 = vmatmul.f32.gmra.mxu0 %v462
    %v910 = vpop.f32.mrf.mxu0
    %v911 = vadd.f32 0.0, %v910
    %912 = vmatmul.f32.gmra.mxu0 %v465
    %v913 = vpop.f32.mrf.mxu0
    %v914 = vadd.f32 0.0, %v913
    %915 = vmatmul.f32.gmra.mxu0 %v468
    %v916 = vpop.f32.mrf.mxu0
    %v917 = vadd.f32 0.0, %v916
    %918 = vmatmul.f32.gmra.mxu0 %v471
    %v919 = vpop.f32.mrf.mxu0
    %v920 = vadd.f32 0.0, %v919
    %921 = vmatmul.f32.gmra.mxu0 %v474
    %v922 = vpop.f32.mrf.mxu0
    %v923 = vadd.f32 0.0, %v922
    %924 = vmatmul.f32.gmra.mxu0 %v477
    %v925 = vpop.f32.mrf.mxu0
    %v926 = vadd.f32 0.0, %v925
    %927 = vmatmul.f32.gmra.mxu0 %v480
    %v928 = vpop.f32.mrf.mxu0
    %v929 = vadd.f32 0.0, %v928
    %930 = vmatmul.f32.gmra.mxu0 %v483
    %v931 = vpop.f32.mrf.mxu0
    %v932 = vadd.f32 0.0, %v931
    %933 = vmatmul.f32.gmra.mxu0 %v486
    %v934 = vpop.f32.mrf.mxu0
    %v935 = vadd.f32 0.0, %v934
    %936 = vmatmul.f32.gmra.mxu0 %v489
    %v937 = vpop.f32.mrf.mxu0
    %v938 = vadd.f32 0.0, %v937
    %939 = vmatmul.f32.gmra.mxu0 %v492
    %v940 = vpop.f32.mrf.mxu0
    %v941 = vadd.f32 0.0, %v940
    %942 = vmatmul.f32.gmra.mxu0 %v495
    %v943 = vpop.f32.mrf.mxu0
    %v944 = vadd.f32 0.0, %v943
    %945 = vmatmul.f32.gmra.mxu0 %v498
    %v946 = vpop.f32.mrf.mxu0
    %v947 = vadd.f32 0.0, %v946
    %948 = vmatmul.f32.gmra.mxu0 %v501
    %v949 = vpop.f32.mrf.mxu0
    %v950 = vadd.f32 0.0, %v949
    %951 = vmatmul.f32.gmra.mxu0 %v504
    %v952 = vpop.f32.mrf.mxu0
    %v953 = vadd.f32 0.0, %v952
    %954 = vmatmul.f32.gmra.mxu0 %v507
    %v955 = vpop.f32.mrf.mxu0
    %v956 = vadd.f32 0.0, %v955
    %957 = vmatmul.f32.gmra.mxu0 %v510
    %v958 = vpop.f32.mrf.mxu0
    %v959 = vadd.f32 0.0, %v958
    %960 = vmatmul.f32.gmra.mxu0 %v513
    %v961 = vpop.f32.mrf.mxu0
    %v962 = vadd.f32 0.0, %v961
    %963 = vmatmul.f32.gmra.mxu0 %v516
    %v964 = vpop.f32.mrf.mxu0
    %v965 = vadd.f32 0.0, %v964
    %966 = vmatmul.f32.gmra.mxu0 %v519
    %v967 = vpop.f32.mrf.mxu0
    %v968 = vadd.f32 0.0, %v967
    %969 = vmatmul.f32.gmra.mxu0 %v522
    %v970 = vpop.f32.mrf.mxu0
    %v971 = vadd.f32 0.0, %v970
    %972 = vmatmul.f32.gmra.mxu0 %v525
    %v973 = vpop.f32.mrf.mxu0
    %v974 = vadd.f32 0.0, %v973
    %975 = vmatmul.f32.gmra.mxu0 %v528
    %v976 = vpop.f32.mrf.mxu0
    %v977 = vadd.f32 0.0, %v976
    %978 = vmatmul.f32.gmra.mxu0 %v531
    %v979 = vpop.f32.mrf.mxu0
    %v980 = vadd.f32 0.0, %v979
    %981 = vmatmul.f32.gmra.mxu0 %v534
    %v982 = vpop.f32.mrf.mxu0
    %v983 = vadd.f32 0.0, %v982
    %984 = vmatmul.f32.gmra.mxu0 %v537
    %v985 = vpop.f32.mrf.mxu0
    %v986 = vadd.f32 0.0, %v985
    %987 = vmatmul.f32.gmra.mxu0 %v540
    %v988 = vpop.f32.mrf.mxu0
    %v989 = vadd.f32 0.0, %v988
    %990 = vmatmul.f32.gmra.mxu0 %v543
    %v991 = vpop.f32.mrf.mxu0
    %v992 = vadd.f32 0.0, %v991
    %993 = vmatmul.f32.gmra.mxu0 %v546
    %v994 = vpop.f32.mrf.mxu0
    %v995 = vadd.f32 0.0, %v994
    %996 = vmatmul.f32.gmra.mxu0 %v549
    %v997 = vpop.f32.mrf.mxu0
    %v998 = vadd.f32 0.0, %v997
    %999 = vmatmul.f32.gmra.mxu0 %v552
    %v1000 = vpop.f32.mrf.mxu0
    %v1001 = vadd.f32 0.0, %v1000
    %1002 = vmatmul.f32.gmra.mxu0 %v555
    %v1003 = vpop.f32.mrf.mxu0
    %v1004 = vadd.f32 0.0, %v1003
    %1005 = vmatmul.f32.gmra.mxu0 %v558
    %v1006 = vpop.f32.mrf.mxu0
    %v1007 = vadd.f32 0.0, %v1006
    %1008 = vmatmul.f32.gmra.mxu0 %v561
    %v1009 = vpop.f32.mrf.mxu0
    %v1010 = vadd.f32 0.0, %v1009
    %1011 = vmatmul.f32.gmra.mxu0 %v564
    %v1012 = vpop.f32.mrf.mxu0
    %v1013 = vadd.f32 0.0, %v1012
    %1014 = vmatmul.f32.gmra.mxu0 %v567
    %v1015 = vpop.f32.mrf.mxu0
    %v1016 = vadd.f32 0.0, %v1015
    %1017 = vmatmul.f32.gmra.mxu0 %v570
    %v1018 = vpop.f32.mrf.mxu0
    %v1019 = vadd.f32 0.0, %v1018
    %1020 = vmatmul.f32.gmra.mxu0 %v573
    %v1021 = vpop.f32.mrf.mxu0
    %v1022 = vadd.f32 0.0, %v1021
    %1023 = vmatmul.f32.gmra.mxu0 %v576
    %v1024 = vpop.f32.mrf.mxu0
    %v1025 = vadd.f32 0.0, %v1024
    %1026 = vmatmul.f32.gmra.mxu0 %v579
    %v1027 = vpop.f32.mrf.mxu0
    %v1028 = vadd.f32 0.0, %v1027
    %1029 = vmatmul.f32.gmra.mxu0 %v582
    %v1030 = vpop.f32.mrf.mxu0
    %v1031 = vadd.f32 0.0, %v1030
    %1032 = vmatmul.f32.gmra.mxu0 %v585
    %v1033 = vpop.f32.mrf.mxu0
    %v1034 = vadd.f32 0.0, %v1033
    %1035 = vmatmul.f32.gmra.mxu0 %v588
    %v1036 = vpop.f32.mrf.mxu0
    %v1037 = vadd.f32 0.0, %v1036
    %1038 = vmatmul.f32.gmra.mxu0 %v591
    %v1039 = vpop.f32.mrf.mxu0
    %v1040 = vadd.f32 0.0, %v1039
    %1041 = vmatmul.f32.gmra.mxu0 %v594
    %v1042 = vpop.f32.mrf.mxu0
    %v1043 = vadd.f32 0.0, %v1042
    %1044 = vmatmul.f32.gmra.mxu0 %v597
    %v1045 = vpop.f32.mrf.mxu0
    %v1046 = vadd.f32 0.0, %v1045
    %1047 = vmatmul.f32.gmra.mxu0 %v600
    %v1048 = vpop.f32.mrf.mxu0
    %v1049 = vadd.f32 0.0, %v1048
    %1050 = vmatmul.f32.gmra.mxu0 %v603
    %v1051 = vpop.f32.mrf.mxu0
    %v1052 = vadd.f32 0.0, %v1051
    %1053 = vmatmul.f32.gmra.mxu0 %v606
    %v1054 = vpop.f32.mrf.mxu0
    %v1055 = vadd.f32 0.0, %v1054
    %1056 = vmatmul.f32.gmra.mxu0 %v609
    %v1057 = vpop.f32.mrf.mxu0
    %v1058 = vadd.f32 0.0, %v1057
    %1059 = vmatmul.f32.gmra.mxu0 %v612
    %v1060 = vpop.f32.mrf.mxu0
    %v1061 = vadd.f32 0.0, %v1060
    %1062 = vmatmul.f32.gmra.mxu0 %v615
    %v1063 = vpop.f32.mrf.mxu0
    %v1064 = vadd.f32 0.0, %v1063
    %1065 = vmatmul.f32.gmra.mxu0 %v618
    %v1066 = vpop.f32.mrf.mxu0
    %v1067 = vadd.f32 0.0, %v1066
    %1068 = vdwg.mxu0
    %v1069 = vld [vmem:[%s2] sm:$0x1]
    %v1070 = vld [vmem:[%s3] sm:$0x1]
    %v1071 = vadd.f32 %v638, %v641
    %v1072 = vadd.f32 %v1071, %v644
    %v1073 = vadd.f32 %v1072, %v647
    %v1074 = vadd.f32 %v1073, %v650
    %v1075 = vadd.f32 %v1074, %v653
    %v1076 = vadd.f32 %v1075, %v656
    %v1077 = vadd.f32 %v1076, %v659
    %v1078 = vadd.f32 %v1077, %v662
    %v1079 = vadd.f32 %v1078, %v665
    %v1080 = vadd.f32 %v1079, %v668
    %v1081 = vadd.f32 %v1080, %v671
    %v1082 = vadd.f32 %v1081, %v674
    %v1083 = vadd.f32 %v1082, %v677
    %v1084 = vadd.f32 %v1083, %v680
    %v1085 = vadd.f32 %v1084, %v683
    %v1086 = vadd.f32 %v1085, %v686
    %v1087 = vadd.f32 %v1086, %v689
    %v1088 = vadd.f32 %v1087, %v692
    %v1089 = vadd.f32 %v1088, %v695
    %v1090 = vadd.f32 %v1089, %v698
    %v1091 = vadd.f32 %v1090, %v701
    %v1092 = vadd.f32 %v1091, %v704
    %v1093 = vadd.f32 %v1092, %v707
    %v1094 = vadd.f32 %v1093, %v710
    %v1095 = vadd.f32 %v1094, %v713
    %v1096 = vadd.f32 %v1095, %v716
    %v1097 = vadd.f32 %v1096, %v719
    %v1098 = vadd.f32 %v1097, %v722
    %v1099 = vadd.f32 %v1098, %v725
    %v1100 = vadd.f32 %v1099, %v728
    %v1101 = vadd.f32 %v1100, %v731
    %v1102 = vadd.f32 %v1101, %v734
    %v1103 = vadd.f32 %v1102, %v737
    %v1104 = vadd.f32 %v1103, %v740
    %v1105 = vadd.f32 %v1104, %v743
    %v1106 = vadd.f32 %v1105, %v746
    %v1107 = vadd.f32 %v1106, %v749
    %v1108 = vadd.f32 %v1107, %v752
    %v1109 = vadd.f32 %v1108, %v755
    %v1110 = vadd.f32 %v1109, %v758
    %v1111 = vadd.f32 %v1110, %v761
    %v1112 = vadd.f32 %v1111, %v764
    %v1113 = vadd.f32 %v1112, %v767
    %v1114 = vadd.f32 %v1113, %v770
    %v1115 = vadd.f32 %v1114, %v773
    %v1116 = vadd.f32 %v1115, %v776
    %v1117 = vadd.f32 %v1116, %v779
    %v1118 = vadd.f32 %v1117, %v782
    %v1119 = vadd.f32 %v1118, %v785
    %v1120 = vadd.f32 %v1119, %v788
    %v1121 = vadd.f32 %v1120, %v791
    %v1122 = vadd.f32 %v1121, %v794
    %v1123 = vadd.f32 %v1122, %v797
    %v1124 = vadd.f32 %v1123, %v800
    %v1125 = vadd.f32 %v1124, %v803
    %v1126 = vadd.f32 %v1125, %v806
    %v1127 = vadd.f32 %v1126, %v809
    %v1128 = vadd.f32 %v1127, %v812
    %v1129 = vadd.f32 %v1128, %v815
    %v1130 = vadd.f32 %v1129, %v818
    %v1131 = vadd.f32 %v1130, %v821
    %v1132 = vadd.f32 %v1131, %v824
    %v1133 = vadd.f32 %v1132, %v827
    %v1134 = vadd.f32 %v1133, %v830
    %v1135 = vadd.f32 %v1134, %v833
    %v1136 = vadd.f32 %v1135, %v836
    %v1137 = vadd.f32 %v1136, %v839
    %v1138 = vadd.f32 %v1137, %v842
    %v1139 = vadd.f32 %v1138, %v845
    %v1140 = vadd.f32 %v1139, %v848
    %v1141 = vadd.f32 %v1140, %v851
    %v1142 = vadd.f32 %v1141, %v854
    %v1143 = vadd.f32 %v1142, %v857
    %v1144 = vadd.f32 %v1143, %v860
    %v1145 = vadd.f32 %v1144, %v863
    %v1146 = vadd.f32 %v1145, %v866
    %v1147 = vadd.f32 %v1146, %v869
    %v1148 = vadd.f32 %v1147, %v872
    %v1149 = vadd.f32 %v1148, %v875
    %v1150 = vadd.f32 %v1149, %v878
    %v1151 = vadd.f32 %v1150, %v881
    %v1152 = vadd.f32 %v1151, %v884
    %v1153 = vadd.f32 %v1152, %v887
    %v1154 = vadd.f32 %v1153, %v890
    %v1155 = vadd.f32 %v1154, %v893
    %v1156 = vadd.f32 %v1155, %v896
    %v1157 = vadd.f32 %v1156, %v899
    %v1158 = vadd.f32 %v1157, %v902
    %v1159 = vadd.f32 %v1158, %v905
    %v1160 = vadd.f32 %v1159, %v908
    %v1161 = vadd.f32 %v1160, %v911
    %v1162 = vadd.f32 %v1161, %v914
    %v1163 = vadd.f32 %v1162, %v917
    %v1164 = vadd.f32 %v1163, %v920
    %v1165 = vadd.f32 %v1164, %v923
    %v1166 = vadd.f32 %v1165, %v926
    %v1167 = vadd.f32 %v1166, %v929
    %v1168 = vadd.f32 %v1167, %v932
    %v1169 = vadd.f32 %v1168, %v935
    %v1170 = vadd.f32 %v1169, %v938
    %v1171 = vadd.f32 %v1170, %v941
    %v1172 = vadd.f32 %v1171, %v944
    %v1173 = vadd.f32 %v1172, %v947
    %v1174 = vadd.f32 %v1173, %v950
    %v1175 = vadd.f32 %v1174, %v953
    %v1176 = vadd.f32 %v1175, %v956
    %v1177 = vadd.f32 %v1176, %v959
    %v1178 = vadd.f32 %v1177, %v962
    %v1179 = vadd.f32 %v1178, %v965
    %v1180 = vadd.f32 %v1179, %v968
    %v1181 = vadd.f32 %v1180, %v971
    %v1182 = vadd.f32 %v1181, %v974
    %v1183 = vadd.f32 %v1182, %v977
    %v1184 = vadd.f32 %v1183, %v980
    %v1185 = vadd.f32 %v1184, %v983
    %v1186 = vadd.f32 %v1185, %v986
    %v1187 = vadd.f32 %v1186, %v989
    %v1188 = vadd.f32 %v1187, %v992
    %v1189 = vadd.f32 %v1188, %v995
    %v1190 = vadd.f32 %v1189, %v998
    %v1191 = vadd.f32 %v1190, %v1001
    %v1192 = vadd.f32 %v1191, %v1004
    %v1193 = vadd.f32 %v1192, %v1007
    %v1194 = vadd.f32 %v1193, %v1010
    %v1195 = vadd.f32 %v1194, %v1013
    %v1196 = vadd.f32 %v1195, %v1016
    %v1197 = vadd.f32 %v1196, %v1019
    %v1198 = vadd.f32 %v1197, %v1022
    %v1199 = vadd.f32 %v1198, %v1025
    %v1200 = vadd.f32 %v1199, %v1028
    %v1201 = vadd.f32 %v1200, %v1031
    %v1202 = vadd.f32 %v1201, %v1034
    %v1203 = vadd.f32 %v1202, %v1037
    %v1204 = vadd.f32 %v1203, %v1040
    %v1205 = vadd.f32 %v1204, %v1043
    %v1206 = vadd.f32 %v1205, %v1046
    %v1207 = vadd.f32 %v1206, %v1049
    %v1208 = vadd.f32 %v1207, %v1052
    %v1209 = vadd.f32 %v1208, %v1055
    %v1210 = vadd.f32 %v1209, %v1058
    %v1211 = vadd.f32 %v1210, %v1061
    %v1212 = vadd.f32 %v1211, %v1064
    %v1213 = vadd.f32 %v1212, %v1067
    %v1214 = vrot.slane %v1213, 4
    %v1215 = vadd.f32 %v1213, %v1214
    %v1216 = vrot.slane %v1215, 2
    %v1217 = vadd.f32 %v1215, %v1216
    %v1218 = vrot.slane %v1217, 1
    %v1219 = vadd.f32 %v1217, %v1218
    %v1220 = vmul.f32 %v638, %v638
    %v1221 = vmul.f32 %v641, %v641
    %v1222 = vmul.f32 %v644, %v644
    %v1223 = vmul.f32 %v647, %v647
    %v1224 = vmul.f32 %v650, %v650
    %v1225 = vmul.f32 %v653, %v653
    %v1226 = vmul.f32 %v656, %v656
    %v1227 = vmul.f32 %v659, %v659
    %v1228 = vmul.f32 %v662, %v662
    %v1229 = vmul.f32 %v665, %v665
    %v1230 = vmul.f32 %v668, %v668
    %v1231 = vmul.f32 %v671, %v671
    %v1232 = vmul.f32 %v674, %v674
    %v1233 = vmul.f32 %v677, %v677
    %v1234 = vmul.f32 %v680, %v680
    %v1235 = vmul.f32 %v683, %v683
    %v1236 = vmul.f32 %v686, %v686
    %v1237 = vmul.f32 %v689, %v689
    %v1238 = vmul.f32 %v692, %v692
    %v1239 = vmul.f32 %v695, %v695
    %v1240 = vmul.f32 %v698, %v698
    %v1241 = vmul.f32 %v701, %v701
    %v1242 = vmul.f32 %v704, %v704
    %v1243 = vmul.f32 %v707, %v707
    %v1244 = vmul.f32 %v710, %v710
    %v1245 = vmul.f32 %v713, %v713
    %v1246 = vmul.f32 %v716, %v716
    %v1247 = vmul.f32 %v719, %v719
    %v1248 = vmul.f32 %v722, %v722
    %v1249 = vmul.f32 %v725, %v725
    %v1250 = vmul.f32 %v728, %v728
    %v1251 = vmul.f32 %v731, %v731
    %v1252 = vmul.f32 %v734, %v734
    %v1253 = vmul.f32 %v737, %v737
    %v1254 = vmul.f32 %v740, %v740
    %v1255 = vmul.f32 %v743, %v743
    %v1256 = vmul.f32 %v746, %v746
    %v1257 = vmul.f32 %v749, %v749
    %v1258 = vmul.f32 %v752, %v752
    %v1259 = vmul.f32 %v755, %v755
    %v1260 = vmul.f32 %v758, %v758
    %v1261 = vmul.f32 %v761, %v761
    %v1262 = vmul.f32 %v764, %v764
    %v1263 = vmul.f32 %v767, %v767
    %v1264 = vmul.f32 %v770, %v770
    %v1265 = vmul.f32 %v773, %v773
    %v1266 = vmul.f32 %v776, %v776
    %v1267 = vmul.f32 %v779, %v779
    %v1268 = vmul.f32 %v782, %v782
    %v1269 = vmul.f32 %v785, %v785
    %v1270 = vmul.f32 %v788, %v788
    %v1271 = vmul.f32 %v791, %v791
    %v1272 = vmul.f32 %v794, %v794
    %v1273 = vmul.f32 %v797, %v797
    %v1274 = vmul.f32 %v800, %v800
    %v1275 = vmul.f32 %v803, %v803
    %v1276 = vmul.f32 %v806, %v806
    %v1277 = vmul.f32 %v809, %v809
    %v1278 = vmul.f32 %v812, %v812
    %v1279 = vmul.f32 %v815, %v815
    %v1280 = vmul.f32 %v818, %v818
    %v1281 = vmul.f32 %v821, %v821
    %v1282 = vmul.f32 %v824, %v824
    %v1283 = vmul.f32 %v827, %v827
    %v1284 = vmul.f32 %v830, %v830
    %v1285 = vmul.f32 %v833, %v833
    %v1286 = vmul.f32 %v836, %v836
    %v1287 = vmul.f32 %v839, %v839
    %v1288 = vmul.f32 %v842, %v842
    %v1289 = vmul.f32 %v845, %v845
    %v1290 = vmul.f32 %v848, %v848
    %v1291 = vmul.f32 %v851, %v851
    %v1292 = vmul.f32 %v854, %v854
    %v1293 = vmul.f32 %v857, %v857
    %v1294 = vmul.f32 %v860, %v860
    %v1295 = vmul.f32 %v863, %v863
    %v1296 = vmul.f32 %v866, %v866
    %v1297 = vmul.f32 %v869, %v869
    %v1298 = vmul.f32 %v872, %v872
    %v1299 = vmul.f32 %v875, %v875
    %v1300 = vmul.f32 %v878, %v878
    %v1301 = vmul.f32 %v881, %v881
    %v1302 = vmul.f32 %v884, %v884
    %v1303 = vmul.f32 %v887, %v887
    %v1304 = vmul.f32 %v890, %v890
    %v1305 = vmul.f32 %v893, %v893
    %v1306 = vmul.f32 %v896, %v896
    %v1307 = vmul.f32 %v899, %v899
    %v1308 = vmul.f32 %v902, %v902
    %v1309 = vmul.f32 %v905, %v905
    %v1310 = vmul.f32 %v908, %v908
    %v1311 = vmul.f32 %v911, %v911
    %v1312 = vmul.f32 %v914, %v914
    %v1313 = vmul.f32 %v917, %v917
    %v1314 = vmul.f32 %v920, %v920
    %v1315 = vmul.f32 %v923, %v923
    %v1316 = vmul.f32 %v926, %v926
    %v1317 = vmul.f32 %v929, %v929
    %v1318 = vmul.f32 %v932, %v932
    %v1319 = vmul.f32 %v935, %v935
    %v1320 = vmul.f32 %v938, %v938
    %v1321 = vmul.f32 %v941, %v941
    %v1322 = vmul.f32 %v944, %v944
    %v1323 = vmul.f32 %v947, %v947
    %v1324 = vmul.f32 %v950, %v950
    %v1325 = vmul.f32 %v953, %v953
    %v1326 = vmul.f32 %v956, %v956
    %v1327 = vmul.f32 %v959, %v959
    %v1328 = vmul.f32 %v962, %v962
    %v1329 = vmul.f32 %v965, %v965
    %v1330 = vmul.f32 %v968, %v968
    %v1331 = vmul.f32 %v971, %v971
    %v1332 = vmul.f32 %v974, %v974
    %v1333 = vmul.f32 %v977, %v977
    %v1334 = vmul.f32 %v980, %v980
    %v1335 = vmul.f32 %v983, %v983
    %v1336 = vmul.f32 %v986, %v986
    %v1337 = vmul.f32 %v989, %v989
    %v1338 = vmul.f32 %v992, %v992
    %v1339 = vmul.f32 %v995, %v995
    %v1340 = vmul.f32 %v998, %v998
    %v1341 = vmul.f32 %v1001, %v1001
    %v1342 = vmul.f32 %v1004, %v1004
    %v1343 = vmul.f32 %v1007, %v1007
    %v1344 = vmul.f32 %v1010, %v1010
    %v1345 = vmul.f32 %v1013, %v1013
    %v1346 = vmul.f32 %v1016, %v1016
    %v1347 = vmul.f32 %v1019, %v1019
    %v1348 = vmul.f32 %v1022, %v1022
    %v1349 = vmul.f32 %v1025, %v1025
    %v1350 = vmul.f32 %v1028, %v1028
    %v1351 = vmul.f32 %v1031, %v1031
    %v1352 = vmul.f32 %v1034, %v1034
    %v1353 = vmul.f32 %v1037, %v1037
    %v1354 = vmul.f32 %v1040, %v1040
    %v1355 = vmul.f32 %v1043, %v1043
    %v1356 = vmul.f32 %v1046, %v1046
    %v1357 = vmul.f32 %v1049, %v1049
    %v1358 = vmul.f32 %v1052, %v1052
    %v1359 = vmul.f32 %v1055, %v1055
    %v1360 = vmul.f32 %v1058, %v1058
    %v1361 = vmul.f32 %v1061, %v1061
    %v1362 = vmul.f32 %v1064, %v1064
    %v1363 = vmul.f32 %v1067, %v1067
    %v1364 = vadd.f32 %v1220, %v1221
    %v1365 = vadd.f32 %v1364, %v1222
    %v1366 = vadd.f32 %v1365, %v1223
    %v1367 = vadd.f32 %v1366, %v1224
    %v1368 = vadd.f32 %v1367, %v1225
    %v1369 = vadd.f32 %v1368, %v1226
    %v1370 = vadd.f32 %v1369, %v1227
    %v1371 = vadd.f32 %v1370, %v1228
    %v1372 = vadd.f32 %v1371, %v1229
    %v1373 = vadd.f32 %v1372, %v1230
    %v1374 = vadd.f32 %v1373, %v1231
    %v1375 = vadd.f32 %v1374, %v1232
    %v1376 = vadd.f32 %v1375, %v1233
    %v1377 = vadd.f32 %v1376, %v1234
    %v1378 = vadd.f32 %v1377, %v1235
    %v1379 = vadd.f32 %v1378, %v1236
    %v1380 = vadd.f32 %v1379, %v1237
    %v1381 = vadd.f32 %v1380, %v1238
    %v1382 = vadd.f32 %v1381, %v1239
    %v1383 = vadd.f32 %v1382, %v1240
    %v1384 = vadd.f32 %v1383, %v1241
    %v1385 = vadd.f32 %v1384, %v1242
    %v1386 = vadd.f32 %v1385, %v1243
    %v1387 = vadd.f32 %v1386, %v1244
    %v1388 = vadd.f32 %v1387, %v1245
    %v1389 = vadd.f32 %v1388, %v1246
    %v1390 = vadd.f32 %v1389, %v1247
    %v1391 = vadd.f32 %v1390, %v1248
    %v1392 = vadd.f32 %v1391, %v1249
    %v1393 = vadd.f32 %v1392, %v1250
    %v1394 = vadd.f32 %v1393, %v1251
    %v1395 = vadd.f32 %v1394, %v1252
    %v1396 = vadd.f32 %v1395, %v1253
    %v1397 = vadd.f32 %v1396, %v1254
    %v1398 = vadd.f32 %v1397, %v1255
    %v1399 = vadd.f32 %v1398, %v1256
    %v1400 = vadd.f32 %v1399, %v1257
    %v1401 = vadd.f32 %v1400, %v1258
    %v1402 = vadd.f32 %v1401, %v1259
    %v1403 = vadd.f32 %v1402, %v1260
    %v1404 = vadd.f32 %v1403, %v1261
    %v1405 = vadd.f32 %v1404, %v1262
    %v1406 = vadd.f32 %v1405, %v1263
    %v1407 = vadd.f32 %v1406, %v1264
    %v1408 = vadd.f32 %v1407, %v1265
    %v1409 = vadd.f32 %v1408, %v1266
    %v1410 = vadd.f32 %v1409, %v1267
    %v1411 = vadd.f32 %v1410, %v1268
    %v1412 = vadd.f32 %v1411, %v1269
    %v1413 = vadd.f32 %v1412, %v1270
    %v1414 = vadd.f32 %v1413, %v1271
    %v1415 = vadd.f32 %v1414, %v1272
    %v1416 = vadd.f32 %v1415, %v1273
    %v1417 = vadd.f32 %v1416, %v1274
    %v1418 = vadd.f32 %v1417, %v1275
    %v1419 = vadd.f32 %v1418, %v1276
    %v1420 = vadd.f32 %v1419, %v1277
    %v1421 = vadd.f32 %v1420, %v1278
    %v1422 = vadd.f32 %v1421, %v1279
    %v1423 = vadd.f32 %v1422, %v1280
    %v1424 = vadd.f32 %v1423, %v1281
    %v1425 = vadd.f32 %v1424, %v1282
    %v1426 = vadd.f32 %v1425, %v1283
    %v1427 = vadd.f32 %v1426, %v1284
    %v1428 = vadd.f32 %v1427, %v1285
    %v1429 = vadd.f32 %v1428, %v1286
    %v1430 = vadd.f32 %v1429, %v1287
    %v1431 = vadd.f32 %v1430, %v1288
    %v1432 = vadd.f32 %v1431, %v1289
    %v1433 = vadd.f32 %v1432, %v1290
    %v1434 = vadd.f32 %v1433, %v1291
    %v1435 = vadd.f32 %v1434, %v1292
    %v1436 = vadd.f32 %v1435, %v1293
    %v1437 = vadd.f32 %v1436, %v1294
    %v1438 = vadd.f32 %v1437, %v1295
    %v1439 = vadd.f32 %v1438, %v1296
    %v1440 = vadd.f32 %v1439, %v1297
    %v1441 = vadd.f32 %v1440, %v1298
    %v1442 = vadd.f32 %v1441, %v1299
    %v1443 = vadd.f32 %v1442, %v1300
    %v1444 = vadd.f32 %v1443, %v1301
    %v1445 = vadd.f32 %v1444, %v1302
    %v1446 = vadd.f32 %v1445, %v1303
    %v1447 = vadd.f32 %v1446, %v1304
    %v1448 = vadd.f32 %v1447, %v1305
    %v1449 = vadd.f32 %v1448, %v1306
    %v1450 = vadd.f32 %v1449, %v1307
    %v1451 = vadd.f32 %v1450, %v1308
    %v1452 = vadd.f32 %v1451, %v1309
    %v1453 = vadd.f32 %v1452, %v1310
    %v1454 = vadd.f32 %v1453, %v1311
    %v1455 = vadd.f32 %v1454, %v1312
    %v1456 = vadd.f32 %v1455, %v1313
    %v1457 = vadd.f32 %v1456, %v1314
    %v1458 = vadd.f32 %v1457, %v1315
    %v1459 = vadd.f32 %v1458, %v1316
    %v1460 = vadd.f32 %v1459, %v1317
    %v1461 = vadd.f32 %v1460, %v1318
    %v1462 = vadd.f32 %v1461, %v1319
    %v1463 = vadd.f32 %v1462, %v1320
    %v1464 = vadd.f32 %v1463, %v1321
    %v1465 = vadd.f32 %v1464, %v1322
    %v1466 = vadd.f32 %v1465, %v1323
    %v1467 = vadd.f32 %v1466, %v1324
    %v1468 = vadd.f32 %v1467, %v1325
    %v1469 = vadd.f32 %v1468, %v1326
    %v1470 = vadd.f32 %v1469, %v1327
    %v1471 = vadd.f32 %v1470, %v1328
    %v1472 = vadd.f32 %v1471, %v1329
    %v1473 = vadd.f32 %v1472, %v1330
    %v1474 = vadd.f32 %v1473, %v1331
    %v1475 = vadd.f32 %v1474, %v1332
    %v1476 = vadd.f32 %v1475, %v1333
    %v1477 = vadd.f32 %v1476, %v1334
    %v1478 = vadd.f32 %v1477, %v1335
    %v1479 = vadd.f32 %v1478, %v1336
    %v1480 = vadd.f32 %v1479, %v1337
    %v1481 = vadd.f32 %v1480, %v1338
    %v1482 = vadd.f32 %v1481, %v1339
    %v1483 = vadd.f32 %v1482, %v1340
    %v1484 = vadd.f32 %v1483, %v1341
    %v1485 = vadd.f32 %v1484, %v1342
    %v1486 = vadd.f32 %v1485, %v1343
    %v1487 = vadd.f32 %v1486, %v1344
    %v1488 = vadd.f32 %v1487, %v1345
    %v1489 = vadd.f32 %v1488, %v1346
    %v1490 = vadd.f32 %v1489, %v1347
    %v1491 = vadd.f32 %v1490, %v1348
    %v1492 = vadd.f32 %v1491, %v1349
    %v1493 = vadd.f32 %v1492, %v1350
    %v1494 = vadd.f32 %v1493, %v1351
    %v1495 = vadd.f32 %v1494, %v1352
    %v1496 = vadd.f32 %v1495, %v1353
    %v1497 = vadd.f32 %v1496, %v1354
    %v1498 = vadd.f32 %v1497, %v1355
    %v1499 = vadd.f32 %v1498, %v1356
    %v1500 = vadd.f32 %v1499, %v1357
    %v1501 = vadd.f32 %v1500, %v1358
    %v1502 = vadd.f32 %v1501, %v1359
    %v1503 = vadd.f32 %v1502, %v1360
    %v1504 = vadd.f32 %v1503, %v1361
    %v1505 = vadd.f32 %v1504, %v1362
    %v1506 = vadd.f32 %v1505, %v1363
    %v1507 = vrot.slane %v1506, 4
    %v1508 = vadd.f32 %v1506, %v1507
    %v1509 = vrot.slane %v1508, 2
    %v1510 = vadd.f32 %v1508, %v1509
    %v1511 = vrot.slane %v1510, 1
    %v1512 = vadd.f32 %v1510, %v1511
    %v1513 = vmul.f32 %v1219, 0.00086805556
    %v1514 = vmul.f32 %v1512, 0.00086805556
    %v1515 = vmul.f32 %v1513, %v1513
    %v1516 = vsub.f32 %v1514, %v1515
    %v1517 = vmax.f32 %v1516, 0.0
    %v1518 = vadd.f32 %v1517, 1e-05
    %v1519 = vrsqrt.pop %v1518
    %v1520 = vmul.f32 %v1519, %v1518
    %v1521 = vmul.f32 %v1520, %v1519
    %v1522 = vmul.f32 0.5, %v1521
    %v1523 = vsub.f32 1.5, %v1522
    %v1524 = vmul.f32 %v1519, %v1523
    %vm1525 = vweird.f32 %v1518
    %vm1526 = vweird.f32 %v1519
    %vm1527 = vmor %vm1525, %vm1526
    %v1528 = vsel %vm1527, %v1519, %v1524
    %v1529 = vmul.f32 %v1069, %v1528
    %v1530 = vmul.f32 %v1513, %v1529
    %v1531 = vsub.f32 %v1070, %v1530
    %v1533 = vperm.slane %v1529, 0
    %v1535 = vmul.f32 %v638, %v1533
    %v1536 = vmul.f32 %v641, %v1533
    %v1537 = vmul.f32 %v644, %v1533
    %v1538 = vmul.f32 %v647, %v1533
    %v1539 = vmul.f32 %v650, %v1533
    %v1540 = vmul.f32 %v653, %v1533
    %v1541 = vmul.f32 %v656, %v1533
    %v1542 = vmul.f32 %v659, %v1533
    %v1543 = vmul.f32 %v662, %v1533
    %v1544 = vmul.f32 %v665, %v1533
    %v1545 = vmul.f32 %v668, %v1533
    %v1546 = vmul.f32 %v671, %v1533
    %v1547 = vmul.f32 %v674, %v1533
    %v1548 = vmul.f32 %v677, %v1533
    %v1549 = vmul.f32 %v680, %v1533
    %v1550 = vmul.f32 %v683, %v1533
    %v1551 = vmul.f32 %v686, %v1533
    %v1552 = vmul.f32 %v689, %v1533
    %v1553 = vmul.f32 %v692, %v1533
    %v1554 = vmul.f32 %v695, %v1533
    %v1555 = vmul.f32 %v698, %v1533
    %v1556 = vmul.f32 %v701, %v1533
    %v1557 = vmul.f32 %v704, %v1533
    %v1558 = vmul.f32 %v707, %v1533
    %v1559 = vmul.f32 %v710, %v1533
    %v1560 = vmul.f32 %v713, %v1533
    %v1561 = vmul.f32 %v716, %v1533
    %v1562 = vmul.f32 %v719, %v1533
    %v1563 = vmul.f32 %v722, %v1533
    %v1564 = vmul.f32 %v725, %v1533
    %v1565 = vmul.f32 %v728, %v1533
    %v1566 = vmul.f32 %v731, %v1533
    %v1567 = vmul.f32 %v734, %v1533
    %v1568 = vmul.f32 %v737, %v1533
    %v1569 = vmul.f32 %v740, %v1533
    %v1570 = vmul.f32 %v743, %v1533
    %v1571 = vmul.f32 %v746, %v1533
    %v1572 = vmul.f32 %v749, %v1533
    %v1573 = vmul.f32 %v752, %v1533
    %v1574 = vmul.f32 %v755, %v1533
    %v1575 = vmul.f32 %v758, %v1533
    %v1576 = vmul.f32 %v761, %v1533
    %v1577 = vmul.f32 %v764, %v1533
    %v1578 = vmul.f32 %v767, %v1533
    %v1579 = vmul.f32 %v770, %v1533
    %v1580 = vmul.f32 %v773, %v1533
    %v1581 = vmul.f32 %v776, %v1533
    %v1582 = vmul.f32 %v779, %v1533
    %v1583 = vmul.f32 %v782, %v1533
    %v1584 = vmul.f32 %v785, %v1533
    %v1585 = vmul.f32 %v788, %v1533
    %v1586 = vmul.f32 %v791, %v1533
    %v1587 = vmul.f32 %v794, %v1533
    %v1588 = vmul.f32 %v797, %v1533
    %v1589 = vmul.f32 %v800, %v1533
    %v1590 = vmul.f32 %v803, %v1533
    %v1591 = vmul.f32 %v806, %v1533
    %v1592 = vmul.f32 %v809, %v1533
    %v1593 = vmul.f32 %v812, %v1533
    %v1594 = vmul.f32 %v815, %v1533
    %v1595 = vmul.f32 %v818, %v1533
    %v1596 = vmul.f32 %v821, %v1533
    %v1597 = vmul.f32 %v824, %v1533
    %v1598 = vmul.f32 %v827, %v1533
    %v1599 = vmul.f32 %v830, %v1533
    %v1600 = vmul.f32 %v833, %v1533
    %v1601 = vmul.f32 %v836, %v1533
    %v1602 = vmul.f32 %v839, %v1533
    %v1603 = vmul.f32 %v842, %v1533
    %v1604 = vmul.f32 %v845, %v1533
    %v1605 = vmul.f32 %v848, %v1533
    %v1606 = vmul.f32 %v851, %v1533
    %v1607 = vmul.f32 %v854, %v1533
    %v1608 = vmul.f32 %v857, %v1533
    %v1609 = vmul.f32 %v860, %v1533
    %v1610 = vmul.f32 %v863, %v1533
    %v1611 = vmul.f32 %v866, %v1533
    %v1612 = vmul.f32 %v869, %v1533
    %v1613 = vmul.f32 %v872, %v1533
    %v1614 = vmul.f32 %v875, %v1533
    %v1615 = vmul.f32 %v878, %v1533
    %v1616 = vmul.f32 %v881, %v1533
    %v1617 = vmul.f32 %v884, %v1533
    %v1618 = vmul.f32 %v887, %v1533
    %v1619 = vmul.f32 %v890, %v1533
    %v1620 = vmul.f32 %v893, %v1533
    %v1621 = vmul.f32 %v896, %v1533
    %v1622 = vmul.f32 %v899, %v1533
    %v1623 = vmul.f32 %v902, %v1533
    %v1624 = vmul.f32 %v905, %v1533
    %v1625 = vmul.f32 %v908, %v1533
    %v1626 = vmul.f32 %v911, %v1533
    %v1627 = vmul.f32 %v914, %v1533
    %v1628 = vmul.f32 %v917, %v1533
    %v1629 = vmul.f32 %v920, %v1533
    %v1630 = vmul.f32 %v923, %v1533
    %v1631 = vmul.f32 %v926, %v1533
    %v1632 = vmul.f32 %v929, %v1533
    %v1633 = vmul.f32 %v932, %v1533
    %v1634 = vmul.f32 %v935, %v1533
    %v1635 = vmul.f32 %v938, %v1533
    %v1636 = vmul.f32 %v941, %v1533
    %v1637 = vmul.f32 %v944, %v1533
    %v1638 = vmul.f32 %v947, %v1533
    %v1639 = vmul.f32 %v950, %v1533
    %v1640 = vmul.f32 %v953, %v1533
    %v1641 = vmul.f32 %v956, %v1533
    %v1642 = vmul.f32 %v959, %v1533
    %v1643 = vmul.f32 %v962, %v1533
    %v1644 = vmul.f32 %v965, %v1533
    %v1645 = vmul.f32 %v968, %v1533
    %v1646 = vmul.f32 %v971, %v1533
    %v1647 = vmul.f32 %v974, %v1533
    %v1648 = vmul.f32 %v977, %v1533
    %v1649 = vmul.f32 %v980, %v1533
    %v1650 = vmul.f32 %v983, %v1533
    %v1651 = vmul.f32 %v986, %v1533
    %v1652 = vmul.f32 %v989, %v1533
    %v1653 = vmul.f32 %v992, %v1533
    %v1654 = vmul.f32 %v995, %v1533
    %v1655 = vmul.f32 %v998, %v1533
    %v1656 = vmul.f32 %v1001, %v1533
    %v1657 = vmul.f32 %v1004, %v1533
    %v1658 = vmul.f32 %v1007, %v1533
    %v1659 = vmul.f32 %v1010, %v1533
    %v1660 = vmul.f32 %v1013, %v1533
    %v1661 = vmul.f32 %v1016, %v1533
    %v1662 = vmul.f32 %v1019, %v1533
    %v1663 = vmul.f32 %v1022, %v1533
    %v1664 = vmul.f32 %v1025, %v1533
    %v1665 = vmul.f32 %v1028, %v1533
    %v1666 = vmul.f32 %v1031, %v1533
    %v1667 = vmul.f32 %v1034, %v1533
    %v1668 = vmul.f32 %v1037, %v1533
    %v1669 = vmul.f32 %v1040, %v1533
    %v1670 = vmul.f32 %v1043, %v1533
    %v1671 = vmul.f32 %v1046, %v1533
    %v1672 = vmul.f32 %v1049, %v1533
    %v1673 = vmul.f32 %v1052, %v1533
    %v1674 = vmul.f32 %v1055, %v1533
    %v1675 = vmul.f32 %v1058, %v1533
    %v1676 = vmul.f32 %v1061, %v1533
    %v1677 = vmul.f32 %v1064, %v1533
    %v1678 = vmul.f32 %v1067, %v1533
    %v1680 = vperm.slane %v1531, 0
    %v1682 = vadd.f32 %v1535, %v1680
    %v1683 = vadd.f32 %v1536, %v1680
    %v1684 = vadd.f32 %v1537, %v1680
    %v1685 = vadd.f32 %v1538, %v1680
    %v1686 = vadd.f32 %v1539, %v1680
    %v1687 = vadd.f32 %v1540, %v1680
    %v1688 = vadd.f32 %v1541, %v1680
    %v1689 = vadd.f32 %v1542, %v1680
    %v1690 = vadd.f32 %v1543, %v1680
    %v1691 = vadd.f32 %v1544, %v1680
    %v1692 = vadd.f32 %v1545, %v1680
    %v1693 = vadd.f32 %v1546, %v1680
    %v1694 = vadd.f32 %v1547, %v1680
    %v1695 = vadd.f32 %v1548, %v1680
    %v1696 = vadd.f32 %v1549, %v1680
    %v1697 = vadd.f32 %v1550, %v1680
    %v1698 = vadd.f32 %v1551, %v1680
    %v1699 = vadd.f32 %v1552, %v1680
    %v1700 = vadd.f32 %v1553, %v1680
    %v1701 = vadd.f32 %v1554, %v1680
    %v1702 = vadd.f32 %v1555, %v1680
    %v1703 = vadd.f32 %v1556, %v1680
    %v1704 = vadd.f32 %v1557, %v1680
    %v1705 = vadd.f32 %v1558, %v1680
    %v1706 = vadd.f32 %v1559, %v1680
    %v1707 = vadd.f32 %v1560, %v1680
    %v1708 = vadd.f32 %v1561, %v1680
    %v1709 = vadd.f32 %v1562, %v1680
    %v1710 = vadd.f32 %v1563, %v1680
    %v1711 = vadd.f32 %v1564, %v1680
    %v1712 = vadd.f32 %v1565, %v1680
    %v1713 = vadd.f32 %v1566, %v1680
    %v1714 = vadd.f32 %v1567, %v1680
    %v1715 = vadd.f32 %v1568, %v1680
    %v1716 = vadd.f32 %v1569, %v1680
    %v1717 = vadd.f32 %v1570, %v1680
    %v1718 = vadd.f32 %v1571, %v1680
    %v1719 = vadd.f32 %v1572, %v1680
    %v1720 = vadd.f32 %v1573, %v1680
    %v1721 = vadd.f32 %v1574, %v1680
    %v1722 = vadd.f32 %v1575, %v1680
    %v1723 = vadd.f32 %v1576, %v1680
    %v1724 = vadd.f32 %v1577, %v1680
    %v1725 = vadd.f32 %v1578, %v1680
    %v1726 = vadd.f32 %v1579, %v1680
    %v1727 = vadd.f32 %v1580, %v1680
    %v1728 = vadd.f32 %v1581, %v1680
    %v1729 = vadd.f32 %v1582, %v1680
    %v1730 = vadd.f32 %v1583, %v1680
    %v1731 = vadd.f32 %v1584, %v1680
    %v1732 = vadd.f32 %v1585, %v1680
    %v1733 = vadd.f32 %v1586, %v1680
    %v1734 = vadd.f32 %v1587, %v1680
    %v1735 = vadd.f32 %v1588, %v1680
    %v1736 = vadd.f32 %v1589, %v1680
    %v1737 = vadd.f32 %v1590, %v1680
    %v1738 = vadd.f32 %v1591, %v1680
    %v1739 = vadd.f32 %v1592, %v1680
    %v1740 = vadd.f32 %v1593, %v1680
    %v1741 = vadd.f32 %v1594, %v1680
    %v1742 = vadd.f32 %v1595, %v1680
    %v1743 = vadd.f32 %v1596, %v1680
    %v1744 = vadd.f32 %v1597, %v1680
    %v1745 = vadd.f32 %v1598, %v1680
    %v1746 = vadd.f32 %v1599, %v1680
    %v1747 = vadd.f32 %v1600, %v1680
    %v1748 = vadd.f32 %v1601, %v1680
    %v1749 = vadd.f32 %v1602, %v1680
    %v1750 = vadd.f32 %v1603, %v1680
    %v1751 = vadd.f32 %v1604, %v1680
    %v1752 = vadd.f32 %v1605, %v1680
    %v1753 = vadd.f32 %v1606, %v1680
    %v1754 = vadd.f32 %v1607, %v1680
    %v1755 = vadd.f32 %v1608, %v1680
    %v1756 = vadd.f32 %v1609, %v1680
    %v1757 = vadd.f32 %v1610, %v1680
    %v1758 = vadd.f32 %v1611, %v1680
    %v1759 = vadd.f32 %v1612, %v1680
    %v1760 = vadd.f32 %v1613, %v1680
    %v1761 = vadd.f32 %v1614, %v1680
    %v1762 = vadd.f32 %v1615, %v1680
    %v1763 = vadd.f32 %v1616, %v1680
    %v1764 = vadd.f32 %v1617, %v1680
    %v1765 = vadd.f32 %v1618, %v1680
    %v1766 = vadd.f32 %v1619, %v1680
    %v1767 = vadd.f32 %v1620, %v1680
    %v1768 = vadd.f32 %v1621, %v1680
    %v1769 = vadd.f32 %v1622, %v1680
    %v1770 = vadd.f32 %v1623, %v1680
    %v1771 = vadd.f32 %v1624, %v1680
    %v1772 = vadd.f32 %v1625, %v1680
    %v1773 = vadd.f32 %v1626, %v1680
    %v1774 = vadd.f32 %v1627, %v1680
    %v1775 = vadd.f32 %v1628, %v1680
    %v1776 = vadd.f32 %v1629, %v1680
    %v1777 = vadd.f32 %v1630, %v1680
    %v1778 = vadd.f32 %v1631, %v1680
    %v1779 = vadd.f32 %v1632, %v1680
    %v1780 = vadd.f32 %v1633, %v1680
    %v1781 = vadd.f32 %v1634, %v1680
    %v1782 = vadd.f32 %v1635, %v1680
    %v1783 = vadd.f32 %v1636, %v1680
    %v1784 = vadd.f32 %v1637, %v1680
    %v1785 = vadd.f32 %v1638, %v1680
    %v1786 = vadd.f32 %v1639, %v1680
    %v1787 = vadd.f32 %v1640, %v1680
    %v1788 = vadd.f32 %v1641, %v1680
    %v1789 = vadd.f32 %v1642, %v1680
    %v1790 = vadd.f32 %v1643, %v1680
    %v1791 = vadd.f32 %v1644, %v1680
    %v1792 = vadd.f32 %v1645, %v1680
    %v1793 = vadd.f32 %v1646, %v1680
    %v1794 = vadd.f32 %v1647, %v1680
    %v1795 = vadd.f32 %v1648, %v1680
    %v1796 = vadd.f32 %v1649, %v1680
    %v1797 = vadd.f32 %v1650, %v1680
    %v1798 = vadd.f32 %v1651, %v1680
    %v1799 = vadd.f32 %v1652, %v1680
    %v1800 = vadd.f32 %v1653, %v1680
    %v1801 = vadd.f32 %v1654, %v1680
    %v1802 = vadd.f32 %v1655, %v1680
    %v1803 = vadd.f32 %v1656, %v1680
    %v1804 = vadd.f32 %v1657, %v1680
    %v1805 = vadd.f32 %v1658, %v1680
    %v1806 = vadd.f32 %v1659, %v1680
    %v1807 = vadd.f32 %v1660, %v1680
    %v1808 = vadd.f32 %v1661, %v1680
    %v1809 = vadd.f32 %v1662, %v1680
    %v1810 = vadd.f32 %v1663, %v1680
    %v1811 = vadd.f32 %v1664, %v1680
    %v1812 = vadd.f32 %v1665, %v1680
    %v1813 = vadd.f32 %v1666, %v1680
    %v1814 = vadd.f32 %v1667, %v1680
    %v1815 = vadd.f32 %v1668, %v1680
    %v1816 = vadd.f32 %v1669, %v1680
    %v1817 = vadd.f32 %v1670, %v1680
    %v1818 = vadd.f32 %v1671, %v1680
    %v1819 = vadd.f32 %v1672, %v1680
    %v1820 = vadd.f32 %v1673, %v1680
    %v1821 = vadd.f32 %v1674, %v1680
    %v1822 = vadd.f32 %v1675, %v1680
    %v1823 = vadd.f32 %v1676, %v1680
    %v1824 = vadd.f32 %v1677, %v1680
    %v1825 = vadd.f32 %v1678, %v1680
    %v1826 = vmax.f32 %v1682, 0.0
    %v1827 = vmax.f32 %v1683, 0.0
    %v1828 = vmax.f32 %v1684, 0.0
    %v1829 = vmax.f32 %v1685, 0.0
    %v1830 = vmax.f32 %v1686, 0.0
    %v1831 = vmax.f32 %v1687, 0.0
    %v1832 = vmax.f32 %v1688, 0.0
    %v1833 = vmax.f32 %v1689, 0.0
    %v1834 = vmax.f32 %v1690, 0.0
    %v1835 = vmax.f32 %v1691, 0.0
    %v1836 = vmax.f32 %v1692, 0.0
    %v1837 = vmax.f32 %v1693, 0.0
    %v1838 = vmax.f32 %v1694, 0.0
    %v1839 = vmax.f32 %v1695, 0.0
    %v1840 = vmax.f32 %v1696, 0.0
    %v1841 = vmax.f32 %v1697, 0.0
    %v1842 = vmax.f32 %v1698, 0.0
    %v1843 = vmax.f32 %v1699, 0.0
    %v1844 = vmax.f32 %v1700, 0.0
    %v1845 = vmax.f32 %v1701, 0.0
    %v1846 = vmax.f32 %v1702, 0.0
    %v1847 = vmax.f32 %v1703, 0.0
    %v1848 = vmax.f32 %v1704, 0.0
    %v1849 = vmax.f32 %v1705, 0.0
    %v1850 = vmax.f32 %v1706, 0.0
    %v1851 = vmax.f32 %v1707, 0.0
    %v1852 = vmax.f32 %v1708, 0.0
    %v1853 = vmax.f32 %v1709, 0.0
    %v1854 = vmax.f32 %v1710, 0.0
    %v1855 = vmax.f32 %v1711, 0.0
    %v1856 = vmax.f32 %v1712, 0.0
    %v1857 = vmax.f32 %v1713, 0.0
    %v1858 = vmax.f32 %v1714, 0.0
    %v1859 = vmax.f32 %v1715, 0.0
    %v1860 = vmax.f32 %v1716, 0.0
    %v1861 = vmax.f32 %v1717, 0.0
    %v1862 = vmax.f32 %v1718, 0.0
    %v1863 = vmax.f32 %v1719, 0.0
    %v1864 = vmax.f32 %v1720, 0.0
    %v1865 = vmax.f32 %v1721, 0.0
    %v1866 = vmax.f32 %v1722, 0.0
    %v1867 = vmax.f32 %v1723, 0.0
    %v1868 = vmax.f32 %v1724, 0.0
    %v1869 = vmax.f32 %v1725, 0.0
    %v1870 = vmax.f32 %v1726, 0.0
    %v1871 = vmax.f32 %v1727, 0.0
    %v1872 = vmax.f32 %v1728, 0.0
    %v1873 = vmax.f32 %v1729, 0.0
    %v1874 = vmax.f32 %v1730, 0.0
    %v1875 = vmax.f32 %v1731, 0.0
    %v1876 = vmax.f32 %v1732, 0.0
    %v1877 = vmax.f32 %v1733, 0.0
    %v1878 = vmax.f32 %v1734, 0.0
    %v1879 = vmax.f32 %v1735, 0.0
    %v1880 = vmax.f32 %v1736, 0.0
    %v1881 = vmax.f32 %v1737, 0.0
    %v1882 = vmax.f32 %v1738, 0.0
    %v1883 = vmax.f32 %v1739, 0.0
    %v1884 = vmax.f32 %v1740, 0.0
    %v1885 = vmax.f32 %v1741, 0.0
    %v1886 = vmax.f32 %v1742, 0.0
    %v1887 = vmax.f32 %v1743, 0.0
    %v1888 = vmax.f32 %v1744, 0.0
    %v1889 = vmax.f32 %v1745, 0.0
    %v1890 = vmax.f32 %v1746, 0.0
    %v1891 = vmax.f32 %v1747, 0.0
    %v1892 = vmax.f32 %v1748, 0.0
    %v1893 = vmax.f32 %v1749, 0.0
    %v1894 = vmax.f32 %v1750, 0.0
    %v1895 = vmax.f32 %v1751, 0.0
    %v1896 = vmax.f32 %v1752, 0.0
    %v1897 = vmax.f32 %v1753, 0.0
    %v1898 = vmax.f32 %v1754, 0.0
    %v1899 = vmax.f32 %v1755, 0.0
    %v1900 = vmax.f32 %v1756, 0.0
    %v1901 = vmax.f32 %v1757, 0.0
    %v1902 = vmax.f32 %v1758, 0.0
    %v1903 = vmax.f32 %v1759, 0.0
    %v1904 = vmax.f32 %v1760, 0.0
    %v1905 = vmax.f32 %v1761, 0.0
    %v1906 = vmax.f32 %v1762, 0.0
    %v1907 = vmax.f32 %v1763, 0.0
    %v1908 = vmax.f32 %v1764, 0.0
    %v1909 = vmax.f32 %v1765, 0.0
    %v1910 = vmax.f32 %v1766, 0.0
    %v1911 = vmax.f32 %v1767, 0.0
    %v1912 = vmax.f32 %v1768, 0.0
    %v1913 = vmax.f32 %v1769, 0.0
    %v1914 = vmax.f32 %v1770, 0.0
    %v1915 = vmax.f32 %v1771, 0.0
    %v1916 = vmax.f32 %v1772, 0.0
    %v1917 = vmax.f32 %v1773, 0.0
    %v1918 = vmax.f32 %v1774, 0.0
    %v1919 = vmax.f32 %v1775, 0.0
    %v1920 = vmax.f32 %v1776, 0.0
    %v1921 = vmax.f32 %v1777, 0.0
    %v1922 = vmax.f32 %v1778, 0.0
    %v1923 = vmax.f32 %v1779, 0.0
    %v1924 = vmax.f32 %v1780, 0.0
    %v1925 = vmax.f32 %v1781, 0.0
    %v1926 = vmax.f32 %v1782, 0.0
    %v1927 = vmax.f32 %v1783, 0.0
    %v1928 = vmax.f32 %v1784, 0.0
    %v1929 = vmax.f32 %v1785, 0.0
    %v1930 = vmax.f32 %v1786, 0.0
    %v1931 = vmax.f32 %v1787, 0.0
    %v1932 = vmax.f32 %v1788, 0.0
    %v1933 = vmax.f32 %v1789, 0.0
    %v1934 = vmax.f32 %v1790, 0.0
    %v1935 = vmax.f32 %v1791, 0.0
    %v1936 = vmax.f32 %v1792, 0.0
    %v1937 = vmax.f32 %v1793, 0.0
    %v1938 = vmax.f32 %v1794, 0.0
    %v1939 = vmax.f32 %v1795, 0.0
    %v1940 = vmax.f32 %v1796, 0.0
    %v1941 = vmax.f32 %v1797, 0.0
    %v1942 = vmax.f32 %v1798, 0.0
    %v1943 = vmax.f32 %v1799, 0.0
    %v1944 = vmax.f32 %v1800, 0.0
    %v1945 = vmax.f32 %v1801, 0.0
    %v1946 = vmax.f32 %v1802, 0.0
    %v1947 = vmax.f32 %v1803, 0.0
    %v1948 = vmax.f32 %v1804, 0.0
    %v1949 = vmax.f32 %v1805, 0.0
    %v1950 = vmax.f32 %v1806, 0.0
    %v1951 = vmax.f32 %v1807, 0.0
    %v1952 = vmax.f32 %v1808, 0.0
    %v1953 = vmax.f32 %v1809, 0.0
    %v1954 = vmax.f32 %v1810, 0.0
    %v1955 = vmax.f32 %v1811, 0.0
    %v1956 = vmax.f32 %v1812, 0.0
    %v1957 = vmax.f32 %v1813, 0.0
    %v1958 = vmax.f32 %v1814, 0.0
    %v1959 = vmax.f32 %v1815, 0.0
    %v1960 = vmax.f32 %v1816, 0.0
    %v1961 = vmax.f32 %v1817, 0.0
    %v1962 = vmax.f32 %v1818, 0.0
    %v1963 = vmax.f32 %v1819, 0.0
    %v1964 = vmax.f32 %v1820, 0.0
    %v1965 = vmax.f32 %v1821, 0.0
    %v1966 = vmax.f32 %v1822, 0.0
    %v1967 = vmax.f32 %v1823, 0.0
    %v1968 = vmax.f32 %v1824, 0.0
    %v1969 = vmax.f32 %v1825, 0.0
    %1970 = vst [vmem:[#allocation2] sm:$0xff] %v1826
    %1971 = vst [vmem:[#allocation2 + $0x8] sm:$0xff] %v1827
    %1972 = vst [vmem:[#allocation2 + $0x10] sm:$0xff] %v1828
    %1973 = vst [vmem:[#allocation2 + $0x18] sm:$0xff] %v1829
    %1974 = vst [vmem:[#allocation2 + $0x20] sm:$0xff] %v1830
    %1975 = vst [vmem:[#allocation2 + $0x28] sm:$0xff] %v1831
    %1976 = vst [vmem:[#allocation2 + $0x30] sm:$0xff] %v1832
    %1977 = vst [vmem:[#allocation2 + $0x38] sm:$0xff] %v1833
    %1978 = vst [vmem:[#allocation2 + $0x40] sm:$0xff] %v1834
    %1979 = vst [vmem:[#allocation2 + $0x48] sm:$0xff] %v1835
    %1980 = vst [vmem:[#allocation2 + $0x50] sm:$0xff] %v1836
    %1981 = vst [vmem:[#allocation2 + $0x58] sm:$0xff] %v1837
    %1982 = vst [vmem:[#allocation2 + $0x60] sm:$0xff] %v1838
    %1983 = vst [vmem:[#allocation2 + $0x68] sm:$0xff] %v1839
    %1984 = vst [vmem:[#allocation2 + $0x70] sm:$0xff] %v1840
    %1985 = vst [vmem:[#allocation2 + $0x78] sm:$0xff] %v1841
    %1986 = vst [vmem:[#allocation2 + $0x80] sm:$0xff] %v1842
    %1987 = vst [vmem:[#allocation2 + $0x88] sm:$0xff] %v1843
    %1988 = vst [vmem:[#allocation2 + $0x90] sm:$0xff] %v1844
    %1989 = vst [vmem:[#allocation2 + $0x98] sm:$0xff] %v1845
    %1990 = vst [vmem:[#allocation2 + $0xa0] sm:$0xff] %v1846
    %1991 = vst [vmem:[#allocation2 + $0xa8] sm:$0xff] %v1847
    %1992 = vst [vmem:[#allocation2 + $0xb0] sm:$0xff] %v1848
    %1993 = vst [vmem:[#allocation2 + $0xb8] sm:$0xff] %v1849
    %1994 = vst [vmem:[#allocation2 + $0xc0] sm:$0xff] %v1850
    %1995 = vst [vmem:[#allocation2 + $0xc8] sm:$0xff] %v1851
    %1996 = vst [vmem:[#allocation2 + $0xd0] sm:$0xff] %v1852
    %1997 = vst [vmem:[#allocation2 + $0xd8] sm:$0xff] %v1853
    %1998 = vst [vmem:[#allocation2 + $0xe0] sm:$0xff] %v1854
    %1999 = vst [vmem:[#allocation2 + $0xe8] sm:$0xff] %v1855
    %2000 = vst [vmem:[#allocation2 + $0xf0] sm:$0xff] %v1856
    %2001 = vst [vmem:[#allocation2 + $0xf8] sm:$0xff] %v1857
    %2002 = vst [vmem:[#allocation2 + $0x100] sm:$0xff] %v1858
    %2003 = vst [vmem:[#allocation2 + $0x108] sm:$0xff] %v1859
    %2004 = vst [vmem:[#allocation2 + $0x110] sm:$0xff] %v1860
    %2005 = vst [vmem:[#allocation2 + $0x118] sm:$0xff] %v1861
    %2006 = vst [vmem:[#allocation2 + $0x120] sm:$0xff] %v1862
    %2007 = vst [vmem:[#allocation2 + $0x128] sm:$0xff] %v1863
    %2008 = vst [vmem:[#allocation2 + $0x130] sm:$0xff] %v1864
    %2009 = vst [vmem:[#allocation2 + $0x138] sm:$0xff] %v1865
    %2010 = vst [vmem:[#allocation2 + $0x140] sm:$0xff] %v1866
    %2011 = vst [vmem:[#allocation2 + $0x148] sm:$0xff] %v1867
    %2012 = vst [vmem:[#allocation2 + $0x150] sm:$0xff] %v1868
    %2013 = vst [vmem:[#allocation2 + $0x158] sm:$0xff] %v1869
    %2014 = vst [vmem:[#allocation2 + $0x160] sm:$0xff] %v1870
    %2015 = vst [vmem:[#allocation2 + $0x168] sm:$0xff] %v1871
    %2016 = vst [vmem:[#allocation2 + $0x170] sm:$0xff] %v1872
    %2017 = vst [vmem:[#allocation2 + $0x178] sm:$0xff] %v1873
    %2018 = vst [vmem:[#allocation2 + $0x180] sm:$0xff] %v1874
    %2019 = vst [vmem:[#allocation2 + $0x188] sm:$0xff] %v1875
    %2020 = vst [vmem:[#allocation2 + $0x190] sm:$0xff] %v1876
    %2021 = vst [vmem:[#allocation2 + $0x198] sm:$0xff] %v1877
    %2022 = vst [vmem:[#allocation2 + $0x1a0] sm:$0xff] %v1878
    %2023 = vst [vmem:[#allocation2 + $0x1a8] sm:$0xff] %v1879
    %2024 = vst [vmem:[#allocation2 + $0x1b0] sm:$0xff] %v1880
    %2025 = vst [vmem:[#allocation2 + $0x1b8] sm:$0xff] %v1881
    %2026 = vst [vmem:[#allocation2 + $0x1c0] sm:$0xff] %v1882
    %2027 = vst [vmem:[#allocation2 + $0x1c8] sm:$0xff] %v1883
    %2028 = vst [vmem:[#allocation2 + $0x1d0] sm:$0xff] %v1884
    %2029 = vst [vmem:[#allocation2 + $0x1d8] sm:$0xff] %v1885
    %2030 = vst [vmem:[#allocation2 + $0x1e0] sm:$0xff] %v1886
    %2031 = vst [vmem:[#allocation2 + $0x1e8] sm:$0xff] %v1887
    %2032 = vst [vmem:[#allocation2 + $0x1f0] sm:$0xff] %v1888
    %2033 = vst [vmem:[#allocation2 + $0x1f8] sm:$0xff] %v1889
    %2034 = vst [vmem:[#allocation2 + $0x200] sm:$0xff] %v1890
    %2035 = vst [vmem:[#allocation2 + $0x208] sm:$0xff] %v1891
    %2036 = vst [vmem:[#allocation2 + $0x210] sm:$0xff] %v1892
    %2037 = vst [vmem:[#allocation2 + $0x218] sm:$0xff] %v1893
    %2038 = vst [vmem:[#allocation2 + $0x220] sm:$0xff] %v1894
    %2039 = vst [vmem:[#allocation2 + $0x228] sm:$0xff] %v1895
    %2040 = vst [vmem:[#allocation2 + $0x230] sm:$0xff] %v1896
    %2041 = vst [vmem:[#allocation2 + $0x238] sm:$0xff] %v1897
    %2042 = vst [vmem:[#allocation2 + $0x240] sm:$0xff] %v1898
    %2043 = vst [vmem:[#allocation2 + $0x248] sm:$0xff] %v1899
    %2044 = vst [vmem:[#allocation2 + $0x250] sm:$0xff] %v1900
    %2045 = vst [vmem:[#allocation2 + $0x258] sm:$0xff] %v1901
    %2046 = vst [vmem:[#allocation2 + $0x260] sm:$0xff] %v1902
    %2047 = vst [vmem:[#allocation2 + $0x268] sm:$0xff] %v1903
    %2048 = vst [vmem:[#allocation2 + $0x270] sm:$0xff] %v1904
    %2049 = vst [vmem:[#allocation2 + $0x278] sm:$0xff] %v1905
    %2050 = vst [vmem:[#allocation2 + $0x280] sm:$0xff] %v1906
    %2051 = vst [vmem:[#allocation2 + $0x288] sm:$0xff] %v1907
    %2052 = vst [vmem:[#allocation2 + $0x290] sm:$0xff] %v1908
    %2053 = vst [vmem:[#allocation2 + $0x298] sm:$0xff] %v1909
    %2054 = vst [vmem:[#allocation2 + $0x2a0] sm:$0xff] %v1910
    %2055 = vst [vmem:[#allocation2 + $0x2a8] sm:$0xff] %v1911
    %2056 = vst [vmem:[#allocation2 + $0x2b0] sm:$0xff] %v1912
    %2057 = vst [vmem:[#allocation2 + $0x2b8] sm:$0xff] %v1913
    %2058 = vst [vmem:[#allocation2 + $0x2c0] sm:$0xff] %v1914
    %2059 = vst [vmem:[#allocation2 + $0x2c8] sm:$0xff] %v1915
    %2060 = vst [vmem:[#allocation2 + $0x2d0] sm:$0xff] %v1916
    %2061 = vst [vmem:[#allocation2 + $0x2d8] sm:$0xff] %v1917
    %2062 = vst [vmem:[#allocation2 + $0x2e0] sm:$0xff] %v1918
    %2063 = vst [vmem:[#allocation2 + $0x2e8] sm:$0xff] %v1919
    %2064 = vst [vmem:[#allocation2 + $0x2f0] sm:$0xff] %v1920
    %2065 = vst [vmem:[#allocation2 + $0x2f8] sm:$0xff] %v1921
    %2066 = vst [vmem:[#allocation2 + $0x300] sm:$0xff] %v1922
    %2067 = vst [vmem:[#allocation2 + $0x308] sm:$0xff] %v1923
    %2068 = vst [vmem:[#allocation2 + $0x310] sm:$0xff] %v1924
    %2069 = vst [vmem:[#allocation2 + $0x318] sm:$0xff] %v1925
    %2070 = vst [vmem:[#allocation2 + $0x320] sm:$0xff] %v1926
    %2071 = vst [vmem:[#allocation2 + $0x328] sm:$0xff] %v1927
    %2072 = vst [vmem:[#allocation2 + $0x330] sm:$0xff] %v1928
    %2073 = vst [vmem:[#allocation2 + $0x338] sm:$0xff] %v1929
    %2074 = vst [vmem:[#allocation2 + $0x340] sm:$0xff] %v1930
    %2075 = vst [vmem:[#allocation2 + $0x348] sm:$0xff] %v1931
    %2076 = vst [vmem:[#allocation2 + $0x350] sm:$0xff] %v1932
    %2077 = vst [vmem:[#allocation2 + $0x358] sm:$0xff] %v1933
    %2078 = vst [vmem:[#allocation2 + $0x360] sm:$0xff] %v1934
    %2079 = vst [vmem:[#allocation2 + $0x368] sm:$0xff] %v1935
    %2080 = vst [vmem:[#allocation2 + $0x370] sm:$0xff] %v1936
    %2081 = vst [vmem:[#allocation2 + $0x378] sm:$0xff] %v1937
    %2082 = vst [vmem:[#allocation2 + $0x380] sm:$0xff] %v1938
    %2083 = vst [vmem:[#allocation2 + $0x388] sm:$0xff] %v1939
    %2084 = vst [vmem:[#allocation2 + $0x390] sm:$0xff] %v1940
    %2085 = vst [vmem:[#allocation2 + $0x398] sm:$0xff] %v1941
    %2086 = vst [vmem:[#allocation2 + $0x3a0] sm:$0xff] %v1942
    %2087 = vst [vmem:[#allocation2 + $0x3a8] sm:$0xff] %v1943
    %2088 = vst [vmem:[#allocation2 + $0x3b0] sm:$0xff] %v1944
    %2089 = vst [vmem:[#allocation2 + $0x3b8] sm:$0xff] %v1945
    %2090 = vst [vmem:[#allocation2 + $0x3c0] sm:$0xff] %v1946
    %2091 = vst [vmem:[#allocation2 + $0x3c8] sm:$0xff] %v1947
    %2092 = vst [vmem:[#allocation2 + $0x3d0] sm:$0xff] %v1948
    %2093 = vst [vmem:[#allocation2 + $0x3d8] sm:$0xff] %v1949
    %2094 = vst [vmem:[#allocation2 + $0x3e0] sm:$0xff] %v1950
    %2095 = vst [vmem:[#allocation2 + $0x3e8] sm:$0xff] %v1951
    %2096 = vst [vmem:[#allocation2 + $0x3f0] sm:$0xff] %v1952
    %2097 = vst [vmem:[#allocation2 + $0x3f8] sm:$0xff] %v1953
    %2098 = vst [vmem:[#allocation2 + $0x400] sm:$0xff] %v1954
    %2099 = vst [vmem:[#allocation2 + $0x408] sm:$0xff] %v1955
    %2100 = vst [vmem:[#allocation2 + $0x410] sm:$0xff] %v1956
    %2101 = vst [vmem:[#allocation2 + $0x418] sm:$0xff] %v1957
    %2102 = vst [vmem:[#allocation2 + $0x420] sm:$0xff] %v1958
    %2103 = vst [vmem:[#allocation2 + $0x428] sm:$0xff] %v1959
    %2104 = vst [vmem:[#allocation2 + $0x430] sm:$0xff] %v1960
    %2105 = vst [vmem:[#allocation2 + $0x438] sm:$0xff] %v1961
    %2106 = vst [vmem:[#allocation2 + $0x440] sm:$0xff] %v1962
    %2107 = vst [vmem:[#allocation2 + $0x448] sm:$0xff] %v1963
    %2108 = vst [vmem:[#allocation2 + $0x450] sm:$0xff] %v1964
    %2109 = vst [vmem:[#allocation2 + $0x458] sm:$0xff] %v1965
    %2110 = vst [vmem:[#allocation2 + $0x460] sm:$0xff] %v1966
    %2111 = vst [vmem:[#allocation2 + $0x468] sm:$0xff] %v1967
    %2112 = vst [vmem:[#allocation2 + $0x470] sm:$0xff] %v1968
    %2113 = vst [vmem:[#allocation2 + $0x478] sm:$0xff] %v1969
    %v2114 = vld [vmem:[#allocation2] ss:$2 sm:$0xff]
    %s2115 = scalar_lea.vmem [#allocation2], 16
    %v2116 = vld [vmem:[%s2115] ss:$2 sm:$0xf]
    %s2117 = scalar_lea.vmem [#allocation2], 48
    %v2118 = vld [vmem:[%s2117] ss:$2 sm:$0xff]
    %s2119 = scalar_lea.vmem [#allocation2], 64
    %v2120 = vld [vmem:[%s2119] ss:$2 sm:$0xf]
    %s2121 = scalar_lea.vmem [#allocation2], 96
    %v2122 = vld [vmem:[%s2121] ss:$2 sm:$0xff]
    %s2123 = scalar_lea.vmem [#allocation2], 112
    %v2124 = vld [vmem:[%s2123] ss:$2 sm:$0xf]
    %s2125 = scalar_lea.vmem [#allocation2], 144
    %v2126 = vld [vmem:[%s2125] ss:$2 sm:$0xff]
    %s2127 = scalar_lea.vmem [#allocation2], 160
    %v2128 = vld [vmem:[%s2127] ss:$2 sm:$0xf]
    %s2129 = scalar_lea.vmem [#allocation2], 192
    %v2130 = vld [vmem:[%s2129] ss:$2 sm:$0xff]
    %s2131 = scalar_lea.vmem [#allocation2], 208
    %v2132 = vld [vmem:[%s2131] ss:$2 sm:$0xf]
    %s2133 = scalar_lea.vmem [#allocation2], 240
    %v2134 = vld [vmem:[%s2133] ss:$2 sm:$0xff]
    %s2135 = scalar_lea.vmem [#allocation2], 256
    %v2136 = vld [vmem:[%s2135] ss:$2 sm:$0xf]
    %s2137 = scalar_lea.vmem [#allocation2], 288
    %v2138 = vld [vmem:[%s2137] ss:$2 sm:$0xff]
    %s2139 = scalar_lea.vmem [#allocation2], 304
    %v2140 = vld [vmem:[%s2139] ss:$2 sm:$0xf]
    %s2141 = scalar_lea.vmem [#allocation2], 336
    %v2142 = vld [vmem:[%s2141] ss:$2 sm:$0xff]
    %s2143 = scalar_lea.vmem [#allocation2], 352
    %v2144 = vld [vmem:[%s2143] ss:$2 sm:$0xf]
    %s2145 = scalar_lea.vmem [#allocation2], 384
    %v2146 = vld [vmem:[%s2145] ss:$2 sm:$0xff]
    %s2147 = scalar_lea.vmem [#allocation2], 400
    %v2148 = vld [vmem:[%s2147] ss:$2 sm:$0xf]
    %s2149 = scalar_lea.vmem [#allocation2], 432
    %v2150 = vld [vmem:[%s2149] ss:$2 sm:$0xff]
    %s2151 = scalar_lea.vmem [#allocation2], 448
    %v2152 = vld [vmem:[%s2151] ss:$2 sm:$0xf]
    %s2153 = scalar_lea.vmem [#allocation2], 480
    %v2154 = vld [vmem:[%s2153] ss:$2 sm:$0xff]
    %s2155 = scalar_lea.vmem [#allocation2], 496
    %v2156 = vld [vmem:[%s2155] ss:$2 sm:$0xf]
    %s2157 = scalar_lea.vmem [#allocation2], 528
    %v2158 = vld [vmem:[%s2157] ss:$2 sm:$0xff]
    %s2159 = scalar_lea.vmem [#allocation2], 544
    %v2160 = vld [vmem:[%s2159] ss:$2 sm:$0xf]
    %s2161 = scalar_lea.vmem [#allocation2], 576
    %v2162 = vld [vmem:[%s2161] ss:$2 sm:$0xff]
    %s2163 = scalar_lea.vmem [#allocation2], 592
    %v2164 = vld [vmem:[%s2163] ss:$2 sm:$0xf]
    %s2165 = scalar_lea.vmem [#allocation2], 624
    %v2166 = vld [vmem:[%s2165] ss:$2 sm:$0xff]
    %s2167 = scalar_lea.vmem [#allocation2], 640
    %v2168 = vld [vmem:[%s2167] ss:$2 sm:$0xf]
    %s2169 = scalar_lea.vmem [#allocation2], 672
    %v2170 = vld [vmem:[%s2169] ss:$2 sm:$0xff]
    %s2171 = scalar_lea.vmem [#allocation2], 688
    %v2172 = vld [vmem:[%s2171] ss:$2 sm:$0xf]
    %s2173 = scalar_lea.vmem [#allocation2], 720
    %v2174 = vld [vmem:[%s2173] ss:$2 sm:$0xff]
    %s2175 = scalar_lea.vmem [#allocation2], 736
    %v2176 = vld [vmem:[%s2175] ss:$2 sm:$0xf]
    %s2177 = scalar_lea.vmem [#allocation2], 768
    %v2178 = vld [vmem:[%s2177] ss:$2 sm:$0xff]
    %s2179 = scalar_lea.vmem [#allocation2], 784
    %v2180 = vld [vmem:[%s2179] ss:$2 sm:$0xf]
    %s2181 = scalar_lea.vmem [#allocation2], 816
    %v2182 = vld [vmem:[%s2181] ss:$2 sm:$0xff]
    %s2183 = scalar_lea.vmem [#allocation2], 832
    %v2184 = vld [vmem:[%s2183] ss:$2 sm:$0xf]
    %s2185 = scalar_lea.vmem [#allocation2], 864
    %v2186 = vld [vmem:[%s2185] ss:$2 sm:$0xff]
    %s2187 = scalar_lea.vmem [#allocation2], 880
    %v2188 = vld [vmem:[%s2187] ss:$2 sm:$0xf]
    %s2189 = scalar_lea.vmem [#allocation2], 912
    %v2190 = vld [vmem:[%s2189] ss:$2 sm:$0xff]
    %s2191 = scalar_lea.vmem [#allocation2], 928
    %v2192 = vld [vmem:[%s2191] ss:$2 sm:$0xf]
    %s2193 = scalar_lea.vmem [#allocation2], 960
    %v2194 = vld [vmem:[%s2193] ss:$2 sm:$0xff]
    %s2195 = scalar_lea.vmem [#allocation2], 976
    %v2196 = vld [vmem:[%s2195] ss:$2 sm:$0xf]
    %s2197 = scalar_lea.vmem [#allocation2], 1008
    %v2198 = vld [vmem:[%s2197] ss:$2 sm:$0xff]
    %s2199 = scalar_lea.vmem [#allocation2], 1024
    %v2200 = vld [vmem:[%s2199] ss:$2 sm:$0xf]
    %s2201 = scalar_lea.vmem [#allocation2], 1056
    %v2202 = vld [vmem:[%s2201] ss:$2 sm:$0xff]
    %s2203 = scalar_lea.vmem [#allocation2], 1072
    %v2204 = vld [vmem:[%s2203] ss:$2 sm:$0xf]
    %s2205 = scalar_lea.vmem [#allocation2], 1104
    %v2206 = vld [vmem:[%s2205] ss:$2 sm:$0xff]
    %s2207 = scalar_lea.vmem [#allocation2], 1120
    %v2208 = vld [vmem:[%s2207] ss:$2 sm:$0xf]
    %s2209 = scalar_lea.vmem [#allocation2], 1
    %v2210 = vld [vmem:[%s2209] ss:$2 sm:$0xff]
    %s2211 = scalar_lea.vmem [#allocation2], 17
    %v2212 = vld [vmem:[%s2211] ss:$2 sm:$0xf]
    %s2213 = scalar_lea.vmem [#allocation2], 49
    %v2214 = vld [vmem:[%s2213] ss:$2 sm:$0xff]
    %s2215 = scalar_lea.vmem [#allocation2], 65
    %v2216 = vld [vmem:[%s2215] ss:$2 sm:$0xf]
    %s2217 = scalar_lea.vmem [#allocation2], 97
    %v2218 = vld [vmem:[%s2217] ss:$2 sm:$0xff]
    %s2219 = scalar_lea.vmem [#allocation2], 113
    %v2220 = vld [vmem:[%s2219] ss:$2 sm:$0xf]
    %s2221 = scalar_lea.vmem [#allocation2], 145
    %v2222 = vld [vmem:[%s2221] ss:$2 sm:$0xff]
    %s2223 = scalar_lea.vmem [#allocation2], 161
    %v2224 = vld [vmem:[%s2223] ss:$2 sm:$0xf]
    %s2225 = scalar_lea.vmem [#allocation2], 193
    %v2226 = vld [vmem:[%s2225] ss:$2 sm:$0xff]
    %s2227 = scalar_lea.vmem [#allocation2], 209
    %v2228 = vld [vmem:[%s2227] ss:$2 sm:$0xf]
    %s2229 = scalar_lea.vmem [#allocation2], 241
    %v2230 = vld [vmem:[%s2229] ss:$2 sm:$0xff]
    %s2231 = scalar_lea.vmem [#allocation2], 257
    %v2232 = vld [vmem:[%s2231] ss:$2 sm:$0xf]
    %s2233 = scalar_lea.vmem [#allocation2], 289
    %v2234 = vld [vmem:[%s2233] ss:$2 sm:$0xff]
    %s2235 = scalar_lea.vmem [#allocation2], 305
    %v2236 = vld [vmem:[%s2235] ss:$2 sm:$0xf]
    %s2237 = scalar_lea.vmem [#allocation2], 337
    %v2238 = vld [vmem:[%s2237] ss:$2 sm:$0xff]
    %s2239 = scalar_lea.vmem [#allocation2], 353
    %v2240 = vld [vmem:[%s2239] ss:$2 sm:$0xf]
    %s2241 = scalar_lea.vmem [#allocation2], 385
    %v2242 = vld [vmem:[%s2241] ss:$2 sm:$0xff]
    %s2243 = scalar_lea.vmem [#allocation2], 401
    %v2244 = vld [vmem:[%s2243] ss:$2 sm:$0xf]
    %s2245 = scalar_lea.vmem [#allocation2], 433
    %v2246 = vld [vmem:[%s2245] ss:$2 sm:$0xff]
    %s2247 = scalar_lea.vmem [#allocation2], 449
    %v2248 = vld [vmem:[%s2247] ss:$2 sm:$0xf]
    %s2249 = scalar_lea.vmem [#allocation2], 481
    %v2250 = vld [vmem:[%s2249] ss:$2 sm:$0xff]
    %s2251 = scalar_lea.vmem [#allocation2], 497
    %v2252 = vld [vmem:[%s2251] ss:$2 sm:$0xf]
    %s2253 = scalar_lea.vmem [#allocation2], 529
    %v2254 = vld [vmem:[%s2253] ss:$2 sm:$0xff]
    %s2255 = scalar_lea.vmem [#allocation2], 545
    %v2256 = vld [vmem:[%s2255] ss:$2 sm:$0xf]
    %s2257 = scalar_lea.vmem [#allocation2], 577
    %v2258 = vld [vmem:[%s2257] ss:$2 sm:$0xff]
    %s2259 = scalar_lea.vmem [#allocation2], 593
    %v2260 = vld [vmem:[%s2259] ss:$2 sm:$0xf]
    %s2261 = scalar_lea.vmem [#allocation2], 625
    %v2262 = vld [vmem:[%s2261] ss:$2 sm:$0xff]
    %s2263 = scalar_lea.vmem [#allocation2], 641
    %v2264 = vld [vmem:[%s2263] ss:$2 sm:$0xf]
    %s2265 = scalar_lea.vmem [#allocation2], 673
    %v2266 = vld [vmem:[%s2265] ss:$2 sm:$0xff]
    %s2267 = scalar_lea.vmem [#allocation2], 689
    %v2268 = vld [vmem:[%s2267] ss:$2 sm:$0xf]
    %s2269 = scalar_lea.vmem [#allocation2], 721
    %v2270 = vld [vmem:[%s2269] ss:$2 sm:$0xff]
    %s2271 = scalar_lea.vmem [#allocation2], 737
    %v2272 = vld [vmem:[%s2271] ss:$2 sm:$0xf]
    %s2273 = scalar_lea.vmem [#allocation2], 769
    %v2274 = vld [vmem:[%s2273] ss:$2 sm:$0xff]
    %s2275 = scalar_lea.vmem [#allocation2], 785
    %v2276 = vld [vmem:[%s2275] ss:$2 sm:$0xf]
    %s2277 = scalar_lea.vmem [#allocation2], 817
    %v2278 = vld [vmem:[%s2277] ss:$2 sm:$0xff]
    %s2279 = scalar_lea.vmem [#allocation2], 833
    %v2280 = vld [vmem:[%s2279] ss:$2 sm:$0xf]
    %s2281 = scalar_lea.vmem [#allocation2], 865
    %v2282 = vld [vmem:[%s2281] ss:$2 sm:$0xff]
    %s2283 = scalar_lea.vmem [#allocation2], 881
    %v2284 = vld [vmem:[%s2283] ss:$2 sm:$0xf]
    %s2285 = scalar_lea.vmem [#allocation2], 913
    %v2286 = vld [vmem:[%s2285] ss:$2 sm:$0xff]
    %s2287 = scalar_lea.vmem [#allocation2], 929
    %v2288 = vld [vmem:[%s2287] ss:$2 sm:$0xf]
    %s2289 = scalar_lea.vmem [#allocation2], 961
    %v2290 = vld [vmem:[%s2289] ss:$2 sm:$0xff]
    %s2291 = scalar_lea.vmem [#allocation2], 977
    %v2292 = vld [vmem:[%s2291] ss:$2 sm:$0xf]
    %s2293 = scalar_lea.vmem [#allocation2], 1009
    %v2294 = vld [vmem:[%s2293] ss:$2 sm:$0xff]
    %s2295 = scalar_lea.vmem [#allocation2], 1025
    %v2296 = vld [vmem:[%s2295] ss:$2 sm:$0xf]
    %s2297 = scalar_lea.vmem [#allocation2], 1057
    %v2298 = vld [vmem:[%s2297] ss:$2 sm:$0xff]
    %s2299 = scalar_lea.vmem [#allocation2], 1073
    %v2300 = vld [vmem:[%s2299] ss:$2 sm:$0xf]
    %s2301 = scalar_lea.vmem [#allocation2], 1105
    %v2302 = vld [vmem:[%s2301] ss:$2 sm:$0xff]
    %s2303 = scalar_lea.vmem [#allocation2], 1121
    %v2304 = vld [vmem:[%s2303] ss:$2 sm:$0xf]
    %v2305 = vmax.f32 %v2114, %v2210
    %v2306 = vmax.f32 %v2116, %v2212
    %v2307 = vmax.f32 %v2118, %v2214
    %v2308 = vmax.f32 %v2120, %v2216
    %v2309 = vmax.f32 %v2122, %v2218
    %v2310 = vmax.f32 %v2124, %v2220
    %v2311 = vmax.f32 %v2126, %v2222
    %v2312 = vmax.f32 %v2128, %v2224
    %v2313 = vmax.f32 %v2130, %v2226
    %v2314 = vmax.f32 %v2132, %v2228
    %v2315 = vmax.f32 %v2134, %v2230
    %v2316 = vmax.f32 %v2136, %v2232
    %v2317 = vmax.f32 %v2138, %v2234
    %v2318 = vmax.f32 %v2140, %v2236
    %v2319 = vmax.f32 %v2142, %v2238
    %v2320 = vmax.f32 %v2144, %v2240
    %v2321 = vmax.f32 %v2146, %v2242
    %v2322 = vmax.f32 %v2148, %v2244
    %v2323 = vmax.f32 %v2150, %v2246
    %v2324 = vmax.f32 %v2152, %v2248
    %v2325 = vmax.f32 %v2154, %v2250
    %v2326 = vmax.f32 %v2156, %v2252
    %v2327 = vmax.f32 %v2158, %v2254
    %v2328 = vmax.f32 %v2160, %v2256
    %v2329 = vmax.f32 %v2162, %v2258
    %v2330 = vmax.f32 %v2164, %v2260
    %v2331 = vmax.f32 %v2166, %v2262
    %v2332 = vmax.f32 %v2168, %v2264
    %v2333 = vmax.f32 %v2170, %v2266
    %v2334 = vmax.f32 %v2172, %v2268
    %v2335 = vmax.f32 %v2174, %v2270
    %v2336 = vmax.f32 %v2176, %v2272
    %v2337 = vmax.f32 %v2178, %v2274
    %v2338 = vmax.f32 %v2180, %v2276
    %v2339 = vmax.f32 %v2182, %v2278
    %v2340 = vmax.f32 %v2184, %v2280
    %v2341 = vmax.f32 %v2186, %v2282
    %v2342 = vmax.f32 %v2188, %v2284
    %v2343 = vmax.f32 %v2190, %v2286
    %v2344 = vmax.f32 %v2192, %v2288
    %v2345 = vmax.f32 %v2194, %v2290
    %v2346 = vmax.f32 %v2196, %v2292
    %v2347 = vmax.f32 %v2198, %v2294
    %v2348 = vmax.f32 %v2200, %v2296
    %v2349 = vmax.f32 %v2202, %v2298
    %v2350 = vmax.f32 %v2204, %v2300
    %v2351 = vmax.f32 %v2206, %v2302
    %v2352 = vmax.f32 %v2208, %v2304
    %s2353 = scalar_lea.vmem [#allocation2], 24
    %v2354 = vld [vmem:[%s2353] ss:$2 sm:$0xff]
    %s2355 = scalar_lea.vmem %s2353, 16 [#allocation2]
    %v2356 = vld [vmem:[%s2355] ss:$2 sm:$0xf]
    %s2357 = scalar_lea.vmem %s2353, 48 [#allocation2]
    %v2358 = vld [vmem:[%s2357] ss:$2 sm:$0xff]
    %s2359 = scalar_lea.vmem %s2353, 64 [#allocation2]
    %v2360 = vld [vmem:[%s2359] ss:$2 sm:$0xf]
    %s2361 = scalar_lea.vmem %s2353, 96 [#allocation2]
    %v2362 = vld [vmem:[%s2361] ss:$2 sm:$0xff]
    %s2363 = scalar_lea.vmem %s2353, 112 [#allocation2]
    %v2364 = vld [vmem:[%s2363] ss:$2 sm:$0xf]
    %s2365 = scalar_lea.vmem %s2353, 144 [#allocation2]
    %v2366 = vld [vmem:[%s2365] ss:$2 sm:$0xff]
    %s2367 = scalar_lea.vmem %s2353, 160 [#allocation2]
    %v2368 = vld [vmem:[%s2367] ss:$2 sm:$0xf]
    %s2369 = scalar_lea.vmem %s2353, 192 [#allocation2]
    %v2370 = vld [vmem:[%s2369] ss:$2 sm:$0xff]
    %s2371 = scalar_lea.vmem %s2353, 208 [#allocation2]
    %v2372 = vld [vmem:[%s2371] ss:$2 sm:$0xf]
    %s2373 = scalar_lea.vmem %s2353, 240 [#allocation2]
    %v2374 = vld [vmem:[%s2373] ss:$2 sm:$0xff]
    %s2375 = scalar_lea.vmem %s2353, 256 [#allocation2]
    %v2376 = vld [vmem:[%s2375] ss:$2 sm:$0xf]
    %s2377 = scalar_lea.vmem %s2353, 288 [#allocation2]
    %v2378 = vld [vmem:[%s2377] ss:$2 sm:$0xff]
    %s2379 = scalar_lea.vmem %s2353, 304 [#allocation2]
    %v2380 = vld [vmem:[%s2379] ss:$2 sm:$0xf]
    %s2381 = scalar_lea.vmem %s2353, 336 [#allocation2]
    %v2382 = vld [vmem:[%s2381] ss:$2 sm:$0xff]
    %s2383 = scalar_lea.vmem %s2353, 352 [#allocation2]
    %v2384 = vld [vmem:[%s2383] ss:$2 sm:$0xf]
    %s2385 = scalar_lea.vmem %s2353, 384 [#allocation2]
    %v2386 = vld [vmem:[%s2385] ss:$2 sm:$0xff]
    %s2387 = scalar_lea.vmem %s2353, 400 [#allocation2]
    %v2388 = vld [vmem:[%s2387] ss:$2 sm:$0xf]
    %s2389 = scalar_lea.vmem %s2353, 432 [#allocation2]
    %v2390 = vld [vmem:[%s2389] ss:$2 sm:$0xff]
    %s2391 = scalar_lea.vmem %s2353, 448 [#allocation2]
    %v2392 = vld [vmem:[%s2391] ss:$2 sm:$0xf]
    %s2393 = scalar_lea.vmem %s2353, 480 [#allocation2]
    %v2394 = vld [vmem:[%s2393] ss:$2 sm:$0xff]
    %s2395 = scalar_lea.vmem %s2353, 496 [#allocation2]
    %v2396 = vld [vmem:[%s2395] ss:$2 sm:$0xf]
    %s2397 = scalar_lea.vmem %s2353, 528 [#allocation2]
    %v2398 = vld [vmem:[%s2397] ss:$2 sm:$0xff]
    %s2399 = scalar_lea.vmem %s2353, 544 [#allocation2]
    %v2400 = vld [vmem:[%s2399] ss:$2 sm:$0xf]
    %s2401 = scalar_lea.vmem %s2353, 576 [#allocation2]
    %v2402 = vld [vmem:[%s2401] ss:$2 sm:$0xff]
    %s2403 = scalar_lea.vmem %s2353, 592 [#allocation2]
    %v2404 = vld [vmem:[%s2403] ss:$2 sm:$0xf]
    %s2405 = scalar_lea.vmem %s2353, 624 [#allocation2]
    %v2406 = vld [vmem:[%s2405] ss:$2 sm:$0xff]
    %s2407 = scalar_lea.vmem %s2353, 640 [#allocation2]
    %v2408 = vld [vmem:[%s2407] ss:$2 sm:$0xf]
    %s2409 = scalar_lea.vmem %s2353, 672 [#allocation2]
    %v2410 = vld [vmem:[%s2409] ss:$2 sm:$0xff]
    %s2411 = scalar_lea.vmem %s2353, 688 [#allocation2]
    %v2412 = vld [vmem:[%s2411] ss:$2 sm:$0xf]
    %s2413 = scalar_lea.vmem %s2353, 720 [#allocation2]
    %v2414 = vld [vmem:[%s2413] ss:$2 sm:$0xff]
    %s2415 = scalar_lea.vmem %s2353, 736 [#allocation2]
    %v2416 = vld [vmem:[%s2415] ss:$2 sm:$0xf]
    %s2417 = scalar_lea.vmem %s2353, 768 [#allocation2]
    %v2418 = vld [vmem:[%s2417] ss:$2 sm:$0xff]
    %s2419 = scalar_lea.vmem %s2353, 784 [#allocation2]
    %v2420 = vld [vmem:[%s2419] ss:$2 sm:$0xf]
    %s2421 = scalar_lea.vmem %s2353, 816 [#allocation2]
    %v2422 = vld [vmem:[%s2421] ss:$2 sm:$0xff]
    %s2423 = scalar_lea.vmem %s2353, 832 [#allocation2]
    %v2424 = vld [vmem:[%s2423] ss:$2 sm:$0xf]
    %s2425 = scalar_lea.vmem %s2353, 864 [#allocation2]
    %v2426 = vld [vmem:[%s2425] ss:$2 sm:$0xff]
    %s2427 = scalar_lea.vmem %s2353, 880 [#allocation2]
    %v2428 = vld [vmem:[%s2427] ss:$2 sm:$0xf]
    %s2429 = scalar_lea.vmem %s2353, 912 [#allocation2]
    %v2430 = vld [vmem:[%s2429] ss:$2 sm:$0xff]
    %s2431 = scalar_lea.vmem %s2353, 928 [#allocation2]
    %v2432 = vld [vmem:[%s2431] ss:$2 sm:$0xf]
    %s2433 = scalar_lea.vmem %s2353, 960 [#allocation2]
    %v2434 = vld [vmem:[%s2433] ss:$2 sm:$0xff]
    %s2435 = scalar_lea.vmem %s2353, 976 [#allocation2]
    %v2436 = vld [vmem:[%s2435] ss:$2 sm:$0xf]
    %s2437 = scalar_lea.vmem %s2353, 1008 [#allocation2]
    %v2438 = vld [vmem:[%s2437] ss:$2 sm:$0xff]
    %s2439 = scalar_lea.vmem %s2353, 1024 [#allocation2]
    %v2440 = vld [vmem:[%s2439] ss:$2 sm:$0xf]
    %s2441 = scalar_lea.vmem %s2353, 1056 [#allocation2]
    %v2442 = vld [vmem:[%s2441] ss:$2 sm:$0xff]
    %s2443 = scalar_lea.vmem %s2353, 1072 [#allocation2]
    %v2444 = vld [vmem:[%s2443] ss:$2 sm:$0xf]
    %s2445 = scalar_lea.vmem %s2353, 1104 [#allocation2]
    %v2446 = vld [vmem:[%s2445] ss:$2 sm:$0xff]
    %s2447 = scalar_lea.vmem %s2353, 1120 [#allocation2]
    %v2448 = vld [vmem:[%s2447] ss:$2 sm:$0xf]
    %s2449 = scalar_lea.vmem %s2353, 1 [#allocation2]
    %v2450 = vld [vmem:[%s2449] ss:$2 sm:$0xff]
    %s2451 = scalar_lea.vmem %s2353, 17 [#allocation2]
    %v2452 = vld [vmem:[%s2451] ss:$2 sm:$0xf]
    %s2453 = scalar_lea.vmem %s2353, 49 [#allocation2]
    %v2454 = vld [vmem:[%s2453] ss:$2 sm:$0xff]
    %s2455 = scalar_lea.vmem %s2353, 65 [#allocation2]
    %v2456 = vld [vmem:[%s2455] ss:$2 sm:$0xf]
    %s2457 = scalar_lea.vmem %s2353, 97 [#allocation2]
    %v2458 = vld [vmem:[%s2457] ss:$2 sm:$0xff]
    %s2459 = scalar_lea.vmem %s2353, 113 [#allocation2]
    %v2460 = vld [vmem:[%s2459] ss:$2 sm:$0xf]
    %s2461 = scalar_lea.vmem %s2353, 145 [#allocation2]
    %v2462 = vld [vmem:[%s2461] ss:$2 sm:$0xff]
    %s2463 = scalar_lea.vmem %s2353, 161 [#allocation2]
    %v2464 = vld [vmem:[%s2463] ss:$2 sm:$0xf]
    %s2465 = scalar_lea.vmem %s2353, 193 [#allocation2]
    %v2466 = vld [vmem:[%s2465] ss:$2 sm:$0xff]
    %s2467 = scalar_lea.vmem %s2353, 209 [#allocation2]
    %v2468 = vld [vmem:[%s2467] ss:$2 sm:$0xf]
    %s2469 = scalar_lea.vmem %s2353, 241 [#allocation2]
    %v2470 = vld [vmem:[%s2469] ss:$2 sm:$0xff]
    %s2471 = scalar_lea.vmem %s2353, 257 [#allocation2]
    %v2472 = vld [vmem:[%s2471] ss:$2 sm:$0xf]
    %s2473 = scalar_lea.vmem %s2353, 289 [#allocation2]
    %v2474 = vld [vmem:[%s2473] ss:$2 sm:$0xff]
    %s2475 = scalar_lea.vmem %s2353, 305 [#allocation2]
    %v2476 = vld [vmem:[%s2475] ss:$2 sm:$0xf]
    %s2477 = scalar_lea.vmem %s2353, 337 [#allocation2]
    %v2478 = vld [vmem:[%s2477] ss:$2 sm:$0xff]
    %s2479 = scalar_lea.vmem %s2353, 353 [#allocation2]
    %v2480 = vld [vmem:[%s2479] ss:$2 sm:$0xf]
    %s2481 = scalar_lea.vmem %s2353, 385 [#allocation2]
    %v2482 = vld [vmem:[%s2481] ss:$2 sm:$0xff]
    %s2483 = scalar_lea.vmem %s2353, 401 [#allocation2]
    %v2484 = vld [vmem:[%s2483] ss:$2 sm:$0xf]
    %s2485 = scalar_lea.vmem %s2353, 433 [#allocation2]
    %v2486 = vld [vmem:[%s2485] ss:$2 sm:$0xff]
    %s2487 = scalar_lea.vmem %s2353, 449 [#allocation2]
    %v2488 = vld [vmem:[%s2487] ss:$2 sm:$0xf]
    %s2489 = scalar_lea.vmem %s2353, 481 [#allocation2]
    %v2490 = vld [vmem:[%s2489] ss:$2 sm:$0xff]
    %s2491 = scalar_lea.vmem %s2353, 497 [#allocation2]
    %v2492 = vld [vmem:[%s2491] ss:$2 sm:$0xf]
    %s2493 = scalar_lea.vmem %s2353, 529 [#allocation2]
    %v2494 = vld [vmem:[%s2493] ss:$2 sm:$0xff]
    %s2495 = scalar_lea.vmem %s2353, 545 [#allocation2]
    %v2496 = vld [vmem:[%s2495] ss:$2 sm:$0xf]
    %s2497 = scalar_lea.vmem %s2353, 577 [#allocation2]
    %v2498 = vld [vmem:[%s2497] ss:$2 sm:$0xff]
    %s2499 = scalar_lea.vmem %s2353, 593 [#allocation2]
    %v2500 = vld [vmem:[%s2499] ss:$2 sm:$0xf]
    %s2501 = scalar_lea.vmem %s2353, 625 [#allocation2]
    %v2502 = vld [vmem:[%s2501] ss:$2 sm:$0xff]
    %s2503 = scalar_lea.vmem %s2353, 641 [#allocation2]
    %v2504 = vld [vmem:[%s2503] ss:$2 sm:$0xf]
    %s2505 = scalar_lea.vmem %s2353, 673 [#allocation2]
    %v2506 = vld [vmem:[%s2505] ss:$2 sm:$0xff]
    %s2507 = scalar_lea.vmem %s2353, 689 [#allocation2]
    %v2508 = vld [vmem:[%s2507] ss:$2 sm:$0xf]
    %s2509 = scalar_lea.vmem %s2353, 721 [#allocation2]
    %v2510 = vld [vmem:[%s2509] ss:$2 sm:$0xff]
    %s2511 = scalar_lea.vmem %s2353, 737 [#allocation2]
    %v2512 = vld [vmem:[%s2511] ss:$2 sm:$0xf]
    %s2513 = scalar_lea.vmem %s2353, 769 [#allocation2]
    %v2514 = vld [vmem:[%s2513] ss:$2 sm:$0xff]
    %s2515 = scalar_lea.vmem %s2353, 785 [#allocation2]
    %v2516 = vld [vmem:[%s2515] ss:$2 sm:$0xf]
    %s2517 = scalar_lea.vmem %s2353, 817 [#allocation2]
    %v2518 = vld [vmem:[%s2517] ss:$2 sm:$0xff]
    %s2519 = scalar_lea.vmem %s2353, 833 [#allocation2]
    %v2520 = vld [vmem:[%s2519] ss:$2 sm:$0xf]
    %s2521 = scalar_lea.vmem %s2353, 865 [#allocation2]
    %v2522 = vld [vmem:[%s2521] ss:$2 sm:$0xff]
    %s2523 = scalar_lea.vmem %s2353, 881 [#allocation2]
    %v2524 = vld [vmem:[%s2523] ss:$2 sm:$0xf]
    %s2525 = scalar_lea.vmem %s2353, 913 [#allocation2]
    %v2526 = vld [vmem:[%s2525] ss:$2 sm:$0xff]
    %s2527 = scalar_lea.vmem %s2353, 929 [#allocation2]
    %v2528 = vld [vmem:[%s2527] ss:$2 sm:$0xf]
    %s2529 = scalar_lea.vmem %s2353, 961 [#allocation2]
    %v2530 = vld [vmem:[%s2529] ss:$2 sm:$0xff]
    %s2531 = scalar_lea.vmem %s2353, 977 [#allocation2]
    %v2532 = vld [vmem:[%s2531] ss:$2 sm:$0xf]
    %s2533 = scalar_lea.vmem %s2353, 1009 [#allocation2]
    %v2534 = vld [vmem:[%s2533] ss:$2 sm:$0xff]
    %s2535 = scalar_lea.vmem %s2353, 1025 [#allocation2]
    %v2536 = vld [vmem:[%s2535] ss:$2 sm:$0xf]
    %s2537 = scalar_lea.vmem %s2353, 1057 [#allocation2]
    %v2538 = vld [vmem:[%s2537] ss:$2 sm:$0xff]
    %s2539 = scalar_lea.vmem %s2353, 1073 [#allocation2]
    %v2540 = vld [vmem:[%s2539] ss:$2 sm:$0xf]
    %s2541 = scalar_lea.vmem %s2353, 1105 [#allocation2]
    %v2542 = vld [vmem:[%s2541] ss:$2 sm:$0xff]
    %s2543 = scalar_lea.vmem %s2353, 1121 [#allocation2]
    %v2544 = vld [vmem:[%s2543] ss:$2 sm:$0xf]
    %v2545 = vmax.f32 %v2354, %v2450
    %v2546 = vmax.f32 %v2356, %v2452
    %v2547 = vmax.f32 %v2358, %v2454
    %v2548 = vmax.f32 %v2360, %v2456
    %v2549 = vmax.f32 %v2362, %v2458
    %v2550 = vmax.f32 %v2364, %v2460
    %v2551 = vmax.f32 %v2366, %v2462
    %v2552 = vmax.f32 %v2368, %v2464
    %v2553 = vmax.f32 %v2370, %v2466
    %v2554 = vmax.f32 %v2372, %v2468
    %v2555 = vmax.f32 %v2374, %v2470
    %v2556 = vmax.f32 %v2376, %v2472
    %v2557 = vmax.f32 %v2378, %v2474
    %v2558 = vmax.f32 %v2380, %v2476
    %v2559 = vmax.f32 %v2382, %v2478
    %v2560 = vmax.f32 %v2384, %v2480
    %v2561 = vmax.f32 %v2386, %v2482
    %v2562 = vmax.f32 %v2388, %v2484
    %v2563 = vmax.f32 %v2390, %v2486
    %v2564 = vmax.f32 %v2392, %v2488
    %v2565 = vmax.f32 %v2394, %v2490
    %v2566 = vmax.f32 %v2396, %v2492
    %v2567 = vmax.f32 %v2398, %v2494
    %v2568 = vmax.f32 %v2400, %v2496
    %v2569 = vmax.f32 %v2402, %v2498
    %v2570 = vmax.f32 %v2404, %v2500
    %v2571 = vmax.f32 %v2406, %v2502
    %v2572 = vmax.f32 %v2408, %v2504
    %v2573 = vmax.f32 %v2410, %v2506
    %v2574 = vmax.f32 %v2412, %v2508
    %v2575 = vmax.f32 %v2414, %v2510
    %v2576 = vmax.f32 %v2416, %v2512
    %v2577 = vmax.f32 %v2418, %v2514
    %v2578 = vmax.f32 %v2420, %v2516
    %v2579 = vmax.f32 %v2422, %v2518
    %v2580 = vmax.f32 %v2424, %v2520
    %v2581 = vmax.f32 %v2426, %v2522
    %v2582 = vmax.f32 %v2428, %v2524
    %v2583 = vmax.f32 %v2430, %v2526
    %v2584 = vmax.f32 %v2432, %v2528
    %v2585 = vmax.f32 %v2434, %v2530
    %v2586 = vmax.f32 %v2436, %v2532
    %v2587 = vmax.f32 %v2438, %v2534
    %v2588 = vmax.f32 %v2440, %v2536
    %v2589 = vmax.f32 %v2442, %v2538
    %v2590 = vmax.f32 %v2444, %v2540
    %v2591 = vmax.f32 %v2446, %v2542
    %v2592 = vmax.f32 %v2448, %v2544
    %v2593 = vmax.f32 %v2305, %v2545
    %v2594 = vmax.f32 %v2306, %v2546
    %v2595 = vmax.f32 %v2307, %v2547
    %v2596 = vmax.f32 %v2308, %v2548
    %v2597 = vmax.f32 %v2309, %v2549
    %v2598 = vmax.f32 %v2310, %v2550
    %v2599 = vmax.f32 %v2311, %v2551
    %v2600 = vmax.f32 %v2312, %v2552
    %v2601 = vmax.f32 %v2313, %v2553
    %v2602 = vmax.f32 %v2314, %v2554
    %v2603 = vmax.f32 %v2315, %v2555
    %v2604 = vmax.f32 %v2316, %v2556
    %v2605 = vmax.f32 %v2317, %v2557
    %v2606 = vmax.f32 %v2318, %v2558
    %v2607 = vmax.f32 %v2319, %v2559
    %v2608 = vmax.f32 %v2320, %v2560
    %v2609 = vmax.f32 %v2321, %v2561
    %v2610 = vmax.f32 %v2322, %v2562
    %v2611 = vmax.f32 %v2323, %v2563
    %v2612 = vmax.f32 %v2324, %v2564
    %v2613 = vmax.f32 %v2325, %v2565
    %v2614 = vmax.f32 %v2326, %v2566
    %v2615 = vmax.f32 %v2327, %v2567
    %v2616 = vmax.f32 %v2328, %v2568
    %v2617 = vmax.f32 %v2329, %v2569
    %v2618 = vmax.f32 %v2330, %v2570
    %v2619 = vmax.f32 %v2331, %v2571
    %v2620 = vmax.f32 %v2332, %v2572
    %v2621 = vmax.f32 %v2333, %v2573
    %v2622 = vmax.f32 %v2334, %v2574
    %v2623 = vmax.f32 %v2335, %v2575
    %v2624 = vmax.f32 %v2336, %v2576
    %v2625 = vmax.f32 %v2337, %v2577
    %v2626 = vmax.f32 %v2338, %v2578
    %v2627 = vmax.f32 %v2339, %v2579
    %v2628 = vmax.f32 %v2340, %v2580
    %v2629 = vmax.f32 %v2341, %v2581
    %v2630 = vmax.f32 %v2342, %v2582
    %v2631 = vmax.f32 %v2343, %v2583
    %v2632 = vmax.f32 %v2344, %v2584
    %v2633 = vmax.f32 %v2345, %v2585
    %v2634 = vmax.f32 %v2346, %v2586
    %v2635 = vmax.f32 %v2347, %v2587
    %v2636 = vmax.f32 %v2348, %v2588
    %v2637 = vmax.f32 %v2349, %v2589
    %v2638 = vmax.f32 %v2350, %v2590
    %v2639 = vmax.f32 %v2351, %v2591
    %v2640 = vmax.f32 %v2352, %v2592
    %v2641 = vld [vmem:[%s4] sm:$0xff]
    %v2642 = vld [vmem:[%s4 + $0x8] sm:$0xff]
    %v2643 = vld [vmem:[%s4 + $0x10] sm:$0xff]
    %v2644 = vld [vmem:[%s4 + $0x18] sm:$0xff]
    %v2645 = vld [vmem:[%s4 + $0x20] sm:$0xff]
    %v2646 = vld [vmem:[%s4 + $0x28] sm:$0xff]
    %v2647 = vld [vmem:[%s4 + $0x30] sm:$0xff]
    %v2648 = vld [vmem:[%s4 + $0x38] sm:$0xff]
    %v2649 = vld [vmem:[%s4 + $0x40] sm:$0xff]
    %v2650 = vld [vmem:[%s4 + $0x48] sm:$0xff]
    %v2651 = vld [vmem:[%s4 + $0x50] sm:$0xff]
    %v2652 = vld [vmem:[%s4 + $0x58] sm:$0xff]
    %v2653 = vld [vmem:[%s4 + $0x60] sm:$0xff]
    %v2654 = vld [vmem:[%s4 + $0x68] sm:$0xff]
    %v2655 = vld [vmem:[%s4 + $0x70] sm:$0xff]
    %v2656 = vld [vmem:[%s4 + $0x78] sm:$0xff]
    %vm2689 = vcmask 1046528
    %v2690 = vrot.slane %v2593, 1
    %v2691 = vrot.slane %v2594, 1
    %v2692 = vsel %vm2689, %v2690, %v2691
    %v2693 = vrot.slane %v2595, 1
    %v2694 = vrot.slane %v2596, 1
    %v2695 = vsel %vm2689, %v2693, %v2694
    %v2696 = vrot.slane %v2597, 1
    %v2697 = vrot.slane %v2598, 1
    %v2698 = vsel %vm2689, %v2696, %v2697
    %v2699 = vrot.slane %v2599, 1
    %v2700 = vrot.slane %v2600, 1
    %v2701 = vsel %vm2689, %v2699, %v2700
    %v2702 = vrot.slane %v2601, 1
    %v2703 = vrot.slane %v2602, 1
    %v2704 = vsel %vm2689, %v2702, %v2703
    %v2705 = vrot.slane %v2603, 1
    %v2706 = vrot.slane %v2604, 1
    %v2707 = vsel %vm2689, %v2705, %v2706
    %v2708 = vrot.slane %v2605, 1
    %v2709 = vrot.slane %v2606, 1
    %v2710 = vsel %vm2689, %v2708, %v2709
    %v2711 = vrot.slane %v2607, 1
    %v2712 = vrot.slane %v2608, 1
    %v2713 = vsel %vm2689, %v2711, %v2712
    %v2714 = vrot.slane %v2617, 1
    %v2715 = vrot.slane %v2618, 1
    %v2716 = vsel %vm2689, %v2714, %v2715
    %v2717 = vrot.slane %v2619, 1
    %v2718 = vrot.slane %v2620, 1
    %v2719 = vsel %vm2689, %v2717, %v2718
    %v2720 = vrot.slane %v2621, 1
    %v2721 = vrot.slane %v2622, 1
    %v2722 = vsel %vm2689, %v2720, %v2721
    %v2723 = vrot.slane %v2623, 1
    %v2724 = vrot.slane %v2624, 1
    %v2725 = vsel %vm2689, %v2723, %v2724
    %v2726 = vrot.slane %v2625, 1
    %v2727 = vrot.slane %v2626, 1
    %v2728 = vsel %vm2689, %v2726, %v2727
    %v2729 = vrot.slane %v2627, 1
    %v2730 = vrot.slane %v2628, 1
    %v2731 = vsel %vm2689, %v2729, %v2730
    %v2732 = vrot.slane %v2629, 1
    %v2733 = vrot.slane %v2630, 1
    %v2734 = vsel %vm2689, %v2732, %v2733
    %v2735 = vrot.slane %v2631, 1
    %v2736 = vrot.slane %v2632, 1
    %v2737 = vsel %vm2689, %v2735, %v2736
    %s2754 = scalar_lea.vmem %s4, 128
    %v2755 = vld [vmem:[%s2754] sm:$0xff]
    %v2756 = vld [vmem:[%s2754 + $0x8] sm:$0xff]
    %v2757 = vld [vmem:[%s2754 + $0x10] sm:$0xff]
    %v2758 = vld [vmem:[%s2754 + $0x18] sm:$0xff]
    %v2759 = vld [vmem:[%s2754 + $0x20] sm:$0xff]
    %v2760 = vld [vmem:[%s2754 + $0x28] sm:$0xff]
    %v2761 = vld [vmem:[%s2754 + $0x30] sm:$0xff]
    %v2762 = vld [vmem:[%s2754 + $0x38] sm:$0xff]
    %v2763 = vld [vmem:[%s2754 + $0x40] sm:$0xff]
    %v2764 = vld [vmem:[%s2754 + $0x48] sm:$0xff]
    %v2765 = vld [vmem:[%s2754 + $0x50] sm:$0xff]
    %v2766 = vld [vmem:[%s2754 + $0x58] sm:$0xff]
    %v2767 = vld [vmem:[%s2754 + $0x60] sm:$0xff]
    %v2768 = vld [vmem:[%s2754 + $0x68] sm:$0xff]
    %v2769 = vld [vmem:[%s2754 + $0x70] sm:$0xff]
    %v2770 = vld [vmem:[%s2754 + $0x78] sm:$0xff]
    %2771 = vmatpush.msra.mxu0 %v2770
    %2772 = vmatpush.msra.mxu0 %v2769
    %2773 = vmatpush.msra.mxu0 %v2768
    %2774 = vmatpush.msra.mxu0 %v2767
    %2775 = vmatpush.msra.mxu0 %v2766
    %2776 = vmatpush.msra.mxu0 %v2765
    %2777 = vmatpush.msra.mxu0 %v2764
    %2778 = vmatpush.msra.mxu0 %v2763
    %2779 = vmatpush.msra.mxu0 %v2762
    %2780 = vmatpush.msra.mxu0 %v2761
    %2781 = vmatpush.msra.mxu0 %v2760
    %2782 = vmatpush.msra.mxu0 %v2759
    %2783 = vmatpush.msra.mxu0 %v2758
    %2784 = vmatpush.msra.mxu0 %v2757
    %2785 = vmatpush.msra.mxu0 %v2756
    %2786 = vmatpush.msra.mxu0 %v2755
    %2787 = vmatmul.f32.gmra.mxu0 %v2692
    %v2788 = vpop.f32.mrf.mxu0
    %v2789 = vadd.f32 0.0, %v2788
    %2790 = vmatmul.f32.gmra.mxu0 %v2695
    %v2791 = vpop.f32.mrf.mxu0
    %v2792 = vadd.f32 0.0, %v2791
    %2793 = vmatmul.f32.gmra.mxu0 %v2698
    %v2794 = vpop.f32.mrf.mxu0
    %v2795 = vadd.f32 0.0, %v2794
    %2796 = vmatmul.f32.gmra.mxu0 %v2701
    %v2797 = vpop.f32.mrf.mxu0
    %v2798 = vadd.f32 0.0, %v2797
    %2799 = vmatmul.f32.gmra.mxu0 %v2704
    %v2800 = vpop.f32.mrf.mxu0
    %v2801 = vadd.f32 0.0, %v2800
    %2802 = vmatmul.f32.gmra.mxu0 %v2707
    %v2803 = vpop.f32.mrf.mxu0
    %v2804 = vadd.f32 0.0, %v2803
    %2805 = vmatmul.f32.gmra.mxu0 %v2710
    %v2806 = vpop.f32.mrf.mxu0
    %v2807 = vadd.f32 0.0, %v2806
    %2808 = vmatmul.f32.gmra.mxu0 %v2713
    %v2809 = vpop.f32.mrf.mxu0
    %v2810 = vadd.f32 0.0, %v2809
    %2811 = vmatmul.f32.gmra.mxu0 %v2716
    %v2812 = vpop.f32.mrf.mxu0
    %v2813 = vadd.f32 0.0, %v2812
    %2814 = vmatmul.f32.gmra.mxu0 %v2719
    %v2815 = vpop.f32.mrf.mxu0
    %v2816 = vadd.f32 0.0, %v2815
    %2817 = vmatmul.f32.gmra.mxu0 %v2722
    %v2818 = vpop.f32.mrf.mxu0
    %v2819 = vadd.f32 0.0, %v2818
    %2820 = vmatmul.f32.gmra.mxu0 %v2725
    %v2821 = vpop.f32.mrf.mxu0
    %v2822 = vadd.f32 0.0, %v2821
    %2823 = vmatmul.f32.gmra.mxu0 %v2728
    %v2824 = vpop.f32.mrf.mxu0
    %v2825 = vadd.f32 0.0, %v2824
    %2826 = vmatmul.f32.gmra.mxu0 %v2731
    %v2827 = vpop.f32.mrf.mxu0
    %v2828 = vadd.f32 0.0, %v2827
    %2829 = vmatmul.f32.gmra.mxu0 %v2734
    %v2830 = vpop.f32.mrf.mxu0
    %v2831 = vadd.f32 0.0, %v2830
    %2832 = vmatmul.f32.gmra.mxu0 %v2737
    %v2833 = vpop.f32.mrf.mxu0
    %v2834 = vadd.f32 0.0, %v2833
    %2835 = vdwg.mxu0
    %2836 = vmatpush.msra.mxu0 %v2656
    %2837 = vmatpush.msra.mxu0 %v2655
    %2838 = vmatpush.msra.mxu0 %v2654
    %2839 = vmatpush.msra.mxu0 %v2653
    %2840 = vmatpush.msra.mxu0 %v2652
    %2841 = vmatpush.msra.mxu0 %v2651
    %2842 = vmatpush.msra.mxu0 %v2650
    %2843 = vmatpush.msra.mxu0 %v2649
    %2844 = vmatpush.msra.mxu0 %v2648
    %2845 = vmatpush.msra.mxu0 %v2647
    %2846 = vmatpush.msra.mxu0 %v2646
    %2847 = vmatpush.msra.mxu0 %v2645
    %2848 = vmatpush.msra.mxu0 %v2644
    %2849 = vmatpush.msra.mxu0 %v2643
    %2850 = vmatpush.msra.mxu0 %v2642
    %2851 = vmatpush.msra.mxu0 %v2641
    %2852 = vmatmul.f32.gmra.mxu0 %v2593
    %v2853 = vpop.f32.mrf.mxu0
    %v2854 = vadd.f32 %v2789, %v2853
    %2855 = vmatmul.f32.gmra.mxu0 %v2595
    %v2856 = vpop.f32.mrf.mxu0
    %v2857 = vadd.f32 %v2792, %v2856
    %2858 = vmatmul.f32.gmra.mxu0 %v2597
    %v2859 = vpop.f32.mrf.mxu0
    %v2860 = vadd.f32 %v2795, %v2859
    %2861 = vmatmul.f32.gmra.mxu0 %v2599
    %v2862 = vpop.f32.mrf.mxu0
    %v2863 = vadd.f32 %v2798, %v2862
    %2864 = vmatmul.f32.gmra.mxu0 %v2601
    %v2865 = vpop.f32.mrf.mxu0
    %v2866 = vadd.f32 %v2801, %v2865
    %2867 = vmatmul.f32.gmra.mxu0 %v2603
    %v2868 = vpop.f32.mrf.mxu0
    %v2869 = vadd.f32 %v2804, %v2868
    %2870 = vmatmul.f32.gmra.mxu0 %v2605
    %v2871 = vpop.f32.mrf.mxu0
    %v2872 = vadd.f32 %v2807, %v2871
    %2873 = vmatmul.f32.gmra.mxu0 %v2607
    %v2874 = vpop.f32.mrf.mxu0
    %v2875 = vadd.f32 %v2810, %v2874
    %2876 = vmatmul.f32.gmra.mxu0 %v2617
    %v2877 = vpop.f32.mrf.mxu0
    %v2878 = vadd.f32 %v2813, %v2877
    %2879 = vmatmul.f32.gmra.mxu0 %v2619
    %v2880 = vpop.f32.mrf.mxu0
    %v2881 = vadd.f32 %v2816, %v2880
    %2882 = vmatmul.f32.gmra.mxu0 %v2621
    %v2883 = vpop.f32.mrf.mxu0
    %v2884 = vadd.f32 %v2819, %v2883
    %2885 = vmatmul.f32.gmra.mxu0 %v2623
    %v2886 = vpop.f32.mrf.mxu0
    %v2887 = vadd.f32 %v2822, %v2886
    %2888 = vmatmul.f32.gmra.mxu0 %v2625
    %v2889 = vpop.f32.mrf.mxu0
    %v2890 = vadd.f32 %v2825, %v2889
    %2891 = vmatmul.f32.gmra.mxu0 %v2627
    %v2892 = vpop.f32.mrf.mxu0
    %v2893 = vadd.f32 %v2828, %v2892
    %2894 = vmatmul.f32.gmra.mxu0 %v2629
    %v2895 = vpop.f32.mrf.mxu0
    %v2896 = vadd.f32 %v2831, %v2895
    %2897 = vmatmul.f32.gmra.mxu0 %v2631
    %v2898 = vpop.f32.mrf.mxu0
    %v2899 = vadd.f32 %v2834, %v2898
    %2900 = vdwg.mxu0
    %vm2901 = vcmask 1045504
    %v2902 = vrot.slane %v2593, 2
    %v2903 = vrot.slane %v2594, 2
    %v2904 = vsel %vm2901, %v2902, %v2903
    %v2905 = vrot.slane %v2595, 2
    %v2906 = vrot.slane %v2596, 2
    %v2907 = vsel %vm2901, %v2905, %v2906
    %v2908 = vrot.slane %v2597, 2
    %v2909 = vrot.slane %v2598, 2
    %v2910 = vsel %vm2901, %v2908, %v2909
    %v2911 = vrot.slane %v2599, 2
    %v2912 = vrot.slane %v2600, 2
    %v2913 = vsel %vm2901, %v2911, %v2912
    %v2914 = vrot.slane %v2601, 2
    %v2915 = vrot.slane %v2602, 2
    %v2916 = vsel %vm2901, %v2914, %v2915
    %v2917 = vrot.slane %v2603, 2
    %v2918 = vrot.slane %v2604, 2
    %v2919 = vsel %vm2901, %v2917, %v2918
    %v2920 = vrot.slane %v2605, 2
    %v2921 = vrot.slane %v2606, 2
    %v2922 = vsel %vm2901, %v2920, %v2921
    %v2923 = vrot.slane %v2607, 2
    %v2924 = vrot.slane %v2608, 2
    %v2925 = vsel %vm2901, %v2923, %v2924
    %v2926 = vrot.slane %v2617, 2
    %v2927 = vrot.slane %v2618, 2
    %v2928 = vsel %vm2901, %v2926, %v2927
    %v2929 = vrot.slane %v2619, 2
    %v2930 = vrot.slane %v2620, 2
    %v2931 = vsel %vm2901, %v2929, %v2930
    %v2932 = vrot.slane %v2621, 2
    %v2933 = vrot.slane %v2622, 2
    %v2934 = vsel %vm2901, %v2932, %v2933
    %v2935 = vrot.slane %v2623, 2
    %v2936 = vrot.slane %v2624, 2
    %v2937 = vsel %vm2901, %v2935, %v2936
    %v2938 = vrot.slane %v2625, 2
    %v2939 = vrot.slane %v2626, 2
    %v2940 = vsel %vm2901, %v2938, %v2939
    %v2941 = vrot.slane %v2627, 2
    %v2942 = vrot.slane %v2628, 2
    %v2943 = vsel %vm2901, %v2941, %v2942
    %v2944 = vrot.slane %v2629, 2
    %v2945 = vrot.slane %v2630, 2
    %v2946 = vsel %vm2901, %v2944, %v2945
    %v2947 = vrot.slane %v2631, 2
    %v2948 = vrot.slane %v2632, 2
    %v2949 = vsel %vm2901, %v2947, %v2948
    %s2966 = scalar_lea.vmem %s4, 256
    %v2967 = vld [vmem:[%s2966] sm:$0xff]
    %v2968 = vld [vmem:[%s2966 + $0x8] sm:$0xff]
    %v2969 = vld [vmem:[%s2966 + $0x10] sm:$0xff]
    %v2970 = vld [vmem:[%s2966 + $0x18] sm:$0xff]
    %v2971 = vld [vmem:[%s2966 + $0x20] sm:$0xff]
    %v2972 = vld [vmem:[%s2966 + $0x28] sm:$0xff]
    %v2973 = vld [vmem:[%s2966 + $0x30] sm:$0xff]
    %v2974 = vld [vmem:[%s2966 + $0x38] sm:$0xff]
    %v2975 = vld [vmem:[%s2966 + $0x40] sm:$0xff]
    %v2976 = vld [vmem:[%s2966 + $0x48] sm:$0xff]
    %v2977 = vld [vmem:[%s2966 + $0x50] sm:$0xff]
    %v2978 = vld [vmem:[%s2966 + $0x58] sm:$0xff]
    %v2979 = vld [vmem:[%s2966 + $0x60] sm:$0xff]
    %v2980 = vld [vmem:[%s2966 + $0x68] sm:$0xff]
    %v2981 = vld [vmem:[%s2966 + $0x70] sm:$0xff]
    %v2982 = vld [vmem:[%s2966 + $0x78] sm:$0xff]
    %2983 = vmatpush.msra.mxu0 %v2982
    %2984 = vmatpush.msra.mxu0 %v2981
    %2985 = vmatpush.msra.mxu0 %v2980
    %2986 = vmatpush.msra.mxu0 %v2979
    %2987 = vmatpush.msra.mxu0 %v2978
    %2988 = vmatpush.msra.mxu0 %v2977
    %2989 = vmatpush.msra.mxu0 %v2976
    %2990 = vmatpush.msra.mxu0 %v2975
    %2991 = vmatpush.msra.mxu0 %v2974
    %2992 = vmatpush.msra.mxu0 %v2973
    %2993 = vmatpush.msra.mxu0 %v2972
    %2994 = vmatpush.msra.mxu0 %v2971
    %2995 = vmatpush.msra.mxu0 %v2970
    %2996 = vmatpush.msra.mxu0 %v2969
    %2997 = vmatpush.msra.mxu0 %v2968
    %2998 = vmatpush.msra.mxu0 %v2967
    %2999 = vmatmul.f32.gmra.mxu0 %v2904
    %v3000 = vpop.f32.mrf.mxu0
    %v3001 = vadd.f32 0.0, %v3000
    %3002 = vmatmul.f32.gmra.mxu0 %v2907
    %v3003 = vpop.f32.mrf.mxu0
    %v3004 = vadd.f32 0.0, %v3003
    %3005 = vmatmul.f32.gmra.mxu0 %v2910
    %v3006 = vpop.f32.mrf.mxu0
    %v3007 = vadd.f32 0.0, %v3006
    %3008 = vmatmul.f32.gmra.mxu0 %v2913
    %v3009 = vpop.f32.mrf.mxu0
    %v3010 = vadd.f32 0.0, %v3009
    %3011 = vmatmul.f32.gmra.mxu0 %v2916
    %v3012 = vpop.f32.mrf.mxu0
    %v3013 = vadd.f32 0.0, %v3012
    %3014 = vmatmul.f32.gmra.mxu0 %v2919
    %v3015 = vpop.f32.mrf.mxu0
    %v3016 = vadd.f32 0.0, %v3015
    %3017 = vmatmul.f32.gmra.mxu0 %v2922
    %v3018 = vpop.f32.mrf.mxu0
    %v3019 = vadd.f32 0.0, %v3018
    %3020 = vmatmul.f32.gmra.mxu0 %v2925
    %v3021 = vpop.f32.mrf.mxu0
    %v3022 = vadd.f32 0.0, %v3021
    %3023 = vmatmul.f32.gmra.mxu0 %v2928
    %v3024 = vpop.f32.mrf.mxu0
    %v3025 = vadd.f32 0.0, %v3024
    %3026 = vmatmul.f32.gmra.mxu0 %v2931
    %v3027 = vpop.f32.mrf.mxu0
    %v3028 = vadd.f32 0.0, %v3027
    %3029 = vmatmul.f32.gmra.mxu0 %v2934
    %v3030 = vpop.f32.mrf.mxu0
    %v3031 = vadd.f32 0.0, %v3030
    %3032 = vmatmul.f32.gmra.mxu0 %v2937
    %v3033 = vpop.f32.mrf.mxu0
    %v3034 = vadd.f32 0.0, %v3033
    %3035 = vmatmul.f32.gmra.mxu0 %v2940
    %v3036 = vpop.f32.mrf.mxu0
    %v3037 = vadd.f32 0.0, %v3036
    %3038 = vmatmul.f32.gmra.mxu0 %v2943
    %v3039 = vpop.f32.mrf.mxu0
    %v3040 = vadd.f32 0.0, %v3039
    %3041 = vmatmul.f32.gmra.mxu0 %v2946
    %v3042 = vpop.f32.mrf.mxu0
    %v3043 = vadd.f32 0.0, %v3042
    %3044 = vmatmul.f32.gmra.mxu0 %v2949
    %v3045 = vpop.f32.mrf.mxu0
    %v3046 = vadd.f32 0.0, %v3045
    %3047 = vdwg.mxu0
    %v3048 = vadd.f32 %v2854, %v3001
    %v3049 = vadd.f32 %v2857, %v3004
    %v3050 = vadd.f32 %v2860, %v3007
    %v3051 = vadd.f32 %v2863, %v3010
    %v3052 = vadd.f32 %v2866, %v3013
    %v3053 = vadd.f32 %v2869, %v3016
    %v3054 = vadd.f32 %v2872, %v3019
    %v3055 = vadd.f32 %v2875, %v3022
    %v3056 = vadd.f32 %v2878, %v3025
    %v3057 = vadd.f32 %v2881, %v3028
    %v3058 = vadd.f32 %v2884, %v3031
    %v3059 = vadd.f32 %v2887, %v3034
    %v3060 = vadd.f32 %v2890, %v3037
    %v3061 = vadd.f32 %v2893, %v3040
    %v3062 = vadd.f32 %v2896, %v3043
    %v3063 = vadd.f32 %v2899, %v3046
    %vm3064 = vcmask 1044480
    %v3065 = vrot.slane %v2593, 3
    %v3066 = vrot.slane %v2594, 3
    %v3067 = vsel %vm3064, %v3065, %v3066
    %v3068 = vrot.slane %v2595, 3
    %v3069 = vrot.slane %v2596, 3
    %v3070 = vsel %vm3064, %v3068, %v3069
    %v3071 = vrot.slane %v2597, 3
    %v3072 = vrot.slane %v2598, 3
    %v3073 = vsel %vm3064, %v3071, %v3072
    %v3074 = vrot.slane %v2599, 3
    %v3075 = vrot.slane %v2600, 3
    %v3076 = vsel %vm3064, %v3074, %v3075
    %v3077 = vrot.slane %v2601, 3
    %v3078 = vrot.slane %v2602, 3
    %v3079 = vsel %vm3064, %v3077, %v3078
    %v3080 = vrot.slane %v2603, 3
    %v3081 = vrot.slane %v2604, 3
    %v3082 = vsel %vm3064, %v3080, %v3081
    %v3083 = vrot.slane %v2605, 3
    %v3084 = vrot.slane %v2606, 3
    %v3085 = vsel %vm3064, %v3083, %v3084
    %v3086 = vrot.slane %v2607, 3
    %v3087 = vrot.slane %v2608, 3
    %v3088 = vsel %vm3064, %v3086, %v3087
    %v3089 = vrot.slane %v2617, 3
    %v3090 = vrot.slane %v2618, 3
    %v3091 = vsel %vm3064, %v3089, %v3090
    %v3092 = vrot.slane %v2619, 3
    %v3093 = vrot.slane %v2620, 3
    %v3094 = vsel %vm3064, %v3092, %v3093
    %v3095 = vrot.slane %v2621, 3
    %v3096 = vrot.slane %v2622, 3
    %v3097 = vsel %vm3064, %v3095, %v3096
    %v3098 = vrot.slane %v2623, 3
    %v3099 = vrot.slane %v2624, 3
    %v3100 = vsel %vm3064, %v3098, %v3099
    %v3101 = vrot.slane %v2625, 3
    %v3102 = vrot.slane %v2626, 3
    %v3103 = vsel %vm3064, %v3101, %v3102
    %v3104 = vrot.slane %v2627, 3
    %v3105 = vrot.slane %v2628, 3
    %v3106 = vsel %vm3064, %v3104, %v3105
    %v3107 = vrot.slane %v2629, 3
    %v3108 = vrot.slane %v2630, 3
    %v3109 = vsel %vm3064, %v3107, %v3108
    %v3110 = vrot.slane %v2631, 3
    %v3111 = vrot.slane %v2632, 3
    %v3112 = vsel %vm3064, %v3110, %v3111
    %s3129 = scalar_lea.vmem %s4, 384
    %v3130 = vld [vmem:[%s3129] sm:$0xff]
    %v3131 = vld [vmem:[%s3129 + $0x8] sm:$0xff]
    %v3132 = vld [vmem:[%s3129 + $0x10] sm:$0xff]
    %v3133 = vld [vmem:[%s3129 + $0x18] sm:$0xff]
    %v3134 = vld [vmem:[%s3129 + $0x20] sm:$0xff]
    %v3135 = vld [vmem:[%s3129 + $0x28] sm:$0xff]
    %v3136 = vld [vmem:[%s3129 + $0x30] sm:$0xff]
    %v3137 = vld [vmem:[%s3129 + $0x38] sm:$0xff]
    %v3138 = vld [vmem:[%s3129 + $0x40] sm:$0xff]
    %v3139 = vld [vmem:[%s3129 + $0x48] sm:$0xff]
    %v3140 = vld [vmem:[%s3129 + $0x50] sm:$0xff]
    %v3141 = vld [vmem:[%s3129 + $0x58] sm:$0xff]
    %v3142 = vld [vmem:[%s3129 + $0x60] sm:$0xff]
    %v3143 = vld [vmem:[%s3129 + $0x68] sm:$0xff]
    %v3144 = vld [vmem:[%s3129 + $0x70] sm:$0xff]
    %v3145 = vld [vmem:[%s3129 + $0x78] sm:$0xff]
    %3146 = vmatpush.msra.mxu0 %v3145
    %3147 = vmatpush.msra.mxu0 %v3144
    %3148 = vmatpush.msra.mxu0 %v3143
    %3149 = vmatpush.msra.mxu0 %v3142
    %3150 = vmatpush.msra.mxu0 %v3141
    %3151 = vmatpush.msra.mxu0 %v3140
    %3152 = vmatpush.msra.mxu0 %v3139
    %3153 = vmatpush.msra.mxu0 %v3138
    %3154 = vmatpush.msra.mxu0 %v3137
    %3155 = vmatpush.msra.mxu0 %v3136
    %3156 = vmatpush.msra.mxu0 %v3135
    %3157 = vmatpush.msra.mxu0 %v3134
    %3158 = vmatpush.msra.mxu0 %v3133
    %3159 = vmatpush.msra.mxu0 %v3132
    %3160 = vmatpush.msra.mxu0 %v3131
    %3161 = vmatpush.msra.mxu0 %v3130
    %3162 = vmatmul.f32.gmra.mxu0 %v3067
    %v3163 = vpop.f32.mrf.mxu0
    %v3164 = vadd.f32 0.0, %v3163
    %3165 = vmatmul.f32.gmra.mxu0 %v3070
    %v3166 = vpop.f32.mrf.mxu0
    %v3167 = vadd.f32 0.0, %v3166
    %3168 = vmatmul.f32.gmra.mxu0 %v3073
    %v3169 = vpop.f32.mrf.mxu0
    %v3170 = vadd.f32 0.0, %v3169
    %3171 = vmatmul.f32.gmra.mxu0 %v3076
    %v3172 = vpop.f32.mrf.mxu0
    %v3173 = vadd.f32 0.0, %v3172
    %3174 = vmatmul.f32.gmra.mxu0 %v3079
    %v3175 = vpop.f32.mrf.mxu0
    %v3176 = vadd.f32 0.0, %v3175
    %3177 = vmatmul.f32.gmra.mxu0 %v3082
    %v3178 = vpop.f32.mrf.mxu0
    %v3179 = vadd.f32 0.0, %v3178
    %3180 = vmatmul.f32.gmra.mxu0 %v3085
    %v3181 = vpop.f32.mrf.mxu0
    %v3182 = vadd.f32 0.0, %v3181
    %3183 = vmatmul.f32.gmra.mxu0 %v3088
    %v3184 = vpop.f32.mrf.mxu0
    %v3185 = vadd.f32 0.0, %v3184
    %3186 = vmatmul.f32.gmra.mxu0 %v3091
    %v3187 = vpop.f32.mrf.mxu0
    %v3188 = vadd.f32 0.0, %v3187
    %3189 = vmatmul.f32.gmra.mxu0 %v3094
    %v3190 = vpop.f32.mrf.mxu0
    %v3191 = vadd.f32 0.0, %v3190
    %3192 = vmatmul.f32.gmra.mxu0 %v3097
    %v3193 = vpop.f32.mrf.mxu0
    %v3194 = vadd.f32 0.0, %v3193
    %3195 = vmatmul.f32.gmra.mxu0 %v3100
    %v3196 = vpop.f32.mrf.mxu0
    %v3197 = vadd.f32 0.0, %v3196
    %3198 = vmatmul.f32.gmra.mxu0 %v3103
    %v3199 = vpop.f32.mrf.mxu0
    %v3200 = vadd.f32 0.0, %v3199
    %3201 = vmatmul.f32.gmra.mxu0 %v3106
    %v3202 = vpop.f32.mrf.mxu0
    %v3203 = vadd.f32 0.0, %v3202
    %3204 = vmatmul.f32.gmra.mxu0 %v3109
    %v3205 = vpop.f32.mrf.mxu0
    %v3206 = vadd.f32 0.0, %v3205
    %3207 = vmatmul.f32.gmra.mxu0 %v3112
    %v3208 = vpop.f32.mrf.mxu0
    %v3209 = vadd.f32 0.0, %v3208
    %3210 = vdwg.mxu0
    %v3211 = vadd.f32 %v3048, %v3164
    %v3212 = vadd.f32 %v3049, %v3167
    %v3213 = vadd.f32 %v3050, %v3170
    %v3214 = vadd.f32 %v3051, %v3173
    %v3215 = vadd.f32 %v3052, %v3176
    %v3216 = vadd.f32 %v3053, %v3179
    %v3217 = vadd.f32 %v3054, %v3182
    %v3218 = vadd.f32 %v3055, %v3185
    %v3219 = vadd.f32 %v3056, %v3188
    %v3220 = vadd.f32 %v3057, %v3191
    %v3221 = vadd.f32 %v3058, %v3194
    %v3222 = vadd.f32 %v3059, %v3197
    %v3223 = vadd.f32 %v3060, %v3200
    %v3224 = vadd.f32 %v3061, %v3203
    %v3225 = vadd.f32 %v3062, %v3206
    %v3226 = vadd.f32 %v3063, %v3209
    %vm3227 = vcmask 1043456
    %v3228 = vrot.slane %v2593, 4
    %v3229 = vrot.slane %v2594, 4
    %v3230 = vsel %vm3227, %v3228, %v3229
    %v3231 = vrot.slane %v2595, 4
    %v3232 = vrot.slane %v2596, 4
    %v3233 = vsel %vm3227, %v3231, %v3232
    %v3234 = vrot.slane %v2597, 4
    %v3235 = vrot.slane %v2598, 4
    %v3236 = vsel %vm3227, %v3234, %v3235
    %v3237 = vrot.slane %v2599, 4
    %v3238 = vrot.slane %v2600, 4
    %v3239 = vsel %vm3227, %v3237, %v3238
    %v3240 = vrot.slane %v2601, 4
    %v3241 = vrot.slane %v2602, 4
    %v3242 = vsel %vm3227, %v3240, %v3241
    %v3243 = vrot.slane %v2603, 4
    %v3244 = vrot.slane %v2604, 4
    %v3245 = vsel %vm3227, %v3243, %v3244
    %v3246 = vrot.slane %v2605, 4
    %v3247 = vrot.slane %v2606, 4
    %v3248 = vsel %vm3227, %v3246, %v3247
    %v3249 = vrot.slane %v2607, 4
    %v3250 = vrot.slane %v2608, 4
    %v3251 = vsel %vm3227, %v3249, %v3250
    %v3252 = vrot.slane %v2617, 4
    %v3253 = vrot.slane %v2618, 4
    %v3254 = vsel %vm3227, %v3252, %v3253
    %v3255 = vrot.slane %v2619, 4
    %v3256 = vrot.slane %v2620, 4
    %v3257 = vsel %vm3227, %v3255, %v3256
    %v3258 = vrot.slane %v2621, 4
    %v3259 = vrot.slane %v2622, 4
    %v3260 = vsel %vm3227, %v3258, %v3259
    %v3261 = vrot.slane %v2623, 4
    %v3262 = vrot.slane %v2624, 4
    %v3263 = vsel %vm3227, %v3261, %v3262
    %v3264 = vrot.slane %v2625, 4
    %v3265 = vrot.slane %v2626, 4
    %v3266 = vsel %vm3227, %v3264, %v3265
    %v3267 = vrot.slane %v2627, 4
    %v3268 = vrot.slane %v2628, 4
    %v3269 = vsel %vm3227, %v3267, %v3268
    %v3270 = vrot.slane %v2629, 4
    %v3271 = vrot.slane %v2630, 4
    %v3272 = vsel %vm3227, %v3270, %v3271
    %v3273 = vrot.slane %v2631, 4
    %v3274 = vrot.slane %v2632, 4
    %v3275 = vsel %vm3227, %v3273, %v3274
    %s3292 = scalar_lea.vmem %s4, 512
    %v3293 = vld [vmem:[%s3292] sm:$0xff]
    %v3294 = vld [vmem:[%s3292 + $0x8] sm:$0xff]
    %v3295 = vld [vmem:[%s3292 + $0x10] sm:$0xff]
    %v3296 = vld [vmem:[%s3292 + $0x18] sm:$0xff]
    %v3297 = vld [vmem:[%s3292 + $0x20] sm:$0xff]
    %v3298 = vld [vmem:[%s3292 + $0x28] sm:$0xff]
    %v3299 = vld [vmem:[%s3292 + $0x30] sm:$0xff]
    %v3300 = vld [vmem:[%s3292 + $0x38] sm:$0xff]
    %v3301 = vld [vmem:[%s3292 + $0x40] sm:$0xff]
    %v3302 = vld [vmem:[%s3292 + $0x48] sm:$0xff]
    %v3303 = vld [vmem:[%s3292 + $0x50] sm:$0xff]
    %v3304 = vld [vmem:[%s3292 + $0x58] sm:$0xff]
    %v3305 = vld [vmem:[%s3292 + $0x60] sm:$0xff]
    %v3306 = vld [vmem:[%s3292 + $0x68] sm:$0xff]
    %v3307 = vld [vmem:[%s3292 + $0x70] sm:$0xff]
    %v3308 = vld [vmem:[%s3292 + $0x78] sm:$0xff]
    %3309 = vmatpush.msra.mxu0 %v3308
    %3310 = vmatpush.msra.mxu0 %v3307
    %3311 = vmatpush.msra.mxu0 %v3306
    %3312 = vmatpush.msra.mxu0 %v3305
    %3313 = vmatpush.msra.mxu0 %v3304
    %3314 = vmatpush.msra.mxu0 %v3303
    %3315 = vmatpush.msra.mxu0 %v3302
    %3316 = vmatpush.msra.mxu0 %v3301
    %3317 = vmatpush.msra.mxu0 %v3300
    %3318 = vmatpush.msra.mxu0 %v3299
    %3319 = vmatpush.msra.mxu0 %v3298
    %3320 = vmatpush.msra.mxu0 %v3297
    %3321 = vmatpush.msra.mxu0 %v3296
    %3322 = vmatpush.msra.mxu0 %v3295
    %3323 = vmatpush.msra.mxu0 %v3294
    %3324 = vmatpush.msra.mxu0 %v3293
    %3325 = vmatmul.f32.gmra.mxu0 %v3230
    %v3326 = vpop.f32.mrf.mxu0
    %v3327 = vadd.f32 0.0, %v3326
    %3328 = vmatmul.f32.gmra.mxu0 %v3233
    %v3329 = vpop.f32.mrf.mxu0
    %v3330 = vadd.f32 0.0, %v3329
    %3331 = vmatmul.f32.gmra.mxu0 %v3236
    %v3332 = vpop.f32.mrf.mxu0
    %v3333 = vadd.f32 0.0, %v3332
    %3334 = vmatmul.f32.gmra.mxu0 %v3239
    %v3335 = vpop.f32.mrf.mxu0
    %v3336 = vadd.f32 0.0, %v3335
    %3337 = vmatmul.f32.gmra.mxu0 %v3242
    %v3338 = vpop.f32.mrf.mxu0
    %v3339 = vadd.f32 0.0, %v3338
    %3340 = vmatmul.f32.gmra.mxu0 %v3245
    %v3341 = vpop.f32.mrf.mxu0
    %v3342 = vadd.f32 0.0, %v3341
    %3343 = vmatmul.f32.gmra.mxu0 %v3248
    %v3344 = vpop.f32.mrf.mxu0
    %v3345 = vadd.f32 0.0, %v3344
    %3346 = vmatmul.f32.gmra.mxu0 %v3251
    %v3347 = vpop.f32.mrf.mxu0
    %v3348 = vadd.f32 0.0, %v3347
    %3349 = vmatmul.f32.gmra.mxu0 %v3254
    %v3350 = vpop.f32.mrf.mxu0
    %v3351 = vadd.f32 0.0, %v3350
    %3352 = vmatmul.f32.gmra.mxu0 %v3257
    %v3353 = vpop.f32.mrf.mxu0
    %v3354 = vadd.f32 0.0, %v3353
    %3355 = vmatmul.f32.gmra.mxu0 %v3260
    %v3356 = vpop.f32.mrf.mxu0
    %v3357 = vadd.f32 0.0, %v3356
    %3358 = vmatmul.f32.gmra.mxu0 %v3263
    %v3359 = vpop.f32.mrf.mxu0
    %v3360 = vadd.f32 0.0, %v3359
    %3361 = vmatmul.f32.gmra.mxu0 %v3266
    %v3362 = vpop.f32.mrf.mxu0
    %v3363 = vadd.f32 0.0, %v3362
    %3364 = vmatmul.f32.gmra.mxu0 %v3269
    %v3365 = vpop.f32.mrf.mxu0
    %v3366 = vadd.f32 0.0, %v3365
    %3367 = vmatmul.f32.gmra.mxu0 %v3272
    %v3368 = vpop.f32.mrf.mxu0
    %v3369 = vadd.f32 0.0, %v3368
    %3370 = vmatmul.f32.gmra.mxu0 %v3275
    %v3371 = vpop.f32.mrf.mxu0
    %v3372 = vadd.f32 0.0, %v3371
    %3373 = vdwg.mxu0
    %v3374 = vadd.f32 %v3211, %v3327
    %v3375 = vadd.f32 %v3212, %v3330
    %v3376 = vadd.f32 %v3213, %v3333
    %v3377 = vadd.f32 %v3214, %v3336
    %v3378 = vadd.f32 %v3215, %v3339
    %v3379 = vadd.f32 %v3216, %v3342
    %v3380 = vadd.f32 %v3217, %v3345
    %v3381 = vadd.f32 %v3218, %v3348
    %v3382 = vadd.f32 %v3219, %v3351
    %v3383 = vadd.f32 %v3220, %v3354
    %v3384 = vadd.f32 %v3221, %v3357
    %v3385 = vadd.f32 %v3222, %v3360
    %v3386 = vadd.f32 %v3223, %v3363
    %v3387 = vadd.f32 %v3224, %v3366
    %v3388 = vadd.f32 %v3225, %v3369
    %v3389 = vadd.f32 %v3226, %v3372
    %s3390 = scalar_lea.vmem %s4, 640
    %v3391 = vld [vmem:[%s3390] sm:$0xff]
    %v3392 = vld [vmem:[%s3390 + $0x8] sm:$0xff]
    %v3393 = vld [vmem:[%s3390 + $0x10] sm:$0xff]
    %v3394 = vld [vmem:[%s3390 + $0x18] sm:$0xff]
    %v3395 = vld [vmem:[%s3390 + $0x20] sm:$0xff]
    %v3396 = vld [vmem:[%s3390 + $0x28] sm:$0xff]
    %v3397 = vld [vmem:[%s3390 + $0x30] sm:$0xff]
    %v3398 = vld [vmem:[%s3390 + $0x38] sm:$0xff]
    %v3399 = vld [vmem:[%s3390 + $0x40] sm:$0xff]
    %v3400 = vld [vmem:[%s3390 + $0x48] sm:$0xff]
    %v3401 = vld [vmem:[%s3390 + $0x50] sm:$0xff]
    %v3402 = vld [vmem:[%s3390 + $0x58] sm:$0xff]
    %v3403 = vld [vmem:[%s3390 + $0x60] sm:$0xff]
    %v3404 = vld [vmem:[%s3390 + $0x68] sm:$0xff]
    %v3405 = vld [vmem:[%s3390 + $0x70] sm:$0xff]
    %v3406 = vld [vmem:[%s3390 + $0x78] sm:$0xff]
    %3407 = vmatpush.msra.mxu0 %v3406
    %3408 = vmatpush.msra.mxu0 %v3405
    %3409 = vmatpush.msra.mxu0 %v3404
    %3410 = vmatpush.msra.mxu0 %v3403
    %3411 = vmatpush.msra.mxu0 %v3402
    %3412 = vmatpush.msra.mxu0 %v3401
    %3413 = vmatpush.msra.mxu0 %v3400
    %3414 = vmatpush.msra.mxu0 %v3399
    %3415 = vmatpush.msra.mxu0 %v3398
    %3416 = vmatpush.msra.mxu0 %v3397
    %3417 = vmatpush.msra.mxu0 %v3396
    %3418 = vmatpush.msra.mxu0 %v3395
    %3419 = vmatpush.msra.mxu0 %v3394
    %3420 = vmatpush.msra.mxu0 %v3393
    %3421 = vmatpush.msra.mxu0 %v3392
    %3422 = vmatpush.msra.mxu0 %v3391
    %3423 = vmatmul.f32.gmra.mxu0 %v2595
    %v3424 = vpop.f32.mrf.mxu0
    %v3425 = vadd.f32 0.0, %v3424
    %3426 = vmatmul.f32.gmra.mxu0 %v2597
    %v3427 = vpop.f32.mrf.mxu0
    %v3428 = vadd.f32 0.0, %v3427
    %3429 = vmatmul.f32.gmra.mxu0 %v2599
    %v3430 = vpop.f32.mrf.mxu0
    %v3431 = vadd.f32 0.0, %v3430
    %3432 = vmatmul.f32.gmra.mxu0 %v2601
    %v3433 = vpop.f32.mrf.mxu0
    %v3434 = vadd.f32 0.0, %v3433
    %3435 = vmatmul.f32.gmra.mxu0 %v2603
    %v3436 = vpop.f32.mrf.mxu0
    %v3437 = vadd.f32 0.0, %v3436
    %3438 = vmatmul.f32.gmra.mxu0 %v2605
    %v3439 = vpop.f32.mrf.mxu0
    %v3440 = vadd.f32 0.0, %v3439
    %3441 = vmatmul.f32.gmra.mxu0 %v2607
    %v3442 = vpop.f32.mrf.mxu0
    %v3443 = vadd.f32 0.0, %v3442
    %3444 = vmatmul.f32.gmra.mxu0 %v2609
    %v3445 = vpop.f32.mrf.mxu0
    %v3446 = vadd.f32 0.0, %v3445
    %3447 = vmatmul.f32.gmra.mxu0 %v2619
    %v3448 = vpop.f32.mrf.mxu0
    %v3449 = vadd.f32 0.0, %v3448
    %3450 = vmatmul.f32.gmra.mxu0 %v2621
    %v3451 = vpop.f32.mrf.mxu0
    %v3452 = vadd.f32 0.0, %v3451
    %3453 = vmatmul.f32.gmra.mxu0 %v2623
    %v3454 = vpop.f32.mrf.mxu0
    %v3455 = vadd.f32 0.0, %v3454
    %3456 = vmatmul.f32.gmra.mxu0 %v2625
    %v3457 = vpop.f32.mrf.mxu0
    %v3458 = vadd.f32 0.0, %v3457
    %3459 = vmatmul.f32.gmra.mxu0 %v2627
    %v3460 = vpop.f32.mrf.mxu0
    %v3461 = vadd.f32 0.0, %v3460
    %3462 = vmatmul.f32.gmra.mxu0 %v2629
    %v3463 = vpop.f32.mrf.mxu0
    %v3464 = vadd.f32 0.0, %v3463
    %3465 = vmatmul.f32.gmra.mxu0 %v2631
    %v3466 = vpop.f32.mrf.mxu0
    %v3467 = vadd.f32 0.0, %v3466
    %3468 = vmatmul.f32.gmra.mxu0 %v2633
    %v3469 = vpop.f32.mrf.mxu0
    %v3470 = vadd.f32 0.0, %v3469
    %3471 = vdwg.mxu0
    %v3472 = vadd.f32 %v3374, %v3425
    %v3473 = vadd.f32 %v3375, %v3428
    %v3474 = vadd.f32 %v3376, %v3431
    %v3475 = vadd.f32 %v3377, %v3434
    %v3476 = vadd.f32 %v3378, %v3437
    %v3477 = vadd.f32 %v3379, %v3440
    %v3478 = vadd.f32 %v3380, %v3443
    %v3479 = vadd.f32 %v3381, %v3446
    %v3480 = vadd.f32 %v3382, %v3449
    %v3481 = vadd.f32 %v3383, %v3452
    %v3482 = vadd.f32 %v3384, %v3455
    %v3483 = vadd.f32 %v3385, %v3458
    %v3484 = vadd.f32 %v3386, %v3461
    %v3485 = vadd.f32 %v3387, %v3464
    %v3486 = vadd.f32 %v3388, %v3467
    %v3487 = vadd.f32 %v3389, %v3470
    %v3492 = vrot.slane %v2609, 1
    %v3493 = vrot.slane %v2610, 1
    %v3494 = vsel %vm2689, %v3492, %v3493
    %v3495 = vrot.slane %v2633, 1
    %v3496 = vrot.slane %v2634, 1
    %v3497 = vsel %vm2689, %v3495, %v3496
    %s3500 = scalar_lea.vmem %s4, 768
    %v3501 = vld [vmem:[%s3500] sm:$0xff]
    %v3502 = vld [vmem:[%s3500 + $0x8] sm:$0xff]
    %v3503 = vld [vmem:[%s3500 + $0x10] sm:$0xff]
    %v3504 = vld [vmem:[%s3500 + $0x18] sm:$0xff]
    %v3505 = vld [vmem:[%s3500 + $0x20] sm:$0xff]
    %v3506 = vld [vmem:[%s3500 + $0x28] sm:$0xff]
    %v3507 = vld [vmem:[%s3500 + $0x30] sm:$0xff]
    %v3508 = vld [vmem:[%s3500 + $0x38] sm:$0xff]
    %v3509 = vld [vmem:[%s3500 + $0x40] sm:$0xff]
    %v3510 = vld [vmem:[%s3500 + $0x48] sm:$0xff]
    %v3511 = vld [vmem:[%s3500 + $0x50] sm:$0xff]
    %v3512 = vld [vmem:[%s3500 + $0x58] sm:$0xff]
    %v3513 = vld [vmem:[%s3500 + $0x60] sm:$0xff]
    %v3514 = vld [vmem:[%s3500 + $0x68] sm:$0xff]
    %v3515 = vld [vmem:[%s3500 + $0x70] sm:$0xff]
    %v3516 = vld [vmem:[%s3500 + $0x78] sm:$0xff]
    %3517 = vmatpush.msra.mxu0 %v3516
    %3518 = vmatpush.msra.mxu0 %v3515
    %3519 = vmatpush.msra.mxu0 %v3514
    %3520 = vmatpush.msra.mxu0 %v3513
    %3521 = vmatpush.msra.mxu0 %v3512
    %3522 = vmatpush.msra.mxu0 %v3511
    %3523 = vmatpush.msra.mxu0 %v3510
    %3524 = vmatpush.msra.mxu0 %v3509
    %3525 = vmatpush.msra.mxu0 %v3508
    %3526 = vmatpush.msra.mxu0 %v3507
    %3527 = vmatpush.msra.mxu0 %v3506
    %3528 = vmatpush.msra.mxu0 %v3505
    %3529 = vmatpush.msra.mxu0 %v3504
    %3530 = vmatpush.msra.mxu0 %v3503
    %3531 = vmatpush.msra.mxu0 %v3502
    %3532 = vmatpush.msra.mxu0 %v3501
    %3533 = vmatmul.f32.gmra.mxu0 %v2695
    %v3534 = vpop.f32.mrf.mxu0
    %v3535 = vadd.f32 0.0, %v3534
    %3536 = vmatmul.f32.gmra.mxu0 %v2698
    %v3537 = vpop.f32.mrf.mxu0
    %v3538 = vadd.f32 0.0, %v3537
    %3539 = vmatmul.f32.gmra.mxu0 %v2701
    %v3540 = vpop.f32.mrf.mxu0
    %v3541 = vadd.f32 0.0, %v3540
    %3542 = vmatmul.f32.gmra.mxu0 %v2704
    %v3543 = vpop.f32.mrf.mxu0
    %v3544 = vadd.f32 0.0, %v3543
    %3545 = vmatmul.f32.gmra.mxu0 %v2707
    %v3546 = vpop.f32.mrf.mxu0
    %v3547 = vadd.f32 0.0, %v3546
    %3548 = vmatmul.f32.gmra.mxu0 %v2710
    %v3549 = vpop.f32.mrf.mxu0
    %v3550 = vadd.f32 0.0, %v3549
    %3551 = vmatmul.f32.gmra.mxu0 %v2713
    %v3552 = vpop.f32.mrf.mxu0
    %v3553 = vadd.f32 0.0, %v3552
    %3554 = vmatmul.f32.gmra.mxu0 %v3494
    %v3555 = vpop.f32.mrf.mxu0
    %v3556 = vadd.f32 0.0, %v3555
    %3557 = vmatmul.f32.gmra.mxu0 %v2719
    %v3558 = vpop.f32.mrf.mxu0
    %v3559 = vadd.f32 0.0, %v3558
    %3560 = vmatmul.f32.gmra.mxu0 %v2722
    %v3561 = vpop.f32.mrf.mxu0
    %v3562 = vadd.f32 0.0, %v3561
    %3563 = vmatmul.f32.gmra.mxu0 %v2725
    %v3564 = vpop.f32.mrf.mxu0
    %v3565 = vadd.f32 0.0, %v3564
    %3566 = vmatmul.f32.gmra.mxu0 %v2728
    %v3567 = vpop.f32.mrf.mxu0
    %v3568 = vadd.f32 0.0, %v3567
    %3569 = vmatmul.f32.gmra.mxu0 %v2731
    %v3570 = vpop.f32.mrf.mxu0
    %v3571 = vadd.f32 0.0, %v3570
    %3572 = vmatmul.f32.gmra.mxu0 %v2734
    %v3573 = vpop.f32.mrf.mxu0
    %v3574 = vadd.f32 0.0, %v3573
    %3575 = vmatmul.f32.gmra.mxu0 %v2737
    %v3576 = vpop.f32.mrf.mxu0
    %v3577 = vadd.f32 0.0, %v3576
    %3578 = vmatmul.f32.gmra.mxu0 %v3497
    %v3579 = vpop.f32.mrf.mxu0
    %v3580 = vadd.f32 0.0, %v3579
    %3581 = vdwg.mxu0
    %v3582 = vadd.f32 %v3472, %v3535
    %v3583 = vadd.f32 %v3473, %v3538
    %v3584 = vadd.f32 %v3474, %v3541
    %v3585 = vadd.f32 %v3475, %v3544
    %v3586 = vadd.f32 %v3476, %v3547
    %v3587 = vadd.f32 %v3477, %v3550
    %v3588 = vadd.f32 %v3478, %v3553
    %v3589 = vadd.f32 %v3479, %v3556
    %v3590 = vadd.f32 %v3480, %v3559
    %v3591 = vadd.f32 %v3481, %v3562
    %v3592 = vadd.f32 %v3482, %v3565
    %v3593 = vadd.f32 %v3483, %v3568
    %v3594 = vadd.f32 %v3484, %v3571
    %v3595 = vadd.f32 %v3485, %v3574
    %v3596 = vadd.f32 %v3486, %v3577
    %v3597 = vadd.f32 %v3487, %v3580
    %v3598 = vrot.slane %v2609, 2
    %v3599 = vrot.slane %v2610, 2
    %v3600 = vsel %vm2901, %v3598, %v3599
    %v3601 = vrot.slane %v2633, 2
    %v3602 = vrot.slane %v2634, 2
    %v3603 = vsel %vm2901, %v3601, %v3602
    %s3606 = scalar_lea.vmem %s4, 896
    %v3607 = vld [vmem:[%s3606] sm:$0xff]
    %v3608 = vld [vmem:[%s3606 + $0x8] sm:$0xff]
    %v3609 = vld [vmem:[%s3606 + $0x10] sm:$0xff]
    %v3610 = vld [vmem:[%s3606 + $0x18] sm:$0xff]
    %v3611 = vld [vmem:[%s3606 + $0x20] sm:$0xff]
    %v3612 = vld [vmem:[%s3606 + $0x28] sm:$0xff]
    %v3613 = vld [vmem:[%s3606 + $0x30] sm:$0xff]
    %v3614 = vld [vmem:[%s3606 + $0x38] sm:$0xff]
    %v3615 = vld [vmem:[%s3606 + $0x40] sm:$0xff]
    %v3616 = vld [vmem:[%s3606 + $0x48] sm:$0xff]
    %v3617 = vld [vmem:[%s3606 + $0x50] sm:$0xff]
    %v3618 = vld [vmem:[%s3606 + $0x58] sm:$0xff]
    %v3619 = vld [vmem:[%s3606 + $0x60] sm:$0xff]
    %v3620 = vld [vmem:[%s3606 + $0x68] sm:$0xff]
    %v3621 = vld [vmem:[%s3606 + $0x70] sm:$0xff]
    %v3622 = vld [vmem:[%s3606 + $0x78] sm:$0xff]
    %3623 = vmatpush.msra.mxu0 %v3622
    %3624 = vmatpush.msra.mxu0 %v3621
    %3625 = vmatpush.msra.mxu0 %v3620
    %3626 = vmatpush.msra.mxu0 %v3619
    %3627 = vmatpush.msra.mxu0 %v3618
    %3628 = vmatpush.msra.mxu0 %v3617
    %3629 = vmatpush.msra.mxu0 %v3616
    %3630 = vmatpush.msra.mxu0 %v3615
    %3631 = vmatpush.msra.mxu0 %v3614
    %3632 = vmatpush.msra.mxu0 %v3613
    %3633 = vmatpush.msra.mxu0 %v3612
    %3634 = vmatpush.msra.mxu0 %v3611
    %3635 = vmatpush.msra.mxu0 %v3610
    %3636 = vmatpush.msra.mxu0 %v3609
    %3637 = vmatpush.msra.mxu0 %v3608
    %3638 = vmatpush.msra.mxu0 %v3607
    %3639 = vmatmul.f32.gmra.mxu0 %v2907
    %v3640 = vpop.f32.mrf.mxu0
    %v3641 = vadd.f32 0.0, %v3640
    %3642 = vmatmul.f32.gmra.mxu0 %v2910
    %v3643 = vpop.f32.mrf.mxu0
    %v3644 = vadd.f32 0.0, %v3643
    %3645 = vmatmul.f32.gmra.mxu0 %v2913
    %v3646 = vpop.f32.mrf.mxu0
    %v3647 = vadd.f32 0.0, %v3646
    %3648 = vmatmul.f32.gmra.mxu0 %v2916
    %v3649 = vpop.f32.mrf.mxu0
    %v3650 = vadd.f32 0.0, %v3649
    %3651 = vmatmul.f32.gmra.mxu0 %v2919
    %v3652 = vpop.f32.mrf.mxu0
    %v3653 = vadd.f32 0.0, %v3652
    %3654 = vmatmul.f32.gmra.mxu0 %v2922
    %v3655 = vpop.f32.mrf.mxu0
    %v3656 = vadd.f32 0.0, %v3655
    %3657 = vmatmul.f32.gmra.mxu0 %v2925
    %v3658 = vpop.f32.mrf.mxu0
    %v3659 = vadd.f32 0.0, %v3658
    %3660 = vmatmul.f32.gmra.mxu0 %v3600
    %v3661 = vpop.f32.mrf.mxu0
    %v3662 = vadd.f32 0.0, %v3661
    %3663 = vmatmul.f32.gmra.mxu0 %v2931
    %v3664 = vpop.f32.mrf.mxu0
    %v3665 = vadd.f32 0.0, %v3664
    %3666 = vmatmul.f32.gmra.mxu0 %v2934
    %v3667 = vpop.f32.mrf.mxu0
    %v3668 = vadd.f32 0.0, %v3667
    %3669 = vmatmul.f32.gmra.mxu0 %v2937
    %v3670 = vpop.f32.mrf.mxu0
    %v3671 = vadd.f32 0.0, %v3670
    %3672 = vmatmul.f32.gmra.mxu0 %v2940
    %v3673 = vpop.f32.mrf.mxu0
    %v3674 = vadd.f32 0.0, %v3673
    %3675 = vmatmul.f32.gmra.mxu0 %v2943
    %v3676 = vpop.f32.mrf.mxu0
    %v3677 = vadd.f32 0.0, %v3676
    %3678 = vmatmul.f32.gmra.mxu0 %v2946
    %v3679 = vpop.f32.mrf.mxu0
    %v3680 = vadd.f32 0.0, %v3679
    %3681 = vmatmul.f32.gmra.mxu0 %v2949
    %v3682 = vpop.f32.mrf.mxu0
    %v3683 = vadd.f32 0.0, %v3682
    %3684 = vmatmul.f32.gmra.mxu0 %v3603
    %v3685 = vpop.f32.mrf.mxu0
    %v3686 = vadd.f32 0.0, %v3685
    %3687 = vdwg.mxu0
    %v3688 = vadd.f32 %v3582, %v3641
    %v3689 = vadd.f32 %v3583, %v3644
    %v3690 = vadd.f32 %v3584, %v3647
    %v3691 = vadd.f32 %v3585, %v3650
    %v3692 = vadd.f32 %v3586, %v3653
    %v3693 = vadd.f32 %v3587, %v3656
    %v3694 = vadd.f32 %v3588, %v3659
    %v3695 = vadd.f32 %v3589, %v3662
    %v3696 = vadd.f32 %v3590, %v3665
    %v3697 = vadd.f32 %v3591, %v3668
    %v3698 = vadd.f32 %v3592, %v3671
    %v3699 = vadd.f32 %v3593, %v3674
    %v3700 = vadd.f32 %v3594, %v3677
    %v3701 = vadd.f32 %v3595, %v3680
    %v3702 = vadd.f32 %v3596, %v3683
    %v3703 = vadd.f32 %v3597, %v3686
    %v3704 = vrot.slane %v2609, 3
    %v3705 = vrot.slane %v2610, 3
    %v3706 = vsel %vm3064, %v3704, %v3705
    %v3707 = vrot.slane %v2633, 3
    %v3708 = vrot.slane %v2634, 3
    %v3709 = vsel %vm3064, %v3707, %v3708
    %s3712 = scalar_lea.vmem %s4, 1024
    %v3713 = vld [vmem:[%s3712] sm:$0xff]
    %v3714 = vld [vmem:[%s3712 + $0x8] sm:$0xff]
    %v3715 = vld [vmem:[%s3712 + $0x10] sm:$0xff]
    %v3716 = vld [vmem:[%s3712 + $0x18] sm:$0xff]
    %v3717 = vld [vmem:[%s3712 + $0x20] sm:$0xff]
    %v3718 = vld [vmem:[%s3712 + $0x28] sm:$0xff]
    %v3719 = vld [vmem:[%s3712 + $0x30] sm:$0xff]
    %v3720 = vld [vmem:[%s3712 + $0x38] sm:$0xff]
    %v3721 = vld [vmem:[%s3712 + $0x40] sm:$0xff]
    %v3722 = vld [vmem:[%s3712 + $0x48] sm:$0xff]
    %v3723 = vld [vmem:[%s3712 + $0x50] sm:$0xff]
    %v3724 = vld [vmem:[%s3712 + $0x58] sm:$0xff]
    %v3725 = vld [vmem:[%s3712 + $0x60] sm:$0xff]
    %v3726 = vld [vmem:[%s3712 + $0x68] sm:$0xff]
    %v3727 = vld [vmem:[%s3712 + $0x70] sm:$0xff]
    %v3728 = vld [vmem:[%s3712 + $0x78] sm:$0xff]
    %3729 = vmatpush.msra.mxu0 %v3728
    %3730 = vmatpush.msra.mxu0 %v3727
    %3731 = vmatpush.msra.mxu0 %v3726
    %3732 = vmatpush.msra.mxu0 %v3725
    %3733 = vmatpush.msra.mxu0 %v3724
    %3734 = vmatpush.msra.mxu0 %v3723
    %3735 = vmatpush.msra.mxu0 %v3722
    %3736 = vmatpush.msra.mxu0 %v3721
    %3737 = vmatpush.msra.mxu0 %v3720
    %3738 = vmatpush.msra.mxu0 %v3719
    %3739 = vmatpush.msra.mxu0 %v3718
    %3740 = vmatpush.msra.mxu0 %v3717
    %3741 = vmatpush.msra.mxu0 %v3716
    %3742 = vmatpush.msra.mxu0 %v3715
    %3743 = vmatpush.msra.mxu0 %v3714
    %3744 = vmatpush.msra.mxu0 %v3713
    %3745 = vmatmul.f32.gmra.mxu0 %v3070
    %v3746 = vpop.f32.mrf.mxu0
    %v3747 = vadd.f32 0.0, %v3746
    %3748 = vmatmul.f32.gmra.mxu0 %v3073
    %v3749 = vpop.f32.mrf.mxu0
    %v3750 = vadd.f32 0.0, %v3749
    %3751 = vmatmul.f32.gmra.mxu0 %v3076
    %v3752 = vpop.f32.mrf.mxu0
    %v3753 = vadd.f32 0.0, %v3752
    %3754 = vmatmul.f32.gmra.mxu0 %v3079
    %v3755 = vpop.f32.mrf.mxu0
    %v3756 = vadd.f32 0.0, %v3755
    %3757 = vmatmul.f32.gmra.mxu0 %v3082
    %v3758 = vpop.f32.mrf.mxu0
    %v3759 = vadd.f32 0.0, %v3758
    %3760 = vmatmul.f32.gmra.mxu0 %v3085
    %v3761 = vpop.f32.mrf.mxu0
    %v3762 = vadd.f32 0.0, %v3761
    %3763 = vmatmul.f32.gmra.mxu0 %v3088
    %v3764 = vpop.f32.mrf.mxu0
    %v3765 = vadd.f32 0.0, %v3764
    %3766 = vmatmul.f32.gmra.mxu0 %v3706
    %v3767 = vpop.f32.mrf.mxu0
    %v3768 = vadd.f32 0.0, %v3767
    %3769 = vmatmul.f32.gmra.mxu0 %v3094
    %v3770 = vpop.f32.mrf.mxu0
    %v3771 = vadd.f32 0.0, %v3770
    %3772 = vmatmul.f32.gmra.mxu0 %v3097
    %v3773 = vpop.f32.mrf.mxu0
    %v3774 = vadd.f32 0.0, %v3773
    %3775 = vmatmul.f32.gmra.mxu0 %v3100
    %v3776 = vpop.f32.mrf.mxu0
    %v3777 = vadd.f32 0.0, %v3776
    %3778 = vmatmul.f32.gmra.mxu0 %v3103
    %v3779 = vpop.f32.mrf.mxu0
    %v3780 = vadd.f32 0.0, %v3779
    %3781 = vmatmul.f32.gmra.mxu0 %v3106
    %v3782 = vpop.f32.mrf.mxu0
    %v3783 = vadd.f32 0.0, %v3782
    %3784 = vmatmul.f32.gmra.mxu0 %v3109
    %v3785 = vpop.f32.mrf.mxu0
    %v3786 = vadd.f32 0.0, %v3785
    %3787 = vmatmul.f32.gmra.mxu0 %v3112
    %v3788 = vpop.f32.mrf.mxu0
    %v3789 = vadd.f32 0.0, %v3788
    %3790 = vmatmul.f32.gmra.mxu0 %v3709
    %v3791 = vpop.f32.mrf.mxu0
    %v3792 = vadd.f32 0.0, %v3791
    %3793 = vdwg.mxu0
    %v3794 = vadd.f32 %v3688, %v3747
    %v3795 = vadd.f32 %v3689, %v3750
    %v3796 = vadd.f32 %v3690, %v3753
    %v3797 = vadd.f32 %v3691, %v3756
    %v3798 = vadd.f32 %v3692, %v3759
    %v3799 = vadd.f32 %v3693, %v3762
    %v3800 = vadd.f32 %v3694, %v3765
    %v3801 = vadd.f32 %v3695, %v3768
    %v3802 = vadd.f32 %v3696, %v3771
    %v3803 = vadd.f32 %v3697, %v3774
    %v3804 = vadd.f32 %v3698, %v3777
    %v3805 = vadd.f32 %v3699, %v3780
    %v3806 = vadd.f32 %v3700, %v3783
    %v3807 = vadd.f32 %v3701, %v3786
    %v3808 = vadd.f32 %v3702, %v3789
    %v3809 = vadd.f32 %v3703, %v3792
    %v3810 = vrot.slane %v2609, 4
    %v3811 = vrot.slane %v2610, 4
    %v3812 = vsel %vm3227, %v3810, %v3811
    %v3813 = vrot.slane %v2633, 4
    %v3814 = vrot.slane %v2634, 4
    %v3815 = vsel %vm3227, %v3813, %v3814
    %s3818 = scalar_lea.vmem %s4, 1152
    %v3819 = vld [vmem:[%s3818] sm:$0xff]
    %v3820 = vld [vmem:[%s3818 + $0x8] sm:$0xff]
    %v3821 = vld [vmem:[%s3818 + $0x10] sm:$0xff]
    %v3822 = vld [vmem:[%s3818 + $0x18] sm:$0xff]
    %v3823 = vld [vmem:[%s3818 + $0x20] sm:$0xff]
    %v3824 = vld [vmem:[%s3818 + $0x28] sm:$0xff]
    %v3825 = vld [vmem:[%s3818 + $0x30] sm:$0xff]
    %v3826 = vld [vmem:[%s3818 + $0x38] sm:$0xff]
    %v3827 = vld [vmem:[%s3818 + $0x40] sm:$0xff]
    %v3828 = vld [vmem:[%s3818 + $0x48] sm:$0xff]
    %v3829 = vld [vmem:[%s3818 + $0x50] sm:$0xff]
    %v3830 = vld [vmem:[%s3818 + $0x58] sm:$0xff]
    %v3831 = vld [vmem:[%s3818 + $0x60] sm:$0xff]
    %v3832 = vld [vmem:[%s3818 + $0x68] sm:$0xff]
    %v3833 = vld [vmem:[%s3818 + $0x70] sm:$0xff]
    %v3834 = vld [vmem:[%s3818 + $0x78] sm:$0xff]
    %3835 = vmatpush.msra.mxu0 %v3834
    %3836 = vmatpush.msra.mxu0 %v3833
    %3837 = vmatpush.msra.mxu0 %v3832
    %3838 = vmatpush.msra.mxu0 %v3831
    %3839 = vmatpush.msra.mxu0 %v3830
    %3840 = vmatpush.msra.mxu0 %v3829
    %3841 = vmatpush.msra.mxu0 %v3828
    %3842 = vmatpush.msra.mxu0 %v3827
    %3843 = vmatpush.msra.mxu0 %v3826
    %3844 = vmatpush.msra.mxu0 %v3825
    %3845 = vmatpush.msra.mxu0 %v3824
    %3846 = vmatpush.msra.mxu0 %v3823
    %3847 = vmatpush.msra.mxu0 %v3822
    %3848 = vmatpush.msra.mxu0 %v3821
    %3849 = vmatpush.msra.mxu0 %v3820
    %3850 = vmatpush.msra.mxu0 %v3819
    %3851 = vmatmul.f32.gmra.mxu0 %v3233
    %v3852 = vpop.f32.mrf.mxu0
    %v3853 = vadd.f32 0.0, %v3852
    %3854 = vmatmul.f32.gmra.mxu0 %v3236
    %v3855 = vpop.f32.mrf.mxu0
    %v3856 = vadd.f32 0.0, %v3855
    %3857 = vmatmul.f32.gmra.mxu0 %v3239
    %v3858 = vpop.f32.mrf.mxu0
    %v3859 = vadd.f32 0.0, %v3858
    %3860 = vmatmul.f32.gmra.mxu0 %v3242
    %v3861 = vpop.f32.mrf.mxu0
    %v3862 = vadd.f32 0.0, %v3861
    %3863 = vmatmul.f32.gmra.mxu0 %v3245
    %v3864 = vpop.f32.mrf.mxu0
    %v3865 = vadd.f32 0.0, %v3864
    %3866 = vmatmul.f32.gmra.mxu0 %v3248
    %v3867 = vpop.f32.mrf.mxu0
    %v3868 = vadd.f32 0.0, %v3867
    %3869 = vmatmul.f32.gmra.mxu0 %v3251
    %v3870 = vpop.f32.mrf.mxu0
    %v3871 = vadd.f32 0.0, %v3870
    %3872 = vmatmul.f32.gmra.mxu0 %v3812
    %v3873 = vpop.f32.mrf.mxu0
    %v3874 = vadd.f32 0.0, %v3873
    %3875 = vmatmul.f32.gmra.mxu0 %v3257
    %v3876 = vpop.f32.mrf.mxu0
    %v3877 = vadd.f32 0.0, %v3876
    %3878 = vmatmul.f32.gmra.mxu0 %v3260
    %v3879 = vpop.f32.mrf.mxu0
    %v3880 = vadd.f32 0.0, %v3879
    %3881 = vmatmul.f32.gmra.mxu0 %v3263
    %v3882 = vpop.f32.mrf.mxu0
    %v3883 = vadd.f32 0.0, %v3882
    %3884 = vmatmul.f32.gmra.mxu0 %v3266
    %v3885 = vpop.f32.mrf.mxu0
    %v3886 = vadd.f32 0.0, %v3885
    %3887 = vmatmul.f32.gmra.mxu0 %v3269
    %v3888 = vpop.f32.mrf.mxu0
    %v3889 = vadd.f32 0.0, %v3888
    %3890 = vmatmul.f32.gmra.mxu0 %v3272
    %v3891 = vpop.f32.mrf.mxu0
    %v3892 = vadd.f32 0.0, %v3891
    %3893 = vmatmul.f32.gmra.mxu0 %v3275
    %v3894 = vpop.f32.mrf.mxu0
    %v3895 = vadd.f32 0.0, %v3894
    %3896 = vmatmul.f32.gmra.mxu0 %v3815
    %v3897 = vpop.f32.mrf.mxu0
    %v3898 = vadd.f32 0.0, %v3897
    %3899 = vdwg.mxu0
    %v3900 = vadd.f32 %v3794, %v3853
    %v3901 = vadd.f32 %v3795, %v3856
    %v3902 = vadd.f32 %v3796, %v3859
    %v3903 = vadd.f32 %v3797, %v3862
    %v3904 = vadd.f32 %v3798, %v3865
    %v3905 = vadd.f32 %v3799, %v3868
    %v3906 = vadd.f32 %v3800, %v3871
    %v3907 = vadd.f32 %v3801, %v3874
    %v3908 = vadd.f32 %v3802, %v3877
    %v3909 = vadd.f32 %v3803, %v3880
    %v3910 = vadd.f32 %v3804, %v3883
    %v3911 = vadd.f32 %v3805, %v3886
    %v3912 = vadd.f32 %v3806, %v3889
    %v3913 = vadd.f32 %v3807, %v3892
    %v3914 = vadd.f32 %v3808, %v3895
    %v3915 = vadd.f32 %v3809, %v3898
    %s3916 = scalar_lea.vmem %s4, 1280
    %v3917 = vld [vmem:[%s3916] sm:$0xff]
    %v3918 = vld [vmem:[%s3916 + $0x8] sm:$0xff]
    %v3919 = vld [vmem:[%s3916 + $0x10] sm:$0xff]
    %v3920 = vld [vmem:[%s3916 + $0x18] sm:$0xff]
    %v3921 = vld [vmem:[%s3916 + $0x20] sm:$0xff]
    %v3922 = vld [vmem:[%s3916 + $0x28] sm:$0xff]
    %v3923 = vld [vmem:[%s3916 + $0x30] sm:$0xff]
    %v3924 = vld [vmem:[%s3916 + $0x38] sm:$0xff]
    %v3925 = vld [vmem:[%s3916 + $0x40] sm:$0xff]
    %v3926 = vld [vmem:[%s3916 + $0x48] sm:$0xff]
    %v3927 = vld [vmem:[%s3916 + $0x50] sm:$0xff]
    %v3928 = vld [vmem:[%s3916 + $0x58] sm:$0xff]
    %v3929 = vld [vmem:[%s3916 + $0x60] sm:$0xff]
    %v3930 = vld [vmem:[%s3916 + $0x68] sm:$0xff]
    %v3931 = vld [vmem:[%s3916 + $0x70] sm:$0xff]
    %v3932 = vld [vmem:[%s3916 + $0x78] sm:$0xff]
    %3933 = vmatpush.msra.mxu0 %v3932
    %3934 = vmatpush.msra.mxu0 %v3931
    %3935 = vmatpush.msra.mxu0 %v3930
    %3936 = vmatpush.msra.mxu0 %v3929
    %3937 = vmatpush.msra.mxu0 %v3928
    %3938 = vmatpush.msra.mxu0 %v3927
    %3939 = vmatpush.msra.mxu0 %v3926
    %3940 = vmatpush.msra.mxu0 %v3925
    %3941 = vmatpush.msra.mxu0 %v3924
    %3942 = vmatpush.msra.mxu0 %v3923
    %3943 = vmatpush.msra.mxu0 %v3922
    %3944 = vmatpush.msra.mxu0 %v3921
    %3945 = vmatpush.msra.mxu0 %v3920
    %3946 = vmatpush.msra.mxu0 %v3919
    %3947 = vmatpush.msra.mxu0 %v3918
    %3948 = vmatpush.msra.mxu0 %v3917
    %3949 = vmatmul.f32.gmra.mxu0 %v2597
    %v3950 = vpop.f32.mrf.mxu0
    %v3951 = vadd.f32 0.0, %v3950
    %3952 = vmatmul.f32.gmra.mxu0 %v2599
    %v3953 = vpop.f32.mrf.mxu0
    %v3954 = vadd.f32 0.0, %v3953
    %3955 = vmatmul.f32.gmra.mxu0 %v2601
    %v3956 = vpop.f32.mrf.mxu0
    %v3957 = vadd.f32 0.0, %v3956
    %3958 = vmatmul.f32.gmra.mxu0 %v2603
    %v3959 = vpop.f32.mrf.mxu0
    %v3960 = vadd.f32 0.0, %v3959
    %3961 = vmatmul.f32.gmra.mxu0 %v2605
    %v3962 = vpop.f32.mrf.mxu0
    %v3963 = vadd.f32 0.0, %v3962
    %3964 = vmatmul.f32.gmra.mxu0 %v2607
    %v3965 = vpop.f32.mrf.mxu0
    %v3966 = vadd.f32 0.0, %v3965
    %3967 = vmatmul.f32.gmra.mxu0 %v2609
    %v3968 = vpop.f32.mrf.mxu0
    %v3969 = vadd.f32 0.0, %v3968
    %3970 = vmatmul.f32.gmra.mxu0 %v2611
    %v3971 = vpop.f32.mrf.mxu0
    %v3972 = vadd.f32 0.0, %v3971
    %3973 = vmatmul.f32.gmra.mxu0 %v2621
    %v3974 = vpop.f32.mrf.mxu0
    %v3975 = vadd.f32 0.0, %v3974
    %3976 = vmatmul.f32.gmra.mxu0 %v2623
    %v3977 = vpop.f32.mrf.mxu0
    %v3978 = vadd.f32 0.0, %v3977
    %3979 = vmatmul.f32.gmra.mxu0 %v2625
    %v3980 = vpop.f32.mrf.mxu0
    %v3981 = vadd.f32 0.0, %v3980
    %3982 = vmatmul.f32.gmra.mxu0 %v2627
    %v3983 = vpop.f32.mrf.mxu0
    %v3984 = vadd.f32 0.0, %v3983
    %3985 = vmatmul.f32.gmra.mxu0 %v2629
    %v3986 = vpop.f32.mrf.mxu0
    %v3987 = vadd.f32 0.0, %v3986
    %3988 = vmatmul.f32.gmra.mxu0 %v2631
    %v3989 = vpop.f32.mrf.mxu0
    %v3990 = vadd.f32 0.0, %v3989
    %3991 = vmatmul.f32.gmra.mxu0 %v2633
    %v3992 = vpop.f32.mrf.mxu0
    %v3993 = vadd.f32 0.0, %v3992
    %3994 = vmatmul.f32.gmra.mxu0 %v2635
    %v3995 = vpop.f32.mrf.mxu0
    %v3996 = vadd.f32 0.0, %v3995
    %3997 = vdwg.mxu0
    %v3998 = vadd.f32 %v3900, %v3951
    %v3999 = vadd.f32 %v3901, %v3954
    %v4000 = vadd.f32 %v3902, %v3957
    %v4001 = vadd.f32 %v3903, %v3960
    %v4002 = vadd.f32 %v3904, %v3963
    %v4003 = vadd.f32 %v3905, %v3966
    %v4004 = vadd.f32 %v3906, %v3969
    %v4005 = vadd.f32 %v3907, %v3972
    %v4006 = vadd.f32 %v3908, %v3975
    %v4007 = vadd.f32 %v3909, %v3978
    %v4008 = vadd.f32 %v3910, %v3981
    %v4009 = vadd.f32 %v3911, %v3984
    %v4010 = vadd.f32 %v3912, %v3987
    %v4011 = vadd.f32 %v3913, %v3990
    %v4012 = vadd.f32 %v3914, %v3993
    %v4013 = vadd.f32 %v3915, %v3996
    %v4018 = vrot.slane %v2611, 1
    %v4019 = vrot.slane %v2612, 1
    %v4020 = vsel %vm2689, %v4018, %v4019
    %v4021 = vrot.slane %v2635, 1
    %v4022 = vrot.slane %v2636, 1
    %v4023 = vsel %vm2689, %v4021, %v4022
    %s4026 = scalar_lea.vmem %s4, 1408
    %v4027 = vld [vmem:[%s4026] sm:$0xff]
    %v4028 = vld [vmem:[%s4026 + $0x8] sm:$0xff]
    %v4029 = vld [vmem:[%s4026 + $0x10] sm:$0xff]
    %v4030 = vld [vmem:[%s4026 + $0x18] sm:$0xff]
    %v4031 = vld [vmem:[%s4026 + $0x20] sm:$0xff]
    %v4032 = vld [vmem:[%s4026 + $0x28] sm:$0xff]
    %v4033 = vld [vmem:[%s4026 + $0x30] sm:$0xff]
    %v4034 = vld [vmem:[%s4026 + $0x38] sm:$0xff]
    %v4035 = vld [vmem:[%s4026 + $0x40] sm:$0xff]
    %v4036 = vld [vmem:[%s4026 + $0x48] sm:$0xff]
    %v4037 = vld [vmem:[%s4026 + $0x50] sm:$0xff]
    %v4038 = vld [vmem:[%s4026 + $0x58] sm:$0xff]
    %v4039 = vld [vmem:[%s4026 + $0x60] sm:$0xff]
    %v4040 = vld [vmem:[%s4026 + $0x68] sm:$0xff]
    %v4041 = vld [vmem:[%s4026 + $0x70] sm:$0xff]
    %v4042 = vld [vmem:[%s4026 + $0x78] sm:$0xff]
    %4043 = vmatpush.msra.mxu0 %v4042
    %4044 = vmatpush.msra.mxu0 %v4041
    %4045 = vmatpush.msra.mxu0 %v4040
    %4046 = vmatpush.msra.mxu0 %v4039
    %4047 = vmatpush.msra.mxu0 %v4038
    %4048 = vmatpush.msra.mxu0 %v4037
    %4049 = vmatpush.msra.mxu0 %v4036
    %4050 = vmatpush.msra.mxu0 %v4035
    %4051 = vmatpush.msra.mxu0 %v4034
    %4052 = vmatpush.msra.mxu0 %v4033
    %4053 = vmatpush.msra.mxu0 %v4032
    %4054 = vmatpush.msra.mxu0 %v4031
    %4055 = vmatpush.msra.mxu0 %v4030
    %4056 = vmatpush.msra.mxu0 %v4029
    %4057 = vmatpush.msra.mxu0 %v4028
    %4058 = vmatpush.msra.mxu0 %v4027
    %4059 = vmatmul.f32.gmra.mxu0 %v2698
    %v4060 = vpop.f32.mrf.mxu0
    %v4061 = vadd.f32 0.0, %v4060
    %4062 = vmatmul.f32.gmra.mxu0 %v2701
    %v4063 = vpop.f32.mrf.mxu0
    %v4064 = vadd.f32 0.0, %v4063
    %4065 = vmatmul.f32.gmra.mxu0 %v2704
    %v4066 = vpop.f32.mrf.mxu0
    %v4067 = vadd.f32 0.0, %v4066
    %4068 = vmatmul.f32.gmra.mxu0 %v2707
    %v4069 = vpop.f32.mrf.mxu0
    %v4070 = vadd.f32 0.0, %v4069
    %4071 = vmatmul.f32.gmra.mxu0 %v2710
    %v4072 = vpop.f32.mrf.mxu0
    %v4073 = vadd.f32 0.0, %v4072
    %4074 = vmatmul.f32.gmra.mxu0 %v2713
    %v4075 = vpop.f32.mrf.mxu0
    %v4076 = vadd.f32 0.0, %v4075
    %4077 = vmatmul.f32.gmra.mxu0 %v3494
    %v4078 = vpop.f32.mrf.mxu0
    %v4079 = vadd.f32 0.0, %v4078
    %4080 = vmatmul.f32.gmra.mxu0 %v4020
    %v4081 = vpop.f32.mrf.mxu0
    %v4082 = vadd.f32 0.0, %v4081
    %4083 = vmatmul.f32.gmra.mxu0 %v2722
    %v4084 = vpop.f32.mrf.mxu0
    %v4085 = vadd.f32 0.0, %v4084
    %4086 = vmatmul.f32.gmra.mxu0 %v2725
    %v4087 = vpop.f32.mrf.mxu0
    %v4088 = vadd.f32 0.0, %v4087
    %4089 = vmatmul.f32.gmra.mxu0 %v2728
    %v4090 = vpop.f32.mrf.mxu0
    %v4091 = vadd.f32 0.0, %v4090
    %4092 = vmatmul.f32.gmra.mxu0 %v2731
    %v4093 = vpop.f32.mrf.mxu0
    %v4094 = vadd.f32 0.0, %v4093
    %4095 = vmatmul.f32.gmra.mxu0 %v2734
    %v4096 = vpop.f32.mrf.mxu0
    %v4097 = vadd.f32 0.0, %v4096
    %4098 = vmatmul.f32.gmra.mxu0 %v2737
    %v4099 = vpop.f32.mrf.mxu0
    %v4100 = vadd.f32 0.0, %v4099
    %4101 = vmatmul.f32.gmra.mxu0 %v3497
    %v4102 = vpop.f32.mrf.mxu0
    %v4103 = vadd.f32 0.0, %v4102
    %4104 = vmatmul.f32.gmra.mxu0 %v4023
    %v4105 = vpop.f32.mrf.mxu0
    %v4106 = vadd.f32 0.0, %v4105
    %4107 = vdwg.mxu0
    %v4108 = vadd.f32 %v3998, %v4061
    %v4109 = vadd.f32 %v3999, %v4064
    %v4110 = vadd.f32 %v4000, %v4067
    %v4111 = vadd.f32 %v4001, %v4070
    %v4112 = vadd.f32 %v4002, %v4073
    %v4113 = vadd.f32 %v4003, %v4076
    %v4114 = vadd.f32 %v4004, %v4079
    %v4115 = vadd.f32 %v4005, %v4082
    %v4116 = vadd.f32 %v4006, %v4085
    %v4117 = vadd.f32 %v4007, %v4088
    %v4118 = vadd.f32 %v4008, %v4091
    %v4119 = vadd.f32 %v4009, %v4094
    %v4120 = vadd.f32 %v4010, %v4097
    %v4121 = vadd.f32 %v4011, %v4100
    %v4122 = vadd.f32 %v4012, %v4103
    %v4123 = vadd.f32 %v4013, %v4106
    %v4124 = vrot.slane %v2611, 2
    %v4125 = vrot.slane %v2612, 2
    %v4126 = vsel %vm2901, %v4124, %v4125
    %v4127 = vrot.slane %v2635, 2
    %v4128 = vrot.slane %v2636, 2
    %v4129 = vsel %vm2901, %v4127, %v4128
    %s4132 = scalar_lea.vmem %s4, 1536
    %v4133 = vld [vmem:[%s4132] sm:$0xff]
    %v4134 = vld [vmem:[%s4132 + $0x8] sm:$0xff]
    %v4135 = vld [vmem:[%s4132 + $0x10] sm:$0xff]
    %v4136 = vld [vmem:[%s4132 + $0x18] sm:$0xff]
    %v4137 = vld [vmem:[%s4132 + $0x20] sm:$0xff]
    %v4138 = vld [vmem:[%s4132 + $0x28] sm:$0xff]
    %v4139 = vld [vmem:[%s4132 + $0x30] sm:$0xff]
    %v4140 = vld [vmem:[%s4132 + $0x38] sm:$0xff]
    %v4141 = vld [vmem:[%s4132 + $0x40] sm:$0xff]
    %v4142 = vld [vmem:[%s4132 + $0x48] sm:$0xff]
    %v4143 = vld [vmem:[%s4132 + $0x50] sm:$0xff]
    %v4144 = vld [vmem:[%s4132 + $0x58] sm:$0xff]
    %v4145 = vld [vmem:[%s4132 + $0x60] sm:$0xff]
    %v4146 = vld [vmem:[%s4132 + $0x68] sm:$0xff]
    %v4147 = vld [vmem:[%s4132 + $0x70] sm:$0xff]
    %v4148 = vld [vmem:[%s4132 + $0x78] sm:$0xff]
    %4149 = vmatpush.msra.mxu0 %v4148
    %4150 = vmatpush.msra.mxu0 %v4147
    %4151 = vmatpush.msra.mxu0 %v4146
    %4152 = vmatpush.msra.mxu0 %v4145
    %4153 = vmatpush.msra.mxu0 %v4144
    %4154 = vmatpush.msra.mxu0 %v4143
    %4155 = vmatpush.msra.mxu0 %v4142
    %4156 = vmatpush.msra.mxu0 %v4141
    %4157 = vmatpush.msra.mxu0 %v4140
    %4158 = vmatpush.msra.mxu0 %v4139
    %4159 = vmatpush.msra.mxu0 %v4138
    %4160 = vmatpush.msra.mxu0 %v4137
    %4161 = vmatpush.msra.mxu0 %v4136
    %4162 = vmatpush.msra.mxu0 %v4135
    %4163 = vmatpush.msra.mxu0 %v4134
    %4164 = vmatpush.msra.mxu0 %v4133
    %4165 = vmatmul.f32.gmra.mxu0 %v2910
    %v4166 = vpop.f32.mrf.mxu0
    %v4167 = vadd.f32 0.0, %v4166
    %4168 = vmatmul.f32.gmra.mxu0 %v2913
    %v4169 = vpop.f32.mrf.mxu0
    %v4170 = vadd.f32 0.0, %v4169
    %4171 = vmatmul.f32.gmra.mxu0 %v2916
    %v4172 = vpop.f32.mrf.mxu0
    %v4173 = vadd.f32 0.0, %v4172
    %4174 = vmatmul.f32.gmra.mxu0 %v2919
    %v4175 = vpop.f32.mrf.mxu0
    %v4176 = vadd.f32 0.0, %v4175
    %4177 = vmatmul.f32.gmra.mxu0 %v2922
    %v4178 = vpop.f32.mrf.mxu0
    %v4179 = vadd.f32 0.0, %v4178
    %4180 = vmatmul.f32.gmra.mxu0 %v2925
    %v4181 = vpop.f32.mrf.mxu0
    %v4182 = vadd.f32 0.0, %v4181
    %4183 = vmatmul.f32.gmra.mxu0 %v3600
    %v4184 = vpop.f32.mrf.mxu0
    %v4185 = vadd.f32 0.0, %v4184
    %4186 = vmatmul.f32.gmra.mxu0 %v4126
    %v4187 = vpop.f32.mrf.mxu0
    %v4188 = vadd.f32 0.0, %v4187
    %4189 = vmatmul.f32.gmra.mxu0 %v2934
    %v4190 = vpop.f32.mrf.mxu0
    %v4191 = vadd.f32 0.0, %v4190
    %4192 = vmatmul.f32.gmra.mxu0 %v2937
    %v4193 = vpop.f32.mrf.mxu0
    %v4194 = vadd.f32 0.0, %v4193
    %4195 = vmatmul.f32.gmra.mxu0 %v2940
    %v4196 = vpop.f32.mrf.mxu0
    %v4197 = vadd.f32 0.0, %v4196
    %4198 = vmatmul.f32.gmra.mxu0 %v2943
    %v4199 = vpop.f32.mrf.mxu0
    %v4200 = vadd.f32 0.0, %v4199
    %4201 = vmatmul.f32.gmra.mxu0 %v2946
    %v4202 = vpop.f32.mrf.mxu0
    %v4203 = vadd.f32 0.0, %v4202
    %4204 = vmatmul.f32.gmra.mxu0 %v2949
    %v4205 = vpop.f32.mrf.mxu0
    %v4206 = vadd.f32 0.0, %v4205
    %4207 = vmatmul.f32.gmra.mxu0 %v3603
    %v4208 = vpop.f32.mrf.mxu0
    %v4209 = vadd.f32 0.0, %v4208
    %4210 = vmatmul.f32.gmra.mxu0 %v4129
    %v4211 = vpop.f32.mrf.mxu0
    %v4212 = vadd.f32 0.0, %v4211
    %4213 = vdwg.mxu0
    %v4214 = vadd.f32 %v4108, %v4167
    %v4215 = vadd.f32 %v4109, %v4170
    %v4216 = vadd.f32 %v4110, %v4173
    %v4217 = vadd.f32 %v4111, %v4176
    %v4218 = vadd.f32 %v4112, %v4179
    %v4219 = vadd.f32 %v4113, %v4182
    %v4220 = vadd.f32 %v4114, %v4185
    %v4221 = vadd.f32 %v4115, %v4188
    %v4222 = vadd.f32 %v4116, %v4191
    %v4223 = vadd.f32 %v4117, %v4194
    %v4224 = vadd.f32 %v4118, %v4197
    %v4225 = vadd.f32 %v4119, %v4200
    %v4226 = vadd.f32 %v4120, %v4203
    %v4227 = vadd.f32 %v4121, %v4206
    %v4228 = vadd.f32 %v4122, %v4209
    %v4229 = vadd.f32 %v4123, %v4212
    %v4230 = vrot.slane %v2611, 3
    %v4231 = vrot.slane %v2612, 3
    %v4232 = vsel %vm3064, %v4230, %v4231
    %v4233 = vrot.slane %v2635, 3
    %v4234 = vrot.slane %v2636, 3
    %v4235 = vsel %vm3064, %v4233, %v4234
    %s4238 = scalar_lea.vmem %s4, 1664
    %v4239 = vld [vmem:[%s4238] sm:$0xff]
    %v4240 = vld [vmem:[%s4238 + $0x8] sm:$0xff]
    %v4241 = vld [vmem:[%s4238 + $0x10] sm:$0xff]
    %v4242 = vld [vmem:[%s4238 + $0x18] sm:$0xff]
    %v4243 = vld [vmem:[%s4238 + $0x20] sm:$0xff]
    %v4244 = vld [vmem:[%s4238 + $0x28] sm:$0xff]
    %v4245 = vld [vmem:[%s4238 + $0x30] sm:$0xff]
    %v4246 = vld [vmem:[%s4238 + $0x38] sm:$0xff]
    %v4247 = vld [vmem:[%s4238 + $0x40] sm:$0xff]
    %v4248 = vld [vmem:[%s4238 + $0x48] sm:$0xff]
    %v4249 = vld [vmem:[%s4238 + $0x50] sm:$0xff]
    %v4250 = vld [vmem:[%s4238 + $0x58] sm:$0xff]
    %v4251 = vld [vmem:[%s4238 + $0x60] sm:$0xff]
    %v4252 = vld [vmem:[%s4238 + $0x68] sm:$0xff]
    %v4253 = vld [vmem:[%s4238 + $0x70] sm:$0xff]
    %v4254 = vld [vmem:[%s4238 + $0x78] sm:$0xff]
    %4255 = vmatpush.msra.mxu0 %v4254
    %4256 = vmatpush.msra.mxu0 %v4253
    %4257 = vmatpush.msra.mxu0 %v4252
    %4258 = vmatpush.msra.mxu0 %v4251
    %4259 = vmatpush.msra.mxu0 %v4250
    %4260 = vmatpush.msra.mxu0 %v4249
    %4261 = vmatpush.msra.mxu0 %v4248
    %4262 = vmatpush.msra.mxu0 %v4247
    %4263 = vmatpush.msra.mxu0 %v4246
    %4264 = vmatpush.msra.mxu0 %v4245
    %4265 = vmatpush.msra.mxu0 %v4244
    %4266 = vmatpush.msra.mxu0 %v4243
    %4267 = vmatpush.msra.mxu0 %v4242
    %4268 = vmatpush.msra.mxu0 %v4241
    %4269 = vmatpush.msra.mxu0 %v4240
    %4270 = vmatpush.msra.mxu0 %v4239
    %4271 = vmatmul.f32.gmra.mxu0 %v3073
    %v4272 = vpop.f32.mrf.mxu0
    %v4273 = vadd.f32 0.0, %v4272
    %4274 = vmatmul.f32.gmra.mxu0 %v3076
    %v4275 = vpop.f32.mrf.mxu0
    %v4276 = vadd.f32 0.0, %v4275
    %4277 = vmatmul.f32.gmra.mxu0 %v3079
    %v4278 = vpop.f32.mrf.mxu0
    %v4279 = vadd.f32 0.0, %v4278
    %4280 = vmatmul.f32.gmra.mxu0 %v3082
    %v4281 = vpop.f32.mrf.mxu0
    %v4282 = vadd.f32 0.0, %v4281
    %4283 = vmatmul.f32.gmra.mxu0 %v3085
    %v4284 = vpop.f32.mrf.mxu0
    %v4285 = vadd.f32 0.0, %v4284
    %4286 = vmatmul.f32.gmra.mxu0 %v3088
    %v4287 = vpop.f32.mrf.mxu0
    %v4288 = vadd.f32 0.0, %v4287
    %4289 = vmatmul.f32.gmra.mxu0 %v3706
    %v4290 = vpop.f32.mrf.mxu0
    %v4291 = vadd.f32 0.0, %v4290
    %4292 = vmatmul.f32.gmra.mxu0 %v4232
    %v4293 = vpop.f32.mrf.mxu0
    %v4294 = vadd.f32 0.0, %v4293
    %4295 = vmatmul.f32.gmra.mxu0 %v3097
    %v4296 = vpop.f32.mrf.mxu0
    %v4297 = vadd.f32 0.0, %v4296
    %4298 = vmatmul.f32.gmra.mxu0 %v3100
    %v4299 = vpop.f32.mrf.mxu0
    %v4300 = vadd.f32 0.0, %v4299
    %4301 = vmatmul.f32.gmra.mxu0 %v3103
    %v4302 = vpop.f32.mrf.mxu0
    %v4303 = vadd.f32 0.0, %v4302
    %4304 = vmatmul.f32.gmra.mxu0 %v3106
    %v4305 = vpop.f32.mrf.mxu0
    %v4306 = vadd.f32 0.0, %v4305
    %4307 = vmatmul.f32.gmra.mxu0 %v3109
    %v4308 = vpop.f32.mrf.mxu0
    %v4309 = vadd.f32 0.0, %v4308
    %4310 = vmatmul.f32.gmra.mxu0 %v3112
    %v4311 = vpop.f32.mrf.mxu0
    %v4312 = vadd.f32 0.0, %v4311
    %4313 = vmatmul.f32.gmra.mxu0 %v3709
    %v4314 = vpop.f32.mrf.mxu0
    %v4315 = vadd.f32 0.0, %v4314
    %4316 = vmatmul.f32.gmra.mxu0 %v4235
    %v4317 = vpop.f32.mrf.mxu0
    %v4318 = vadd.f32 0.0, %v4317
    %4319 = vdwg.mxu0
    %v4320 = vadd.f32 %v4214, %v4273
    %v4321 = vadd.f32 %v4215, %v4276
    %v4322 = vadd.f32 %v4216, %v4279
    %v4323 = vadd.f32 %v4217, %v4282
    %v4324 = vadd.f32 %v4218, %v4285
    %v4325 = vadd.f32 %v4219, %v4288
    %v4326 = vadd.f32 %v4220, %v4291
    %v4327 = vadd.f32 %v4221, %v4294
    %v4328 = vadd.f32 %v4222, %v4297
    %v4329 = vadd.f32 %v4223, %v4300
    %v4330 = vadd.f32 %v4224, %v4303
    %v4331 = vadd.f32 %v4225, %v4306
    %v4332 = vadd.f32 %v4226, %v4309
    %v4333 = vadd.f32 %v4227, %v4312
    %v4334 = vadd.f32 %v4228, %v4315
    %v4335 = vadd.f32 %v4229, %v4318
    %v4336 = vrot.slane %v2611, 4
    %v4337 = vrot.slane %v2612, 4
    %v4338 = vsel %vm3227, %v4336, %v4337
    %v4339 = vrot.slane %v2635, 4
    %v4340 = vrot.slane %v2636, 4
    %v4341 = vsel %vm3227, %v4339, %v4340
    %s4344 = scalar_lea.vmem %s4, 1792
    %v4345 = vld [vmem:[%s4344] sm:$0xff]
    %v4346 = vld [vmem:[%s4344 + $0x8] sm:$0xff]
    %v4347 = vld [vmem:[%s4344 + $0x10] sm:$0xff]
    %v4348 = vld [vmem:[%s4344 + $0x18] sm:$0xff]
    %v4349 = vld [vmem:[%s4344 + $0x20] sm:$0xff]
    %v4350 = vld [vmem:[%s4344 + $0x28] sm:$0xff]
    %v4351 = vld [vmem:[%s4344 + $0x30] sm:$0xff]
    %v4352 = vld [vmem:[%s4344 + $0x38] sm:$0xff]
    %v4353 = vld [vmem:[%s4344 + $0x40] sm:$0xff]
    %v4354 = vld [vmem:[%s4344 + $0x48] sm:$0xff]
    %v4355 = vld [vmem:[%s4344 + $0x50] sm:$0xff]
    %v4356 = vld [vmem:[%s4344 + $0x58] sm:$0xff]
    %v4357 = vld [vmem:[%s4344 + $0x60] sm:$0xff]
    %v4358 = vld [vmem:[%s4344 + $0x68] sm:$0xff]
    %v4359 = vld [vmem:[%s4344 + $0x70] sm:$0xff]
    %v4360 = vld [vmem:[%s4344 + $0x78] sm:$0xff]
    %4361 = vmatpush.msra.mxu0 %v4360
    %4362 = vmatpush.msra.mxu0 %v4359
    %4363 = vmatpush.msra.mxu0 %v4358
    %4364 = vmatpush.msra.mxu0 %v4357
    %4365 = vmatpush.msra.mxu0 %v4356
    %4366 = vmatpush.msra.mxu0 %v4355
    %4367 = vmatpush.msra.mxu0 %v4354
    %4368 = vmatpush.msra.mxu0 %v4353
    %4369 = vmatpush.msra.mxu0 %v4352
    %4370 = vmatpush.msra.mxu0 %v4351
    %4371 = vmatpush.msra.mxu0 %v4350
    %4372 = vmatpush.msra.mxu0 %v4349
    %4373 = vmatpush.msra.mxu0 %v4348
    %4374 = vmatpush.msra.mxu0 %v4347
    %4375 = vmatpush.msra.mxu0 %v4346
    %4376 = vmatpush.msra.mxu0 %v4345
    %4377 = vmatmul.f32.gmra.mxu0 %v3236
    %v4378 = vpop.f32.mrf.mxu0
    %v4379 = vadd.f32 0.0, %v4378
    %4380 = vmatmul.f32.gmra.mxu0 %v3239
    %v4381 = vpop.f32.mrf.mxu0
    %v4382 = vadd.f32 0.0, %v4381
    %4383 = vmatmul.f32.gmra.mxu0 %v3242
    %v4384 = vpop.f32.mrf.mxu0
    %v4385 = vadd.f32 0.0, %v4384
    %4386 = vmatmul.f32.gmra.mxu0 %v3245
    %v4387 = vpop.f32.mrf.mxu0
    %v4388 = vadd.f32 0.0, %v4387
    %4389 = vmatmul.f32.gmra.mxu0 %v3248
    %v4390 = vpop.f32.mrf.mxu0
    %v4391 = vadd.f32 0.0, %v4390
    %4392 = vmatmul.f32.gmra.mxu0 %v3251
    %v4393 = vpop.f32.mrf.mxu0
    %v4394 = vadd.f32 0.0, %v4393
    %4395 = vmatmul.f32.gmra.mxu0 %v3812
    %v4396 = vpop.f32.mrf.mxu0
    %v4397 = vadd.f32 0.0, %v4396
    %4398 = vmatmul.f32.gmra.mxu0 %v4338
    %v4399 = vpop.f32.mrf.mxu0
    %v4400 = vadd.f32 0.0, %v4399
    %4401 = vmatmul.f32.gmra.mxu0 %v3260
    %v4402 = vpop.f32.mrf.mxu0
    %v4403 = vadd.f32 0.0, %v4402
    %4404 = vmatmul.f32.gmra.mxu0 %v3263
    %v4405 = vpop.f32.mrf.mxu0
    %v4406 = vadd.f32 0.0, %v4405
    %4407 = vmatmul.f32.gmra.mxu0 %v3266
    %v4408 = vpop.f32.mrf.mxu0
    %v4409 = vadd.f32 0.0, %v4408
    %4410 = vmatmul.f32.gmra.mxu0 %v3269
    %v4411 = vpop.f32.mrf.mxu0
    %v4412 = vadd.f32 0.0, %v4411
    %4413 = vmatmul.f32.gmra.mxu0 %v3272
    %v4414 = vpop.f32.mrf.mxu0
    %v4415 = vadd.f32 0.0, %v4414
    %4416 = vmatmul.f32.gmra.mxu0 %v3275
    %v4417 = vpop.f32.mrf.mxu0
    %v4418 = vadd.f32 0.0, %v4417
    %4419 = vmatmul.f32.gmra.mxu0 %v3815
    %v4420 = vpop.f32.mrf.mxu0
    %v4421 = vadd.f32 0.0, %v4420
    %4422 = vmatmul.f32.gmra.mxu0 %v4341
    %v4423 = vpop.f32.mrf.mxu0
    %v4424 = vadd.f32 0.0, %v4423
    %4425 = vdwg.mxu0
    %v4426 = vadd.f32 %v4320, %v4379
    %v4427 = vadd.f32 %v4321, %v4382
    %v4428 = vadd.f32 %v4322, %v4385
    %v4429 = vadd.f32 %v4323, %v4388
    %v4430 = vadd.f32 %v4324, %v4391
    %v4431 = vadd.f32 %v4325, %v4394
    %v4432 = vadd.f32 %v4326, %v4397
    %v4433 = vadd.f32 %v4327, %v4400
    %v4434 = vadd.f32 %v4328, %v4403
    %v4435 = vadd.f32 %v4329, %v4406
    %v4436 = vadd.f32 %v4330, %v4409
    %v4437 = vadd.f32 %v4331, %v4412
    %v4438 = vadd.f32 %v4332, %v4415
    %v4439 = vadd.f32 %v4333, %v4418
    %v4440 = vadd.f32 %v4334, %v4421
    %v4441 = vadd.f32 %v4335, %v4424
    %s4442 = scalar_lea.vmem %s4, 1920
    %v4443 = vld [vmem:[%s4442] sm:$0xff]
    %v4444 = vld [vmem:[%s4442 + $0x8] sm:$0xff]
    %v4445 = vld [vmem:[%s4442 + $0x10] sm:$0xff]
    %v4446 = vld [vmem:[%s4442 + $0x18] sm:$0xff]
    %v4447 = vld [vmem:[%s4442 + $0x20] sm:$0xff]
    %v4448 = vld [vmem:[%s4442 + $0x28] sm:$0xff]
    %v4449 = vld [vmem:[%s4442 + $0x30] sm:$0xff]
    %v4450 = vld [vmem:[%s4442 + $0x38] sm:$0xff]
    %v4451 = vld [vmem:[%s4442 + $0x40] sm:$0xff]
    %v4452 = vld [vmem:[%s4442 + $0x48] sm:$0xff]
    %v4453 = vld [vmem:[%s4442 + $0x50] sm:$0xff]
    %v4454 = vld [vmem:[%s4442 + $0x58] sm:$0xff]
    %v4455 = vld [vmem:[%s4442 + $0x60] sm:$0xff]
    %v4456 = vld [vmem:[%s4442 + $0x68] sm:$0xff]
    %v4457 = vld [vmem:[%s4442 + $0x70] sm:$0xff]
    %v4458 = vld [vmem:[%s4442 + $0x78] sm:$0xff]
    %4459 = vmatpush.msra.mxu0 %v4458
    %4460 = vmatpush.msra.mxu0 %v4457
    %4461 = vmatpush.msra.mxu0 %v4456
    %4462 = vmatpush.msra.mxu0 %v4455
    %4463 = vmatpush.msra.mxu0 %v4454
    %4464 = vmatpush.msra.mxu0 %v4453
    %4465 = vmatpush.msra.mxu0 %v4452
    %4466 = vmatpush.msra.mxu0 %v4451
    %4467 = vmatpush.msra.mxu0 %v4450
    %4468 = vmatpush.msra.mxu0 %v4449
    %4469 = vmatpush.msra.mxu0 %v4448
    %4470 = vmatpush.msra.mxu0 %v4447
    %4471 = vmatpush.msra.mxu0 %v4446
    %4472 = vmatpush.msra.mxu0 %v4445
    %4473 = vmatpush.msra.mxu0 %v4444
    %4474 = vmatpush.msra.mxu0 %v4443
    %4475 = vmatmul.f32.gmra.mxu0 %v2599
    %v4476 = vpop.f32.mrf.mxu0
    %v4477 = vadd.f32 0.0, %v4476
    %4478 = vmatmul.f32.gmra.mxu0 %v2601
    %v4479 = vpop.f32.mrf.mxu0
    %v4480 = vadd.f32 0.0, %v4479
    %4481 = vmatmul.f32.gmra.mxu0 %v2603
    %v4482 = vpop.f32.mrf.mxu0
    %v4483 = vadd.f32 0.0, %v4482
    %4484 = vmatmul.f32.gmra.mxu0 %v2605
    %v4485 = vpop.f32.mrf.mxu0
    %v4486 = vadd.f32 0.0, %v4485
    %4487 = vmatmul.f32.gmra.mxu0 %v2607
    %v4488 = vpop.f32.mrf.mxu0
    %v4489 = vadd.f32 0.0, %v4488
    %4490 = vmatmul.f32.gmra.mxu0 %v2609
    %v4491 = vpop.f32.mrf.mxu0
    %v4492 = vadd.f32 0.0, %v4491
    %4493 = vmatmul.f32.gmra.mxu0 %v2611
    %v4494 = vpop.f32.mrf.mxu0
    %v4495 = vadd.f32 0.0, %v4494
    %4496 = vmatmul.f32.gmra.mxu0 %v2613
    %v4497 = vpop.f32.mrf.mxu0
    %v4498 = vadd.f32 0.0, %v4497
    %4499 = vmatmul.f32.gmra.mxu0 %v2623
    %v4500 = vpop.f32.mrf.mxu0
    %v4501 = vadd.f32 0.0, %v4500
    %4502 = vmatmul.f32.gmra.mxu0 %v2625
    %v4503 = vpop.f32.mrf.mxu0
    %v4504 = vadd.f32 0.0, %v4503
    %4505 = vmatmul.f32.gmra.mxu0 %v2627
    %v4506 = vpop.f32.mrf.mxu0
    %v4507 = vadd.f32 0.0, %v4506
    %4508 = vmatmul.f32.gmra.mxu0 %v2629
    %v4509 = vpop.f32.mrf.mxu0
    %v4510 = vadd.f32 0.0, %v4509
    %4511 = vmatmul.f32.gmra.mxu0 %v2631
    %v4512 = vpop.f32.mrf.mxu0
    %v4513 = vadd.f32 0.0, %v4512
    %4514 = vmatmul.f32.gmra.mxu0 %v2633
    %v4515 = vpop.f32.mrf.mxu0
    %v4516 = vadd.f32 0.0, %v4515
    %4517 = vmatmul.f32.gmra.mxu0 %v2635
    %v4518 = vpop.f32.mrf.mxu0
    %v4519 = vadd.f32 0.0, %v4518
    %4520 = vmatmul.f32.gmra.mxu0 %v2637
    %v4521 = vpop.f32.mrf.mxu0
    %v4522 = vadd.f32 0.0, %v4521
    %4523 = vdwg.mxu0
    %v4524 = vadd.f32 %v4426, %v4477
    %v4525 = vadd.f32 %v4427, %v4480
    %v4526 = vadd.f32 %v4428, %v4483
    %v4527 = vadd.f32 %v4429, %v4486
    %v4528 = vadd.f32 %v4430, %v4489
    %v4529 = vadd.f32 %v4431, %v4492
    %v4530 = vadd.f32 %v4432, %v4495
    %v4531 = vadd.f32 %v4433, %v4498
    %v4532 = vadd.f32 %v4434, %v4501
    %v4533 = vadd.f32 %v4435, %v4504
    %v4534 = vadd.f32 %v4436, %v4507
    %v4535 = vadd.f32 %v4437, %v4510
    %v4536 = vadd.f32 %v4438, %v4513
    %v4537 = vadd.f32 %v4439, %v4516
    %v4538 = vadd.f32 %v4440, %v4519
    %v4539 = vadd.f32 %v4441, %v4522
    %v4544 = vrot.slane %v2613, 1
    %v4545 = vrot.slane %v2614, 1
    %v4546 = vsel %vm2689, %v4544, %v4545
    %v4547 = vrot.slane %v2637, 1
    %v4548 = vrot.slane %v2638, 1
    %v4549 = vsel %vm2689, %v4547, %v4548
    %s4552 = scalar_lea.vmem %s4, 2048
    %v4553 = vld [vmem:[%s4552] sm:$0xff]
    %v4554 = vld [vmem:[%s4552 + $0x8] sm:$0xff]
    %v4555 = vld [vmem:[%s4552 + $0x10] sm:$0xff]
    %v4556 = vld [vmem:[%s4552 + $0x18] sm:$0xff]
    %v4557 = vld [vmem:[%s4552 + $0x20] sm:$0xff]
    %v4558 = vld [vmem:[%s4552 + $0x28] sm:$0xff]
    %v4559 = vld [vmem:[%s4552 + $0x30] sm:$0xff]
    %v4560 = vld [vmem:[%s4552 + $0x38] sm:$0xff]
    %v4561 = vld [vmem:[%s4552 + $0x40] sm:$0xff]
    %v4562 = vld [vmem:[%s4552 + $0x48] sm:$0xff]
    %v4563 = vld [vmem:[%s4552 + $0x50] sm:$0xff]
    %v4564 = vld [vmem:[%s4552 + $0x58] sm:$0xff]
    %v4565 = vld [vmem:[%s4552 + $0x60] sm:$0xff]
    %v4566 = vld [vmem:[%s4552 + $0x68] sm:$0xff]
    %v4567 = vld [vmem:[%s4552 + $0x70] sm:$0xff]
    %v4568 = vld [vmem:[%s4552 + $0x78] sm:$0xff]
    %4569 = vmatpush.msra.mxu0 %v4568
    %4570 = vmatpush.msra.mxu0 %v4567
    %4571 = vmatpush.msra.mxu0 %v4566
    %4572 = vmatpush.msra.mxu0 %v4565
    %4573 = vmatpush.msra.mxu0 %v4564
    %4574 = vmatpush.msra.mxu0 %v4563
    %4575 = vmatpush.msra.mxu0 %v4562
    %4576 = vmatpush.msra.mxu0 %v4561
    %4577 = vmatpush.msra.mxu0 %v4560
    %4578 = vmatpush.msra.mxu0 %v4559
    %4579 = vmatpush.msra.mxu0 %v4558
    %4580 = vmatpush.msra.mxu0 %v4557
    %4581 = vmatpush.msra.mxu0 %v4556
    %4582 = vmatpush.msra.mxu0 %v4555
    %4583 = vmatpush.msra.mxu0 %v4554
    %4584 = vmatpush.msra.mxu0 %v4553
    %4585 = vmatmul.f32.gmra.mxu0 %v2701
    %v4586 = vpop.f32.mrf.mxu0
    %v4587 = vadd.f32 0.0, %v4586
    %4588 = vmatmul.f32.gmra.mxu0 %v2704
    %v4589 = vpop.f32.mrf.mxu0
    %v4590 = vadd.f32 0.0, %v4589
    %4591 = vmatmul.f32.gmra.mxu0 %v2707
    %v4592 = vpop.f32.mrf.mxu0
    %v4593 = vadd.f32 0.0, %v4592
    %4594 = vmatmul.f32.gmra.mxu0 %v2710
    %v4595 = vpop.f32.mrf.mxu0
    %v4596 = vadd.f32 0.0, %v4595
    %4597 = vmatmul.f32.gmra.mxu0 %v2713
    %v4598 = vpop.f32.mrf.mxu0
    %v4599 = vadd.f32 0.0, %v4598
    %4600 = vmatmul.f32.gmra.mxu0 %v3494
    %v4601 = vpop.f32.mrf.mxu0
    %v4602 = vadd.f32 0.0, %v4601
    %4603 = vmatmul.f32.gmra.mxu0 %v4020
    %v4604 = vpop.f32.mrf.mxu0
    %v4605 = vadd.f32 0.0, %v4604
    %4606 = vmatmul.f32.gmra.mxu0 %v4546
    %v4607 = vpop.f32.mrf.mxu0
    %v4608 = vadd.f32 0.0, %v4607
    %4609 = vmatmul.f32.gmra.mxu0 %v2725
    %v4610 = vpop.f32.mrf.mxu0
    %v4611 = vadd.f32 0.0, %v4610
    %4612 = vmatmul.f32.gmra.mxu0 %v2728
    %v4613 = vpop.f32.mrf.mxu0
    %v4614 = vadd.f32 0.0, %v4613
    %4615 = vmatmul.f32.gmra.mxu0 %v2731
    %v4616 = vpop.f32.mrf.mxu0
    %v4617 = vadd.f32 0.0, %v4616
    %4618 = vmatmul.f32.gmra.mxu0 %v2734
    %v4619 = vpop.f32.mrf.mxu0
    %v4620 = vadd.f32 0.0, %v4619
    %4621 = vmatmul.f32.gmra.mxu0 %v2737
    %v4622 = vpop.f32.mrf.mxu0
    %v4623 = vadd.f32 0.0, %v4622
    %4624 = vmatmul.f32.gmra.mxu0 %v3497
    %v4625 = vpop.f32.mrf.mxu0
    %v4626 = vadd.f32 0.0, %v4625
    %4627 = vmatmul.f32.gmra.mxu0 %v4023
    %v4628 = vpop.f32.mrf.mxu0
    %v4629 = vadd.f32 0.0, %v4628
    %4630 = vmatmul.f32.gmra.mxu0 %v4549
    %v4631 = vpop.f32.mrf.mxu0
    %v4632 = vadd.f32 0.0, %v4631
    %4633 = vdwg.mxu0
    %v4634 = vadd.f32 %v4524, %v4587
    %v4635 = vadd.f32 %v4525, %v4590
    %v4636 = vadd.f32 %v4526, %v4593
    %v4637 = vadd.f32 %v4527, %v4596
    %v4638 = vadd.f32 %v4528, %v4599
    %v4639 = vadd.f32 %v4529, %v4602
    %v4640 = vadd.f32 %v4530, %v4605
    %v4641 = vadd.f32 %v4531, %v4608
    %v4642 = vadd.f32 %v4532, %v4611
    %v4643 = vadd.f32 %v4533, %v4614
    %v4644 = vadd.f32 %v4534, %v4617
    %v4645 = vadd.f32 %v4535, %v4620
    %v4646 = vadd.f32 %v4536, %v4623
    %v4647 = vadd.f32 %v4537, %v4626
    %v4648 = vadd.f32 %v4538, %v4629
    %v4649 = vadd.f32 %v4539, %v4632
    %v4650 = vrot.slane %v2613, 2
    %v4651 = vrot.slane %v2614, 2
    %v4652 = vsel %vm2901, %v4650, %v4651
    %v4653 = vrot.slane %v2637, 2
    %v4654 = vrot.slane %v2638, 2
    %v4655 = vsel %vm2901, %v4653, %v4654
    %s4658 = scalar_lea.vmem %s4, 2176
    %v4659 = vld [vmem:[%s4658] sm:$0xff]
    %v4660 = vld [vmem:[%s4658 + $0x8] sm:$0xff]
    %v4661 = vld [vmem:[%s4658 + $0x10] sm:$0xff]
    %v4662 = vld [vmem:[%s4658 + $0x18] sm:$0xff]
    %v4663 = vld [vmem:[%s4658 + $0x20] sm:$0xff]
    %v4664 = vld [vmem:[%s4658 + $0x28] sm:$0xff]
    %v4665 = vld [vmem:[%s4658 + $0x30] sm:$0xff]
    %v4666 = vld [vmem:[%s4658 + $0x38] sm:$0xff]
    %v4667 = vld [vmem:[%s4658 + $0x40] sm:$0xff]
    %v4668 = vld [vmem:[%s4658 + $0x48] sm:$0xff]
    %v4669 = vld [vmem:[%s4658 + $0x50] sm:$0xff]
    %v4670 = vld [vmem:[%s4658 + $0x58] sm:$0xff]
    %v4671 = vld [vmem:[%s4658 + $0x60] sm:$0xff]
    %v4672 = vld [vmem:[%s4658 + $0x68] sm:$0xff]
    %v4673 = vld [vmem:[%s4658 + $0x70] sm:$0xff]
    %v4674 = vld [vmem:[%s4658 + $0x78] sm:$0xff]
    %4675 = vmatpush.msra.mxu0 %v4674
    %4676 = vmatpush.msra.mxu0 %v4673
    %4677 = vmatpush.msra.mxu0 %v4672
    %4678 = vmatpush.msra.mxu0 %v4671
    %4679 = vmatpush.msra.mxu0 %v4670
    %4680 = vmatpush.msra.mxu0 %v4669
    %4681 = vmatpush.msra.mxu0 %v4668
    %4682 = vmatpush.msra.mxu0 %v4667
    %4683 = vmatpush.msra.mxu0 %v4666
    %4684 = vmatpush.msra.mxu0 %v4665
    %4685 = vmatpush.msra.mxu0 %v4664
    %4686 = vmatpush.msra.mxu0 %v4663
    %4687 = vmatpush.msra.mxu0 %v4662
    %4688 = vmatpush.msra.mxu0 %v4661
    %4689 = vmatpush.msra.mxu0 %v4660
    %4690 = vmatpush.msra.mxu0 %v4659
    %4691 = vmatmul.f32.gmra.mxu0 %v2913
    %v4692 = vpop.f32.mrf.mxu0
    %v4693 = vadd.f32 0.0, %v4692
    %4694 = vmatmul.f32.gmra.mxu0 %v2916
    %v4695 = vpop.f32.mrf.mxu0
    %v4696 = vadd.f32 0.0, %v4695
    %4697 = vmatmul.f32.gmra.mxu0 %v2919
    %v4698 = vpop.f32.mrf.mxu0
    %v4699 = vadd.f32 0.0, %v4698
    %4700 = vmatmul.f32.gmra.mxu0 %v2922
    %v4701 = vpop.f32.mrf.mxu0
    %v4702 = vadd.f32 0.0, %v4701
    %4703 = vmatmul.f32.gmra.mxu0 %v2925
    %v4704 = vpop.f32.mrf.mxu0
    %v4705 = vadd.f32 0.0, %v4704
    %4706 = vmatmul.f32.gmra.mxu0 %v3600
    %v4707 = vpop.f32.mrf.mxu0
    %v4708 = vadd.f32 0.0, %v4707
    %4709 = vmatmul.f32.gmra.mxu0 %v4126
    %v4710 = vpop.f32.mrf.mxu0
    %v4711 = vadd.f32 0.0, %v4710
    %4712 = vmatmul.f32.gmra.mxu0 %v4652
    %v4713 = vpop.f32.mrf.mxu0
    %v4714 = vadd.f32 0.0, %v4713
    %4715 = vmatmul.f32.gmra.mxu0 %v2937
    %v4716 = vpop.f32.mrf.mxu0
    %v4717 = vadd.f32 0.0, %v4716
    %4718 = vmatmul.f32.gmra.mxu0 %v2940
    %v4719 = vpop.f32.mrf.mxu0
    %v4720 = vadd.f32 0.0, %v4719
    %4721 = vmatmul.f32.gmra.mxu0 %v2943
    %v4722 = vpop.f32.mrf.mxu0
    %v4723 = vadd.f32 0.0, %v4722
    %4724 = vmatmul.f32.gmra.mxu0 %v2946
    %v4725 = vpop.f32.mrf.mxu0
    %v4726 = vadd.f32 0.0, %v4725
    %4727 = vmatmul.f32.gmra.mxu0 %v2949
    %v4728 = vpop.f32.mrf.mxu0
    %v4729 = vadd.f32 0.0, %v4728
    %4730 = vmatmul.f32.gmra.mxu0 %v3603
    %v4731 = vpop.f32.mrf.mxu0
    %v4732 = vadd.f32 0.0, %v4731
    %4733 = vmatmul.f32.gmra.mxu0 %v4129
    %v4734 = vpop.f32.mrf.mxu0
    %v4735 = vadd.f32 0.0, %v4734
    %4736 = vmatmul.f32.gmra.mxu0 %v4655
    %v4737 = vpop.f32.mrf.mxu0
    %v4738 = vadd.f32 0.0, %v4737
    %4739 = vdwg.mxu0
    %v4740 = vadd.f32 %v4634, %v4693
    %v4741 = vadd.f32 %v4635, %v4696
    %v4742 = vadd.f32 %v4636, %v4699
    %v4743 = vadd.f32 %v4637, %v4702
    %v4744 = vadd.f32 %v4638, %v4705
    %v4745 = vadd.f32 %v4639, %v4708
    %v4746 = vadd.f32 %v4640, %v4711
    %v4747 = vadd.f32 %v4641, %v4714
    %v4748 = vadd.f32 %v4642, %v4717
    %v4749 = vadd.f32 %v4643, %v4720
    %v4750 = vadd.f32 %v4644, %v4723
    %v4751 = vadd.f32 %v4645, %v4726
    %v4752 = vadd.f32 %v4646, %v4729
    %v4753 = vadd.f32 %v4647, %v4732
    %v4754 = vadd.f32 %v4648, %v4735
    %v4755 = vadd.f32 %v4649, %v4738
    %v4756 = vrot.slane %v2613, 3
    %v4757 = vrot.slane %v2614, 3
    %v4758 = vsel %vm3064, %v4756, %v4757
    %v4759 = vrot.slane %v2637, 3
    %v4760 = vrot.slane %v2638, 3
    %v4761 = vsel %vm3064, %v4759, %v4760
    %s4764 = scalar_lea.vmem %s4, 2304
    %v4765 = vld [vmem:[%s4764] sm:$0xff]
    %v4766 = vld [vmem:[%s4764 + $0x8] sm:$0xff]
    %v4767 = vld [vmem:[%s4764 + $0x10] sm:$0xff]
    %v4768 = vld [vmem:[%s4764 + $0x18] sm:$0xff]
    %v4769 = vld [vmem:[%s4764 + $0x20] sm:$0xff]
    %v4770 = vld [vmem:[%s4764 + $0x28] sm:$0xff]
    %v4771 = vld [vmem:[%s4764 + $0x30] sm:$0xff]
    %v4772 = vld [vmem:[%s4764 + $0x38] sm:$0xff]
    %v4773 = vld [vmem:[%s4764 + $0x40] sm:$0xff]
    %v4774 = vld [vmem:[%s4764 + $0x48] sm:$0xff]
    %v4775 = vld [vmem:[%s4764 + $0x50] sm:$0xff]
    %v4776 = vld [vmem:[%s4764 + $0x58] sm:$0xff]
    %v4777 = vld [vmem:[%s4764 + $0x60] sm:$0xff]
    %v4778 = vld [vmem:[%s4764 + $0x68] sm:$0xff]
    %v4779 = vld [vmem:[%s4764 + $0x70] sm:$0xff]
    %v4780 = vld [vmem:[%s4764 + $0x78] sm:$0xff]
    %4781 = vmatpush.msra.mxu0 %v4780
    %4782 = vmatpush.msra.mxu0 %v4779
    %4783 = vmatpush.msra.mxu0 %v4778
    %4784 = vmatpush.msra.mxu0 %v4777
    %4785 = vmatpush.msra.mxu0 %v4776
    %4786 = vmatpush.msra.mxu0 %v4775
    %4787 = vmatpush.msra.mxu0 %v4774
    %4788 = vmatpush.msra.mxu0 %v4773
    %4789 = vmatpush.msra.mxu0 %v4772
    %4790 = vmatpush.msra.mxu0 %v4771
    %4791 = vmatpush.msra.mxu0 %v4770
    %4792 = vmatpush.msra.mxu0 %v4769
    %4793 = vmatpush.msra.mxu0 %v4768
    %4794 = vmatpush.msra.mxu0 %v4767
    %4795 = vmatpush.msra.mxu0 %v4766
    %4796 = vmatpush.msra.mxu0 %v4765
    %4797 = vmatmul.f32.gmra.mxu0 %v3076
    %v4798 = vpop.f32.mrf.mxu0
    %v4799 = vadd.f32 0.0, %v4798
    %4800 = vmatmul.f32.gmra.mxu0 %v3079
    %v4801 = vpop.f32.mrf.mxu0
    %v4802 = vadd.f32 0.0, %v4801
    %4803 = vmatmul.f32.gmra.mxu0 %v3082
    %v4804 = vpop.f32.mrf.mxu0
    %v4805 = vadd.f32 0.0, %v4804
    %4806 = vmatmul.f32.gmra.mxu0 %v3085
    %v4807 = vpop.f32.mrf.mxu0
    %v4808 = vadd.f32 0.0, %v4807
    %4809 = vmatmul.f32.gmra.mxu0 %v3088
    %v4810 = vpop.f32.mrf.mxu0
    %v4811 = vadd.f32 0.0, %v4810
    %4812 = vmatmul.f32.gmra.mxu0 %v3706
    %v4813 = vpop.f32.mrf.mxu0
    %v4814 = vadd.f32 0.0, %v4813
    %4815 = vmatmul.f32.gmra.mxu0 %v4232
    %v4816 = vpop.f32.mrf.mxu0
    %v4817 = vadd.f32 0.0, %v4816
    %4818 = vmatmul.f32.gmra.mxu0 %v4758
    %v4819 = vpop.f32.mrf.mxu0
    %v4820 = vadd.f32 0.0, %v4819
    %4821 = vmatmul.f32.gmra.mxu0 %v3100
    %v4822 = vpop.f32.mrf.mxu0
    %v4823 = vadd.f32 0.0, %v4822
    %4824 = vmatmul.f32.gmra.mxu0 %v3103
    %v4825 = vpop.f32.mrf.mxu0
    %v4826 = vadd.f32 0.0, %v4825
    %4827 = vmatmul.f32.gmra.mxu0 %v3106
    %v4828 = vpop.f32.mrf.mxu0
    %v4829 = vadd.f32 0.0, %v4828
    %4830 = vmatmul.f32.gmra.mxu0 %v3109
    %v4831 = vpop.f32.mrf.mxu0
    %v4832 = vadd.f32 0.0, %v4831
    %4833 = vmatmul.f32.gmra.mxu0 %v3112
    %v4834 = vpop.f32.mrf.mxu0
    %v4835 = vadd.f32 0.0, %v4834
    %4836 = vmatmul.f32.gmra.mxu0 %v3709
    %v4837 = vpop.f32.mrf.mxu0
    %v4838 = vadd.f32 0.0, %v4837
    %4839 = vmatmul.f32.gmra.mxu0 %v4235
    %v4840 = vpop.f32.mrf.mxu0
    %v4841 = vadd.f32 0.0, %v4840
    %4842 = vmatmul.f32.gmra.mxu0 %v4761
    %v4843 = vpop.f32.mrf.mxu0
    %v4844 = vadd.f32 0.0, %v4843
    %4845 = vdwg.mxu0
    %v4846 = vadd.f32 %v4740, %v4799
    %v4847 = vadd.f32 %v4741, %v4802
    %v4848 = vadd.f32 %v4742, %v4805
    %v4849 = vadd.f32 %v4743, %v4808
    %v4850 = vadd.f32 %v4744, %v4811
    %v4851 = vadd.f32 %v4745, %v4814
    %v4852 = vadd.f32 %v4746, %v4817
    %v4853 = vadd.f32 %v4747, %v4820
    %v4854 = vadd.f32 %v4748, %v4823
    %v4855 = vadd.f32 %v4749, %v4826
    %v4856 = vadd.f32 %v4750, %v4829
    %v4857 = vadd.f32 %v4751, %v4832
    %v4858 = vadd.f32 %v4752, %v4835
    %v4859 = vadd.f32 %v4753, %v4838
    %v4860 = vadd.f32 %v4754, %v4841
    %v4861 = vadd.f32 %v4755, %v4844
    %v4862 = vrot.slane %v2613, 4
    %v4863 = vrot.slane %v2614, 4
    %v4864 = vsel %vm3227, %v4862, %v4863
    %v4865 = vrot.slane %v2637, 4
    %v4866 = vrot.slane %v2638, 4
    %v4867 = vsel %vm3227, %v4865, %v4866
    %s4870 = scalar_lea.vmem %s4, 2432
    %v4871 = vld [vmem:[%s4870] sm:$0xff]
    %v4872 = vld [vmem:[%s4870 + $0x8] sm:$0xff]
    %v4873 = vld [vmem:[%s4870 + $0x10] sm:$0xff]
    %v4874 = vld [vmem:[%s4870 + $0x18] sm:$0xff]
    %v4875 = vld [vmem:[%s4870 + $0x20] sm:$0xff]
    %v4876 = vld [vmem:[%s4870 + $0x28] sm:$0xff]
    %v4877 = vld [vmem:[%s4870 + $0x30] sm:$0xff]
    %v4878 = vld [vmem:[%s4870 + $0x38] sm:$0xff]
    %v4879 = vld [vmem:[%s4870 + $0x40] sm:$0xff]
    %v4880 = vld [vmem:[%s4870 + $0x48] sm:$0xff]
    %v4881 = vld [vmem:[%s4870 + $0x50] sm:$0xff]
    %v4882 = vld [vmem:[%s4870 + $0x58] sm:$0xff]
    %v4883 = vld [vmem:[%s4870 + $0x60] sm:$0xff]
    %v4884 = vld [vmem:[%s4870 + $0x68] sm:$0xff]
    %v4885 = vld [vmem:[%s4870 + $0x70] sm:$0xff]
    %v4886 = vld [vmem:[%s4870 + $0x78] sm:$0xff]
    %4887 = vmatpush.msra.mxu0 %v4886
    %4888 = vmatpush.msra.mxu0 %v4885
    %4889 = vmatpush.msra.mxu0 %v4884
    %4890 = vmatpush.msra.mxu0 %v4883
    %4891 = vmatpush.msra.mxu0 %v4882
    %4892 = vmatpush.msra.mxu0 %v4881
    %4893 = vmatpush.msra.mxu0 %v4880
    %4894 = vmatpush.msra.mxu0 %v4879
    %4895 = vmatpush.msra.mxu0 %v4878
    %4896 = vmatpush.msra.mxu0 %v4877
    %4897 = vmatpush.msra.mxu0 %v4876
    %4898 = vmatpush.msra.mxu0 %v4875
    %4899 = vmatpush.msra.mxu0 %v4874
    %4900 = vmatpush.msra.mxu0 %v4873
    %4901 = vmatpush.msra.mxu0 %v4872
    %4902 = vmatpush.msra.mxu0 %v4871
    %4903 = vmatmul.f32.gmra.mxu0 %v3239
    %v4904 = vpop.f32.mrf.mxu0
    %v4905 = vadd.f32 0.0, %v4904
    %4906 = vmatmul.f32.gmra.mxu0 %v3242
    %v4907 = vpop.f32.mrf.mxu0
    %v4908 = vadd.f32 0.0, %v4907
    %4909 = vmatmul.f32.gmra.mxu0 %v3245
    %v4910 = vpop.f32.mrf.mxu0
    %v4911 = vadd.f32 0.0, %v4910
    %4912 = vmatmul.f32.gmra.mxu0 %v3248
    %v4913 = vpop.f32.mrf.mxu0
    %v4914 = vadd.f32 0.0, %v4913
    %4915 = vmatmul.f32.gmra.mxu0 %v3251
    %v4916 = vpop.f32.mrf.mxu0
    %v4917 = vadd.f32 0.0, %v4916
    %4918 = vmatmul.f32.gmra.mxu0 %v3812
    %v4919 = vpop.f32.mrf.mxu0
    %v4920 = vadd.f32 0.0, %v4919
    %4921 = vmatmul.f32.gmra.mxu0 %v4338
    %v4922 = vpop.f32.mrf.mxu0
    %v4923 = vadd.f32 0.0, %v4922
    %4924 = vmatmul.f32.gmra.mxu0 %v4864
    %v4925 = vpop.f32.mrf.mxu0
    %v4926 = vadd.f32 0.0, %v4925
    %4927 = vmatmul.f32.gmra.mxu0 %v3263
    %v4928 = vpop.f32.mrf.mxu0
    %v4929 = vadd.f32 0.0, %v4928
    %4930 = vmatmul.f32.gmra.mxu0 %v3266
    %v4931 = vpop.f32.mrf.mxu0
    %v4932 = vadd.f32 0.0, %v4931
    %4933 = vmatmul.f32.gmra.mxu0 %v3269
    %v4934 = vpop.f32.mrf.mxu0
    %v4935 = vadd.f32 0.0, %v4934
    %4936 = vmatmul.f32.gmra.mxu0 %v3272
    %v4937 = vpop.f32.mrf.mxu0
    %v4938 = vadd.f32 0.0, %v4937
    %4939 = vmatmul.f32.gmra.mxu0 %v3275
    %v4940 = vpop.f32.mrf.mxu0
    %v4941 = vadd.f32 0.0, %v4940
    %4942 = vmatmul.f32.gmra.mxu0 %v3815
    %v4943 = vpop.f32.mrf.mxu0
    %v4944 = vadd.f32 0.0, %v4943
    %4945 = vmatmul.f32.gmra.mxu0 %v4341
    %v4946 = vpop.f32.mrf.mxu0
    %v4947 = vadd.f32 0.0, %v4946
    %4948 = vmatmul.f32.gmra.mxu0 %v4867
    %v4949 = vpop.f32.mrf.mxu0
    %v4950 = vadd.f32 0.0, %v4949
    %4951 = vdwg.mxu0
    %v4952 = vadd.f32 %v4846, %v4905
    %v4953 = vadd.f32 %v4847, %v4908
    %v4954 = vadd.f32 %v4848, %v4911
    %v4955 = vadd.f32 %v4849, %v4914
    %v4956 = vadd.f32 %v4850, %v4917
    %v4957 = vadd.f32 %v4851, %v4920
    %v4958 = vadd.f32 %v4852, %v4923
    %v4959 = vadd.f32 %v4853, %v4926
    %v4960 = vadd.f32 %v4854, %v4929
    %v4961 = vadd.f32 %v4855, %v4932
    %v4962 = vadd.f32 %v4856, %v4935
    %v4963 = vadd.f32 %v4857, %v4938
    %v4964 = vadd.f32 %v4858, %v4941
    %v4965 = vadd.f32 %v4859, %v4944
    %v4966 = vadd.f32 %v4860, %v4947
    %v4967 = vadd.f32 %v4861, %v4950
    %s4968 = scalar_lea.vmem %s4, 2560
    %v4969 = vld [vmem:[%s4968] sm:$0xff]
    %v4970 = vld [vmem:[%s4968 + $0x8] sm:$0xff]
    %v4971 = vld [vmem:[%s4968 + $0x10] sm:$0xff]
    %v4972 = vld [vmem:[%s4968 + $0x18] sm:$0xff]
    %v4973 = vld [vmem:[%s4968 + $0x20] sm:$0xff]
    %v4974 = vld [vmem:[%s4968 + $0x28] sm:$0xff]
    %v4975 = vld [vmem:[%s4968 + $0x30] sm:$0xff]
    %v4976 = vld [vmem:[%s4968 + $0x38] sm:$0xff]
    %v4977 = vld [vmem:[%s4968 + $0x40] sm:$0xff]
    %v4978 = vld [vmem:[%s4968 + $0x48] sm:$0xff]
    %v4979 = vld [vmem:[%s4968 + $0x50] sm:$0xff]
    %v4980 = vld [vmem:[%s4968 + $0x58] sm:$0xff]
    %v4981 = vld [vmem:[%s4968 + $0x60] sm:$0xff]
    %v4982 = vld [vmem:[%s4968 + $0x68] sm:$0xff]
    %v4983 = vld [vmem:[%s4968 + $0x70] sm:$0xff]
    %v4984 = vld [vmem:[%s4968 + $0x78] sm:$0xff]
    %4985 = vmatpush.msra.mxu0 %v4984
    %4986 = vmatpush.msra.mxu0 %v4983
    %4987 = vmatpush.msra.mxu0 %v4982
    %4988 = vmatpush.msra.mxu0 %v4981
    %4989 = vmatpush.msra.mxu0 %v4980
    %4990 = vmatpush.msra.mxu0 %v4979
    %4991 = vmatpush.msra.mxu0 %v4978
    %4992 = vmatpush.msra.mxu0 %v4977
    %4993 = vmatpush.msra.mxu0 %v4976
    %4994 = vmatpush.msra.mxu0 %v4975
    %4995 = vmatpush.msra.mxu0 %v4974
    %4996 = vmatpush.msra.mxu0 %v4973
    %4997 = vmatpush.msra.mxu0 %v4972
    %4998 = vmatpush.msra.mxu0 %v4971
    %4999 = vmatpush.msra.mxu0 %v4970
    %5000 = vmatpush.msra.mxu0 %v4969
    %5001 = vmatmul.f32.gmra.mxu0 %v2601
    %v5002 = vpop.f32.mrf.mxu0
    %v5003 = vadd.f32 0.0, %v5002
    %5004 = vmatmul.f32.gmra.mxu0 %v2603
    %v5005 = vpop.f32.mrf.mxu0
    %v5006 = vadd.f32 0.0, %v5005
    %5007 = vmatmul.f32.gmra.mxu0 %v2605
    %v5008 = vpop.f32.mrf.mxu0
    %v5009 = vadd.f32 0.0, %v5008
    %5010 = vmatmul.f32.gmra.mxu0 %v2607
    %v5011 = vpop.f32.mrf.mxu0
    %v5012 = vadd.f32 0.0, %v5011
    %5013 = vmatmul.f32.gmra.mxu0 %v2609
    %v5014 = vpop.f32.mrf.mxu0
    %v5015 = vadd.f32 0.0, %v5014
    %5016 = vmatmul.f32.gmra.mxu0 %v2611
    %v5017 = vpop.f32.mrf.mxu0
    %v5018 = vadd.f32 0.0, %v5017
    %5019 = vmatmul.f32.gmra.mxu0 %v2613
    %v5020 = vpop.f32.mrf.mxu0
    %v5021 = vadd.f32 0.0, %v5020
    %5022 = vmatmul.f32.gmra.mxu0 %v2615
    %v5023 = vpop.f32.mrf.mxu0
    %v5024 = vadd.f32 0.0, %v5023
    %5025 = vmatmul.f32.gmra.mxu0 %v2625
    %v5026 = vpop.f32.mrf.mxu0
    %v5027 = vadd.f32 0.0, %v5026
    %5028 = vmatmul.f32.gmra.mxu0 %v2627
    %v5029 = vpop.f32.mrf.mxu0
    %v5030 = vadd.f32 0.0, %v5029
    %5031 = vmatmul.f32.gmra.mxu0 %v2629
    %v5032 = vpop.f32.mrf.mxu0
    %v5033 = vadd.f32 0.0, %v5032
    %5034 = vmatmul.f32.gmra.mxu0 %v2631
    %v5035 = vpop.f32.mrf.mxu0
    %v5036 = vadd.f32 0.0, %v5035
    %5037 = vmatmul.f32.gmra.mxu0 %v2633
    %v5038 = vpop.f32.mrf.mxu0
    %v5039 = vadd.f32 0.0, %v5038
    %5040 = vmatmul.f32.gmra.mxu0 %v2635
    %v5041 = vpop.f32.mrf.mxu0
    %v5042 = vadd.f32 0.0, %v5041
    %5043 = vmatmul.f32.gmra.mxu0 %v2637
    %v5044 = vpop.f32.mrf.mxu0
    %v5045 = vadd.f32 0.0, %v5044
    %5046 = vmatmul.f32.gmra.mxu0 %v2639
    %v5047 = vpop.f32.mrf.mxu0
    %v5048 = vadd.f32 0.0, %v5047
    %5049 = vdwg.mxu0
    %v5050 = vadd.f32 %v4952, %v5003
    %v5051 = vadd.f32 %v4953, %v5006
    %v5052 = vadd.f32 %v4954, %v5009
    %v5053 = vadd.f32 %v4955, %v5012
    %v5054 = vadd.f32 %v4956, %v5015
    %v5055 = vadd.f32 %v4957, %v5018
    %v5056 = vadd.f32 %v4958, %v5021
    %v5057 = vadd.f32 %v4959, %v5024
    %v5058 = vadd.f32 %v4960, %v5027
    %v5059 = vadd.f32 %v4961, %v5030
    %v5060 = vadd.f32 %v4962, %v5033
    %v5061 = vadd.f32 %v4963, %v5036
    %v5062 = vadd.f32 %v4964, %v5039
    %v5063 = vadd.f32 %v4965, %v5042
    %v5064 = vadd.f32 %v4966, %v5045
    %v5065 = vadd.f32 %v4967, %v5048
    %v5070 = vrot.slane %v2615, 1
    %v5071 = vrot.slane %v2616, 1
    %v5072 = vsel %vm2689, %v5070, %v5071
    %v5073 = vrot.slane %v2639, 1
    %v5074 = vrot.slane %v2640, 1
    %v5075 = vsel %vm2689, %v5073, %v5074
    %s5078 = scalar_lea.vmem %s4, 2688
    %v5079 = vld [vmem:[%s5078] sm:$0xff]
    %v5080 = vld [vmem:[%s5078 + $0x8] sm:$0xff]
    %v5081 = vld [vmem:[%s5078 + $0x10] sm:$0xff]
    %v5082 = vld [vmem:[%s5078 + $0x18] sm:$0xff]
    %v5083 = vld [vmem:[%s5078 + $0x20] sm:$0xff]
    %v5084 = vld [vmem:[%s5078 + $0x28] sm:$0xff]
    %v5085 = vld [vmem:[%s5078 + $0x30] sm:$0xff]
    %v5086 = vld [vmem:[%s5078 + $0x38] sm:$0xff]
    %v5087 = vld [vmem:[%s5078 + $0x40] sm:$0xff]
    %v5088 = vld [vmem:[%s5078 + $0x48] sm:$0xff]
    %v5089 = vld [vmem:[%s5078 + $0x50] sm:$0xff]
    %v5090 = vld [vmem:[%s5078 + $0x58] sm:$0xff]
    %v5091 = vld [vmem:[%s5078 + $0x60] sm:$0xff]
    %v5092 = vld [vmem:[%s5078 + $0x68] sm:$0xff]
    %v5093 = vld [vmem:[%s5078 + $0x70] sm:$0xff]
    %v5094 = vld [vmem:[%s5078 + $0x78] sm:$0xff]
    %5095 = vmatpush.msra.mxu0 %v5094
    %5096 = vmatpush.msra.mxu0 %v5093
    %5097 = vmatpush.msra.mxu0 %v5092
    %5098 = vmatpush.msra.mxu0 %v5091
    %5099 = vmatpush.msra.mxu0 %v5090
    %5100 = vmatpush.msra.mxu0 %v5089
    %5101 = vmatpush.msra.mxu0 %v5088
    %5102 = vmatpush.msra.mxu0 %v5087
    %5103 = vmatpush.msra.mxu0 %v5086
    %5104 = vmatpush.msra.mxu0 %v5085
    %5105 = vmatpush.msra.mxu0 %v5084
    %5106 = vmatpush.msra.mxu0 %v5083
    %5107 = vmatpush.msra.mxu0 %v5082
    %5108 = vmatpush.msra.mxu0 %v5081
    %5109 = vmatpush.msra.mxu0 %v5080
    %5110 = vmatpush.msra.mxu0 %v5079
    %5111 = vmatmul.f32.gmra.mxu0 %v2704
    %v5112 = vpop.f32.mrf.mxu0
    %v5113 = vadd.f32 0.0, %v5112
    %5114 = vmatmul.f32.gmra.mxu0 %v2707
    %v5115 = vpop.f32.mrf.mxu0
    %v5116 = vadd.f32 0.0, %v5115
    %5117 = vmatmul.f32.gmra.mxu0 %v2710
    %v5118 = vpop.f32.mrf.mxu0
    %v5119 = vadd.f32 0.0, %v5118
    %5120 = vmatmul.f32.gmra.mxu0 %v2713
    %v5121 = vpop.f32.mrf.mxu0
    %v5122 = vadd.f32 0.0, %v5121
    %5123 = vmatmul.f32.gmra.mxu0 %v3494
    %v5124 = vpop.f32.mrf.mxu0
    %v5125 = vadd.f32 0.0, %v5124
    %5126 = vmatmul.f32.gmra.mxu0 %v4020
    %v5127 = vpop.f32.mrf.mxu0
    %v5128 = vadd.f32 0.0, %v5127
    %5129 = vmatmul.f32.gmra.mxu0 %v4546
    %v5130 = vpop.f32.mrf.mxu0
    %v5131 = vadd.f32 0.0, %v5130
    %5132 = vmatmul.f32.gmra.mxu0 %v5072
    %v5133 = vpop.f32.mrf.mxu0
    %v5134 = vadd.f32 0.0, %v5133
    %5135 = vmatmul.f32.gmra.mxu0 %v2728
    %v5136 = vpop.f32.mrf.mxu0
    %v5137 = vadd.f32 0.0, %v5136
    %5138 = vmatmul.f32.gmra.mxu0 %v2731
    %v5139 = vpop.f32.mrf.mxu0
    %v5140 = vadd.f32 0.0, %v5139
    %5141 = vmatmul.f32.gmra.mxu0 %v2734
    %v5142 = vpop.f32.mrf.mxu0
    %v5143 = vadd.f32 0.0, %v5142
    %5144 = vmatmul.f32.gmra.mxu0 %v2737
    %v5145 = vpop.f32.mrf.mxu0
    %v5146 = vadd.f32 0.0, %v5145
    %5147 = vmatmul.f32.gmra.mxu0 %v3497
    %v5148 = vpop.f32.mrf.mxu0
    %v5149 = vadd.f32 0.0, %v5148
    %5150 = vmatmul.f32.gmra.mxu0 %v4023
    %v5151 = vpop.f32.mrf.mxu0
    %v5152 = vadd.f32 0.0, %v5151
    %5153 = vmatmul.f32.gmra.mxu0 %v4549
    %v5154 = vpop.f32.mrf.mxu0
    %v5155 = vadd.f32 0.0, %v5154
    %5156 = vmatmul.f32.gmra.mxu0 %v5075
    %v5157 = vpop.f32.mrf.mxu0
    %v5158 = vadd.f32 0.0, %v5157
    %5159 = vdwg.mxu0
    %v5160 = vadd.f32 %v5050, %v5113
    %v5161 = vadd.f32 %v5051, %v5116
    %v5162 = vadd.f32 %v5052, %v5119
    %v5163 = vadd.f32 %v5053, %v5122
    %v5164 = vadd.f32 %v5054, %v5125
    %v5165 = vadd.f32 %v5055, %v5128
    %v5166 = vadd.f32 %v5056, %v5131
    %v5167 = vadd.f32 %v5057, %v5134
    %v5168 = vadd.f32 %v5058, %v5137
    %v5169 = vadd.f32 %v5059, %v5140
    %v5170 = vadd.f32 %v5060, %v5143
    %v5171 = vadd.f32 %v5061, %v5146
    %v5172 = vadd.f32 %v5062, %v5149
    %v5173 = vadd.f32 %v5063, %v5152
    %v5174 = vadd.f32 %v5064, %v5155
    %v5175 = vadd.f32 %v5065, %v5158
    %v5176 = vrot.slane %v2615, 2
    %v5177 = vrot.slane %v2616, 2
    %v5178 = vsel %vm2901, %v5176, %v5177
    %v5179 = vrot.slane %v2639, 2
    %v5180 = vrot.slane %v2640, 2
    %v5181 = vsel %vm2901, %v5179, %v5180
    %s5184 = scalar_lea.vmem %s4, 2816
    %v5185 = vld [vmem:[%s5184] sm:$0xff]
    %v5186 = vld [vmem:[%s5184 + $0x8] sm:$0xff]
    %v5187 = vld [vmem:[%s5184 + $0x10] sm:$0xff]
    %v5188 = vld [vmem:[%s5184 + $0x18] sm:$0xff]
    %v5189 = vld [vmem:[%s5184 + $0x20] sm:$0xff]
    %v5190 = vld [vmem:[%s5184 + $0x28] sm:$0xff]
    %v5191 = vld [vmem:[%s5184 + $0x30] sm:$0xff]
    %v5192 = vld [vmem:[%s5184 + $0x38] sm:$0xff]
    %v5193 = vld [vmem:[%s5184 + $0x40] sm:$0xff]
    %v5194 = vld [vmem:[%s5184 + $0x48] sm:$0xff]
    %v5195 = vld [vmem:[%s5184 + $0x50] sm:$0xff]
    %v5196 = vld [vmem:[%s5184 + $0x58] sm:$0xff]
    %v5197 = vld [vmem:[%s5184 + $0x60] sm:$0xff]
    %v5198 = vld [vmem:[%s5184 + $0x68] sm:$0xff]
    %v5199 = vld [vmem:[%s5184 + $0x70] sm:$0xff]
    %v5200 = vld [vmem:[%s5184 + $0x78] sm:$0xff]
    %5201 = vmatpush.msra.mxu0 %v5200
    %5202 = vmatpush.msra.mxu0 %v5199
    %5203 = vmatpush.msra.mxu0 %v5198
    %5204 = vmatpush.msra.mxu0 %v5197
    %5205 = vmatpush.msra.mxu0 %v5196
    %5206 = vmatpush.msra.mxu0 %v5195
    %5207 = vmatpush.msra.mxu0 %v5194
    %5208 = vmatpush.msra.mxu0 %v5193
    %5209 = vmatpush.msra.mxu0 %v5192
    %5210 = vmatpush.msra.mxu0 %v5191
    %5211 = vmatpush.msra.mxu0 %v5190
    %5212 = vmatpush.msra.mxu0 %v5189
    %5213 = vmatpush.msra.mxu0 %v5188
    %5214 = vmatpush.msra.mxu0 %v5187
    %5215 = vmatpush.msra.mxu0 %v5186
    %5216 = vmatpush.msra.mxu0 %v5185
    %5217 = vmatmul.f32.gmra.mxu0 %v2916
    %v5218 = vpop.f32.mrf.mxu0
    %v5219 = vadd.f32 0.0, %v5218
    %5220 = vmatmul.f32.gmra.mxu0 %v2919
    %v5221 = vpop.f32.mrf.mxu0
    %v5222 = vadd.f32 0.0, %v5221
    %5223 = vmatmul.f32.gmra.mxu0 %v2922
    %v5224 = vpop.f32.mrf.mxu0
    %v5225 = vadd.f32 0.0, %v5224
    %5226 = vmatmul.f32.gmra.mxu0 %v2925
    %v5227 = vpop.f32.mrf.mxu0
    %v5228 = vadd.f32 0.0, %v5227
    %5229 = vmatmul.f32.gmra.mxu0 %v3600
    %v5230 = vpop.f32.mrf.mxu0
    %v5231 = vadd.f32 0.0, %v5230
    %5232 = vmatmul.f32.gmra.mxu0 %v4126
    %v5233 = vpop.f32.mrf.mxu0
    %v5234 = vadd.f32 0.0, %v5233
    %5235 = vmatmul.f32.gmra.mxu0 %v4652
    %v5236 = vpop.f32.mrf.mxu0
    %v5237 = vadd.f32 0.0, %v5236
    %5238 = vmatmul.f32.gmra.mxu0 %v5178
    %v5239 = vpop.f32.mrf.mxu0
    %v5240 = vadd.f32 0.0, %v5239
    %5241 = vmatmul.f32.gmra.mxu0 %v2940
    %v5242 = vpop.f32.mrf.mxu0
    %v5243 = vadd.f32 0.0, %v5242
    %5244 = vmatmul.f32.gmra.mxu0 %v2943
    %v5245 = vpop.f32.mrf.mxu0
    %v5246 = vadd.f32 0.0, %v5245
    %5247 = vmatmul.f32.gmra.mxu0 %v2946
    %v5248 = vpop.f32.mrf.mxu0
    %v5249 = vadd.f32 0.0, %v5248
    %5250 = vmatmul.f32.gmra.mxu0 %v2949
    %v5251 = vpop.f32.mrf.mxu0
    %v5252 = vadd.f32 0.0, %v5251
    %5253 = vmatmul.f32.gmra.mxu0 %v3603
    %v5254 = vpop.f32.mrf.mxu0
    %v5255 = vadd.f32 0.0, %v5254
    %5256 = vmatmul.f32.gmra.mxu0 %v4129
    %v5257 = vpop.f32.mrf.mxu0
    %v5258 = vadd.f32 0.0, %v5257
    %5259 = vmatmul.f32.gmra.mxu0 %v4655
    %v5260 = vpop.f32.mrf.mxu0
    %v5261 = vadd.f32 0.0, %v5260
    %5262 = vmatmul.f32.gmra.mxu0 %v5181
    %v5263 = vpop.f32.mrf.mxu0
    %v5264 = vadd.f32 0.0, %v5263
    %5265 = vdwg.mxu0
    %v5266 = vadd.f32 %v5160, %v5219
    %v5267 = vadd.f32 %v5161, %v5222
    %v5268 = vadd.f32 %v5162, %v5225
    %v5269 = vadd.f32 %v5163, %v5228
    %v5270 = vadd.f32 %v5164, %v5231
    %v5271 = vadd.f32 %v5165, %v5234
    %v5272 = vadd.f32 %v5166, %v5237
    %v5273 = vadd.f32 %v5167, %v5240
    %v5274 = vadd.f32 %v5168, %v5243
    %v5275 = vadd.f32 %v5169, %v5246
    %v5276 = vadd.f32 %v5170, %v5249
    %v5277 = vadd.f32 %v5171, %v5252
    %v5278 = vadd.f32 %v5172, %v5255
    %v5279 = vadd.f32 %v5173, %v5258
    %v5280 = vadd.f32 %v5174, %v5261
    %v5281 = vadd.f32 %v5175, %v5264
    %v5282 = vrot.slane %v2615, 3
    %v5283 = vrot.slane %v2616, 3
    %v5284 = vsel %vm3064, %v5282, %v5283
    %v5285 = vrot.slane %v2639, 3
    %v5286 = vrot.slane %v2640, 3
    %v5287 = vsel %vm3064, %v5285, %v5286
    %s5290 = scalar_lea.vmem %s4, 2944
    %v5291 = vld [vmem:[%s5290] sm:$0xff]
    %v5292 = vld [vmem:[%s5290 + $0x8] sm:$0xff]
    %v5293 = vld [vmem:[%s5290 + $0x10] sm:$0xff]
    %v5294 = vld [vmem:[%s5290 + $0x18] sm:$0xff]
    %v5295 = vld [vmem:[%s5290 + $0x20] sm:$0xff]
    %v5296 = vld [vmem:[%s5290 + $0x28] sm:$0xff]
    %v5297 = vld [vmem:[%s5290 + $0x30] sm:$0xff]
    %v5298 = vld [vmem:[%s5290 + $0x38] sm:$0xff]
    %v5299 = vld [vmem:[%s5290 + $0x40] sm:$0xff]
    %v5300 = vld [vmem:[%s5290 + $0x48] sm:$0xff]
    %v5301 = vld [vmem:[%s5290 + $0x50] sm:$0xff]
    %v5302 = vld [vmem:[%s5290 + $0x58] sm:$0xff]
    %v5303 = vld [vmem:[%s5290 + $0x60] sm:$0xff]
    %v5304 = vld [vmem:[%s5290 + $0x68] sm:$0xff]
    %v5305 = vld [vmem:[%s5290 + $0x70] sm:$0xff]
    %v5306 = vld [vmem:[%s5290 + $0x78] sm:$0xff]
    %5307 = vmatpush.msra.mxu0 %v5306
    %5308 = vmatpush.msra.mxu0 %v5305
    %5309 = vmatpush.msra.mxu0 %v5304
    %5310 = vmatpush.msra.mxu0 %v5303
    %5311 = vmatpush.msra.mxu0 %v5302
    %5312 = vmatpush.msra.mxu0 %v5301
    %5313 = vmatpush.msra.mxu0 %v5300
    %5314 = vmatpush.msra.mxu0 %v5299
    %5315 = vmatpush.msra.mxu0 %v5298
    %5316 = vmatpush.msra.mxu0 %v5297
    %5317 = vmatpush.msra.mxu0 %v5296
    %5318 = vmatpush.msra.mxu0 %v5295
    %5319 = vmatpush.msra.mxu0 %v5294
    %5320 = vmatpush.msra.mxu0 %v5293
    %5321 = vmatpush.msra.mxu0 %v5292
    %5322 = vmatpush.msra.mxu0 %v5291
    %5323 = vmatmul.f32.gmra.mxu0 %v3079
    %v5324 = vpop.f32.mrf.mxu0
    %v5325 = vadd.f32 0.0, %v5324
    %5326 = vmatmul.f32.gmra.mxu0 %v3082
    %v5327 = vpop.f32.mrf.mxu0
    %v5328 = vadd.f32 0.0, %v5327
    %5329 = vmatmul.f32.gmra.mxu0 %v3085
    %v5330 = vpop.f32.mrf.mxu0
    %v5331 = vadd.f32 0.0, %v5330
    %5332 = vmatmul.f32.gmra.mxu0 %v3088
    %v5333 = vpop.f32.mrf.mxu0
    %v5334 = vadd.f32 0.0, %v5333
    %5335 = vmatmul.f32.gmra.mxu0 %v3706
    %v5336 = vpop.f32.mrf.mxu0
    %v5337 = vadd.f32 0.0, %v5336
    %5338 = vmatmul.f32.gmra.mxu0 %v4232
    %v5339 = vpop.f32.mrf.mxu0
    %v5340 = vadd.f32 0.0, %v5339
    %5341 = vmatmul.f32.gmra.mxu0 %v4758
    %v5342 = vpop.f32.mrf.mxu0
    %v5343 = vadd.f32 0.0, %v5342
    %5344 = vmatmul.f32.gmra.mxu0 %v5284
    %v5345 = vpop.f32.mrf.mxu0
    %v5346 = vadd.f32 0.0, %v5345
    %5347 = vmatmul.f32.gmra.mxu0 %v3103
    %v5348 = vpop.f32.mrf.mxu0
    %v5349 = vadd.f32 0.0, %v5348
    %5350 = vmatmul.f32.gmra.mxu0 %v3106
    %v5351 = vpop.f32.mrf.mxu0
    %v5352 = vadd.f32 0.0, %v5351
    %5353 = vmatmul.f32.gmra.mxu0 %v3109
    %v5354 = vpop.f32.mrf.mxu0
    %v5355 = vadd.f32 0.0, %v5354
    %5356 = vmatmul.f32.gmra.mxu0 %v3112
    %v5357 = vpop.f32.mrf.mxu0
    %v5358 = vadd.f32 0.0, %v5357
    %5359 = vmatmul.f32.gmra.mxu0 %v3709
    %v5360 = vpop.f32.mrf.mxu0
    %v5361 = vadd.f32 0.0, %v5360
    %5362 = vmatmul.f32.gmra.mxu0 %v4235
    %v5363 = vpop.f32.mrf.mxu0
    %v5364 = vadd.f32 0.0, %v5363
    %5365 = vmatmul.f32.gmra.mxu0 %v4761
    %v5366 = vpop.f32.mrf.mxu0
    %v5367 = vadd.f32 0.0, %v5366
    %5368 = vmatmul.f32.gmra.mxu0 %v5287
    %v5369 = vpop.f32.mrf.mxu0
    %v5370 = vadd.f32 0.0, %v5369
    %5371 = vdwg.mxu0
    %v5372 = vadd.f32 %v5266, %v5325
    %v5373 = vadd.f32 %v5267, %v5328
    %v5374 = vadd.f32 %v5268, %v5331
    %v5375 = vadd.f32 %v5269, %v5334
    %v5376 = vadd.f32 %v5270, %v5337
    %v5377 = vadd.f32 %v5271, %v5340
    %v5378 = vadd.f32 %v5272, %v5343
    %v5379 = vadd.f32 %v5273, %v5346
    %v5380 = vadd.f32 %v5274, %v5349
    %v5381 = vadd.f32 %v5275, %v5352
    %v5382 = vadd.f32 %v5276, %v5355
    %v5383 = vadd.f32 %v5277, %v5358
    %v5384 = vadd.f32 %v5278, %v5361
    %v5385 = vadd.f32 %v5279, %v5364
    %v5386 = vadd.f32 %v5280, %v5367
    %v5387 = vadd.f32 %v5281, %v5370
    %v5388 = vrot.slane %v2615, 4
    %v5389 = vrot.slane %v2616, 4
    %v5390 = vsel %vm3227, %v5388, %v5389
    %v5391 = vrot.slane %v2639, 4
    %v5392 = vrot.slane %v2640, 4
    %v5393 = vsel %vm3227, %v5391, %v5392
    %s5396 = scalar_lea.vmem %s4, 3072
    %v5397 = vld [vmem:[%s5396] sm:$0xff]
    %v5398 = vld [vmem:[%s5396 + $0x8] sm:$0xff]
    %v5399 = vld [vmem:[%s5396 + $0x10] sm:$0xff]
    %v5400 = vld [vmem:[%s5396 + $0x18] sm:$0xff]
    %v5401 = vld [vmem:[%s5396 + $0x20] sm:$0xff]
    %v5402 = vld [vmem:[%s5396 + $0x28] sm:$0xff]
    %v5403 = vld [vmem:[%s5396 + $0x30] sm:$0xff]
    %v5404 = vld [vmem:[%s5396 + $0x38] sm:$0xff]
    %v5405 = vld [vmem:[%s5396 + $0x40] sm:$0xff]
    %v5406 = vld [vmem:[%s5396 + $0x48] sm:$0xff]
    %v5407 = vld [vmem:[%s5396 + $0x50] sm:$0xff]
    %v5408 = vld [vmem:[%s5396 + $0x58] sm:$0xff]
    %v5409 = vld [vmem:[%s5396 + $0x60] sm:$0xff]
    %v5410 = vld [vmem:[%s5396 + $0x68] sm:$0xff]
    %v5411 = vld [vmem:[%s5396 + $0x70] sm:$0xff]
    %v5412 = vld [vmem:[%s5396 + $0x78] sm:$0xff]
    %5413 = vmatpush.msra.mxu0 %v5412
    %5414 = vmatpush.msra.mxu0 %v5411
    %5415 = vmatpush.msra.mxu0 %v5410
    %5416 = vmatpush.msra.mxu0 %v5409
    %5417 = vmatpush.msra.mxu0 %v5408
    %5418 = vmatpush.msra.mxu0 %v5407
    %5419 = vmatpush.msra.mxu0 %v5406
    %5420 = vmatpush.msra.mxu0 %v5405
    %5421 = vmatpush.msra.mxu0 %v5404
    %5422 = vmatpush.msra.mxu0 %v5403
    %5423 = vmatpush.msra.mxu0 %v5402
    %5424 = vmatpush.msra.mxu0 %v5401
    %5425 = vmatpush.msra.mxu0 %v5400
    %5426 = vmatpush.msra.mxu0 %v5399
    %5427 = vmatpush.msra.mxu0 %v5398
    %5428 = vmatpush.msra.mxu0 %v5397
    %5429 = vmatmul.f32.gmra.mxu0 %v3242
    %v5430 = vpop.f32.mrf.mxu0
    %v5431 = vadd.f32 0.0, %v5430
    %5432 = vmatmul.f32.gmra.mxu0 %v3245
    %v5433 = vpop.f32.mrf.mxu0
    %v5434 = vadd.f32 0.0, %v5433
    %5435 = vmatmul.f32.gmra.mxu0 %v3248
    %v5436 = vpop.f32.mrf.mxu0
    %v5437 = vadd.f32 0.0, %v5436
    %5438 = vmatmul.f32.gmra.mxu0 %v3251
    %v5439 = vpop.f32.mrf.mxu0
    %v5440 = vadd.f32 0.0, %v5439
    %5441 = vmatmul.f32.gmra.mxu0 %v3812
    %v5442 = vpop.f32.mrf.mxu0
    %v5443 = vadd.f32 0.0, %v5442
    %5444 = vmatmul.f32.gmra.mxu0 %v4338
    %v5445 = vpop.f32.mrf.mxu0
    %v5446 = vadd.f32 0.0, %v5445
    %5447 = vmatmul.f32.gmra.mxu0 %v4864
    %v5448 = vpop.f32.mrf.mxu0
    %v5449 = vadd.f32 0.0, %v5448
    %5450 = vmatmul.f32.gmra.mxu0 %v5390
    %v5451 = vpop.f32.mrf.mxu0
    %v5452 = vadd.f32 0.0, %v5451
    %5453 = vmatmul.f32.gmra.mxu0 %v3266
    %v5454 = vpop.f32.mrf.mxu0
    %v5455 = vadd.f32 0.0, %v5454
    %5456 = vmatmul.f32.gmra.mxu0 %v3269
    %v5457 = vpop.f32.mrf.mxu0
    %v5458 = vadd.f32 0.0, %v5457
    %5459 = vmatmul.f32.gmra.mxu0 %v3272
    %v5460 = vpop.f32.mrf.mxu0
    %v5461 = vadd.f32 0.0, %v5460
    %5462 = vmatmul.f32.gmra.mxu0 %v3275
    %v5463 = vpop.f32.mrf.mxu0
    %v5464 = vadd.f32 0.0, %v5463
    %5465 = vmatmul.f32.gmra.mxu0 %v3815
    %v5466 = vpop.f32.mrf.mxu0
    %v5467 = vadd.f32 0.0, %v5466
    %5468 = vmatmul.f32.gmra.mxu0 %v4341
    %v5469 = vpop.f32.mrf.mxu0
    %v5470 = vadd.f32 0.0, %v5469
    %5471 = vmatmul.f32.gmra.mxu0 %v4867
    %v5472 = vpop.f32.mrf.mxu0
    %v5473 = vadd.f32 0.0, %v5472
    %5474 = vmatmul.f32.gmra.mxu0 %v5393
    %v5475 = vpop.f32.mrf.mxu0
    %v5476 = vadd.f32 0.0, %v5475
    %5477 = vdwg.mxu0
    %v5478 = vadd.f32 %v5372, %v5431
    %v5479 = vadd.f32 %v5373, %v5434
    %v5480 = vadd.f32 %v5374, %v5437
    %v5481 = vadd.f32 %v5375, %v5440
    %v5482 = vadd.f32 %v5376, %v5443
    %v5483 = vadd.f32 %v5377, %v5446
    %v5484 = vadd.f32 %v5378, %v5449
    %v5485 = vadd.f32 %v5379, %v5452
    %v5486 = vadd.f32 %v5380, %v5455
    %v5487 = vadd.f32 %v5381, %v5458
    %v5488 = vadd.f32 %v5382, %v5461
    %v5489 = vadd.f32 %v5383, %v5464
    %v5490 = vadd.f32 %v5384, %v5467
    %v5491 = vadd.f32 %v5385, %v5470
    %v5492 = vadd.f32 %v5386, %v5473
    %v5493 = vadd.f32 %v5387, %v5476
    %v5494 = vld [vmem:[%s5] sm:$0x1]
    %v5495 = vld [vmem:[%s6] sm:$0x1]
    %v5496 = vadd.f32 %v5478, %v5479
    %v5497 = vadd.f32 %v5496, %v5480
    %v5498 = vadd.f32 %v5497, %v5481
    %v5499 = vadd.f32 %v5498, %v5482
    %v5500 = vadd.f32 %v5499, %v5483
    %v5501 = vadd.f32 %v5500, %v5484
    %v5502 = vadd.f32 %v5501, %v5485
    %v5503 = vadd.f32 %v5502, %v5486
    %v5504 = vadd.f32 %v5503, %v5487
    %v5505 = vadd.f32 %v5504, %v5488
    %v5506 = vadd.f32 %v5505, %v5489
    %v5507 = vadd.f32 %v5506, %v5490
    %v5508 = vadd.f32 %v5507, %v5491
    %v5509 = vadd.f32 %v5508, %v5492
    %v5510 = vadd.f32 %v5509, %v5493
    %v5511 = vrot.slane %v5510, 4
    %v5512 = vadd.f32 %v5510, %v5511
    %v5513 = vrot.slane %v5512, 2
    %v5514 = vadd.f32 %v5512, %v5513
    %v5515 = vrot.slane %v5514, 1
    %v5516 = vadd.f32 %v5514, %v5515
    %v5517 = vmul.f32 %v5478, %v5478
    %v5518 = vmul.f32 %v5479, %v5479
    %v5519 = vmul.f32 %v5480, %v5480
    %v5520 = vmul.f32 %v5481, %v5481
    %v5521 = vmul.f32 %v5482, %v5482
    %v5522 = vmul.f32 %v5483, %v5483
    %v5523 = vmul.f32 %v5484, %v5484
    %v5524 = vmul.f32 %v5485, %v5485
    %v5525 = vmul.f32 %v5486, %v5486
    %v5526 = vmul.f32 %v5487, %v5487
    %v5527 = vmul.f32 %v5488, %v5488
    %v5528 = vmul.f32 %v5489, %v5489
    %v5529 = vmul.f32 %v5490, %v5490
    %v5530 = vmul.f32 %v5491, %v5491
    %v5531 = vmul.f32 %v5492, %v5492
    %v5532 = vmul.f32 %v5493, %v5493
    %v5533 = vadd.f32 %v5517, %v5518
    %v5534 = vadd.f32 %v5533, %v5519
    %v5535 = vadd.f32 %v5534, %v5520
    %v5536 = vadd.f32 %v5535, %v5521
    %v5537 = vadd.f32 %v5536, %v5522
    %v5538 = vadd.f32 %v5537, %v5523
    %v5539 = vadd.f32 %v5538, %v5524
    %v5540 = vadd.f32 %v5539, %v5525
    %v5541 = vadd.f32 %v5540, %v5526
    %v5542 = vadd.f32 %v5541, %v5527
    %v5543 = vadd.f32 %v5542, %v5528
    %v5544 = vadd.f32 %v5543, %v5529
    %v5545 = vadd.f32 %v5544, %v5530
    %v5546 = vadd.f32 %v5545, %v5531
    %v5547 = vadd.f32 %v5546, %v5532
    %v5548 = vrot.slane %v5547, 4
    %v5549 = vadd.f32 %v5547, %v5548
    %v5550 = vrot.slane %v5549, 2
    %v5551 = vadd.f32 %v5549, %v5550
    %v5552 = vrot.slane %v5551, 1
    %v5553 = vadd.f32 %v5551, %v5552
    %v5554 = vmul.f32 %v5516, 0.0078125
    %v5555 = vmul.f32 %v5553, 0.0078125
    %v5556 = vmul.f32 %v5554, %v5554
    %v5557 = vsub.f32 %v5555, %v5556
    %v5558 = vmax.f32 %v5557, 0.0
    %v5559 = vadd.f32 %v5558, 1e-05
    %v5560 = vrsqrt.pop %v5559
    %v5561 = vmul.f32 %v5560, %v5559
    %v5562 = vmul.f32 %v5561, %v5560
    %v5563 = vmul.f32 0.5, %v5562
    %v5564 = vsub.f32 1.5, %v5563
    %v5565 = vmul.f32 %v5560, %v5564
    %vm5566 = vweird.f32 %v5559
    %vm5567 = vweird.f32 %v5560
    %vm5568 = vmor %vm5566, %vm5567
    %v5569 = vsel %vm5568, %v5560, %v5565
    %v5570 = vmul.f32 %v5494, %v5569
    %v5571 = vmul.f32 %v5554, %v5570
    %v5572 = vsub.f32 %v5495, %v5571
    %v5574 = vperm.slane %v5570, 0
    %v5576 = vmul.f32 %v5478, %v5574
    %v5577 = vmul.f32 %v5479, %v5574
    %v5578 = vmul.f32 %v5480, %v5574
    %v5579 = vmul.f32 %v5481, %v5574
    %v5580 = vmul.f32 %v5482, %v5574
    %v5581 = vmul.f32 %v5483, %v5574
    %v5582 = vmul.f32 %v5484, %v5574
    %v5583 = vmul.f32 %v5485, %v5574
    %v5584 = vmul.f32 %v5486, %v5574
    %v5585 = vmul.f32 %v5487, %v5574
    %v5586 = vmul.f32 %v5488, %v5574
    %v5587 = vmul.f32 %v5489, %v5574
    %v5588 = vmul.f32 %v5490, %v5574
    %v5589 = vmul.f32 %v5491, %v5574
    %v5590 = vmul.f32 %v5492, %v5574
    %v5591 = vmul.f32 %v5493, %v5574
    %v5593 = vperm.slane %v5572, 0
    %v5595 = vadd.f32 %v5576, %v5593
    %v5596 = vadd.f32 %v5577, %v5593
    %v5597 = vadd.f32 %v5578, %v5593
    %v5598 = vadd.f32 %v5579, %v5593
    %v5599 = vadd.f32 %v5580, %v5593
    %v5600 = vadd.f32 %v5581, %v5593
    %v5601 = vadd.f32 %v5582, %v5593
    %v5602 = vadd.f32 %v5583, %v5593
    %v5603 = vadd.f32 %v5584, %v5593
    %v5604 = vadd.f32 %v5585, %v5593
    %v5605 = vadd.f32 %v5586, %v5593
    %v5606 = vadd.f32 %v5587, %v5593
    %v5607 = vadd.f32 %v5588, %v5593
    %v5608 = vadd.f32 %v5589, %v5593
    %v5609 = vadd.f32 %v5590, %v5593
    %v5610 = vadd.f32 %v5591, %v5593
    %v5611 = vmax.f32 %v5595, 0.0
    %v5612 = vmax.f32 %v5596, 0.0
    %v5613 = vmax.f32 %v5597, 0.0
    %v5614 = vmax.f32 %v5598, 0.0
    %v5615 = vmax.f32 %v5599, 0.0
    %v5616 = vmax.f32 %v5600, 0.0
    %v5617 = vmax.f32 %v5601, 0.0
    %v5618 = vmax.f32 %v5602, 0.0
    %v5619 = vmax.f32 %v5603, 0.0
    %v5620 = vmax.f32 %v5604, 0.0
    %v5621 = vmax.f32 %v5605, 0.0
    %v5622 = vmax.f32 %v5606, 0.0
    %v5623 = vmax.f32 %v5607, 0.0
    %v5624 = vmax.f32 %v5608, 0.0
    %v5625 = vmax.f32 %v5609, 0.0
    %v5626 = vmax.f32 %v5610, 0.0
    %5627 = vst [vmem:[#allocation3] sm:$0xff] %v5611
    %5628 = vst [vmem:[#allocation3 + $0x8] sm:$0xff] %v5612
    %5629 = vst [vmem:[#allocation3 + $0x10] sm:$0xff] %v5613
    %5630 = vst [vmem:[#allocation3 + $0x18] sm:$0xff] %v5614
    %5631 = vst [vmem:[#allocation3 + $0x20] sm:$0xff] %v5615
    %5632 = vst [vmem:[#allocation3 + $0x28] sm:$0xff] %v5616
    %5633 = vst [vmem:[#allocation3 + $0x30] sm:$0xff] %v5617
    %5634 = vst [vmem:[#allocation3 + $0x38] sm:$0xff] %v5618
    %5635 = vst [vmem:[#allocation3 + $0x40] sm:$0xff] %v5619
    %5636 = vst [vmem:[#allocation3 + $0x48] sm:$0xff] %v5620
    %5637 = vst [vmem:[#allocation3 + $0x50] sm:$0xff] %v5621
    %5638 = vst [vmem:[#allocation3 + $0x58] sm:$0xff] %v5622
    %5639 = vst [vmem:[#allocation3 + $0x60] sm:$0xff] %v5623
    %5640 = vst [vmem:[#allocation3 + $0x68] sm:$0xff] %v5624
    %5641 = vst [vmem:[#allocation3 + $0x70] sm:$0xff] %v5625
    %5642 = vst [vmem:[#allocation3 + $0x78] sm:$0xff] %v5626
    %v5643 = vld [vmem:[#allocation3] ss:$2 sm:$0xf]
    %s5644 = scalar_lea.vmem [#allocation3], 16
    %v5645 = vld [vmem:[%s5644] ss:$2 sm:$0xf]
    %s5646 = scalar_lea.vmem [#allocation3], 32
    %v5647 = vld [vmem:[%s5646] ss:$2 sm:$0xf]
    %s5648 = scalar_lea.vmem [#allocation3], 48
    %v5649 = vld [vmem:[%s5648] ss:$2 sm:$0xf]
    %s5650 = scalar_lea.vmem [#allocation3], 64
    %v5651 = vld [vmem:[%s5650] ss:$2 sm:$0xf]
    %s5652 = scalar_lea.vmem [#allocation3], 80
    %v5653 = vld [vmem:[%s5652] ss:$2 sm:$0xf]
    %s5654 = scalar_lea.vmem [#allocation3], 96
    %v5655 = vld [vmem:[%s5654] ss:$2 sm:$0xf]
    %s5656 = scalar_lea.vmem [#allocation3], 112
    %v5657 = vld [vmem:[%s5656] ss:$2 sm:$0xf]
    %s5658 = scalar_lea.vmem [#allocation3], 1
    %v5659 = vld [vmem:[%s5658] ss:$2 sm:$0xf]
    %s5660 = scalar_lea.vmem [#allocation3], 17
    %v5661 = vld [vmem:[%s5660] ss:$2 sm:$0xf]
    %s5662 = scalar_lea.vmem [#allocation3], 33
    %v5663 = vld [vmem:[%s5662] ss:$2 sm:$0xf]
    %s5664 = scalar_lea.vmem [#allocation3], 49
    %v5665 = vld [vmem:[%s5664] ss:$2 sm:$0xf]
    %s5666 = scalar_lea.vmem [#allocation3], 65
    %v5667 = vld [vmem:[%s5666] ss:$2 sm:$0xf]
    %s5668 = scalar_lea.vmem [#allocation3], 81
    %v5669 = vld [vmem:[%s5668] ss:$2 sm:$0xf]
    %s5670 = scalar_lea.vmem [#allocation3], 97
    %v5671 = vld [vmem:[%s5670] ss:$2 sm:$0xf]
    %s5672 = scalar_lea.vmem [#allocation3], 113
    %v5673 = vld [vmem:[%s5672] ss:$2 sm:$0xf]
    %v5674 = vmax.f32 %v5643, %v5659
    %v5675 = vmax.f32 %v5645, %v5661
    %v5676 = vmax.f32 %v5647, %v5663
    %v5677 = vmax.f32 %v5649, %v5665
    %v5678 = vmax.f32 %v5651, %v5667
    %v5679 = vmax.f32 %v5653, %v5669
    %v5680 = vmax.f32 %v5655, %v5671
    %v5681 = vmax.f32 %v5657, %v5673
    %s5682 = scalar_lea.vmem [#allocation3], 8
    %v5683 = vld [vmem:[%s5682] ss:$2 sm:$0xf]
    %s5684 = scalar_lea.vmem %s5682, 16 [#allocation3]
    %v5685 = vld [vmem:[%s5684] ss:$2 sm:$0xf]
    %s5686 = scalar_lea.vmem %s5682, 32 [#allocation3]
    %v5687 = vld [vmem:[%s5686] ss:$2 sm:$0xf]
    %s5688 = scalar_lea.vmem %s5682, 48 [#allocation3]
    %v5689 = vld [vmem:[%s5688] ss:$2 sm:$0xf]
    %s5690 = scalar_lea.vmem %s5682, 64 [#allocation3]
    %v5691 = vld [vmem:[%s5690] ss:$2 sm:$0xf]
    %s5692 = scalar_lea.vmem %s5682, 80 [#allocation3]
    %v5693 = vld [vmem:[%s5692] ss:$2 sm:$0xf]
    %s5694 = scalar_lea.vmem %s5682, 96 [#allocation3]
    %v5695 = vld [vmem:[%s5694] ss:$2 sm:$0xf]
    %s5696 = scalar_lea.vmem %s5682, 112 [#allocation3]
    %v5697 = vld [vmem:[%s5696] ss:$2 sm:$0xf]
    %s5698 = scalar_lea.vmem %s5682, 1 [#allocation3]
    %v5699 = vld [vmem:[%s5698] ss:$2 sm:$0xf]
    %s5700 = scalar_lea.vmem %s5682, 17 [#allocation3]
    %v5701 = vld [vmem:[%s5700] ss:$2 sm:$0xf]
    %s5702 = scalar_lea.vmem %s5682, 33 [#allocation3]
    %v5703 = vld [vmem:[%s5702] ss:$2 sm:$0xf]
    %s5704 = scalar_lea.vmem %s5682, 49 [#allocation3]
    %v5705 = vld [vmem:[%s5704] ss:$2 sm:$0xf]
    %s5706 = scalar_lea.vmem %s5682, 65 [#allocation3]
    %v5707 = vld [vmem:[%s5706] ss:$2 sm:$0xf]
    %s5708 = scalar_lea.vmem %s5682, 81 [#allocation3]
    %v5709 = vld [vmem:[%s5708] ss:$2 sm:$0xf]
    %s5710 = scalar_lea.vmem %s5682, 97 [#allocation3]
    %v5711 = vld [vmem:[%s5710] ss:$2 sm:$0xf]
    %s5712 = scalar_lea.vmem %s5682, 113 [#allocation3]
    %v5713 = vld [vmem:[%s5712] ss:$2 sm:$0xf]
    %v5714 = vmax.f32 %v5683, %v5699
    %v5715 = vmax.f32 %v5685, %v5701
    %v5716 = vmax.f32 %v5687, %v5703
    %v5717 = vmax.f32 %v5689, %v5705
    %v5718 = vmax.f32 %v5691, %v5707
    %v5719 = vmax.f32 %v5693, %v5709
    %v5720 = vmax.f32 %v5695, %v5711
    %v5721 = vmax.f32 %v5697, %v5713
    %v5722 = vmax.f32 %v5674, %v5714
    %v5723 = vmax.f32 %v5675, %v5715
    %v5724 = vmax.f32 %v5676, %v5716
    %v5725 = vmax.f32 %v5677, %v5717
    %v5726 = vmax.f32 %v5678, %v5718
    %v5727 = vmax.f32 %v5679, %v5719
    %v5728 = vmax.f32 %v5680, %v5720
    %v5729 = vmax.f32 %v5681, %v5721
    %v5730 = vld [vmem:[%s7] sm:$0xff]
    %v5731 = vld [vmem:[%s7 + $0x8] sm:$0xff]
    %v5732 = vld [vmem:[%s7 + $0x10] sm:$0xff]
    %v5733 = vld [vmem:[%s7 + $0x18] sm:$0xff]
    %v5734 = vld [vmem:[%s7 + $0x20] sm:$0xff]
    %v5735 = vld [vmem:[%s7 + $0x28] sm:$0xff]
    %v5736 = vld [vmem:[%s7 + $0x30] sm:$0xff]
    %v5737 = vld [vmem:[%s7 + $0x38] sm:$0xff]
    %v5738 = vld [vmem:[%s7 + $0x40] sm:$0xff]
    %v5739 = vld [vmem:[%s7 + $0x48] sm:$0xff]
    %v5740 = vld [vmem:[%s7 + $0x50] sm:$0xff]
    %v5741 = vld [vmem:[%s7 + $0x58] sm:$0xff]
    %v5742 = vld [vmem:[%s7 + $0x60] sm:$0xff]
    %v5743 = vld [vmem:[%s7 + $0x68] sm:$0xff]
    %v5744 = vld [vmem:[%s7 + $0x70] sm:$0xff]
    %v5745 = vld [vmem:[%s7 + $0x78] sm:$0xff]
    %v5746 = vld [vmem:[%s7 + $0x80] sm:$0xff]
    %v5747 = vld [vmem:[%s7 + $0x88] sm:$0xff]
    %v5748 = vld [vmem:[%s7 + $0x90] sm:$0xff]
    %v5749 = vld [vmem:[%s7 + $0x98] sm:$0xff]
    %v5750 = vld [vmem:[%s7 + $0xa0] sm:$0xff]
    %v5751 = vld [vmem:[%s7 + $0xa8] sm:$0xff]
    %v5752 = vld [vmem:[%s7 + $0xb0] sm:$0xff]
    %v5753 = vld [vmem:[%s7 + $0xb8] sm:$0xff]
    %v5754 = vld [vmem:[%s7 + $0xc0] sm:$0xff]
    %v5755 = vld [vmem:[%s7 + $0xc8] sm:$0xff]
    %v5756 = vld [vmem:[%s7 + $0xd0] sm:$0xff]
    %v5757 = vld [vmem:[%s7 + $0xd8] sm:$0xff]
    %v5758 = vld [vmem:[%s7 + $0xe0] sm:$0xff]
    %v5759 = vld [vmem:[%s7 + $0xe8] sm:$0xff]
    %v5760 = vld [vmem:[%s7 + $0xf0] sm:$0xff]
    %v5761 = vld [vmem:[%s7 + $0xf8] sm:$0xff]
    %s5762 = scalar_lea.vmem %s7, 256
    %v5763 = vld [vmem:[%s5762] sm:$0xff]
    %v5764 = vld [vmem:[%s5762 + $0x8] sm:$0xff]
    %v5765 = vld [vmem:[%s5762 + $0x10] sm:$0xff]
    %v5766 = vld [vmem:[%s5762 + $0x18] sm:$0xff]
    %v5767 = vld [vmem:[%s5762 + $0x20] sm:$0xff]
    %v5768 = vld [vmem:[%s5762 + $0x28] sm:$0xff]
    %v5769 = vld [vmem:[%s5762 + $0x30] sm:$0xff]
    %v5770 = vld [vmem:[%s5762 + $0x38] sm:$0xff]
    %v5771 = vld [vmem:[%s5762 + $0x40] sm:$0xff]
    %v5772 = vld [vmem:[%s5762 + $0x48] sm:$0xff]
    %v5773 = vld [vmem:[%s5762 + $0x50] sm:$0xff]
    %v5774 = vld [vmem:[%s5762 + $0x58] sm:$0xff]
    %v5775 = vld [vmem:[%s5762 + $0x60] sm:$0xff]
    %v5776 = vld [vmem:[%s5762 + $0x68] sm:$0xff]
    %v5777 = vld [vmem:[%s5762 + $0x70] sm:$0xff]
    %v5778 = vld [vmem:[%s5762 + $0x78] sm:$0xff]
    %v5779 = vld [vmem:[%s5762 + $0x80] sm:$0xff]
    %v5780 = vld [vmem:[%s5762 + $0x88] sm:$0xff]
    %v5781 = vld [vmem:[%s5762 + $0x90] sm:$0xff]
    %v5782 = vld [vmem:[%s5762 + $0x98] sm:$0xff]
    %v5783 = vld [vmem:[%s5762 + $0xa0] sm:$0xff]
    %v5784 = vld [vmem:[%s5762 + $0xa8] sm:$0xff]
    %v5785 = vld [vmem:[%s5762 + $0xb0] sm:$0xff]
    %v5786 = vld [vmem:[%s5762 + $0xb8] sm:$0xff]
    %v5787 = vld [vmem:[%s5762 + $0xc0] sm:$0xff]
    %v5788 = vld [vmem:[%s5762 + $0xc8] sm:$0xff]
    %v5789 = vld [vmem:[%s5762 + $0xd0] sm:$0xff]
    %v5790 = vld [vmem:[%s5762 + $0xd8] sm:$0xff]
    %v5791 = vld [vmem:[%s5762 + $0xe0] sm:$0xff]
    %v5792 = vld [vmem:[%s5762 + $0xe8] sm:$0xff]
    %v5793 = vld [vmem:[%s5762 + $0xf0] sm:$0xff]
    %v5794 = vld [vmem:[%s5762 + $0xf8] sm:$0xff]
    %v5797 = vrot.slane %v5722, 1
    %vm5798 = vcmask 1041409
    %v5799 = vsel %vm5798, %v5726, %v5797
    %5801 = vmatpush.msra.mxu0 %v5793
    %5802 = vmatpush.msra.mxu0 %v5791
    %5803 = vmatpush.msra.mxu0 %v5789
    %5804 = vmatpush.msra.mxu0 %v5787
    %5805 = vmatpush.msra.mxu0 %v5785
    %5806 = vmatpush.msra.mxu0 %v5783
    %5807 = vmatpush.msra.mxu0 %v5781
    %5808 = vmatpush.msra.mxu0 %v5779
    %5809 = vmatpush.msra.mxu0 %v5777
    %5810 = vmatpush.msra.mxu0 %v5775
    %5811 = vmatpush.msra.mxu0 %v5773
    %5812 = vmatpush.msra.mxu0 %v5771
    %5813 = vmatpush.msra.mxu0 %v5769
    %5814 = vmatpush.msra.mxu0 %v5767
    %5815 = vmatpush.msra.mxu0 %v5765
    %5816 = vmatpush.msra.mxu0 %v5763
    %5817 = vmatmul.f32.gmra.mxu0 %v5799
    %v5818 = vpop.f32.mrf.mxu0
    %v5819 = vadd.f32 0.0, %v5818
    %5820 = vdwg.mxu0
    %5821 = vmatpush.msra.mxu0 %v5794
    %5822 = vmatpush.msra.mxu0 %v5792
    %5823 = vmatpush.msra.mxu0 %v5790
    %5824 = vmatpush.msra.mxu0 %v5788
    %5825 = vmatpush.msra.mxu0 %v5786
    %5826 = vmatpush.msra.mxu0 %v5784
    %5827 = vmatpush.msra.mxu0 %v5782
    %5828 = vmatpush.msra.mxu0 %v5780
    %5829 = vmatpush.msra.mxu0 %v5778
    %5830 = vmatpush.msra.mxu0 %v5776
    %5831 = vmatpush.msra.mxu0 %v5774
    %5832 = vmatpush.msra.mxu0 %v5772
    %5833 = vmatpush.msra.mxu0 %v5770
    %5834 = vmatpush.msra.mxu0 %v5768
    %5835 = vmatpush.msra.mxu0 %v5766
    %5836 = vmatpush.msra.mxu0 %v5764
    %5837 = vmatmul.f32.gmra.mxu0 %v5799
    %v5838 = vpop.f32.mrf.mxu0
    %v5839 = vadd.f32 0.0, %v5838
    %5840 = vdwg.mxu0
    %v5841 = vrot.slane %v5726, 7
    %v5842 = vsel %vm5798, %v5841, %v5722
    %5844 = vmatpush.msra.mxu0 %v5760
    %5845 = vmatpush.msra.mxu0 %v5758
    %5846 = vmatpush.msra.mxu0 %v5756
    %5847 = vmatpush.msra.mxu0 %v5754
    %5848 = vmatpush.msra.mxu0 %v5752
    %5849 = vmatpush.msra.mxu0 %v5750
    %5850 = vmatpush.msra.mxu0 %v5748
    %5851 = vmatpush.msra.mxu0 %v5746
    %5852 = vmatpush.msra.mxu0 %v5744
    %5853 = vmatpush.msra.mxu0 %v5742
    %5854 = vmatpush.msra.mxu0 %v5740
    %5855 = vmatpush.msra.mxu0 %v5738
    %5856 = vmatpush.msra.mxu0 %v5736
    %5857 = vmatpush.msra.mxu0 %v5734
    %5858 = vmatpush.msra.mxu0 %v5732
    %5859 = vmatpush.msra.mxu0 %v5730
    %5860 = vmatmul.f32.gmra.mxu0 %v5842
    %v5861 = vpop.f32.mrf.mxu0
    %v5862 = vadd.f32 %v5819, %v5861
    %5863 = vdwg.mxu0
    %5864 = vmatpush.msra.mxu0 %v5761
    %5865 = vmatpush.msra.mxu0 %v5759
    %5866 = vmatpush.msra.mxu0 %v5757
    %5867 = vmatpush.msra.mxu0 %v5755
    %5868 = vmatpush.msra.mxu0 %v5753
    %5869 = vmatpush.msra.mxu0 %v5751
    %5870 = vmatpush.msra.mxu0 %v5749
    %5871 = vmatpush.msra.mxu0 %v5747
    %5872 = vmatpush.msra.mxu0 %v5745
    %5873 = vmatpush.msra.mxu0 %v5743
    %5874 = vmatpush.msra.mxu0 %v5741
    %5875 = vmatpush.msra.mxu0 %v5739
    %5876 = vmatpush.msra.mxu0 %v5737
    %5877 = vmatpush.msra.mxu0 %v5735
    %5878 = vmatpush.msra.mxu0 %v5733
    %5879 = vmatpush.msra.mxu0 %v5731
    %5880 = vmatmul.f32.gmra.mxu0 %v5842
    %v5881 = vpop.f32.mrf.mxu0
    %v5882 = vadd.f32 %v5839, %v5881
    %5883 = vdwg.mxu0
    %s5884 = scalar_lea.vmem %s7, 512
    %v5885 = vld [vmem:[%s5884] sm:$0xff]
    %v5886 = vld [vmem:[%s5884 + $0x8] sm:$0xff]
    %v5887 = vld [vmem:[%s5884 + $0x10] sm:$0xff]
    %v5888 = vld [vmem:[%s5884 + $0x18] sm:$0xff]
    %v5889 = vld [vmem:[%s5884 + $0x20] sm:$0xff]
    %v5890 = vld [vmem:[%s5884 + $0x28] sm:$0xff]
    %v5891 = vld [vmem:[%s5884 + $0x30] sm:$0xff]
    %v5892 = vld [vmem:[%s5884 + $0x38] sm:$0xff]
    %v5893 = vld [vmem:[%s5884 + $0x40] sm:$0xff]
    %v5894 = vld [vmem:[%s5884 + $0x48] sm:$0xff]
    %v5895 = vld [vmem:[%s5884 + $0x50] sm:$0xff]
    %v5896 = vld [vmem:[%s5884 + $0x58] sm:$0xff]
    %v5897 = vld [vmem:[%s5884 + $0x60] sm:$0xff]
    %v5898 = vld [vmem:[%s5884 + $0x68] sm:$0xff]
    %v5899 = vld [vmem:[%s5884 + $0x70] sm:$0xff]
    %v5900 = vld [vmem:[%s5884 + $0x78] sm:$0xff]
    %v5901 = vld [vmem:[%s5884 + $0x80] sm:$0xff]
    %v5902 = vld [vmem:[%s5884 + $0x88] sm:$0xff]
    %v5903 = vld [vmem:[%s5884 + $0x90] sm:$0xff]
    %v5904 = vld [vmem:[%s5884 + $0x98] sm:$0xff]
    %v5905 = vld [vmem:[%s5884 + $0xa0] sm:$0xff]
    %v5906 = vld [vmem:[%s5884 + $0xa8] sm:$0xff]
    %v5907 = vld [vmem:[%s5884 + $0xb0] sm:$0xff]
    %v5908 = vld [vmem:[%s5884 + $0xb8] sm:$0xff]
    %v5909 = vld [vmem:[%s5884 + $0xc0] sm:$0xff]
    %v5910 = vld [vmem:[%s5884 + $0xc8] sm:$0xff]
    %v5911 = vld [vmem:[%s5884 + $0xd0] sm:$0xff]
    %v5912 = vld [vmem:[%s5884 + $0xd8] sm:$0xff]
    %v5913 = vld [vmem:[%s5884 + $0xe0] sm:$0xff]
    %v5914 = vld [vmem:[%s5884 + $0xe8] sm:$0xff]
    %v5915 = vld [vmem:[%s5884 + $0xf0] sm:$0xff]
    %v5916 = vld [vmem:[%s5884 + $0xf8] sm:$0xff]
    %v5917 = vrot.slane %v5722, 2
    %v5918 = vrot.slane %v5726, 1
    %v5919 = vsel %vm5798, %v5918, %v5917
    %5921 = vmatpush.msra.mxu0 %v5915
    %5922 = vmatpush.msra.mxu0 %v5913
    %5923 = vmatpush.msra.mxu0 %v5911
    %5924 = vmatpush.msra.mxu0 %v5909
    %5925 = vmatpush.msra.mxu0 %v5907
    %5926 = vmatpush.msra.mxu0 %v5905
    %5927 = vmatpush.msra.mxu0 %v5903
    %5928 = vmatpush.msra.mxu0 %v5901
    %5929 = vmatpush.msra.mxu0 %v5899
    %5930 = vmatpush.msra.mxu0 %v5897
    %5931 = vmatpush.msra.mxu0 %v5895
    %5932 = vmatpush.msra.mxu0 %v5893
    %5933 = vmatpush.msra.mxu0 %v5891
    %5934 = vmatpush.msra.mxu0 %v5889
    %5935 = vmatpush.msra.mxu0 %v5887
    %5936 = vmatpush.msra.mxu0 %v5885
    %5937 = vmatmul.f32.gmra.mxu0 %v5919
    %v5938 = vpop.f32.mrf.mxu0
    %v5939 = vadd.f32 0.0, %v5938
    %5940 = vdwg.mxu0
    %5941 = vmatpush.msra.mxu0 %v5916
    %5942 = vmatpush.msra.mxu0 %v5914
    %5943 = vmatpush.msra.mxu0 %v5912
    %5944 = vmatpush.msra.mxu0 %v5910
    %5945 = vmatpush.msra.mxu0 %v5908
    %5946 = vmatpush.msra.mxu0 %v5906
    %5947 = vmatpush.msra.mxu0 %v5904
    %5948 = vmatpush.msra.mxu0 %v5902
    %5949 = vmatpush.msra.mxu0 %v5900
    %5950 = vmatpush.msra.mxu0 %v5898
    %5951 = vmatpush.msra.mxu0 %v5896
    %5952 = vmatpush.msra.mxu0 %v5894
    %5953 = vmatpush.msra.mxu0 %v5892
    %5954 = vmatpush.msra.mxu0 %v5890
    %5955 = vmatpush.msra.mxu0 %v5888
    %5956 = vmatpush.msra.mxu0 %v5886
    %5957 = vmatmul.f32.gmra.mxu0 %v5919
    %v5958 = vpop.f32.mrf.mxu0
    %v5959 = vadd.f32 0.0, %v5958
    %5960 = vdwg.mxu0
    %v5961 = vadd.f32 %v5862, %v5939
    %v5962 = vadd.f32 %v5882, %v5959
    %s5963 = scalar_lea.vmem %s7, 768
    %v5964 = vld [vmem:[%s5963] sm:$0xff]
    %v5965 = vld [vmem:[%s5963 + $0x8] sm:$0xff]
    %v5966 = vld [vmem:[%s5963 + $0x10] sm:$0xff]
    %v5967 = vld [vmem:[%s5963 + $0x18] sm:$0xff]
    %v5968 = vld [vmem:[%s5963 + $0x20] sm:$0xff]
    %v5969 = vld [vmem:[%s5963 + $0x28] sm:$0xff]
    %v5970 = vld [vmem:[%s5963 + $0x30] sm:$0xff]
    %v5971 = vld [vmem:[%s5963 + $0x38] sm:$0xff]
    %v5972 = vld [vmem:[%s5963 + $0x40] sm:$0xff]
    %v5973 = vld [vmem:[%s5963 + $0x48] sm:$0xff]
    %v5974 = vld [vmem:[%s5963 + $0x50] sm:$0xff]
    %v5975 = vld [vmem:[%s5963 + $0x58] sm:$0xff]
    %v5976 = vld [vmem:[%s5963 + $0x60] sm:$0xff]
    %v5977 = vld [vmem:[%s5963 + $0x68] sm:$0xff]
    %v5978 = vld [vmem:[%s5963 + $0x70] sm:$0xff]
    %v5979 = vld [vmem:[%s5963 + $0x78] sm:$0xff]
    %v5980 = vld [vmem:[%s5963 + $0x80] sm:$0xff]
    %v5981 = vld [vmem:[%s5963 + $0x88] sm:$0xff]
    %v5982 = vld [vmem:[%s5963 + $0x90] sm:$0xff]
    %v5983 = vld [vmem:[%s5963 + $0x98] sm:$0xff]
    %v5984 = vld [vmem:[%s5963 + $0xa0] sm:$0xff]
    %v5985 = vld [vmem:[%s5963 + $0xa8] sm:$0xff]
    %v5986 = vld [vmem:[%s5963 + $0xb0] sm:$0xff]
    %v5987 = vld [vmem:[%s5963 + $0xb8] sm:$0xff]
    %v5988 = vld [vmem:[%s5963 + $0xc0] sm:$0xff]
    %v5989 = vld [vmem:[%s5963 + $0xc8] sm:$0xff]
    %v5990 = vld [vmem:[%s5963 + $0xd0] sm:$0xff]
    %v5991 = vld [vmem:[%s5963 + $0xd8] sm:$0xff]
    %v5992 = vld [vmem:[%s5963 + $0xe0] sm:$0xff]
    %v5993 = vld [vmem:[%s5963 + $0xe8] sm:$0xff]
    %v5994 = vld [vmem:[%s5963 + $0xf0] sm:$0xff]
    %v5995 = vld [vmem:[%s5963 + $0xf8] sm:$0xff]
    %v5996 = vrot.slane %v5722, 3
    %v5997 = vrot.slane %v5726, 2
    %v5998 = vsel %vm5798, %v5997, %v5996
    %6000 = vmatpush.msra.mxu0 %v5994
    %6001 = vmatpush.msra.mxu0 %v5992
    %6002 = vmatpush.msra.mxu0 %v5990
    %6003 = vmatpush.msra.mxu0 %v5988
    %6004 = vmatpush.msra.mxu0 %v5986
    %6005 = vmatpush.msra.mxu0 %v5984
    %6006 = vmatpush.msra.mxu0 %v5982
    %6007 = vmatpush.msra.mxu0 %v5980
    %6008 = vmatpush.msra.mxu0 %v5978
    %6009 = vmatpush.msra.mxu0 %v5976
    %6010 = vmatpush.msra.mxu0 %v5974
    %6011 = vmatpush.msra.mxu0 %v5972
    %6012 = vmatpush.msra.mxu0 %v5970
    %6013 = vmatpush.msra.mxu0 %v5968
    %6014 = vmatpush.msra.mxu0 %v5966
    %6015 = vmatpush.msra.mxu0 %v5964
    %6016 = vmatmul.f32.gmra.mxu0 %v5998
    %v6017 = vpop.f32.mrf.mxu0
    %v6018 = vadd.f32 0.0, %v6017
    %6019 = vdwg.mxu0
    %6020 = vmatpush.msra.mxu0 %v5995
    %6021 = vmatpush.msra.mxu0 %v5993
    %6022 = vmatpush.msra.mxu0 %v5991
    %6023 = vmatpush.msra.mxu0 %v5989
    %6024 = vmatpush.msra.mxu0 %v5987
    %6025 = vmatpush.msra.mxu0 %v5985
    %6026 = vmatpush.msra.mxu0 %v5983
    %6027 = vmatpush.msra.mxu0 %v5981
    %6028 = vmatpush.msra.mxu0 %v5979
    %6029 = vmatpush.msra.mxu0 %v5977
    %6030 = vmatpush.msra.mxu0 %v5975
    %6031 = vmatpush.msra.mxu0 %v5973
    %6032 = vmatpush.msra.mxu0 %v5971
    %6033 = vmatpush.msra.mxu0 %v5969
    %6034 = vmatpush.msra.mxu0 %v5967
    %6035 = vmatpush.msra.mxu0 %v5965
    %6036 = vmatmul.f32.gmra.mxu0 %v5998
    %v6037 = vpop.f32.mrf.mxu0
    %v6038 = vadd.f32 0.0, %v6037
    %6039 = vdwg.mxu0
    %v6040 = vadd.f32 %v5961, %v6018
    %v6041 = vadd.f32 %v5962, %v6038
    %s6042 = scalar_lea.vmem %s7, 1024
    %v6043 = vld [vmem:[%s6042] sm:$0xff]
    %v6044 = vld [vmem:[%s6042 + $0x8] sm:$0xff]
    %v6045 = vld [vmem:[%s6042 + $0x10] sm:$0xff]
    %v6046 = vld [vmem:[%s6042 + $0x18] sm:$0xff]
    %v6047 = vld [vmem:[%s6042 + $0x20] sm:$0xff]
    %v6048 = vld [vmem:[%s6042 + $0x28] sm:$0xff]
    %v6049 = vld [vmem:[%s6042 + $0x30] sm:$0xff]
    %v6050 = vld [vmem:[%s6042 + $0x38] sm:$0xff]
    %v6051 = vld [vmem:[%s6042 + $0x40] sm:$0xff]
    %v6052 = vld [vmem:[%s6042 + $0x48] sm:$0xff]
    %v6053 = vld [vmem:[%s6042 + $0x50] sm:$0xff]
    %v6054 = vld [vmem:[%s6042 + $0x58] sm:$0xff]
    %v6055 = vld [vmem:[%s6042 + $0x60] sm:$0xff]
    %v6056 = vld [vmem:[%s6042 + $0x68] sm:$0xff]
    %v6057 = vld [vmem:[%s6042 + $0x70] sm:$0xff]
    %v6058 = vld [vmem:[%s6042 + $0x78] sm:$0xff]
    %v6059 = vld [vmem:[%s6042 + $0x80] sm:$0xff]
    %v6060 = vld [vmem:[%s6042 + $0x88] sm:$0xff]
    %v6061 = vld [vmem:[%s6042 + $0x90] sm:$0xff]
    %v6062 = vld [vmem:[%s6042 + $0x98] sm:$0xff]
    %v6063 = vld [vmem:[%s6042 + $0xa0] sm:$0xff]
    %v6064 = vld [vmem:[%s6042 + $0xa8] sm:$0xff]
    %v6065 = vld [vmem:[%s6042 + $0xb0] sm:$0xff]
    %v6066 = vld [vmem:[%s6042 + $0xb8] sm:$0xff]
    %v6067 = vld [vmem:[%s6042 + $0xc0] sm:$0xff]
    %v6068 = vld [vmem:[%s6042 + $0xc8] sm:$0xff]
    %v6069 = vld [vmem:[%s6042 + $0xd0] sm:$0xff]
    %v6070 = vld [vmem:[%s6042 + $0xd8] sm:$0xff]
    %v6071 = vld [vmem:[%s6042 + $0xe0] sm:$0xff]
    %v6072 = vld [vmem:[%s6042 + $0xe8] sm:$0xff]
    %v6073 = vld [vmem:[%s6042 + $0xf0] sm:$0xff]
    %v6074 = vld [vmem:[%s6042 + $0xf8] sm:$0xff]
    %v6077 = vrot.slane %v5727, 7
    %v6078 = vsel %vm5798, %v6077, %v5723
    %6080 = vmatpush.msra.mxu0 %v6073
    %6081 = vmatpush.msra.mxu0 %v6071
    %6082 = vmatpush.msra.mxu0 %v6069
    %6083 = vmatpush.msra.mxu0 %v6067
    %6084 = vmatpush.msra.mxu0 %v6065
    %6085 = vmatpush.msra.mxu0 %v6063
    %6086 = vmatpush.msra.mxu0 %v6061
    %6087 = vmatpush.msra.mxu0 %v6059
    %6088 = vmatpush.msra.mxu0 %v6057
    %6089 = vmatpush.msra.mxu0 %v6055
    %6090 = vmatpush.msra.mxu0 %v6053
    %6091 = vmatpush.msra.mxu0 %v6051
    %6092 = vmatpush.msra.mxu0 %v6049
    %6093 = vmatpush.msra.mxu0 %v6047
    %6094 = vmatpush.msra.mxu0 %v6045
    %6095 = vmatpush.msra.mxu0 %v6043
    %6096 = vmatmul.f32.gmra.mxu0 %v6078
    %v6097 = vpop.f32.mrf.mxu0
    %v6098 = vadd.f32 0.0, %v6097
    %6099 = vdwg.mxu0
    %6100 = vmatpush.msra.mxu0 %v6074
    %6101 = vmatpush.msra.mxu0 %v6072
    %6102 = vmatpush.msra.mxu0 %v6070
    %6103 = vmatpush.msra.mxu0 %v6068
    %6104 = vmatpush.msra.mxu0 %v6066
    %6105 = vmatpush.msra.mxu0 %v6064
    %6106 = vmatpush.msra.mxu0 %v6062
    %6107 = vmatpush.msra.mxu0 %v6060
    %6108 = vmatpush.msra.mxu0 %v6058
    %6109 = vmatpush.msra.mxu0 %v6056
    %6110 = vmatpush.msra.mxu0 %v6054
    %6111 = vmatpush.msra.mxu0 %v6052
    %6112 = vmatpush.msra.mxu0 %v6050
    %6113 = vmatpush.msra.mxu0 %v6048
    %6114 = vmatpush.msra.mxu0 %v6046
    %6115 = vmatpush.msra.mxu0 %v6044
    %6116 = vmatmul.f32.gmra.mxu0 %v6078
    %v6117 = vpop.f32.mrf.mxu0
    %v6118 = vadd.f32 0.0, %v6117
    %6119 = vdwg.mxu0
    %v6120 = vadd.f32 %v6040, %v6098
    %v6121 = vadd.f32 %v6041, %v6118
    %s6122 = scalar_lea.vmem %s7, 1280
    %v6123 = vld [vmem:[%s6122] sm:$0xff]
    %v6124 = vld [vmem:[%s6122 + $0x8] sm:$0xff]
    %v6125 = vld [vmem:[%s6122 + $0x10] sm:$0xff]
    %v6126 = vld [vmem:[%s6122 + $0x18] sm:$0xff]
    %v6127 = vld [vmem:[%s6122 + $0x20] sm:$0xff]
    %v6128 = vld [vmem:[%s6122 + $0x28] sm:$0xff]
    %v6129 = vld [vmem:[%s6122 + $0x30] sm:$0xff]
    %v6130 = vld [vmem:[%s6122 + $0x38] sm:$0xff]
    %v6131 = vld [vmem:[%s6122 + $0x40] sm:$0xff]
    %v6132 = vld [vmem:[%s6122 + $0x48] sm:$0xff]
    %v6133 = vld [vmem:[%s6122 + $0x50] sm:$0xff]
    %v6134 = vld [vmem:[%s6122 + $0x58] sm:$0xff]
    %v6135 = vld [vmem:[%s6122 + $0x60] sm:$0xff]
    %v6136 = vld [vmem:[%s6122 + $0x68] sm:$0xff]
    %v6137 = vld [vmem:[%s6122 + $0x70] sm:$0xff]
    %v6138 = vld [vmem:[%s6122 + $0x78] sm:$0xff]
    %v6139 = vld [vmem:[%s6122 + $0x80] sm:$0xff]
    %v6140 = vld [vmem:[%s6122 + $0x88] sm:$0xff]
    %v6141 = vld [vmem:[%s6122 + $0x90] sm:$0xff]
    %v6142 = vld [vmem:[%s6122 + $0x98] sm:$0xff]
    %v6143 = vld [vmem:[%s6122 + $0xa0] sm:$0xff]
    %v6144 = vld [vmem:[%s6122 + $0xa8] sm:$0xff]
    %v6145 = vld [vmem:[%s6122 + $0xb0] sm:$0xff]
    %v6146 = vld [vmem:[%s6122 + $0xb8] sm:$0xff]
    %v6147 = vld [vmem:[%s6122 + $0xc0] sm:$0xff]
    %v6148 = vld [vmem:[%s6122 + $0xc8] sm:$0xff]
    %v6149 = vld [vmem:[%s6122 + $0xd0] sm:$0xff]
    %v6150 = vld [vmem:[%s6122 + $0xd8] sm:$0xff]
    %v6151 = vld [vmem:[%s6122 + $0xe0] sm:$0xff]
    %v6152 = vld [vmem:[%s6122 + $0xe8] sm:$0xff]
    %v6153 = vld [vmem:[%s6122 + $0xf0] sm:$0xff]
    %v6154 = vld [vmem:[%s6122 + $0xf8] sm:$0xff]
    %v6155 = vrot.slane %v5723, 1
    %v6156 = vsel %vm5798, %v5727, %v6155
    %6158 = vmatpush.msra.mxu0 %v6153
    %6159 = vmatpush.msra.mxu0 %v6151
    %6160 = vmatpush.msra.mxu0 %v6149
    %6161 = vmatpush.msra.mxu0 %v6147
    %6162 = vmatpush.msra.mxu0 %v6145
    %6163 = vmatpush.msra.mxu0 %v6143
    %6164 = vmatpush.msra.mxu0 %v6141
    %6165 = vmatpush.msra.mxu0 %v6139
    %6166 = vmatpush.msra.mxu0 %v6137
    %6167 = vmatpush.msra.mxu0 %v6135
    %6168 = vmatpush.msra.mxu0 %v6133
    %6169 = vmatpush.msra.mxu0 %v6131
    %6170 = vmatpush.msra.mxu0 %v6129
    %6171 = vmatpush.msra.mxu0 %v6127
    %6172 = vmatpush.msra.mxu0 %v6125
    %6173 = vmatpush.msra.mxu0 %v6123
    %6174 = vmatmul.f32.gmra.mxu0 %v6156
    %v6175 = vpop.f32.mrf.mxu0
    %v6176 = vadd.f32 0.0, %v6175
    %6177 = vdwg.mxu0
    %6178 = vmatpush.msra.mxu0 %v6154
    %6179 = vmatpush.msra.mxu0 %v6152
    %6180 = vmatpush.msra.mxu0 %v6150
    %6181 = vmatpush.msra.mxu0 %v6148
    %6182 = vmatpush.msra.mxu0 %v6146
    %6183 = vmatpush.msra.mxu0 %v6144
    %6184 = vmatpush.msra.mxu0 %v6142
    %6185 = vmatpush.msra.mxu0 %v6140
    %6186 = vmatpush.msra.mxu0 %v6138
    %6187 = vmatpush.msra.mxu0 %v6136
    %6188 = vmatpush.msra.mxu0 %v6134
    %6189 = vmatpush.msra.mxu0 %v6132
    %6190 = vmatpush.msra.mxu0 %v6130
    %6191 = vmatpush.msra.mxu0 %v6128
    %6192 = vmatpush.msra.mxu0 %v6126
    %6193 = vmatpush.msra.mxu0 %v6124
    %6194 = vmatmul.f32.gmra.mxu0 %v6156
    %v6195 = vpop.f32.mrf.mxu0
    %v6196 = vadd.f32 0.0, %v6195
    %6197 = vdwg.mxu0
    %v6198 = vadd.f32 %v6120, %v6176
    %v6199 = vadd.f32 %v6121, %v6196
    %s6200 = scalar_lea.vmem %s7, 1536
    %v6201 = vld [vmem:[%s6200] sm:$0xff]
    %v6202 = vld [vmem:[%s6200 + $0x8] sm:$0xff]
    %v6203 = vld [vmem:[%s6200 + $0x10] sm:$0xff]
    %v6204 = vld [vmem:[%s6200 + $0x18] sm:$0xff]
    %v6205 = vld [vmem:[%s6200 + $0x20] sm:$0xff]
    %v6206 = vld [vmem:[%s6200 + $0x28] sm:$0xff]
    %v6207 = vld [vmem:[%s6200 + $0x30] sm:$0xff]
    %v6208 = vld [vmem:[%s6200 + $0x38] sm:$0xff]
    %v6209 = vld [vmem:[%s6200 + $0x40] sm:$0xff]
    %v6210 = vld [vmem:[%s6200 + $0x48] sm:$0xff]
    %v6211 = vld [vmem:[%s6200 + $0x50] sm:$0xff]
    %v6212 = vld [vmem:[%s6200 + $0x58] sm:$0xff]
    %v6213 = vld [vmem:[%s6200 + $0x60] sm:$0xff]
    %v6214 = vld [vmem:[%s6200 + $0x68] sm:$0xff]
    %v6215 = vld [vmem:[%s6200 + $0x70] sm:$0xff]
    %v6216 = vld [vmem:[%s6200 + $0x78] sm:$0xff]
    %v6217 = vld [vmem:[%s6200 + $0x80] sm:$0xff]
    %v6218 = vld [vmem:[%s6200 + $0x88] sm:$0xff]
    %v6219 = vld [vmem:[%s6200 + $0x90] sm:$0xff]
    %v6220 = vld [vmem:[%s6200 + $0x98] sm:$0xff]
    %v6221 = vld [vmem:[%s6200 + $0xa0] sm:$0xff]
    %v6222 = vld [vmem:[%s6200 + $0xa8] sm:$0xff]
    %v6223 = vld [vmem:[%s6200 + $0xb0] sm:$0xff]
    %v6224 = vld [vmem:[%s6200 + $0xb8] sm:$0xff]
    %v6225 = vld [vmem:[%s6200 + $0xc0] sm:$0xff]
    %v6226 = vld [vmem:[%s6200 + $0xc8] sm:$0xff]
    %v6227 = vld [vmem:[%s6200 + $0xd0] sm:$0xff]
    %v6228 = vld [vmem:[%s6200 + $0xd8] sm:$0xff]
    %v6229 = vld [vmem:[%s6200 + $0xe0] sm:$0xff]
    %v6230 = vld [vmem:[%s6200 + $0xe8] sm:$0xff]
    %v6231 = vld [vmem:[%s6200 + $0xf0] sm:$0xff]
    %v6232 = vld [vmem:[%s6200 + $0xf8] sm:$0xff]
    %v6233 = vrot.slane %v5723, 2
    %v6234 = vrot.slane %v5727, 1
    %v6235 = vsel %vm5798, %v6234, %v6233
    %6237 = vmatpush.msra.mxu0 %v6231
    %6238 = vmatpush.msra.mxu0 %v6229
    %6239 = vmatpush.msra.mxu0 %v6227
    %6240 = vmatpush.msra.mxu0 %v6225
    %6241 = vmatpush.msra.mxu0 %v6223
    %6242 = vmatpush.msra.mxu0 %v6221
    %6243 = vmatpush.msra.mxu0 %v6219
    %6244 = vmatpush.msra.mxu0 %v6217
    %6245 = vmatpush.msra.mxu0 %v6215
    %6246 = vmatpush.msra.mxu0 %v6213
    %6247 = vmatpush.msra.mxu0 %v6211
    %6248 = vmatpush.msra.mxu0 %v6209
    %6249 = vmatpush.msra.mxu0 %v6207
    %6250 = vmatpush.msra.mxu0 %v6205
    %6251 = vmatpush.msra.mxu0 %v6203
    %6252 = vmatpush.msra.mxu0 %v6201
    %6253 = vmatmul.f32.gmra.mxu0 %v6235
    %v6254 = vpop.f32.mrf.mxu0
    %v6255 = vadd.f32 0.0, %v6254
    %6256 = vdwg.mxu0
    %6257 = vmatpush.msra.mxu0 %v6232
    %6258 = vmatpush.msra.mxu0 %v6230
    %6259 = vmatpush.msra.mxu0 %v6228
    %6260 = vmatpush.msra.mxu0 %v6226
    %6261 = vmatpush.msra.mxu0 %v6224
    %6262 = vmatpush.msra.mxu0 %v6222
    %6263 = vmatpush.msra.mxu0 %v6220
    %6264 = vmatpush.msra.mxu0 %v6218
    %6265 = vmatpush.msra.mxu0 %v6216
    %6266 = vmatpush.msra.mxu0 %v6214
    %6267 = vmatpush.msra.mxu0 %v6212
    %6268 = vmatpush.msra.mxu0 %v6210
    %6269 = vmatpush.msra.mxu0 %v6208
    %6270 = vmatpush.msra.mxu0 %v6206
    %6271 = vmatpush.msra.mxu0 %v6204
    %6272 = vmatpush.msra.mxu0 %v6202
    %6273 = vmatmul.f32.gmra.mxu0 %v6235
    %v6274 = vpop.f32.mrf.mxu0
    %v6275 = vadd.f32 0.0, %v6274
    %6276 = vdwg.mxu0
    %v6277 = vadd.f32 %v6198, %v6255
    %v6278 = vadd.f32 %v6199, %v6275
    %s6279 = scalar_lea.vmem %s7, 1792
    %v6280 = vld [vmem:[%s6279] sm:$0xff]
    %v6281 = vld [vmem:[%s6279 + $0x8] sm:$0xff]
    %v6282 = vld [vmem:[%s6279 + $0x10] sm:$0xff]
    %v6283 = vld [vmem:[%s6279 + $0x18] sm:$0xff]
    %v6284 = vld [vmem:[%s6279 + $0x20] sm:$0xff]
    %v6285 = vld [vmem:[%s6279 + $0x28] sm:$0xff]
    %v6286 = vld [vmem:[%s6279 + $0x30] sm:$0xff]
    %v6287 = vld [vmem:[%s6279 + $0x38] sm:$0xff]
    %v6288 = vld [vmem:[%s6279 + $0x40] sm:$0xff]
    %v6289 = vld [vmem:[%s6279 + $0x48] sm:$0xff]
    %v6290 = vld [vmem:[%s6279 + $0x50] sm:$0xff]
    %v6291 = vld [vmem:[%s6279 + $0x58] sm:$0xff]
    %v6292 = vld [vmem:[%s6279 + $0x60] sm:$0xff]
    %v6293 = vld [vmem:[%s6279 + $0x68] sm:$0xff]
    %v6294 = vld [vmem:[%s6279 + $0x70] sm:$0xff]
    %v6295 = vld [vmem:[%s6279 + $0x78] sm:$0xff]
    %v6296 = vld [vmem:[%s6279 + $0x80] sm:$0xff]
    %v6297 = vld [vmem:[%s6279 + $0x88] sm:$0xff]
    %v6298 = vld [vmem:[%s6279 + $0x90] sm:$0xff]
    %v6299 = vld [vmem:[%s6279 + $0x98] sm:$0xff]
    %v6300 = vld [vmem:[%s6279 + $0xa0] sm:$0xff]
    %v6301 = vld [vmem:[%s6279 + $0xa8] sm:$0xff]
    %v6302 = vld [vmem:[%s6279 + $0xb0] sm:$0xff]
    %v6303 = vld [vmem:[%s6279 + $0xb8] sm:$0xff]
    %v6304 = vld [vmem:[%s6279 + $0xc0] sm:$0xff]
    %v6305 = vld [vmem:[%s6279 + $0xc8] sm:$0xff]
    %v6306 = vld [vmem:[%s6279 + $0xd0] sm:$0xff]
    %v6307 = vld [vmem:[%s6279 + $0xd8] sm:$0xff]
    %v6308 = vld [vmem:[%s6279 + $0xe0] sm:$0xff]
    %v6309 = vld [vmem:[%s6279 + $0xe8] sm:$0xff]
    %v6310 = vld [vmem:[%s6279 + $0xf0] sm:$0xff]
    %v6311 = vld [vmem:[%s6279 + $0xf8] sm:$0xff]
    %v6312 = vrot.slane %v5723, 3
    %v6313 = vrot.slane %v5727, 2
    %v6314 = vsel %vm5798, %v6313, %v6312
    %6316 = vmatpush.msra.mxu0 %v6310
    %6317 = vmatpush.msra.mxu0 %v6308
    %6318 = vmatpush.msra.mxu0 %v6306
    %6319 = vmatpush.msra.mxu0 %v6304
    %6320 = vmatpush.msra.mxu0 %v6302
    %6321 = vmatpush.msra.mxu0 %v6300
    %6322 = vmatpush.msra.mxu0 %v6298
    %6323 = vmatpush.msra.mxu0 %v6296
    %6324 = vmatpush.msra.mxu0 %v6294
    %6325 = vmatpush.msra.mxu0 %v6292
    %6326 = vmatpush.msra.mxu0 %v6290
    %6327 = vmatpush.msra.mxu0 %v6288
    %6328 = vmatpush.msra.mxu0 %v6286
    %6329 = vmatpush.msra.mxu0 %v6284
    %6330 = vmatpush.msra.mxu0 %v6282
    %6331 = vmatpush.msra.mxu0 %v6280
    %6332 = vmatmul.f32.gmra.mxu0 %v6314
    %v6333 = vpop.f32.mrf.mxu0
    %v6334 = vadd.f32 0.0, %v6333
    %6335 = vdwg.mxu0
    %6336 = vmatpush.msra.mxu0 %v6311
    %6337 = vmatpush.msra.mxu0 %v6309
    %6338 = vmatpush.msra.mxu0 %v6307
    %6339 = vmatpush.msra.mxu0 %v6305
    %6340 = vmatpush.msra.mxu0 %v6303
    %6341 = vmatpush.msra.mxu0 %v6301
    %6342 = vmatpush.msra.mxu0 %v6299
    %6343 = vmatpush.msra.mxu0 %v6297
    %6344 = vmatpush.msra.mxu0 %v6295
    %6345 = vmatpush.msra.mxu0 %v6293
    %6346 = vmatpush.msra.mxu0 %v6291
    %6347 = vmatpush.msra.mxu0 %v6289
    %6348 = vmatpush.msra.mxu0 %v6287
    %6349 = vmatpush.msra.mxu0 %v6285
    %6350 = vmatpush.msra.mxu0 %v6283
    %6351 = vmatpush.msra.mxu0 %v6281
    %6352 = vmatmul.f32.gmra.mxu0 %v6314
    %v6353 = vpop.f32.mrf.mxu0
    %v6354 = vadd.f32 0.0, %v6353
    %6355 = vdwg.mxu0
    %v6356 = vadd.f32 %v6277, %v6334
    %v6357 = vadd.f32 %v6278, %v6354
    %s6358 = scalar_lea.vmem %s7, 2048
    %v6359 = vld [vmem:[%s6358] sm:$0xff]
    %v6360 = vld [vmem:[%s6358 + $0x8] sm:$0xff]
    %v6361 = vld [vmem:[%s6358 + $0x10] sm:$0xff]
    %v6362 = vld [vmem:[%s6358 + $0x18] sm:$0xff]
    %v6363 = vld [vmem:[%s6358 + $0x20] sm:$0xff]
    %v6364 = vld [vmem:[%s6358 + $0x28] sm:$0xff]
    %v6365 = vld [vmem:[%s6358 + $0x30] sm:$0xff]
    %v6366 = vld [vmem:[%s6358 + $0x38] sm:$0xff]
    %v6367 = vld [vmem:[%s6358 + $0x40] sm:$0xff]
    %v6368 = vld [vmem:[%s6358 + $0x48] sm:$0xff]
    %v6369 = vld [vmem:[%s6358 + $0x50] sm:$0xff]
    %v6370 = vld [vmem:[%s6358 + $0x58] sm:$0xff]
    %v6371 = vld [vmem:[%s6358 + $0x60] sm:$0xff]
    %v6372 = vld [vmem:[%s6358 + $0x68] sm:$0xff]
    %v6373 = vld [vmem:[%s6358 + $0x70] sm:$0xff]
    %v6374 = vld [vmem:[%s6358 + $0x78] sm:$0xff]
    %v6375 = vld [vmem:[%s6358 + $0x80] sm:$0xff]
    %v6376 = vld [vmem:[%s6358 + $0x88] sm:$0xff]
    %v6377 = vld [vmem:[%s6358 + $0x90] sm:$0xff]
    %v6378 = vld [vmem:[%s6358 + $0x98] sm:$0xff]
    %v6379 = vld [vmem:[%s6358 + $0xa0] sm:$0xff]
    %v6380 = vld [vmem:[%s6358 + $0xa8] sm:$0xff]
    %v6381 = vld [vmem:[%s6358 + $0xb0] sm:$0xff]
    %v6382 = vld [vmem:[%s6358 + $0xb8] sm:$0xff]
    %v6383 = vld [vmem:[%s6358 + $0xc0] sm:$0xff]
    %v6384 = vld [vmem:[%s6358 + $0xc8] sm:$0xff]
    %v6385 = vld [vmem:[%s6358 + $0xd0] sm:$0xff]
    %v6386 = vld [vmem:[%s6358 + $0xd8] sm:$0xff]
    %v6387 = vld [vmem:[%s6358 + $0xe0] sm:$0xff]
    %v6388 = vld [vmem:[%s6358 + $0xe8] sm:$0xff]
    %v6389 = vld [vmem:[%s6358 + $0xf0] sm:$0xff]
    %v6390 = vld [vmem:[%s6358 + $0xf8] sm:$0xff]
    %v6393 = vrot.slane %v5728, 7
    %v6394 = vsel %vm5798, %v6393, %v5724
    %6396 = vmatpush.msra.mxu0 %v6389
    %6397 = vmatpush.msra.mxu0 %v6387
    %6398 = vmatpush.msra.mxu0 %v6385
    %6399 = vmatpush.msra.mxu0 %v6383
    %6400 = vmatpush.msra.mxu0 %v6381
    %6401 = vmatpush.msra.mxu0 %v6379
    %6402 = vmatpush.msra.mxu0 %v6377
    %6403 = vmatpush.msra.mxu0 %v6375
    %6404 = vmatpush.msra.mxu0 %v6373
    %6405 = vmatpush.msra.mxu0 %v6371
    %6406 = vmatpush.msra.mxu0 %v6369
    %6407 = vmatpush.msra.mxu0 %v6367
    %6408 = vmatpush.msra.mxu0 %v6365
    %6409 = vmatpush.msra.mxu0 %v6363
    %6410 = vmatpush.msra.mxu0 %v6361
    %6411 = vmatpush.msra.mxu0 %v6359
    %6412 = vmatmul.f32.gmra.mxu0 %v6394
    %v6413 = vpop.f32.mrf.mxu0
    %v6414 = vadd.f32 0.0, %v6413
    %6415 = vdwg.mxu0
    %6416 = vmatpush.msra.mxu0 %v6390
    %6417 = vmatpush.msra.mxu0 %v6388
    %6418 = vmatpush.msra.mxu0 %v6386
    %6419 = vmatpush.msra.mxu0 %v6384
    %6420 = vmatpush.msra.mxu0 %v6382
    %6421 = vmatpush.msra.mxu0 %v6380
    %6422 = vmatpush.msra.mxu0 %v6378
    %6423 = vmatpush.msra.mxu0 %v6376
    %6424 = vmatpush.msra.mxu0 %v6374
    %6425 = vmatpush.msra.mxu0 %v6372
    %6426 = vmatpush.msra.mxu0 %v6370
    %6427 = vmatpush.msra.mxu0 %v6368
    %6428 = vmatpush.msra.mxu0 %v6366
    %6429 = vmatpush.msra.mxu0 %v6364
    %6430 = vmatpush.msra.mxu0 %v6362
    %6431 = vmatpush.msra.mxu0 %v6360
    %6432 = vmatmul.f32.gmra.mxu0 %v6394
    %v6433 = vpop.f32.mrf.mxu0
    %v6434 = vadd.f32 0.0, %v6433
    %6435 = vdwg.mxu0
    %v6436 = vadd.f32 %v6356, %v6414
    %v6437 = vadd.f32 %v6357, %v6434
    %s6438 = scalar_lea.vmem %s7, 2304
    %v6439 = vld [vmem:[%s6438] sm:$0xff]
    %v6440 = vld [vmem:[%s6438 + $0x8] sm:$0xff]
    %v6441 = vld [vmem:[%s6438 + $0x10] sm:$0xff]
    %v6442 = vld [vmem:[%s6438 + $0x18] sm:$0xff]
    %v6443 = vld [vmem:[%s6438 + $0x20] sm:$0xff]
    %v6444 = vld [vmem:[%s6438 + $0x28] sm:$0xff]
    %v6445 = vld [vmem:[%s6438 + $0x30] sm:$0xff]
    %v6446 = vld [vmem:[%s6438 + $0x38] sm:$0xff]
    %v6447 = vld [vmem:[%s6438 + $0x40] sm:$0xff]
    %v6448 = vld [vmem:[%s6438 + $0x48] sm:$0xff]
    %v6449 = vld [vmem:[%s6438 + $0x50] sm:$0xff]
    %v6450 = vld [vmem:[%s6438 + $0x58] sm:$0xff]
    %v6451 = vld [vmem:[%s6438 + $0x60] sm:$0xff]
    %v6452 = vld [vmem:[%s6438 + $0x68] sm:$0xff]
    %v6453 = vld [vmem:[%s6438 + $0x70] sm:$0xff]
    %v6454 = vld [vmem:[%s6438 + $0x78] sm:$0xff]
    %v6455 = vld [vmem:[%s6438 + $0x80] sm:$0xff]
    %v6456 = vld [vmem:[%s6438 + $0x88] sm:$0xff]
    %v6457 = vld [vmem:[%s6438 + $0x90] sm:$0xff]
    %v6458 = vld [vmem:[%s6438 + $0x98] sm:$0xff]
    %v6459 = vld [vmem:[%s6438 + $0xa0] sm:$0xff]
    %v6460 = vld [vmem:[%s6438 + $0xa8] sm:$0xff]
    %v6461 = vld [vmem:[%s6438 + $0xb0] sm:$0xff]
    %v6462 = vld [vmem:[%s6438 + $0xb8] sm:$0xff]
    %v6463 = vld [vmem:[%s6438 + $0xc0] sm:$0xff]
    %v6464 = vld [vmem:[%s6438 + $0xc8] sm:$0xff]
    %v6465 = vld [vmem:[%s6438 + $0xd0] sm:$0xff]
    %v6466 = vld [vmem:[%s6438 + $0xd8] sm:$0xff]
    %v6467 = vld [vmem:[%s6438 + $0xe0] sm:$0xff]
    %v6468 = vld [vmem:[%s6438 + $0xe8] sm:$0xff]
    %v6469 = vld [vmem:[%s6438 + $0xf0] sm:$0xff]
    %v6470 = vld [vmem:[%s6438 + $0xf8] sm:$0xff]
    %v6471 = vrot.slane %v5724, 1
    %v6472 = vsel %vm5798, %v5728, %v6471
    %6474 = vmatpush.msra.mxu0 %v6469
    %6475 = vmatpush.msra.mxu0 %v6467
    %6476 = vmatpush.msra.mxu0 %v6465
    %6477 = vmatpush.msra.mxu0 %v6463
    %6478 = vmatpush.msra.mxu0 %v6461
    %6479 = vmatpush.msra.mxu0 %v6459
    %6480 = vmatpush.msra.mxu0 %v6457
    %6481 = vmatpush.msra.mxu0 %v6455
    %6482 = vmatpush.msra.mxu0 %v6453
    %6483 = vmatpush.msra.mxu0 %v6451
    %6484 = vmatpush.msra.mxu0 %v6449
    %6485 = vmatpush.msra.mxu0 %v6447
    %6486 = vmatpush.msra.mxu0 %v6445
    %6487 = vmatpush.msra.mxu0 %v6443
    %6488 = vmatpush.msra.mxu0 %v6441
    %6489 = vmatpush.msra.mxu0 %v6439
    %6490 = vmatmul.f32.gmra.mxu0 %v6472
    %v6491 = vpop.f32.mrf.mxu0
    %v6492 = vadd.f32 0.0, %v6491
    %6493 = vdwg.mxu0
    %6494 = vmatpush.msra.mxu0 %v6470
    %6495 = vmatpush.msra.mxu0 %v6468
    %6496 = vmatpush.msra.mxu0 %v6466
    %6497 = vmatpush.msra.mxu0 %v6464
    %6498 = vmatpush.msra.mxu0 %v6462
    %6499 = vmatpush.msra.mxu0 %v6460
    %6500 = vmatpush.msra.mxu0 %v6458
    %6501 = vmatpush.msra.mxu0 %v6456
    %6502 = vmatpush.msra.mxu0 %v6454
    %6503 = vmatpush.msra.mxu0 %v6452
    %6504 = vmatpush.msra.mxu0 %v6450
    %6505 = vmatpush.msra.mxu0 %v6448
    %6506 = vmatpush.msra.mxu0 %v6446
    %6507 = vmatpush.msra.mxu0 %v6444
    %6508 = vmatpush.msra.mxu0 %v6442
    %6509 = vmatpush.msra.mxu0 %v6440
    %6510 = vmatmul.f32.gmra.mxu0 %v6472
    %v6511 = vpop.f32.mrf.mxu0
    %v6512 = vadd.f32 0.0, %v6511
    %6513 = vdwg.mxu0
    %v6514 = vadd.f32 %v6436, %v6492
    %v6515 = vadd.f32 %v6437, %v6512
    %s6516 = scalar_lea.vmem %s7, 2560
    %v6517 = vld [vmem:[%s6516] sm:$0xff]
    %v6518 = vld [vmem:[%s6516 + $0x8] sm:$0xff]
    %v6519 = vld [vmem:[%s6516 + $0x10] sm:$0xff]
    %v6520 = vld [vmem:[%s6516 + $0x18] sm:$0xff]
    %v6521 = vld [vmem:[%s6516 + $0x20] sm:$0xff]
    %v6522 = vld [vmem:[%s6516 + $0x28] sm:$0xff]
    %v6523 = vld [vmem:[%s6516 + $0x30] sm:$0xff]
    %v6524 = vld [vmem:[%s6516 + $0x38] sm:$0xff]
    %v6525 = vld [vmem:[%s6516 + $0x40] sm:$0xff]
    %v6526 = vld [vmem:[%s6516 + $0x48] sm:$0xff]
    %v6527 = vld [vmem:[%s6516 + $0x50] sm:$0xff]
    %v6528 = vld [vmem:[%s6516 + $0x58] sm:$0xff]
    %v6529 = vld [vmem:[%s6516 + $0x60] sm:$0xff]
    %v6530 = vld [vmem:[%s6516 + $0x68] sm:$0xff]
    %v6531 = vld [vmem:[%s6516 + $0x70] sm:$0xff]
    %v6532 = vld [vmem:[%s6516 + $0x78] sm:$0xff]
    %v6533 = vld [vmem:[%s6516 + $0x80] sm:$0xff]
    %v6534 = vld [vmem:[%s6516 + $0x88] sm:$0xff]
    %v6535 = vld [vmem:[%s6516 + $0x90] sm:$0xff]
    %v6536 = vld [vmem:[%s6516 + $0x98] sm:$0xff]
    %v6537 = vld [vmem:[%s6516 + $0xa0] sm:$0xff]
    %v6538 = vld [vmem:[%s6516 + $0xa8] sm:$0xff]
    %v6539 = vld [vmem:[%s6516 + $0xb0] sm:$0xff]
    %v6540 = vld [vmem:[%s6516 + $0xb8] sm:$0xff]
    %v6541 = vld [vmem:[%s6516 + $0xc0] sm:$0xff]
    %v6542 = vld [vmem:[%s6516 + $0xc8] sm:$0xff]
    %v6543 = vld [vmem:[%s6516 + $0xd0] sm:$0xff]
    %v6544 = vld [vmem:[%s6516 + $0xd8] sm:$0xff]
    %v6545 = vld [vmem:[%s6516 + $0xe0] sm:$0xff]
    %v6546 = vld [vmem:[%s6516 + $0xe8] sm:$0xff]
    %v6547 = vld [vmem:[%s6516 + $0xf0] sm:$0xff]
    %v6548 = vld [vmem:[%s6516 + $0xf8] sm:$0xff]
    %v6549 = vrot.slane %v5724, 2
    %v6550 = vrot.slane %v5728, 1
    %v6551 = vsel %vm5798, %v6550, %v6549
    %6553 = vmatpush.msra.mxu0 %v6547
    %6554 = vmatpush.msra.mxu0 %v6545
    %6555 = vmatpush.msra.mxu0 %v6543
    %6556 = vmatpush.msra.mxu0 %v6541
    %6557 = vmatpush.msra.mxu0 %v6539
    %6558 = vmatpush.msra.mxu0 %v6537
    %6559 = vmatpush.msra.mxu0 %v6535
    %6560 = vmatpush.msra.mxu0 %v6533
    %6561 = vmatpush.msra.mxu0 %v6531
    %6562 = vmatpush.msra.mxu0 %v6529
    %6563 = vmatpush.msra.mxu0 %v6527
    %6564 = vmatpush.msra.mxu0 %v6525
    %6565 = vmatpush.msra.mxu0 %v6523
    %6566 = vmatpush.msra.mxu0 %v6521
    %6567 = vmatpush.msra.mxu0 %v6519
    %6568 = vmatpush.msra.mxu0 %v6517
    %6569 = vmatmul.f32.gmra.mxu0 %v6551
    %v6570 = vpop.f32.mrf.mxu0
    %v6571 = vadd.f32 0.0, %v6570
    %6572 = vdwg.mxu0
    %6573 = vmatpush.msra.mxu0 %v6548
    %6574 = vmatpush.msra.mxu0 %v6546
    %6575 = vmatpush.msra.mxu0 %v6544
    %6576 = vmatpush.msra.mxu0 %v6542
    %6577 = vmatpush.msra.mxu0 %v6540
    %6578 = vmatpush.msra.mxu0 %v6538
    %6579 = vmatpush.msra.mxu0 %v6536
    %6580 = vmatpush.msra.mxu0 %v6534
    %6581 = vmatpush.msra.mxu0 %v6532
    %6582 = vmatpush.msra.mxu0 %v6530
    %6583 = vmatpush.msra.mxu0 %v6528
    %6584 = vmatpush.msra.mxu0 %v6526
    %6585 = vmatpush.msra.mxu0 %v6524
    %6586 = vmatpush.msra.mxu0 %v6522
    %6587 = vmatpush.msra.mxu0 %v6520
    %6588 = vmatpush.msra.mxu0 %v6518
    %6589 = vmatmul.f32.gmra.mxu0 %v6551
    %v6590 = vpop.f32.mrf.mxu0
    %v6591 = vadd.f32 0.0, %v6590
    %6592 = vdwg.mxu0
    %v6593 = vadd.f32 %v6514, %v6571
    %v6594 = vadd.f32 %v6515, %v6591
    %s6595 = scalar_lea.vmem %s7, 2816
    %v6596 = vld [vmem:[%s6595] sm:$0xff]
    %v6597 = vld [vmem:[%s6595 + $0x8] sm:$0xff]
    %v6598 = vld [vmem:[%s6595 + $0x10] sm:$0xff]
    %v6599 = vld [vmem:[%s6595 + $0x18] sm:$0xff]
    %v6600 = vld [vmem:[%s6595 + $0x20] sm:$0xff]
    %v6601 = vld [vmem:[%s6595 + $0x28] sm:$0xff]
    %v6602 = vld [vmem:[%s6595 + $0x30] sm:$0xff]
    %v6603 = vld [vmem:[%s6595 + $0x38] sm:$0xff]
    %v6604 = vld [vmem:[%s6595 + $0x40] sm:$0xff]
    %v6605 = vld [vmem:[%s6595 + $0x48] sm:$0xff]
    %v6606 = vld [vmem:[%s6595 + $0x50] sm:$0xff]
    %v6607 = vld [vmem:[%s6595 + $0x58] sm:$0xff]
    %v6608 = vld [vmem:[%s6595 + $0x60] sm:$0xff]
    %v6609 = vld [vmem:[%s6595 + $0x68] sm:$0xff]
    %v6610 = vld [vmem:[%s6595 + $0x70] sm:$0xff]
    %v6611 = vld [vmem:[%s6595 + $0x78] sm:$0xff]
    %v6612 = vld [vmem:[%s6595 + $0x80] sm:$0xff]
    %v6613 = vld [vmem:[%s6595 + $0x88] sm:$0xff]
    %v6614 = vld [vmem:[%s6595 + $0x90] sm:$0xff]
    %v6615 = vld [vmem:[%s6595 + $0x98] sm:$0xff]
    %v6616 = vld [vmem:[%s6595 + $0xa0] sm:$0xff]
    %v6617 = vld [vmem:[%s6595 + $0xa8] sm:$0xff]
    %v6618 = vld [vmem:[%s6595 + $0xb0] sm:$0xff]
    %v6619 = vld [vmem:[%s6595 + $0xb8] sm:$0xff]
    %v6620 = vld [vmem:[%s6595 + $0xc0] sm:$0xff]
    %v6621 = vld [vmem:[%s6595 + $0xc8] sm:$0xff]
    %v6622 = vld [vmem:[%s6595 + $0xd0] sm:$0xff]
    %v6623 = vld [vmem:[%s6595 + $0xd8] sm:$0xff]
    %v6624 = vld [vmem:[%s6595 + $0xe0] sm:$0xff]
    %v6625 = vld [vmem:[%s6595 + $0xe8] sm:$0xff]
    %v6626 = vld [vmem:[%s6595 + $0xf0] sm:$0xff]
    %v6627 = vld [vmem:[%s6595 + $0xf8] sm:$0xff]
    %v6628 = vrot.slane %v5724, 3
    %v6629 = vrot.slane %v5728, 2
    %v6630 = vsel %vm5798, %v6629, %v6628
    %6632 = vmatpush.msra.mxu0 %v6626
    %6633 = vmatpush.msra.mxu0 %v6624
    %6634 = vmatpush.msra.mxu0 %v6622
    %6635 = vmatpush.msra.mxu0 %v6620
    %6636 = vmatpush.msra.mxu0 %v6618
    %6637 = vmatpush.msra.mxu0 %v6616
    %6638 = vmatpush.msra.mxu0 %v6614
    %6639 = vmatpush.msra.mxu0 %v6612
    %6640 = vmatpush.msra.mxu0 %v6610
    %6641 = vmatpush.msra.mxu0 %v6608
    %6642 = vmatpush.msra.mxu0 %v6606
    %6643 = vmatpush.msra.mxu0 %v6604
    %6644 = vmatpush.msra.mxu0 %v6602
    %6645 = vmatpush.msra.mxu0 %v6600
    %6646 = vmatpush.msra.mxu0 %v6598
    %6647 = vmatpush.msra.mxu0 %v6596
    %6648 = vmatmul.f32.gmra.mxu0 %v6630
    %v6649 = vpop.f32.mrf.mxu0
    %v6650 = vadd.f32 0.0, %v6649
    %6651 = vdwg.mxu0
    %6652 = vmatpush.msra.mxu0 %v6627
    %6653 = vmatpush.msra.mxu0 %v6625
    %6654 = vmatpush.msra.mxu0 %v6623
    %6655 = vmatpush.msra.mxu0 %v6621
    %6656 = vmatpush.msra.mxu0 %v6619
    %6657 = vmatpush.msra.mxu0 %v6617
    %6658 = vmatpush.msra.mxu0 %v6615
    %6659 = vmatpush.msra.mxu0 %v6613
    %6660 = vmatpush.msra.mxu0 %v6611
    %6661 = vmatpush.msra.mxu0 %v6609
    %6662 = vmatpush.msra.mxu0 %v6607
    %6663 = vmatpush.msra.mxu0 %v6605
    %6664 = vmatpush.msra.mxu0 %v6603
    %6665 = vmatpush.msra.mxu0 %v6601
    %6666 = vmatpush.msra.mxu0 %v6599
    %6667 = vmatpush.msra.mxu0 %v6597
    %6668 = vmatmul.f32.gmra.mxu0 %v6630
    %v6669 = vpop.f32.mrf.mxu0
    %v6670 = vadd.f32 0.0, %v6669
    %6671 = vdwg.mxu0
    %v6672 = vadd.f32 %v6593, %v6650
    %v6673 = vadd.f32 %v6594, %v6670
    %s6674 = scalar_lea.vmem %s7, 3072
    %v6675 = vld [vmem:[%s6674] sm:$0xff]
    %v6676 = vld [vmem:[%s6674 + $0x8] sm:$0xff]
    %v6677 = vld [vmem:[%s6674 + $0x10] sm:$0xff]
    %v6678 = vld [vmem:[%s6674 + $0x18] sm:$0xff]
    %v6679 = vld [vmem:[%s6674 + $0x20] sm:$0xff]
    %v6680 = vld [vmem:[%s6674 + $0x28] sm:$0xff]
    %v6681 = vld [vmem:[%s6674 + $0x30] sm:$0xff]
    %v6682 = vld [vmem:[%s6674 + $0x38] sm:$0xff]
    %v6683 = vld [vmem:[%s6674 + $0x40] sm:$0xff]
    %v6684 = vld [vmem:[%s6674 + $0x48] sm:$0xff]
    %v6685 = vld [vmem:[%s6674 + $0x50] sm:$0xff]
    %v6686 = vld [vmem:[%s6674 + $0x58] sm:$0xff]
    %v6687 = vld [vmem:[%s6674 + $0x60] sm:$0xff]
    %v6688 = vld [vmem:[%s6674 + $0x68] sm:$0xff]
    %v6689 = vld [vmem:[%s6674 + $0x70] sm:$0xff]
    %v6690 = vld [vmem:[%s6674 + $0x78] sm:$0xff]
    %v6691 = vld [vmem:[%s6674 + $0x80] sm:$0xff]
    %v6692 = vld [vmem:[%s6674 + $0x88] sm:$0xff]
    %v6693 = vld [vmem:[%s6674 + $0x90] sm:$0xff]
    %v6694 = vld [vmem:[%s6674 + $0x98] sm:$0xff]
    %v6695 = vld [vmem:[%s6674 + $0xa0] sm:$0xff]
    %v6696 = vld [vmem:[%s6674 + $0xa8] sm:$0xff]
    %v6697 = vld [vmem:[%s6674 + $0xb0] sm:$0xff]
    %v6698 = vld [vmem:[%s6674 + $0xb8] sm:$0xff]
    %v6699 = vld [vmem:[%s6674 + $0xc0] sm:$0xff]
    %v6700 = vld [vmem:[%s6674 + $0xc8] sm:$0xff]
    %v6701 = vld [vmem:[%s6674 + $0xd0] sm:$0xff]
    %v6702 = vld [vmem:[%s6674 + $0xd8] sm:$0xff]
    %v6703 = vld [vmem:[%s6674 + $0xe0] sm:$0xff]
    %v6704 = vld [vmem:[%s6674 + $0xe8] sm:$0xff]
    %v6705 = vld [vmem:[%s6674 + $0xf0] sm:$0xff]
    %v6706 = vld [vmem:[%s6674 + $0xf8] sm:$0xff]
    %v6709 = vrot.slane %v5729, 7
    %v6710 = vsel %vm5798, %v6709, %v5725
    %6712 = vmatpush.msra.mxu0 %v6705
    %6713 = vmatpush.msra.mxu0 %v6703
    %6714 = vmatpush.msra.mxu0 %v6701
    %6715 = vmatpush.msra.mxu0 %v6699
    %6716 = vmatpush.msra.mxu0 %v6697
    %6717 = vmatpush.msra.mxu0 %v6695
    %6718 = vmatpush.msra.mxu0 %v6693
    %6719 = vmatpush.msra.mxu0 %v6691
    %6720 = vmatpush.msra.mxu0 %v6689
    %6721 = vmatpush.msra.mxu0 %v6687
    %6722 = vmatpush.msra.mxu0 %v6685
    %6723 = vmatpush.msra.mxu0 %v6683
    %6724 = vmatpush.msra.mxu0 %v6681
    %6725 = vmatpush.msra.mxu0 %v6679
    %6726 = vmatpush.msra.mxu0 %v6677
    %6727 = vmatpush.msra.mxu0 %v6675
    %6728 = vmatmul.f32.gmra.mxu0 %v6710
    %v6729 = vpop.f32.mrf.mxu0
    %v6730 = vadd.f32 0.0, %v6729
    %6731 = vdwg.mxu0
    %6732 = vmatpush.msra.mxu0 %v6706
    %6733 = vmatpush.msra.mxu0 %v6704
    %6734 = vmatpush.msra.mxu0 %v6702
    %6735 = vmatpush.msra.mxu0 %v6700
    %6736 = vmatpush.msra.mxu0 %v6698
    %6737 = vmatpush.msra.mxu0 %v6696
    %6738 = vmatpush.msra.mxu0 %v6694
    %6739 = vmatpush.msra.mxu0 %v6692
    %6740 = vmatpush.msra.mxu0 %v6690
    %6741 = vmatpush.msra.mxu0 %v6688
    %6742 = vmatpush.msra.mxu0 %v6686
    %6743 = vmatpush.msra.mxu0 %v6684
    %6744 = vmatpush.msra.mxu0 %v6682
    %6745 = vmatpush.msra.mxu0 %v6680
    %6746 = vmatpush.msra.mxu0 %v6678
    %6747 = vmatpush.msra.mxu0 %v6676
    %6748 = vmatmul.f32.gmra.mxu0 %v6710
    %v6749 = vpop.f32.mrf.mxu0
    %v6750 = vadd.f32 0.0, %v6749
    %6751 = vdwg.mxu0
    %v6752 = vadd.f32 %v6672, %v6730
    %v6753 = vadd.f32 %v6673, %v6750
    %s6754 = scalar_lea.vmem %s7, 3328
    %v6755 = vld [vmem:[%s6754] sm:$0xff]
    %v6756 = vld [vmem:[%s6754 + $0x8] sm:$0xff]
    %v6757 = vld [vmem:[%s6754 + $0x10] sm:$0xff]
    %v6758 = vld [vmem:[%s6754 + $0x18] sm:$0xff]
    %v6759 = vld [vmem:[%s6754 + $0x20] sm:$0xff]
    %v6760 = vld [vmem:[%s6754 + $0x28] sm:$0xff]
    %v6761 = vld [vmem:[%s6754 + $0x30] sm:$0xff]
    %v6762 = vld [vmem:[%s6754 + $0x38] sm:$0xff]
    %v6763 = vld [vmem:[%s6754 + $0x40] sm:$0xff]
    %v6764 = vld [vmem:[%s6754 + $0x48] sm:$0xff]
    %v6765 = vld [vmem:[%s6754 + $0x50] sm:$0xff]
    %v6766 = vld [vmem:[%s6754 + $0x58] sm:$0xff]
    %v6767 = vld [vmem:[%s6754 + $0x60] sm:$0xff]
    %v6768 = vld [vmem:[%s6754 + $0x68] sm:$0xff]
    %v6769 = vld [vmem:[%s6754 + $0x70] sm:$0xff]
    %v6770 = vld [vmem:[%s6754 + $0x78] sm:$0xff]
    %v6771 = vld [vmem:[%s6754 + $0x80] sm:$0xff]
    %v6772 = vld [vmem:[%s6754 + $0x88] sm:$0xff]
    %v6773 = vld [vmem:[%s6754 + $0x90] sm:$0xff]
    %v6774 = vld [vmem:[%s6754 + $0x98] sm:$0xff]
    %v6775 = vld [vmem:[%s6754 + $0xa0] sm:$0xff]
    %v6776 = vld [vmem:[%s6754 + $0xa8] sm:$0xff]
    %v6777 = vld [vmem:[%s6754 + $0xb0] sm:$0xff]
    %v6778 = vld [vmem:[%s6754 + $0xb8] sm:$0xff]
    %v6779 = vld [vmem:[%s6754 + $0xc0] sm:$0xff]
    %v6780 = vld [vmem:[%s6754 + $0xc8] sm:$0xff]
    %v6781 = vld [vmem:[%s6754 + $0xd0] sm:$0xff]
    %v6782 = vld [vmem:[%s6754 + $0xd8] sm:$0xff]
    %v6783 = vld [vmem:[%s6754 + $0xe0] sm:$0xff]
    %v6784 = vld [vmem:[%s6754 + $0xe8] sm:$0xff]
    %v6785 = vld [vmem:[%s6754 + $0xf0] sm:$0xff]
    %v6786 = vld [vmem:[%s6754 + $0xf8] sm:$0xff]
    %v6787 = vrot.slane %v5725, 1
    %v6788 = vsel %vm5798, %v5729, %v6787
    %6790 = vmatpush.msra.mxu0 %v6785
    %6791 = vmatpush.msra.mxu0 %v6783
    %6792 = vmatpush.msra.mxu0 %v6781
    %6793 = vmatpush.msra.mxu0 %v6779
    %6794 = vmatpush.msra.mxu0 %v6777
    %6795 = vmatpush.msra.mxu0 %v6775
    %6796 = vmatpush.msra.mxu0 %v6773
    %6797 = vmatpush.msra.mxu0 %v6771
    %6798 = vmatpush.msra.mxu0 %v6769
    %6799 = vmatpush.msra.mxu0 %v6767
    %6800 = vmatpush.msra.mxu0 %v6765
    %6801 = vmatpush.msra.mxu0 %v6763
    %6802 = vmatpush.msra.mxu0 %v6761
    %6803 = vmatpush.msra.mxu0 %v6759
    %6804 = vmatpush.msra.mxu0 %v6757
    %6805 = vmatpush.msra.mxu0 %v6755
    %6806 = vmatmul.f32.gmra.mxu0 %v6788
    %v6807 = vpop.f32.mrf.mxu0
    %v6808 = vadd.f32 0.0, %v6807
    %6809 = vdwg.mxu0
    %6810 = vmatpush.msra.mxu0 %v6786
    %6811 = vmatpush.msra.mxu0 %v6784
    %6812 = vmatpush.msra.mxu0 %v6782
    %6813 = vmatpush.msra.mxu0 %v6780
    %6814 = vmatpush.msra.mxu0 %v6778
    %6815 = vmatpush.msra.mxu0 %v6776
    %6816 = vmatpush.msra.mxu0 %v6774
    %6817 = vmatpush.msra.mxu0 %v6772
    %6818 = vmatpush.msra.mxu0 %v6770
    %6819 = vmatpush.msra.mxu0 %v6768
    %6820 = vmatpush.msra.mxu0 %v6766
    %6821 = vmatpush.msra.mxu0 %v6764
    %6822 = vmatpush.msra.mxu0 %v6762
    %6823 = vmatpush.msra.mxu0 %v6760
    %6824 = vmatpush.msra.mxu0 %v6758
    %6825 = vmatpush.msra.mxu0 %v6756
    %6826 = vmatmul.f32.gmra.mxu0 %v6788
    %v6827 = vpop.f32.mrf.mxu0
    %v6828 = vadd.f32 0.0, %v6827
    %6829 = vdwg.mxu0
    %v6830 = vadd.f32 %v6752, %v6808
    %v6831 = vadd.f32 %v6753, %v6828
    %s6832 = scalar_lea.vmem %s7, 3584
    %v6833 = vld [vmem:[%s6832] sm:$0xff]
    %v6834 = vld [vmem:[%s6832 + $0x8] sm:$0xff]
    %v6835 = vld [vmem:[%s6832 + $0x10] sm:$0xff]
    %v6836 = vld [vmem:[%s6832 + $0x18] sm:$0xff]
    %v6837 = vld [vmem:[%s6832 + $0x20] sm:$0xff]
    %v6838 = vld [vmem:[%s6832 + $0x28] sm:$0xff]
    %v6839 = vld [vmem:[%s6832 + $0x30] sm:$0xff]
    %v6840 = vld [vmem:[%s6832 + $0x38] sm:$0xff]
    %v6841 = vld [vmem:[%s6832 + $0x40] sm:$0xff]
    %v6842 = vld [vmem:[%s6832 + $0x48] sm:$0xff]
    %v6843 = vld [vmem:[%s6832 + $0x50] sm:$0xff]
    %v6844 = vld [vmem:[%s6832 + $0x58] sm:$0xff]
    %v6845 = vld [vmem:[%s6832 + $0x60] sm:$0xff]
    %v6846 = vld [vmem:[%s6832 + $0x68] sm:$0xff]
    %v6847 = vld [vmem:[%s6832 + $0x70] sm:$0xff]
    %v6848 = vld [vmem:[%s6832 + $0x78] sm:$0xff]
    %v6849 = vld [vmem:[%s6832 + $0x80] sm:$0xff]
    %v6850 = vld [vmem:[%s6832 + $0x88] sm:$0xff]
    %v6851 = vld [vmem:[%s6832 + $0x90] sm:$0xff]
    %v6852 = vld [vmem:[%s6832 + $0x98] sm:$0xff]
    %v6853 = vld [vmem:[%s6832 + $0xa0] sm:$0xff]
    %v6854 = vld [vmem:[%s6832 + $0xa8] sm:$0xff]
    %v6855 = vld [vmem:[%s6832 + $0xb0] sm:$0xff]
    %v6856 = vld [vmem:[%s6832 + $0xb8] sm:$0xff]
    %v6857 = vld [vmem:[%s6832 + $0xc0] sm:$0xff]
    %v6858 = vld [vmem:[%s6832 + $0xc8] sm:$0xff]
    %v6859 = vld [vmem:[%s6832 + $0xd0] sm:$0xff]
    %v6860 = vld [vmem:[%s6832 + $0xd8] sm:$0xff]
    %v6861 = vld [vmem:[%s6832 + $0xe0] sm:$0xff]
    %v6862 = vld [vmem:[%s6832 + $0xe8] sm:$0xff]
    %v6863 = vld [vmem:[%s6832 + $0xf0] sm:$0xff]
    %v6864 = vld [vmem:[%s6832 + $0xf8] sm:$0xff]
    %v6865 = vrot.slane %v5725, 2
    %v6866 = vrot.slane %v5729, 1
    %v6867 = vsel %vm5798, %v6866, %v6865
    %6869 = vmatpush.msra.mxu0 %v6863
    %6870 = vmatpush.msra.mxu0 %v6861
    %6871 = vmatpush.msra.mxu0 %v6859
    %6872 = vmatpush.msra.mxu0 %v6857
    %6873 = vmatpush.msra.mxu0 %v6855
    %6874 = vmatpush.msra.mxu0 %v6853
    %6875 = vmatpush.msra.mxu0 %v6851
    %6876 = vmatpush.msra.mxu0 %v6849
    %6877 = vmatpush.msra.mxu0 %v6847
    %6878 = vmatpush.msra.mxu0 %v6845
    %6879 = vmatpush.msra.mxu0 %v6843
    %6880 = vmatpush.msra.mxu0 %v6841
    %6881 = vmatpush.msra.mxu0 %v6839
    %6882 = vmatpush.msra.mxu0 %v6837
    %6883 = vmatpush.msra.mxu0 %v6835
    %6884 = vmatpush.msra.mxu0 %v6833
    %6885 = vmatmul.f32.gmra.mxu0 %v6867
    %v6886 = vpop.f32.mrf.mxu0
    %v6887 = vadd.f32 0.0, %v6886
    %6888 = vdwg.mxu0
    %6889 = vmatpush.msra.mxu0 %v6864
    %6890 = vmatpush.msra.mxu0 %v6862
    %6891 = vmatpush.msra.mxu0 %v6860
    %6892 = vmatpush.msra.mxu0 %v6858
    %6893 = vmatpush.msra.mxu0 %v6856
    %6894 = vmatpush.msra.mxu0 %v6854
    %6895 = vmatpush.msra.mxu0 %v6852
    %6896 = vmatpush.msra.mxu0 %v6850
    %6897 = vmatpush.msra.mxu0 %v6848
    %6898 = vmatpush.msra.mxu0 %v6846
    %6899 = vmatpush.msra.mxu0 %v6844
    %6900 = vmatpush.msra.mxu0 %v6842
    %6901 = vmatpush.msra.mxu0 %v6840
    %6902 = vmatpush.msra.mxu0 %v6838
    %6903 = vmatpush.msra.mxu0 %v6836
    %6904 = vmatpush.msra.mxu0 %v6834
    %6905 = vmatmul.f32.gmra.mxu0 %v6867
    %v6906 = vpop.f32.mrf.mxu0
    %v6907 = vadd.f32 0.0, %v6906
    %6908 = vdwg.mxu0
    %v6909 = vadd.f32 %v6830, %v6887
    %v6910 = vadd.f32 %v6831, %v6907
    %s6911 = scalar_lea.vmem %s7, 3840
    %v6912 = vld [vmem:[%s6911] sm:$0xff]
    %v6913 = vld [vmem:[%s6911 + $0x8] sm:$0xff]
    %v6914 = vld [vmem:[%s6911 + $0x10] sm:$0xff]
    %v6915 = vld [vmem:[%s6911 + $0x18] sm:$0xff]
    %v6916 = vld [vmem:[%s6911 + $0x20] sm:$0xff]
    %v6917 = vld [vmem:[%s6911 + $0x28] sm:$0xff]
    %v6918 = vld [vmem:[%s6911 + $0x30] sm:$0xff]
    %v6919 = vld [vmem:[%s6911 + $0x38] sm:$0xff]
    %v6920 = vld [vmem:[%s6911 + $0x40] sm:$0xff]
    %v6921 = vld [vmem:[%s6911 + $0x48] sm:$0xff]
    %v6922 = vld [vmem:[%s6911 + $0x50] sm:$0xff]
    %v6923 = vld [vmem:[%s6911 + $0x58] sm:$0xff]
    %v6924 = vld [vmem:[%s6911 + $0x60] sm:$0xff]
    %v6925 = vld [vmem:[%s6911 + $0x68] sm:$0xff]
    %v6926 = vld [vmem:[%s6911 + $0x70] sm:$0xff]
    %v6927 = vld [vmem:[%s6911 + $0x78] sm:$0xff]
    %v6928 = vld [vmem:[%s6911 + $0x80] sm:$0xff]
    %v6929 = vld [vmem:[%s6911 + $0x88] sm:$0xff]
    %v6930 = vld [vmem:[%s6911 + $0x90] sm:$0xff]
    %v6931 = vld [vmem:[%s6911 + $0x98] sm:$0xff]
    %v6932 = vld [vmem:[%s6911 + $0xa0] sm:$0xff]
    %v6933 = vld [vmem:[%s6911 + $0xa8] sm:$0xff]
    %v6934 = vld [vmem:[%s6911 + $0xb0] sm:$0xff]
    %v6935 = vld [vmem:[%s6911 + $0xb8] sm:$0xff]
    %v6936 = vld [vmem:[%s6911 + $0xc0] sm:$0xff]
    %v6937 = vld [vmem:[%s6911 + $0xc8] sm:$0xff]
    %v6938 = vld [vmem:[%s6911 + $0xd0] sm:$0xff]
    %v6939 = vld [vmem:[%s6911 + $0xd8] sm:$0xff]
    %v6940 = vld [vmem:[%s6911 + $0xe0] sm:$0xff]
    %v6941 = vld [vmem:[%s6911 + $0xe8] sm:$0xff]
    %v6942 = vld [vmem:[%s6911 + $0xf0] sm:$0xff]
    %v6943 = vld [vmem:[%s6911 + $0xf8] sm:$0xff]
    %v6944 = vrot.slane %v5725, 3
    %v6945 = vrot.slane %v5729, 2
    %v6946 = vsel %vm5798, %v6945, %v6944
    %6948 = vmatpush.msra.mxu0 %v6942
    %6949 = vmatpush.msra.mxu0 %v6940
    %6950 = vmatpush.msra.mxu0 %v6938
    %6951 = vmatpush.msra.mxu0 %v6936
    %6952 = vmatpush.msra.mxu0 %v6934
    %6953 = vmatpush.msra.mxu0 %v6932
    %6954 = vmatpush.msra.mxu0 %v6930
    %6955 = vmatpush.msra.mxu0 %v6928
    %6956 = vmatpush.msra.mxu0 %v6926
    %6957 = vmatpush.msra.mxu0 %v6924
    %6958 = vmatpush.msra.mxu0 %v6922
    %6959 = vmatpush.msra.mxu0 %v6920
    %6960 = vmatpush.msra.mxu0 %v6918
    %6961 = vmatpush.msra.mxu0 %v6916
    %6962 = vmatpush.msra.mxu0 %v6914
    %6963 = vmatpush.msra.mxu0 %v6912
    %6964 = vmatmul.f32.gmra.mxu0 %v6946
    %v6965 = vpop.f32.mrf.mxu0
    %v6966 = vadd.f32 0.0, %v6965
    %6967 = vdwg.mxu0
    %6968 = vmatpush.msra.mxu0 %v6943
    %6969 = vmatpush.msra.mxu0 %v6941
    %6970 = vmatpush.msra.mxu0 %v6939
    %6971 = vmatpush.msra.mxu0 %v6937
    %6972 = vmatpush.msra.mxu0 %v6935
    %6973 = vmatpush.msra.mxu0 %v6933
    %6974 = vmatpush.msra.mxu0 %v6931
    %6975 = vmatpush.msra.mxu0 %v6929
    %6976 = vmatpush.msra.mxu0 %v6927
    %6977 = vmatpush.msra.mxu0 %v6925
    %6978 = vmatpush.msra.mxu0 %v6923
    %6979 = vmatpush.msra.mxu0 %v6921
    %6980 = vmatpush.msra.mxu0 %v6919
    %6981 = vmatpush.msra.mxu0 %v6917
    %6982 = vmatpush.msra.mxu0 %v6915
    %6983 = vmatpush.msra.mxu0 %v6913
    %6984 = vmatmul.f32.gmra.mxu0 %v6946
    %v6985 = vpop.f32.mrf.mxu0
    %v6986 = vadd.f32 0.0, %v6985
    %6987 = vdwg.mxu0
    %v6988 = vadd.f32 %v6909, %v6966
    %v6989 = vadd.f32 %v6910, %v6986
    %v6990 = vld [vmem:[%s8] sm:$0x3]
    %v6992 = vperm.slane %v6990, 0
    %v6993 = vperm.slane %v6990, 1
    %v6996 = vadd.f32 %v6988, %v6992
    %v6997 = vadd.f32 %v6989, %v6993
    %v6998 = vmax.f32 %v6996, 0.0
    %v6999 = vmax.f32 %v6997, 0.0
    %v7000 = vld [vmem:[%s9] sm:$0xff]
    %v7001 = vld [vmem:[%s9 + $0x8] sm:$0xff]
    %v7002 = vld [vmem:[%s9 + $0x10] sm:$0xff]
    %v7003 = vld [vmem:[%s9 + $0x18] sm:$0xff]
    %v7004 = vld [vmem:[%s9 + $0x20] sm:$0xff]
    %v7005 = vld [vmem:[%s9 + $0x28] sm:$0xff]
    %v7006 = vld [vmem:[%s9 + $0x30] sm:$0xff]
    %v7007 = vld [vmem:[%s9 + $0x38] sm:$0xff]
    %v7008 = vld [vmem:[%s9 + $0x40] sm:$0xff]
    %v7009 = vld [vmem:[%s9 + $0x48] sm:$0xff]
    %v7010 = vld [vmem:[%s9 + $0x50] sm:$0xff]
    %v7011 = vld [vmem:[%s9 + $0x58] sm:$0xff]
    %v7012 = vld [vmem:[%s9 + $0x60] sm:$0xff]
    %v7013 = vld [vmem:[%s9 + $0x68] sm:$0xff]
    %v7014 = vld [vmem:[%s9 + $0x70] sm:$0xff]
    %v7015 = vld [vmem:[%s9 + $0x78] sm:$0xff]
    %v7016 = vld [vmem:[%s9 + $0x80] sm:$0xff]
    %v7017 = vld [vmem:[%s9 + $0x88] sm:$0xff]
    %v7018 = vld [vmem:[%s9 + $0x90] sm:$0xff]
    %v7019 = vld [vmem:[%s9 + $0x98] sm:$0xff]
    %v7020 = vld [vmem:[%s9 + $0xa0] sm:$0xff]
    %v7021 = vld [vmem:[%s9 + $0xa8] sm:$0xff]
    %v7022 = vld [vmem:[%s9 + $0xb0] sm:$0xff]
    %v7023 = vld [vmem:[%s9 + $0xb8] sm:$0xff]
    %v7024 = vld [vmem:[%s9 + $0xc0] sm:$0xff]
    %v7025 = vld [vmem:[%s9 + $0xc8] sm:$0xff]
    %v7026 = vld [vmem:[%s9 + $0xd0] sm:$0xff]
    %v7027 = vld [vmem:[%s9 + $0xd8] sm:$0xff]
    %v7028 = vld [vmem:[%s9 + $0xe0] sm:$0xff]
    %v7029 = vld [vmem:[%s9 + $0xe8] sm:$0xff]
    %v7030 = vld [vmem:[%s9 + $0xf0] sm:$0xff]
    %v7031 = vld [vmem:[%s9 + $0xf8] sm:$0xff]
    %v7032 = vld [vmem:[%s10] sm:$0x1]
    %v7034 = vperm.slane %v7032, 0
    %7036 = vmatpush.msra.mxu0 %v7015
    %7037 = vmatpush.msra.mxu0 %v7014
    %7038 = vmatpush.msra.mxu0 %v7013
    %7039 = vmatpush.msra.mxu0 %v7012
    %7040 = vmatpush.msra.mxu0 %v7011
    %7041 = vmatpush.msra.mxu0 %v7010
    %7042 = vmatpush.msra.mxu0 %v7009
    %7043 = vmatpush.msra.mxu0 %v7008
    %7044 = vmatpush.msra.mxu0 %v7007
    %7045 = vmatpush.msra.mxu0 %v7006
    %7046 = vmatpush.msra.mxu0 %v7005
    %7047 = vmatpush.msra.mxu0 %v7004
    %7048 = vmatpush.msra.mxu0 %v7003
    %7049 = vmatpush.msra.mxu0 %v7002
    %7050 = vmatpush.msra.mxu0 %v7001
    %7051 = vmatpush.msra.mxu0 %v7000
    %7052 = vmatmul.f32.gmra.mxu0 %v6998
    %v7053 = vpop.f32.mrf.mxu0
    %v7054 = vadd.f32 %v7034, %v7053
    %7055 = vdwg.mxu0
    %7056 = vmatpush.msra.mxu0 %v7031
    %7057 = vmatpush.msra.mxu0 %v7030
    %7058 = vmatpush.msra.mxu0 %v7029
    %7059 = vmatpush.msra.mxu0 %v7028
    %7060 = vmatpush.msra.mxu0 %v7027
    %7061 = vmatpush.msra.mxu0 %v7026
    %7062 = vmatpush.msra.mxu0 %v7025
    %7063 = vmatpush.msra.mxu0 %v7024
    %7064 = vmatpush.msra.mxu0 %v7023
    %7065 = vmatpush.msra.mxu0 %v7022
    %7066 = vmatpush.msra.mxu0 %v7021
    %7067 = vmatpush.msra.mxu0 %v7020
    %7068 = vmatpush.msra.mxu0 %v7019
    %7069 = vmatpush.msra.mxu0 %v7018
    %7070 = vmatpush.msra.mxu0 %v7017
    %7071 = vmatpush.msra.mxu0 %v7016
    %7072 = vmatmul.f32.gmra.mxu0 %v6999
    %v7073 = vpop.f32.mrf.mxu0
    %v7074 = vadd.f32 %v7054, %v7073
    %7075 = vdwg.mxu0
    %vm7076 = vcmask 1041408
    %v7077 = vsel %vm7076, %v7074, -inf
    %7078 = vmax.xlane.f32.xlu0 %v7077
    %v7079 = vpop.xlane.xlu0 %7078
    %v7080 = vsub.f32 %v7074, %v7079
    %v7081 = vmul.f32 %v7080, 1.442695
    %v7082 = vpow.pop %v7081
    %v7083 = vsel %vm7076, %v7082, 0.0
    %7084 = vadd.xlane.f32.xlu0 %v7083
    %v7085 = vpop.xlane.xlu0 %7084
    %v7086 = vlog2.pop %v7085
    %v7087 = vmul.f32 %v7086, 0.6931472
    %v7088 = vadd.f32 %v7087, %v7079
    %v7089 = vsub.f32 %v7074, %v7088
    %vm7090 = vcmask 197632
    %7091 = vst.msk [vmem:[#allocation4] sm:$0x3] %vm7090, %v7089
    // Predicated region
    $region46: #{net_forward.1} parent=1 // pred_check
      _
    $region47: #{net_forward.1} parent=1 // pred_check_branch
      %7093 = sbr.rel (0) target = $region49
    $region48: #{net_forward.1} parent=1 // pred_region
      %7095 = vsyncadd [#allocation5], 0
      %s7097 = sshll.u32 [#allocation4], 4
      %s7098 = int_to_ptr.vmem [resolvable:$true] %s7097
      %s7099 = sshll.u32 %s11, 4
      %s7100 = int_to_ptr.hbm [resolvable:$true] %s7099
      %7102 = dma.vmem_to_hbm [thread:$0]  %s7098, 32, %s7100, [#allocation5]
    $region49: #{net_forward.1} parent=1 // pred_fallthru
      _
    // Predicated region
    $region50: #{net_forward.1} parent=1 // pred_check
      _
    $region51: #{net_forward.1} parent=1 // pred_check_branch
      %7104 = sbr.rel (0) target = $region53
    $region52: #{net_forward.1} parent=1 // pred_region
      %7106 = dma.done [#allocation5], 32
    $region53: #{net_forward.1} parent=1 // pred_fallthru
      _
    %7107 = vsyncpa [#allocation5], 1

</llo_original>
